<compile_context>
chip_gen: v7x
topology: tpu7x:2x2x1
jax: 0.10.0
libtpu: 0.0.40
codegen_flags: <defaults>
</compile_context>

<pallas_src>
import functools

import jax
import jax.numpy as jnp
from jax import lax
from jax.experimental import pallas as pl
from jax.experimental.pallas import tpu as pltpu

_MIB = 1024 * 1024


# --------------------------------------------------------------------------- #
# Fused kernels
# --------------------------------------------------------------------------- #
def _mha_ln_kernel(x_ref, kv_ref,
                   wq_ref, bq_ref, wk_ref, bk_ref, wv_ref, bv_ref,
                   wo_ref, bo_ref, g_ref, beta_ref, o_ref, *, nhead):
    """One batch element per grid step.
    o = LayerNorm(x + OutProj(MultiHeadAttn(QProj(x), KProj(kv), VProj(kv))))."""
    x = x_ref[0]                                       # (L, E) f32
    kv = kv_ref[0]                                     # (S, E) f32
    E = x.shape[-1]
    dh = E // nhead

    # Projections: bf16 operands -> MXU, f32 accumulation.
    # wq / bq already carry the 1/sqrt(dh) attention scale (folded at prep time).
    xb = x.astype(jnp.bfloat16)
    kvb = kv.astype(jnp.bfloat16)
    q = jnp.dot(xb, wq_ref[...], preferred_element_type=jnp.float32) + bq_ref[...]
    k = jnp.dot(kvb, wk_ref[...], preferred_element_type=jnp.float32) + bk_ref[...]
    v = jnp.dot(kvb, wv_ref[...], preferred_element_type=jnp.float32) + bv_ref[...]

    # Per-head attention (heads statically unrolled); the output projection is
    # accumulated per head (attn += ctx_h @ wo[h*dh:(h+1)*dh, :]) so no lane-axis
    # concatenation / relayout is needed and everything stays VMEM-resident.
    attn = None
    for h in range(nhead):
        sl = slice(h * dh, (h + 1) * dh)
        qh = q[:, sl].astype(jnp.bfloat16)             # (L, dh)
        khT = k[:, sl].T.astype(jnp.bfloat16)          # (dh, S)
        vh = v[:, sl].astype(jnp.bfloat16)             # (S, dh)

        s = jnp.dot(qh, khT, preferred_element_type=jnp.float32)        # (L, S) f32
        s = s - jnp.max(s, axis=-1, keepdims=True)
        p = jnp.exp(s)
        p = p * pl.reciprocal(jnp.sum(p, axis=-1, keepdims=True), approx=True)

        ctx_h = jnp.dot(p.astype(jnp.bfloat16), vh,
                        preferred_element_type=jnp.float32)              # (L, dh)
        wo_h = wo_ref[sl, :].astype(jnp.bfloat16)                        # (dh, E)
        part = jnp.dot(ctx_h.astype(jnp.bfloat16), wo_h,
                       preferred_element_type=jnp.float32)               # (L, E)
        attn = part if attn is None else attn + part
    attn = attn + bo_ref[...]

    # Residual add + LayerNorm epilogue (eps = 1e-5, PyTorch default), f32 on the VPU.
    z = x + attn
    mu = jnp.mean(z, axis=-1, keepdims=True)
    var = jnp.mean((z - mu) * (z - mu), axis=-1, keepdims=True)
    o_ref[0] = (z - mu) * lax.rsqrt(var + 1e-5) * g_ref[...] + beta_ref[...]


def _ffn_ln_kernel(x_ref, w1_ref, b1_ref, w2_ref, b2_ref, g_ref, beta_ref, o_ref):
    """o = LayerNorm(x + linear2(relu(linear1(x)))) on one (tm, E) row tile."""
    x = x_ref[...]                                                       # (tm, E) f32
    h = jnp.dot(x.astype(jnp.bfloat16), w1_ref[...],
                preferred_element_type=jnp.float32) + b1_ref[...]
    h = jnp.maximum(h, 0.0)
    f = jnp.dot(h.astype(jnp.bfloat16), w2_ref[...],
                preferred_element_type=jnp.float32) + b2_ref[...]
    z = x + f
    mu = jnp.mean(z, axis=-1, keepdims=True)
    var = jnp.mean((z - mu) * (z - mu), axis=-1, keepdims=True)
    o_ref[...] = (z - mu) * lax.rsqrt(var + 1e-5) * g_ref[...] + beta_ref[...]


# --------------------------------------------------------------------------- #
# pallas_call wrappers
# --------------------------------------------------------------------------- #
def _compiler_params(n_grid_axes, est_block_bytes):
    # Cap the VMEM limit below v7x's 64 MiB physical VMEM (v5e/v6e have 128 MiB),
    # but never below a comfortable floor for compiler scratch.
    limit = int(min(48 * _MIB, max(16 * _MIB, 4 * est_block_bytes)))
    return pltpu.CompilerParams(
        dimension_semantics=("parallel",) * n_grid_axes,
        vmem_limit_bytes=limit)


def _prep_attn_operands(p, nhead):
    """Kernel operands: bf16 projection weights for the MXU, 1/sqrt(dh) folded into
    the q projection.  wo stays f32 (it is row-sliced per head in-kernel and cast to
    bf16 there; f32 rows keep the slices sublane-tile aligned for any head_dim>=8)."""
    E = p["wq"].shape[0]
    scale = float(E // nhead) ** -0.5
    return dict(
        wq=(p["wq"] * scale).astype(jnp.bfloat16), bq=(p["bq"] * scale).reshape(1, E),
        wk=p["wk"].astype(jnp.bfloat16),           bk=p["bk"].reshape(1, E),
        wv=p["wv"].astype(jnp.bfloat16),           bv=p["bv"].reshape(1, E),
        wo=p["wo"],                                bo=p["bo"].reshape(1, E),
    )


def mha_layernorm(x_ble, kv_bse, attn_p, gamma, beta, nhead):
    """x: (B, L, E) residual / query source, kv: (B, S, E) key/value source."""
    B, L, E = x_ble.shape
    S = kv_bse.shape[1]
    kernel = functools.partial(_mha_ln_kernel, nhead=nhead)
    fixed = lambda b: (0, 0)
    est = (2 * (2 * L * E + S * E) * 4          # double-buffered x / out / kv blocks (f32)
           + 3 * E * E * 2 + E * E * 4          # bf16 wq/wk/wv + f32 wo
           + 10 * E * 4)                        # biases + LN params
    return pl.pallas_call(
        kernel,
        out_shape=jax.ShapeDtypeStruct((B, L, E), jnp.float32),
        grid=(B,),
        in_specs=[
            pl.BlockSpec((1, L, E), lambda b: (b, 0, 0)),
            pl.BlockSpec((1, S, E), lambda b: (b, 0, 0)),
            pl.BlockSpec((E, E), fixed), pl.BlockSpec((1, E), fixed),   # wq, bq
            pl.BlockSpec((E, E), fixed), pl.BlockSpec((1, E), fixed),   # wk, bk
            pl.BlockSpec((E, E), fixed), pl.BlockSpec((1, E), fixed),   # wv, bv
            pl.BlockSpec((E, E), fixed), pl.BlockSpec((1, E), fixed),   # wo, bo
            pl.BlockSpec((1, E), fixed), pl.BlockSpec((1, E), fixed),   # ln gamma, beta
        ],
        out_specs=pl.BlockSpec((1, L, E), lambda b: (b, 0, 0)),
        compiler_params=_compiler_params(1, est),
    )(x_ble, kv_bse,
      attn_p["wq"], attn_p["bq"], attn_p["wk"], attn_p["bk"],
      attn_p["wv"], attn_p["bv"], attn_p["wo"], attn_p["bo"],
      gamma.reshape(1, E), beta.reshape(1, E))


def _pick_row_tile(M, E, F, max_rows=512, vmem_budget=40 * _MIB):
    """Largest row tile (multiple of 8, dividing M) whose double-buffered working set
    fits the VMEM budget; prefer >=2 grid steps so both v7x TensorCores get work."""
    per_row = (2 * 2 * E + F) * 4               # x/out double-buffered + FFN hidden (f32)
    cap = max(8, min(max_rows, vmem_budget // max(per_row, 1)))
    divs = [t for t in range(8, min(M, cap) + 1, 8) if M % t == 0]
    if not divs:
        return M
    multi = [t for t in divs if M // t >= 2]
    return max(multi) if multi else max(divs)


def ffn_layernorm(x, w1, b1, w2, b2, gamma, beta):
    """x: (M, E) -> LayerNorm(x + linear2(relu(linear1(x)))), row-tiled pipelined grid."""
    M, E = x.shape
    F = w1.shape[1]
    tm = _pick_row_tile(M, E, F)
    fixed = lambda i: (0, 0)
    est = (2 * 2 * tm * E * 4 + tm * F * 4      # double-buffered x/out tiles + hidden
           + 2 * E * F * 2                      # bf16 weights
           + (F + 3 * E) * 4)
    return pl.pallas_call(
        _ffn_ln_kernel,
        out_shape=jax.ShapeDtypeStruct((M, E), jnp.float32),
        grid=(M // tm,),
        in_specs=[
            pl.BlockSpec((tm, E), lambda i: (i, 0)),
            pl.BlockSpec((E, F), fixed), pl.BlockSpec((1, F), fixed),
            pl.BlockSpec((F, E), fixed), pl.BlockSpec((1, E), fixed),
            pl.BlockSpec((1, E), fixed), pl.BlockSpec((1, E), fixed),
        ],
        out_specs=pl.BlockSpec((tm, E), lambda i: (i, 0)),
        compiler_params=_compiler_params(1, est),
    )(x, w1.astype(jnp.bfloat16), b1.reshape(1, F),
      w2.astype(jnp.bfloat16), b2.reshape(1, E),
      gamma.reshape(1, E), beta.reshape(1, E))


# --------------------------------------------------------------------------- #
# TransformerDecoderLayer forward
# --------------------------------------------------------------------------- #
def transformer_decoder_layer(query_bcp, key_bcp, query_pos, key_pos, params, nhead):
    """query: (B, C, Pq), key: (B, C, Pk) -> (B, C, Pq).
    query_pos / key_pos unused (self_posembed = cross_posembed = None)."""
    del query_pos, key_pos
    B, C, Pq = query_bcp.shape

    # Lane-dense internal layout (B, points, channels); single transpose in/out.
    x = jnp.transpose(query_bcp, (0, 2, 1)).astype(jnp.float32)     # (B, L, E)
    kv = jnp.transpose(key_bcp, (0, 2, 1)).astype(jnp.float32)      # (B, S, E)

    self_p = _prep_attn_operands(params["self_attn"], nhead)
    cross_p = _prep_attn_operands(params["cross_attn"], nhead)

    x = mha_layernorm(x, x, self_p, params["norm1_g"], params["norm1_b"], nhead)
    x = mha_layernorm(x, kv, cross_p, params["norm2_g"], params["norm2_b"], nhead)

    x = ffn_layernorm(x.reshape(B * Pq, C),
                      params["w1"], params["b1"], params["w2"], params["b2"],
                      params["norm3_g"], params["norm3_b"])
    return jnp.transpose(x.reshape(B, Pq, C), (0, 2, 1))            # (B, C, Pq)


# --------------------------------------------------------------------------- #
# Deterministic parameter construction (shapes from __init__)
# --------------------------------------------------------------------------- #
def _xavier(key, shape):
    fan_in, fan_out = shape[0], shape[1]
    bound = (6.0 / (fan_in + fan_out)) ** 0.5
    return jax.random.uniform(key, shape, jnp.float32, -bound, bound)


def make_params(key, d_model, nhead, dim_ff):
    keys = jax.random.split(key, 10)

    def attn_params(k0, k1, k2, k3):
        # weights stored in "x @ w" orientation (in, out); biases zero per _reset_parameters
        return dict(
            wq=_xavier(k0, (d_model, d_model)), bq=jnp.zeros((d_model,), jnp.float32),
            wk=_xavier(k1, (d_model, d_model)), bk=jnp.zeros((d_model,), jnp.float32),
            wv=_xavier(k2, (d_model, d_model)), bv=jnp.zeros((d_model,), jnp.float32),
            wo=_xavier(k3, (d_model, d_model)), bo=jnp.zeros((d_model,), jnp.float32),
        )

    return dict(
        self_attn=attn_params(*jax.random.split(keys[0], 4)),
        cross_attn=attn_params(*jax.random.split(keys[1], 4)),
        w1=_xavier(keys[2], (d_model, dim_ff)),
        b1=jax.random.uniform(keys[3], (dim_ff,), jnp.float32, -0.05, 0.05),
        w2=_xavier(keys[4], (dim_ff, d_model)),
        b2=jax.random.uniform(keys[5], (d_model,), jnp.float32, -0.05, 0.05),
        norm1_g=jnp.ones((d_model,), jnp.float32), norm1_b=jnp.zeros((d_model,), jnp.float32),
        norm2_g=jnp.ones((d_model,), jnp.float32), norm2_b=jnp.zeros((d_model,), jnp.float32),
        norm3_g=jnp.ones((d_model,), jnp.float32), norm3_b=jnp.zeros((d_model,), jnp.float32),
    )


# --------------------------------------------------------------------------- #
# Pure-JAX references
# --------------------------------------------------------------------------- #
def _layernorm_ref(z, g, b):
    mu = jnp.mean(z, axis=-1, keepdims=True)
    var = jnp.mean((z - mu) ** 2, axis=-1, keepdims=True)
    return (z - mu) / jnp.sqrt(var + 1e-5) * g + b


def _ref_forward_matched(query_bcp, key_bcp, params, nhead):
    """Reference mirroring the kernel's bf16 matmul-operand rounding (f32 accumulation),
    so the comparison isolates kernel bugs from the intentional bf16 quantization."""

    def mha(x, kv, p):
        B, L, E = x.shape
        S = kv.shape[1]
        dh = E // nhead
        xb = x.astype(jnp.bfloat16)
        kvb = kv.astype(jnp.bfloat16)
        q = jnp.einsum("ble,eo->blo", xb, p["wq"],
                       preferred_element_type=jnp.float32) + p["bq"][0]
        k = jnp.einsum("ble,eo->blo", kvb, p["wk"],
                       preferred_element_type=jnp.float32) + p["bk"][0]
        v = jnp.einsum("ble,eo->blo", kvb, p["wv"],
                       preferred_element_type=jnp.float32) + p["bv"][0]
        qh = q.reshape(B, L, nhead, dh).astype(jnp.bfloat16)
        kh = k.reshape(B, S, nhead, dh).astype(jnp.bfloat16)
        vh = v.reshape(B, S, nhead, dh).astype(jnp.bfloat16)
        s = jnp.einsum("blhd,bshd->bhls", qh, kh, preferred_element_type=jnp.float32)
        s = s - jnp.max(s, axis=-1, keepdims=True)
        e = jnp.exp(s)
        pa = e / jnp.sum(e, axis=-1, keepdims=True)
        ctx = jnp.einsum("bhls,bshd->blhd", pa.astype(jnp.bfloat16), vh,
                         preferred_element_type=jnp.float32).reshape(B, L, E)
        return jnp.einsum("ble,eo->blo", ctx.astype(jnp.bfloat16),
                          p["wo"].astype(jnp.bfloat16),
                          preferred_element_type=jnp.float32) + p["bo"][0]

    x = jnp.transpose(query_bcp, (0, 2, 1)).astype(jnp.float32)
    kv = jnp.transpose(key_bcp, (0, 2, 1)).astype(jnp.float32)
    sp = _prep_attn_operands(params["self_attn"], nhead)
    cp = _prep_attn_operands(params["cross_attn"], nhead)
    x = _layernorm_ref(x + mha(x, x, sp), params["norm1_g"], params["norm1_b"])
    x = _layernorm_ref(x + mha(x, kv, cp), params["norm2_g"], params["norm2_b"])
    h = jnp.einsum("ble,ef->blf", x.astype(jnp.bfloat16),
                   params["w1"].astype(jnp.bfloat16),
                   preferred_element_type=jnp.float32) + params["b1"]
    h = jnp.maximum(h, 0.0)
    f = jnp.einsum("blf,fe->ble", h.astype(jnp.bfloat16),
                   params["w2"].astype(jnp.bfloat16),
                   preferred_element_type=jnp.float32) + params["b2"]
    x = _layernorm_ref(x + f, params["norm3_g"], params["norm3_b"])
    return jnp.transpose(x, (0, 2, 1))


def _ref_forward_f32(query_bcp, key_bcp, params, nhead):
    """Standard full-f32 reference of the PyTorch forward (looser comparison bound,
    since the Pallas kernels intentionally use bf16 MXU operands)."""
    hi = jax.lax.Precision.HIGHEST

    def mha(x, kv, p):
        B, L, E = x.shape
        S = kv.shape[1]
        dh = E // nhead
        q = jnp.einsum("ble,eo->blo", x, p["wq"], precision=hi) + p["bq"]
        k = jnp.einsum("ble,eo->blo", kv, p["wk"], precision=hi) + p["bk"]
        v = jnp.einsum("ble,eo->blo", kv, p["wv"], precision=hi) + p["bv"]
        qh = q.reshape(B, L, nhead, dh) * (dh ** -0.5)
        kh = k.reshape(B, S, nhead, dh)
        vh = v.reshape(B, S, nhead, dh)
        s = jnp.einsum("blhd,bshd->bhls", qh, kh, precision=hi)
        pa = jax.nn.softmax(s, axis=-1)
        ctx = jnp.einsum("bhls,bshd->blhd", pa, vh, precision=hi).reshape(B, L, E)
        return jnp.einsum("ble,eo->blo", ctx, p["wo"], precision=hi) + p["bo"]

    x = jnp.transpose(query_bcp, (0, 2, 1)).astype(jnp.float32)
    kv = jnp.transpose(key_bcp, (0, 2, 1)).astype(jnp.float32)
    x = _layernorm_ref(x + mha(x, x, params["self_attn"]),
                       params["norm1_g"], params["norm1_b"])
    x = _layernorm_ref(x + mha(x, kv, params["cross_attn"]),
                       params["norm2_g"], params["norm2_b"])
    h = jnp.maximum(jnp.einsum("ble,ef->blf", x, params["w1"], precision=hi)
                    + params["b1"], 0.0)
    f = jnp.einsum("blf,fe->ble", h, params["w2"], precision=hi) + params["b2"]
    x = _layernorm_ref(x + f, params["norm3_g"], params["norm3_b"])
    return jnp.transpose(x, (0, 2, 1))


# --------------------------------------------------------------------------- #
if __name__ == "__main__":
    # Representative small config (lane-dense E=128, as recommended for TPU layouts).
    d_model, nhead, dim_ff = 128, 8, 256
    B, Pq, Pk = 2, 64, 128

    key = jax.random.PRNGKey(0)
    k_q, k_k, k_qp, k_kp, k_par = jax.random.split(key, 5)

    query = jax.random.normal(k_q, (B, d_model, Pq), jnp.float32)    # (B, C, Pq)
    key_t = jax.random.normal(k_k, (B, d_model, Pk), jnp.float32)    # (B, C, Pk)
    query_pos = jax.random.normal(k_qp, (B, Pq, 3), jnp.float32)     # unused (posembed=None)
    key_pos = jax.random.normal(k_kp, (B, Pk, 3), jnp.float32)       # unused (posembed=None)

    params = make_params(k_par, d_model, nhead, dim_ff)

    fwd = jax.jit(functools.partial(transformer_decoder_layer, nhead=nhead))
    out = jax.block_until_ready(fwd(query, key_t, query_pos, key_pos, params))
    assert out.shape == (B, d_model, Pq)

    # Strict check vs a reference with matched bf16 operand rounding.
    ref_m = _ref_forward_matched(query, key_t, params, nhead)
    err_m = float(jnp.max(jnp.abs(out - ref_m)))
    assert err_m < 3e-2, err_m

    # Sanity check vs the full-f32 PyTorch-equivalent math (bf16 MXU operands => looser).
    ref_f = _ref_forward_f32(query, key_t, params, nhead)
    err_f = float(jnp.max(jnp.abs(out - ref_f)))
    assert err_f < 2e-1, err_f

    print("KERNEL_OK")
</pallas_src>

<mosaic_0001>
module attributes {stable_mosaic.version = 11 : i64} {
  func.func @_mha_ln_kernel(%arg0: i32, %arg1: memref<1x64x128xf32, #tpu.memory_space<vmem>>, %arg2: memref<1x128x128xf32, #tpu.memory_space<vmem>>, %arg3: memref<128x128xbf16, #tpu.memory_space<vmem>>, %arg4: memref<1x128xf32, #tpu.memory_space<vmem>>, %arg5: memref<128x128xbf16, #tpu.memory_space<vmem>>, %arg6: memref<1x128xf32, #tpu.memory_space<vmem>>, %arg7: memref<128x128xbf16, #tpu.memory_space<vmem>>, %arg8: memref<1x128xf32, #tpu.memory_space<vmem>>, %arg9: memref<128x128xf32, #tpu.memory_space<vmem>>, %arg10: memref<1x128xf32, #tpu.memory_space<vmem>>, %arg11: memref<1x128xf32, #tpu.memory_space<vmem>>, %arg12: memref<1x128xf32, #tpu.memory_space<vmem>>, %arg13: memref<1x64x128xf32, #tpu.memory_space<vmem>>) attributes {dimension_semantics = [#tpu.dimension_semantics<parallel>], iteration_bounds = array<i64: 2>, scalar_prefetch = 0 : i64, scratch_operands = 0 : i64, tpu.core_type = #tpu.core_type<tc>, window_params = [{transform_indices = @transform_0, window_bounds = array<i64: 1, 64, 128>}, {transform_indices = @transform_1, window_bounds = array<i64: 1, 128, 128>}, {pipeline_mode = #tpu.pipeline_mode<synchronous>, transform_indices = @transform_2, window_bounds = array<i64: 128, 128>}, {pipeline_mode = #tpu.pipeline_mode<synchronous>, transform_indices = @transform_3, window_bounds = array<i64: 1, 128>}, {pipeline_mode = #tpu.pipeline_mode<synchronous>, transform_indices = @transform_4, window_bounds = array<i64: 128, 128>}, {pipeline_mode = #tpu.pipeline_mode<synchronous>, transform_indices = @transform_5, window_bounds = array<i64: 1, 128>}, {pipeline_mode = #tpu.pipeline_mode<synchronous>, transform_indices = @transform_6, window_bounds = array<i64: 128, 128>}, {pipeline_mode = #tpu.pipeline_mode<synchronous>, transform_indices = @transform_7, window_bounds = array<i64: 1, 128>}, {pipeline_mode = #tpu.pipeline_mode<synchronous>, transform_indices = @transform_8, window_bounds = array<i64: 128, 128>}, {pipeline_mode = #tpu.pipeline_mode<synchronous>, transform_indices = @transform_9, window_bounds = array<i64: 1, 128>}, {pipeline_mode = #tpu.pipeline_mode<synchronous>, transform_indices = @transform_10, window_bounds = array<i64: 1, 128>}, {pipeline_mode = #tpu.pipeline_mode<synchronous>, transform_indices = @transform_11, window_bounds = array<i64: 1, 128>}, {transform_indices = @transform_12, window_bounds = array<i64: 1, 64, 128>}]} {
    %c0 = arith.constant 0 : index
    %c0_0 = arith.constant 0 : index
    %c0_1 = arith.constant 0 : index
    %0 = vector.load %arg1[%c0, %c0_0, %c0_1] : memref<1x64x128xf32, #tpu.memory_space<vmem>>, vector<1x64x128xf32>
    %1 = vector.shape_cast %0 : vector<1x64x128xf32> to vector<64x128xf32>
    %c0_2 = arith.constant 0 : index
    %c0_3 = arith.constant 0 : index
    %c0_4 = arith.constant 0 : index
    %2 = vector.load %arg2[%c0_2, %c0_3, %c0_4] : memref<1x128x128xf32, #tpu.memory_space<vmem>>, vector<1x128x128xf32>
    %3 = vector.shape_cast %2 : vector<1x128x128xf32> to vector<128x128xf32>
    %4 = arith.truncf %1 : vector<64x128xf32> to vector<64x128xbf16>
    %5 = arith.truncf %3 : vector<128x128xf32> to vector<128x128xbf16>
    %c0_5 = arith.constant 0 : index
    %c0_6 = arith.constant 0 : index
    %6 = vector.load %arg3[%c0_5, %c0_6] : memref<128x128xbf16, #tpu.memory_space<vmem>>, vector<128x128xbf16>
    %cst = arith.constant dense<0.000000e+00> : vector<64x128xf32>
    %7 = tpu.matmul %4, %6, %cst {dimension_numbers = #tpu.dot_dimension_numbers<[1], [0], [0], [1], [0, 0, 1, 1], [], []>} : vector<64x128xbf16>, vector<128x128xbf16>, vector<64x128xf32> -> vector<64x128xf32>
    %c0_7 = arith.constant 0 : index
    %c0_8 = arith.constant 0 : index
    %8 = vector.load %arg4[%c0_7, %c0_8] : memref<1x128xf32, #tpu.memory_space<vmem>>, vector<1x128xf32>
    %9 = vector.broadcast %8 : vector<1x128xf32> to vector<64x128xf32>
    %10 = arith.addf %7, %9 : vector<64x128xf32>
    %c0_9 = arith.constant 0 : index
    %c0_10 = arith.constant 0 : index
    %11 = vector.load %arg5[%c0_9, %c0_10] : memref<128x128xbf16, #tpu.memory_space<vmem>>, vector<128x128xbf16>
    %cst_11 = arith.constant dense<0.000000e+00> : vector<128x128xf32>
    %12 = tpu.matmul %5, %11, %cst_11 {dimension_numbers = #tpu.dot_dimension_numbers<[1], [0], [0], [1], [0, 0, 1, 1], [], []>} : vector<128x128xbf16>, vector<128x128xbf16>, vector<128x128xf32> -> vector<128x128xf32>
    %c0_12 = arith.constant 0 : index
    %c0_13 = arith.constant 0 : index
    %13 = vector.load %arg6[%c0_12, %c0_13] : memref<1x128xf32, #tpu.memory_space<vmem>>, vector<1x128xf32>
    %14 = vector.broadcast %13 : vector<1x128xf32> to vector<128x128xf32>
    %15 = arith.addf %12, %14 : vector<128x128xf32>
    %c0_14 = arith.constant 0 : index
    %c0_15 = arith.constant 0 : index
    %16 = vector.load %arg7[%c0_14, %c0_15] : memref<128x128xbf16, #tpu.memory_space<vmem>>, vector<128x128xbf16>
    %cst_16 = arith.constant dense<0.000000e+00> : vector<128x128xf32>
    %17 = tpu.matmul %5, %16, %cst_16 {dimension_numbers = #tpu.dot_dimension_numbers<[1], [0], [0], [1], [0, 0, 1, 1], [], []>} : vector<128x128xbf16>, vector<128x128xbf16>, vector<128x128xf32> -> vector<128x128xf32>
    %c0_17 = arith.constant 0 : index
    %c0_18 = arith.constant 0 : index
    %18 = vector.load %arg8[%c0_17, %c0_18] : memref<1x128xf32, #tpu.memory_space<vmem>>, vector<1x128xf32>
    %19 = vector.broadcast %18 : vector<1x128xf32> to vector<128x128xf32>
    %20 = arith.addf %17, %19 : vector<128x128xf32>
    %21 = vector.extract_strided_slice %10 {offsets = [0, 0], sizes = [64, 16], strides = [1, 1]} : vector<64x128xf32> to vector<64x16xf32>
    %22 = arith.truncf %21 : vector<64x16xf32> to vector<64x16xbf16>
    %23 = vector.extract_strided_slice %15 {offsets = [0, 0], sizes = [128, 16], strides = [1, 1]} : vector<128x128xf32> to vector<128x16xf32>
    %24 = tpu.transpose %23, [1, 0] : vector<128x16xf32> -> vector<16x128xf32>
    %25 = arith.truncf %24 : vector<16x128xf32> to vector<16x128xbf16>
    %26 = vector.extract_strided_slice %20 {offsets = [0, 0], sizes = [128, 16], strides = [1, 1]} : vector<128x128xf32> to vector<128x16xf32>
    %27 = arith.truncf %26 : vector<128x16xf32> to vector<128x16xbf16>
    %cst_19 = arith.constant dense<0.000000e+00> : vector<64x128xf32>
    %28 = tpu.matmul %22, %25, %cst_19 {dimension_numbers = #tpu.dot_dimension_numbers<[1], [0], [0], [1], [0, 0, 1, 1], [], []>} : vector<64x16xbf16>, vector<16x128xbf16>, vector<64x128xf32> -> vector<64x128xf32>
    %cst_20 = arith.constant dense<0xFF800000> : vector<64xf32>
    %29 = vector.multi_reduction <maximumf>, %28, %cst_20 [1] : vector<64x128xf32> to vector<64xf32>
    %30 = vector.shape_cast %29 : vector<64xf32> to vector<64x1xf32>
    %31 = vector.broadcast %30 : vector<64x1xf32> to vector<64x128xf32>
    %32 = arith.subf %28, %31 : vector<64x128xf32>
    %33 = math.exp %32 : vector<64x128xf32>
    %cst_21 = arith.constant dense<0.000000e+00> : vector<64xf32>
    %34 = vector.multi_reduction <add>, %33, %cst_21 [1] : vector<64x128xf32> to vector<64xf32>
    %35 = vector.shape_cast %34 : vector<64xf32> to vector<64x1xf32>
    %36 = tpu.reciprocal %35 {approx = true} : vector<64x1xf32> -> vector<64x1xf32>
    %37 = vector.broadcast %36 : vector<64x1xf32> to vector<64x128xf32>
    %38 = arith.mulf %33, %37 : vector<64x128xf32>
    %39 = arith.truncf %38 : vector<64x128xf32> to vector<64x128xbf16>
    %cst_22 = arith.constant dense<0.000000e+00> : vector<64x16xf32>
    %40 = tpu.matmul %39, %27, %cst_22 {dimension_numbers = #tpu.dot_dimension_numbers<[1], [0], [0], [1], [0, 0, 1, 1], [], []>} : vector<64x128xbf16>, vector<128x16xbf16>, vector<64x16xf32> -> vector<64x16xf32>
    %c0_23 = arith.constant 0 : index
    %c0_24 = arith.constant 0 : index
    %41 = vector.load %arg9[%c0_23, %c0_24] : memref<128x128xf32, #tpu.memory_space<vmem>>, vector<16x128xf32>
    %42 = arith.truncf %41 : vector<16x128xf32> to vector<16x128xbf16>
    %43 = arith.truncf %40 : vector<64x16xf32> to vector<64x16xbf16>
    %cst_25 = arith.constant dense<0.000000e+00> : vector<64x128xf32>
    %44 = tpu.matmul %43, %42, %cst_25 {dimension_numbers = #tpu.dot_dimension_numbers<[1], [0], [0], [1], [0, 0, 1, 1], [], []>} : vector<64x16xbf16>, vector<16x128xbf16>, vector<64x128xf32> -> vector<64x128xf32>
    %45 = vector.extract_strided_slice %10 {offsets = [0, 16], sizes = [64, 16], strides = [1, 1]} : vector<64x128xf32> to vector<64x16xf32>
    %46 = arith.truncf %45 : vector<64x16xf32> to vector<64x16xbf16>
    %47 = vector.extract_strided_slice %15 {offsets = [0, 16], sizes = [128, 16], strides = [1, 1]} : vector<128x128xf32> to vector<128x16xf32>
    %48 = tpu.transpose %47, [1, 0] : vector<128x16xf32> -> vector<16x128xf32>
    %49 = arith.truncf %48 : vector<16x128xf32> to vector<16x128xbf16>
    %50 = vector.extract_strided_slice %20 {offsets = [0, 16], sizes = [128, 16], strides = [1, 1]} : vector<128x128xf32> to vector<128x16xf32>
    %51 = arith.truncf %50 : vector<128x16xf32> to vector<128x16xbf16>
    %cst_26 = arith.constant dense<0.000000e+00> : vector<64x128xf32>
    %52 = tpu.matmul %46, %49, %cst_26 {dimension_numbers = #tpu.dot_dimension_numbers<[1], [0], [0], [1], [0, 0, 1, 1], [], []>} : vector<64x16xbf16>, vector<16x128xbf16>, vector<64x128xf32> -> vector<64x128xf32>
    %cst_27 = arith.constant dense<0xFF800000> : vector<64xf32>
    %53 = vector.multi_reduction <maximumf>, %52, %cst_27 [1] : vector<64x128xf32> to vector<64xf32>
    %54 = vector.shape_cast %53 : vector<64xf32> to vector<64x1xf32>
    %55 = vector.broadcast %54 : vector<64x1xf32> to vector<64x128xf32>
    %56 = arith.subf %52, %55 : vector<64x128xf32>
    %57 = math.exp %56 : vector<64x128xf32>
    %cst_28 = arith.constant dense<0.000000e+00> : vector<64xf32>
    %58 = vector.multi_reduction <add>, %57, %cst_28 [1] : vector<64x128xf32> to vector<64xf32>
    %59 = vector.shape_cast %58 : vector<64xf32> to vector<64x1xf32>
    %60 = tpu.reciprocal %59 {approx = true} : vector<64x1xf32> -> vector<64x1xf32>
    %61 = vector.broadcast %60 : vector<64x1xf32> to vector<64x128xf32>
    %62 = arith.mulf %57, %61 : vector<64x128xf32>
    %63 = arith.truncf %62 : vector<64x128xf32> to vector<64x128xbf16>
    %cst_29 = arith.constant dense<0.000000e+00> : vector<64x16xf32>
    %64 = tpu.matmul %63, %51, %cst_29 {dimension_numbers = #tpu.dot_dimension_numbers<[1], [0], [0], [1], [0, 0, 1, 1], [], []>} : vector<64x128xbf16>, vector<128x16xbf16>, vector<64x16xf32> -> vector<64x16xf32>
    %c16 = arith.constant 16 : index
    %c0_30 = arith.constant 0 : index
    %65 = vector.load %arg9[%c16, %c0_30] : memref<128x128xf32, #tpu.memory_space<vmem>>, vector<16x128xf32>
    %66 = arith.truncf %65 : vector<16x128xf32> to vector<16x128xbf16>
    %67 = arith.truncf %64 : vector<64x16xf32> to vector<64x16xbf16>
    %cst_31 = arith.constant dense<0.000000e+00> : vector<64x128xf32>
    %68 = tpu.matmul %67, %66, %cst_31 {dimension_numbers = #tpu.dot_dimension_numbers<[1], [0], [0], [1], [0, 0, 1, 1], [], []>} : vector<64x16xbf16>, vector<16x128xbf16>, vector<64x128xf32> -> vector<64x128xf32>
    %69 = arith.addf %44, %68 : vector<64x128xf32>
    %70 = vector.extract_strided_slice %10 {offsets = [0, 32], sizes = [64, 16], strides = [1, 1]} : vector<64x128xf32> to vector<64x16xf32>
    %71 = arith.truncf %70 : vector<64x16xf32> to vector<64x16xbf16>
    %72 = vector.extract_strided_slice %15 {offsets = [0, 32], sizes = [128, 16], strides = [1, 1]} : vector<128x128xf32> to vector<128x16xf32>
    %73 = tpu.transpose %72, [1, 0] : vector<128x16xf32> -> vector<16x128xf32>
    %74 = arith.truncf %73 : vector<16x128xf32> to vector<16x128xbf16>
    %75 = vector.extract_strided_slice %20 {offsets = [0, 32], sizes = [128, 16], strides = [1, 1]} : vector<128x128xf32> to vector<128x16xf32>
    %76 = arith.truncf %75 : vector<128x16xf32> to vector<128x16xbf16>
    %cst_32 = arith.constant dense<0.000000e+00> : vector<64x128xf32>
    %77 = tpu.matmul %71, %74, %cst_32 {dimension_numbers = #tpu.dot_dimension_numbers<[1], [0], [0], [1], [0, 0, 1, 1], [], []>} : vector<64x16xbf16>, vector<16x128xbf16>, vector<64x128xf32> -> vector<64x128xf32>
    %cst_33 = arith.constant dense<0xFF800000> : vector<64xf32>
    %78 = vector.multi_reduction <maximumf>, %77, %cst_33 [1] : vector<64x128xf32> to vector<64xf32>
    %79 = vector.shape_cast %78 : vector<64xf32> to vector<64x1xf32>
    %80 = vector.broadcast %79 : vector<64x1xf32> to vector<64x128xf32>
    %81 = arith.subf %77, %80 : vector<64x128xf32>
    %82 = math.exp %81 : vector<64x128xf32>
    %cst_34 = arith.constant dense<0.000000e+00> : vector<64xf32>
    %83 = vector.multi_reduction <add>, %82, %cst_34 [1] : vector<64x128xf32> to vector<64xf32>
    %84 = vector.shape_cast %83 : vector<64xf32> to vector<64x1xf32>
    %85 = tpu.reciprocal %84 {approx = true} : vector<64x1xf32> -> vector<64x1xf32>
    %86 = vector.broadcast %85 : vector<64x1xf32> to vector<64x128xf32>
    %87 = arith.mulf %82, %86 : vector<64x128xf32>
    %88 = arith.truncf %87 : vector<64x128xf32> to vector<64x128xbf16>
    %cst_35 = arith.constant dense<0.000000e+00> : vector<64x16xf32>
    %89 = tpu.matmul %88, %76, %cst_35 {dimension_numbers = #tpu.dot_dimension_numbers<[1], [0], [0], [1], [0, 0, 1, 1], [], []>} : vector<64x128xbf16>, vector<128x16xbf16>, vector<64x16xf32> -> vector<64x16xf32>
    %c32 = arith.constant 32 : index
    %c0_36 = arith.constant 0 : index
    %90 = vector.load %arg9[%c32, %c0_36] : memref<128x128xf32, #tpu.memory_space<vmem>>, vector<16x128xf32>
    %91 = arith.truncf %90 : vector<16x128xf32> to vector<16x128xbf16>
    %92 = arith.truncf %89 : vector<64x16xf32> to vector<64x16xbf16>
    %cst_37 = arith.constant dense<0.000000e+00> : vector<64x128xf32>
    %93 = tpu.matmul %92, %91, %cst_37 {dimension_numbers = #tpu.dot_dimension_numbers<[1], [0], [0], [1], [0, 0, 1, 1], [], []>} : vector<64x16xbf16>, vector<16x128xbf16>, vector<64x128xf32> -> vector<64x128xf32>
    %94 = arith.addf %69, %93 : vector<64x128xf32>
    %95 = vector.extract_strided_slice %10 {offsets = [0, 48], sizes = [64, 16], strides = [1, 1]} : vector<64x128xf32> to vector<64x16xf32>
    %96 = arith.truncf %95 : vector<64x16xf32> to vector<64x16xbf16>
    %97 = vector.extract_strided_slice %15 {offsets = [0, 48], sizes = [128, 16], strides = [1, 1]} : vector<128x128xf32> to vector<128x16xf32>
    %98 = tpu.transpose %97, [1, 0] : vector<128x16xf32> -> vector<16x128xf32>
    %99 = arith.truncf %98 : vector<16x128xf32> to vector<16x128xbf16>
    %100 = vector.extract_strided_slice %20 {offsets = [0, 48], sizes = [128, 16], strides = [1, 1]} : vector<128x128xf32> to vector<128x16xf32>
    %101 = arith.truncf %100 : vector<128x16xf32> to vector<128x16xbf16>
    %cst_38 = arith.constant dense<0.000000e+00> : vector<64x128xf32>
    %102 = tpu.matmul %96, %99, %cst_38 {dimension_numbers = #tpu.dot_dimension_numbers<[1], [0], [0], [1], [0, 0, 1, 1], [], []>} : vector<64x16xbf16>, vector<16x128xbf16>, vector<64x128xf32> -> vector<64x128xf32>
    %cst_39 = arith.constant dense<0xFF800000> : vector<64xf32>
    %103 = vector.multi_reduction <maximumf>, %102, %cst_39 [1] : vector<64x128xf32> to vector<64xf32>
    %104 = vector.shape_cast %103 : vector<64xf32> to vector<64x1xf32>
    %105 = vector.broadcast %104 : vector<64x1xf32> to vector<64x128xf32>
    %106 = arith.subf %102, %105 : vector<64x128xf32>
    %107 = math.exp %106 : vector<64x128xf32>
    %cst_40 = arith.constant dense<0.000000e+00> : vector<64xf32>
    %108 = vector.multi_reduction <add>, %107, %cst_40 [1] : vector<64x128xf32> to vector<64xf32>
    %109 = vector.shape_cast %108 : vector<64xf32> to vector<64x1xf32>
    %110 = tpu.reciprocal %109 {approx = true} : vector<64x1xf32> -> vector<64x1xf32>
    %111 = vector.broadcast %110 : vector<64x1xf32> to vector<64x128xf32>
    %112 = arith.mulf %107, %111 : vector<64x128xf32>
    %113 = arith.truncf %112 : vector<64x128xf32> to vector<64x128xbf16>
    %cst_41 = arith.constant dense<0.000000e+00> : vector<64x16xf32>
    %114 = tpu.matmul %113, %101, %cst_41 {dimension_numbers = #tpu.dot_dimension_numbers<[1], [0], [0], [1], [0, 0, 1, 1], [], []>} : vector<64x128xbf16>, vector<128x16xbf16>, vector<64x16xf32> -> vector<64x16xf32>
    %c48 = arith.constant 48 : index
    %c0_42 = arith.constant 0 : index
    %115 = vector.load %arg9[%c48, %c0_42] : memref<128x128xf32, #tpu.memory_space<vmem>>, vector<16x128xf32>
    %116 = arith.truncf %115 : vector<16x128xf32> to vector<16x128xbf16>
    %117 = arith.truncf %114 : vector<64x16xf32> to vector<64x16xbf16>
    %cst_43 = arith.constant dense<0.000000e+00> : vector<64x128xf32>
    %118 = tpu.matmul %117, %116, %cst_43 {dimension_numbers = #tpu.dot_dimension_numbers<[1], [0], [0], [1], [0, 0, 1, 1], [], []>} : vector<64x16xbf16>, vector<16x128xbf16>, vector<64x128xf32> -> vector<64x128xf32>
    %119 = arith.addf %94, %118 : vector<64x128xf32>
    %120 = vector.extract_strided_slice %10 {offsets = [0, 64], sizes = [64, 16], strides = [1, 1]} : vector<64x128xf32> to vector<64x16xf32>
    %121 = arith.truncf %120 : vector<64x16xf32> to vector<64x16xbf16>
    %122 = vector.extract_strided_slice %15 {offsets = [0, 64], sizes = [128, 16], strides = [1, 1]} : vector<128x128xf32> to vector<128x16xf32>
    %123 = tpu.transpose %122, [1, 0] : vector<128x16xf32> -> vector<16x128xf32>
    %124 = arith.truncf %123 : vector<16x128xf32> to vector<16x128xbf16>
    %125 = vector.extract_strided_slice %20 {offsets = [0, 64], sizes = [128, 16], strides = [1, 1]} : vector<128x128xf32> to vector<128x16xf32>
    %126 = arith.truncf %125 : vector<128x16xf32> to vector<128x16xbf16>
    %cst_44 = arith.constant dense<0.000000e+00> : vector<64x128xf32>
    %127 = tpu.matmul %121, %124, %cst_44 {dimension_numbers = #tpu.dot_dimension_numbers<[1], [0], [0], [1], [0, 0, 1, 1], [], []>} : vector<64x16xbf16>, vector<16x128xbf16>, vector<64x128xf32> -> vector<64x128xf32>
    %cst_45 = arith.constant dense<0xFF800000> : vector<64xf32>
    %128 = vector.multi_reduction <maximumf>, %127, %cst_45 [1] : vector<64x128xf32> to vector<64xf32>
    %129 = vector.shape_cast %128 : vector<64xf32> to vector<64x1xf32>
    %130 = vector.broadcast %129 : vector<64x1xf32> to vector<64x128xf32>
    %131 = arith.subf %127, %130 : vector<64x128xf32>
    %132 = math.exp %131 : vector<64x128xf32>
    %cst_46 = arith.constant dense<0.000000e+00> : vector<64xf32>
    %133 = vector.multi_reduction <add>, %132, %cst_46 [1] : vector<64x128xf32> to vector<64xf32>
    %134 = vector.shape_cast %133 : vector<64xf32> to vector<64x1xf32>
    %135 = tpu.reciprocal %134 {approx = true} : vector<64x1xf32> -> vector<64x1xf32>
    %136 = vector.broadcast %135 : vector<64x1xf32> to vector<64x128xf32>
    %137 = arith.mulf %132, %136 : vector<64x128xf32>
    %138 = arith.truncf %137 : vector<64x128xf32> to vector<64x128xbf16>
    %cst_47 = arith.constant dense<0.000000e+00> : vector<64x16xf32>
    %139 = tpu.matmul %138, %126, %cst_47 {dimension_numbers = #tpu.dot_dimension_numbers<[1], [0], [0], [1], [0, 0, 1, 1], [], []>} : vector<64x128xbf16>, vector<128x16xbf16>, vector<64x16xf32> -> vector<64x16xf32>
    %c64 = arith.constant 64 : index
    %c0_48 = arith.constant 0 : index
    %140 = vector.load %arg9[%c64, %c0_48] : memref<128x128xf32, #tpu.memory_space<vmem>>, vector<16x128xf32>
    %141 = arith.truncf %140 : vector<16x128xf32> to vector<16x128xbf16>
    %142 = arith.truncf %139 : vector<64x16xf32> to vector<64x16xbf16>
    %cst_49 = arith.constant dense<0.000000e+00> : vector<64x128xf32>
    %143 = tpu.matmul %142, %141, %cst_49 {dimension_numbers = #tpu.dot_dimension_numbers<[1], [0], [0], [1], [0, 0, 1, 1], [], []>} : vector<64x16xbf16>, vector<16x128xbf16>, vector<64x128xf32> -> vector<64x128xf32>
    %144 = arith.addf %119, %143 : vector<64x128xf32>
    %145 = vector.extract_strided_slice %10 {offsets = [0, 80], sizes = [64, 16], strides = [1, 1]} : vector<64x128xf32> to vector<64x16xf32>
    %146 = arith.truncf %145 : vector<64x16xf32> to vector<64x16xbf16>
    %147 = vector.extract_strided_slice %15 {offsets = [0, 80], sizes = [128, 16], strides = [1, 1]} : vector<128x128xf32> to vector<128x16xf32>
    %148 = tpu.transpose %147, [1, 0] : vector<128x16xf32> -> vector<16x128xf32>
    %149 = arith.truncf %148 : vector<16x128xf32> to vector<16x128xbf16>
    %150 = vector.extract_strided_slice %20 {offsets = [0, 80], sizes = [128, 16], strides = [1, 1]} : vector<128x128xf32> to vector<128x16xf32>
    %151 = arith.truncf %150 : vector<128x16xf32> to vector<128x16xbf16>
    %cst_50 = arith.constant dense<0.000000e+00> : vector<64x128xf32>
    %152 = tpu.matmul %146, %149, %cst_50 {dimension_numbers = #tpu.dot_dimension_numbers<[1], [0], [0], [1], [0, 0, 1, 1], [], []>} : vector<64x16xbf16>, vector<16x128xbf16>, vector<64x128xf32> -> vector<64x128xf32>
    %cst_51 = arith.constant dense<0xFF800000> : vector<64xf32>
    %153 = vector.multi_reduction <maximumf>, %152, %cst_51 [1] : vector<64x128xf32> to vector<64xf32>
    %154 = vector.shape_cast %153 : vector<64xf32> to vector<64x1xf32>
    %155 = vector.broadcast %154 : vector<64x1xf32> to vector<64x128xf32>
    %156 = arith.subf %152, %155 : vector<64x128xf32>
    %157 = math.exp %156 : vector<64x128xf32>
    %cst_52 = arith.constant dense<0.000000e+00> : vector<64xf32>
    %158 = vector.multi_reduction <add>, %157, %cst_52 [1] : vector<64x128xf32> to vector<64xf32>
    %159 = vector.shape_cast %158 : vector<64xf32> to vector<64x1xf32>
    %160 = tpu.reciprocal %159 {approx = true} : vector<64x1xf32> -> vector<64x1xf32>
    %161 = vector.broadcast %160 : vector<64x1xf32> to vector<64x128xf32>
    %162 = arith.mulf %157, %161 : vector<64x128xf32>
    %163 = arith.truncf %162 : vector<64x128xf32> to vector<64x128xbf16>
    %cst_53 = arith.constant dense<0.000000e+00> : vector<64x16xf32>
    %164 = tpu.matmul %163, %151, %cst_53 {dimension_numbers = #tpu.dot_dimension_numbers<[1], [0], [0], [1], [0, 0, 1, 1], [], []>} : vector<64x128xbf16>, vector<128x16xbf16>, vector<64x16xf32> -> vector<64x16xf32>
    %c80 = arith.constant 80 : index
    %c0_54 = arith.constant 0 : index
    %165 = vector.load %arg9[%c80, %c0_54] : memref<128x128xf32, #tpu.memory_space<vmem>>, vector<16x128xf32>
    %166 = arith.truncf %165 : vector<16x128xf32> to vector<16x128xbf16>
    %167 = arith.truncf %164 : vector<64x16xf32> to vector<64x16xbf16>
    %cst_55 = arith.constant dense<0.000000e+00> : vector<64x128xf32>
    %168 = tpu.matmul %167, %166, %cst_55 {dimension_numbers = #tpu.dot_dimension_numbers<[1], [0], [0], [1], [0, 0, 1, 1], [], []>} : vector<64x16xbf16>, vector<16x128xbf16>, vector<64x128xf32> -> vector<64x128xf32>
    %169 = arith.addf %144, %168 : vector<64x128xf32>
    %170 = vector.extract_strided_slice %10 {offsets = [0, 96], sizes = [64, 16], strides = [1, 1]} : vector<64x128xf32> to vector<64x16xf32>
    %171 = arith.truncf %170 : vector<64x16xf32> to vector<64x16xbf16>
    %172 = vector.extract_strided_slice %15 {offsets = [0, 96], sizes = [128, 16], strides = [1, 1]} : vector<128x128xf32> to vector<128x16xf32>
    %173 = tpu.transpose %172, [1, 0] : vector<128x16xf32> -> vector<16x128xf32>
    %174 = arith.truncf %173 : vector<16x128xf32> to vector<16x128xbf16>
    %175 = vector.extract_strided_slice %20 {offsets = [0, 96], sizes = [128, 16], strides = [1, 1]} : vector<128x128xf32> to vector<128x16xf32>
    %176 = arith.truncf %175 : vector<128x16xf32> to vector<128x16xbf16>
    %cst_56 = arith.constant dense<0.000000e+00> : vector<64x128xf32>
    %177 = tpu.matmul %171, %174, %cst_56 {dimension_numbers = #tpu.dot_dimension_numbers<[1], [0], [0], [1], [0, 0, 1, 1], [], []>} : vector<64x16xbf16>, vector<16x128xbf16>, vector<64x128xf32> -> vector<64x128xf32>
    %cst_57 = arith.constant dense<0xFF800000> : vector<64xf32>
    %178 = vector.multi_reduction <maximumf>, %177, %cst_57 [1] : vector<64x128xf32> to vector<64xf32>
    %179 = vector.shape_cast %178 : vector<64xf32> to vector<64x1xf32>
    %180 = vector.broadcast %179 : vector<64x1xf32> to vector<64x128xf32>
    %181 = arith.subf %177, %180 : vector<64x128xf32>
    %182 = math.exp %181 : vector<64x128xf32>
    %cst_58 = arith.constant dense<0.000000e+00> : vector<64xf32>
    %183 = vector.multi_reduction <add>, %182, %cst_58 [1] : vector<64x128xf32> to vector<64xf32>
    %184 = vector.shape_cast %183 : vector<64xf32> to vector<64x1xf32>
    %185 = tpu.reciprocal %184 {approx = true} : vector<64x1xf32> -> vector<64x1xf32>
    %186 = vector.broadcast %185 : vector<64x1xf32> to vector<64x128xf32>
    %187 = arith.mulf %182, %186 : vector<64x128xf32>
    %188 = arith.truncf %187 : vector<64x128xf32> to vector<64x128xbf16>
    %cst_59 = arith.constant dense<0.000000e+00> : vector<64x16xf32>
    %189 = tpu.matmul %188, %176, %cst_59 {dimension_numbers = #tpu.dot_dimension_numbers<[1], [0], [0], [1], [0, 0, 1, 1], [], []>} : vector<64x128xbf16>, vector<128x16xbf16>, vector<64x16xf32> -> vector<64x16xf32>
    %c96 = arith.constant 96 : index
    %c0_60 = arith.constant 0 : index
    %190 = vector.load %arg9[%c96, %c0_60] : memref<128x128xf32, #tpu.memory_space<vmem>>, vector<16x128xf32>
    %191 = arith.truncf %190 : vector<16x128xf32> to vector<16x128xbf16>
    %192 = arith.truncf %189 : vector<64x16xf32> to vector<64x16xbf16>
    %cst_61 = arith.constant dense<0.000000e+00> : vector<64x128xf32>
    %193 = tpu.matmul %192, %191, %cst_61 {dimension_numbers = #tpu.dot_dimension_numbers<[1], [0], [0], [1], [0, 0, 1, 1], [], []>} : vector<64x16xbf16>, vector<16x128xbf16>, vector<64x128xf32> -> vector<64x128xf32>
    %194 = arith.addf %169, %193 : vector<64x128xf32>
    %195 = vector.extract_strided_slice %10 {offsets = [0, 112], sizes = [64, 16], strides = [1, 1]} : vector<64x128xf32> to vector<64x16xf32>
    %196 = arith.truncf %195 : vector<64x16xf32> to vector<64x16xbf16>
    %197 = vector.extract_strided_slice %15 {offsets = [0, 112], sizes = [128, 16], strides = [1, 1]} : vector<128x128xf32> to vector<128x16xf32>
    %198 = tpu.transpose %197, [1, 0] : vector<128x16xf32> -> vector<16x128xf32>
    %199 = arith.truncf %198 : vector<16x128xf32> to vector<16x128xbf16>
    %200 = vector.extract_strided_slice %20 {offsets = [0, 112], sizes = [128, 16], strides = [1, 1]} : vector<128x128xf32> to vector<128x16xf32>
    %201 = arith.truncf %200 : vector<128x16xf32> to vector<128x16xbf16>
    %cst_62 = arith.constant dense<0.000000e+00> : vector<64x128xf32>
    %202 = tpu.matmul %196, %199, %cst_62 {dimension_numbers = #tpu.dot_dimension_numbers<[1], [0], [0], [1], [0, 0, 1, 1], [], []>} : vector<64x16xbf16>, vector<16x128xbf16>, vector<64x128xf32> -> vector<64x128xf32>
    %cst_63 = arith.constant dense<0xFF800000> : vector<64xf32>
    %203 = vector.multi_reduction <maximumf>, %202, %cst_63 [1] : vector<64x128xf32> to vector<64xf32>
    %204 = vector.shape_cast %203 : vector<64xf32> to vector<64x1xf32>
    %205 = vector.broadcast %204 : vector<64x1xf32> to vector<64x128xf32>
    %206 = arith.subf %202, %205 : vector<64x128xf32>
    %207 = math.exp %206 : vector<64x128xf32>
    %cst_64 = arith.constant dense<0.000000e+00> : vector<64xf32>
    %208 = vector.multi_reduction <add>, %207, %cst_64 [1] : vector<64x128xf32> to vector<64xf32>
    %209 = vector.shape_cast %208 : vector<64xf32> to vector<64x1xf32>
    %210 = tpu.reciprocal %209 {approx = true} : vector<64x1xf32> -> vector<64x1xf32>
    %211 = vector.broadcast %210 : vector<64x1xf32> to vector<64x128xf32>
    %212 = arith.mulf %207, %211 : vector<64x128xf32>
    %213 = arith.truncf %212 : vector<64x128xf32> to vector<64x128xbf16>
    %cst_65 = arith.constant dense<0.000000e+00> : vector<64x16xf32>
    %214 = tpu.matmul %213, %201, %cst_65 {dimension_numbers = #tpu.dot_dimension_numbers<[1], [0], [0], [1], [0, 0, 1, 1], [], []>} : vector<64x128xbf16>, vector<128x16xbf16>, vector<64x16xf32> -> vector<64x16xf32>
    %c112 = arith.constant 112 : index
    %c0_66 = arith.constant 0 : index
    %215 = vector.load %arg9[%c112, %c0_66] : memref<128x128xf32, #tpu.memory_space<vmem>>, vector<16x128xf32>
    %216 = arith.truncf %215 : vector<16x128xf32> to vector<16x128xbf16>
    %217 = arith.truncf %214 : vector<64x16xf32> to vector<64x16xbf16>
    %cst_67 = arith.constant dense<0.000000e+00> : vector<64x128xf32>
    %218 = tpu.matmul %217, %216, %cst_67 {dimension_numbers = #tpu.dot_dimension_numbers<[1], [0], [0], [1], [0, 0, 1, 1], [], []>} : vector<64x16xbf16>, vector<16x128xbf16>, vector<64x128xf32> -> vector<64x128xf32>
    %219 = arith.addf %194, %218 : vector<64x128xf32>
    %c0_68 = arith.constant 0 : index
    %c0_69 = arith.constant 0 : index
    %220 = vector.load %arg10[%c0_68, %c0_69] : memref<1x128xf32, #tpu.memory_space<vmem>>, vector<1x128xf32>
    %221 = vector.broadcast %220 : vector<1x128xf32> to vector<64x128xf32>
    %222 = arith.addf %219, %221 : vector<64x128xf32>
    %223 = arith.addf %1, %222 : vector<64x128xf32>
    %cst_70 = arith.constant dense<0.000000e+00> : vector<64xf32>
    %224 = vector.multi_reduction <add>, %223, %cst_70 [1] : vector<64x128xf32> to vector<64xf32>
    %225 = vector.shape_cast %224 : vector<64xf32> to vector<64x1xf32>
    %cst_71 = arith.constant 1.280000e+02 : f32
    %226 = vector.broadcast %cst_71 : f32 to vector<64x1xf32>
    %227 = arith.divf %225, %226 : vector<64x1xf32>
    %228 = vector.broadcast %227 : vector<64x1xf32> to vector<64x128xf32>
    %229 = arith.subf %223, %228 : vector<64x128xf32>
    %230 = vector.broadcast %227 : vector<64x1xf32> to vector<64x128xf32>
    %231 = arith.subf %223, %230 : vector<64x128xf32>
    %232 = arith.mulf %229, %231 : vector<64x128xf32>
    %cst_72 = arith.constant dense<0.000000e+00> : vector<64xf32>
    %233 = vector.multi_reduction <add>, %232, %cst_72 [1] : vector<64x128xf32> to vector<64xf32>
    %234 = vector.shape_cast %233 : vector<64xf32> to vector<64x1xf32>
    %cst_73 = arith.constant 1.280000e+02 : f32
    %235 = vector.broadcast %cst_73 : f32 to vector<64x1xf32>
    %236 = arith.divf %234, %235 : vector<64x1xf32>
    %237 = vector.broadcast %227 : vector<64x1xf32> to vector<64x128xf32>
    %238 = arith.subf %223, %237 : vector<64x128xf32>
    %cst_74 = arith.constant 9.99999974E-6 : f32
    %239 = vector.broadcast %cst_74 : f32 to vector<64x1xf32>
    %240 = arith.addf %236, %239 : vector<64x1xf32>
    %241 = math.rsqrt %240 : vector<64x1xf32>
    %242 = vector.broadcast %241 : vector<64x1xf32> to vector<64x128xf32>
    %243 = arith.mulf %238, %242 : vector<64x128xf32>
    %c0_75 = arith.constant 0 : index
    %c0_76 = arith.constant 0 : index
    %244 = vector.load %arg11[%c0_75, %c0_76] : memref<1x128xf32, #tpu.memory_space<vmem>>, vector<1x128xf32>
    %245 = vector.broadcast %244 : vector<1x128xf32> to vector<64x128xf32>
    %246 = arith.mulf %243, %245 : vector<64x128xf32>
    %c0_77 = arith.constant 0 : index
    %c0_78 = arith.constant 0 : index
    %247 = vector.load %arg12[%c0_77, %c0_78] : memref<1x128xf32, #tpu.memory_space<vmem>>, vector<1x128xf32>
    %248 = vector.broadcast %247 : vector<1x128xf32> to vector<64x128xf32>
    %249 = arith.addf %246, %248 : vector<64x128xf32>
    %c0_79 = arith.constant 0 : index
    %c0_80 = arith.constant 0 : index
    %c0_81 = arith.constant 0 : index
    %250 = vector.load %arg13[%c0_79, %c0_80, %c0_81] : memref<1x64x128xf32, #tpu.memory_space<vmem>>, vector<1x64x128xf32>
    %251 = vector.shape_cast %250 : vector<1x64x128xf32> to vector<64x128xf32>
    %252 = vector.shape_cast %249 : vector<64x128xf32> to vector<1x64x128xf32>
    tpu.vector_store %arg13[%c0_79, %c0_80, %c0_81], %252 {strides = array<i32>} : memref<1x64x128xf32, #tpu.memory_space<vmem>>, vector<1x64x128xf32>,
    return
  }
  func.func @transform_0(%arg0: i32) -> (i32, i32, i32) {
    %c0_i32 = arith.constant 0 : i32
    %c0_i32_0 = arith.constant 0 : i32
    %c0_i32_1 = arith.constant 0 : i32
    return %arg0, %c0_i32, %c0_i32_0 : i32, i32, i32
  }
  func.func @transform_1(%arg0: i32) -> (i32, i32, i32) {
    %c0_i32 = arith.constant 0 : i32
    %c0_i32_0 = arith.constant 0 : i32
    %c0_i32_1 = arith.constant 0 : i32
    return %arg0, %c0_i32, %c0_i32_0 : i32, i32, i32
  }
  func.func @transform_2(%arg0: i32) -> (i32, i32) {
    %c0_i32 = arith.constant 0 : i32
    %c0_i32_0 = arith.constant 0 : i32
    %c0_i32_1 = arith.constant 0 : i32
    return %c0_i32, %c0_i32_0 : i32, i32
  }
  func.func @transform_3(%arg0: i32) -> (i32, i32) {
    %c0_i32 = arith.constant 0 : i32
    %c0_i32_0 = arith.constant 0 : i32
    %c0_i32_1 = arith.constant 0 : i32
    return %c0_i32, %c0_i32_0 : i32, i32
  }
  func.func @transform_4(%arg0: i32) -> (i32, i32) {
    %c0_i32 = arith.constant 0 : i32
    %c0_i32_0 = arith.constant 0 : i32
    %c0_i32_1 = arith.constant 0 : i32
    return %c0_i32, %c0_i32_0 : i32, i32
  }
  func.func @transform_5(%arg0: i32) -> (i32, i32) {
    %c0_i32 = arith.constant 0 : i32
    %c0_i32_0 = arith.constant 0 : i32
    %c0_i32_1 = arith.constant 0 : i32
    return %c0_i32, %c0_i32_0 : i32, i32
  }
  func.func @transform_6(%arg0: i32) -> (i32, i32) {
    %c0_i32 = arith.constant 0 : i32
    %c0_i32_0 = arith.constant 0 : i32
    %c0_i32_1 = arith.constant 0 : i32
    return %c0_i32, %c0_i32_0 : i32, i32
  }
  func.func @transform_7(%arg0: i32) -> (i32, i32) {
    %c0_i32 = arith.constant 0 : i32
    %c0_i32_0 = arith.constant 0 : i32
    %c0_i32_1 = arith.constant 0 : i32
    return %c0_i32, %c0_i32_0 : i32, i32
  }
  func.func @transform_8(%arg0: i32) -> (i32, i32) {
    %c0_i32 = arith.constant 0 : i32
    %c0_i32_0 = arith.constant 0 : i32
    %c0_i32_1 = arith.constant 0 : i32
    return %c0_i32, %c0_i32_0 : i32, i32
  }
  func.func @transform_9(%arg0: i32) -> (i32, i32) {
    %c0_i32 = arith.constant 0 : i32
    %c0_i32_0 = arith.constant 0 : i32
    %c0_i32_1 = arith.constant 0 : i32
    return %c0_i32, %c0_i32_0 : i32, i32
  }
  func.func @transform_10(%arg0: i32) -> (i32, i32) {
    %c0_i32 = arith.constant 0 : i32
    %c0_i32_0 = arith.constant 0 : i32
    %c0_i32_1 = arith.constant 0 : i32
    return %c0_i32, %c0_i32_0 : i32, i32
  }
  func.func @transform_11(%arg0: i32) -> (i32, i32) {
    %c0_i32 = arith.constant 0 : i32
    %c0_i32_0 = arith.constant 0 : i32
    %c0_i32_1 = arith.constant 0 : i32
    return %c0_i32, %c0_i32_0 : i32, i32
  }
  func.func @transform_12(%arg0: i32) -> (i32, i32, i32) {
    %c0_i32 = arith.constant 0 : i32
    %c0_i32_0 = arith.constant 0 : i32
    %c0_i32_1 = arith.constant 0 : i32
    return %arg0, %c0_i32, %c0_i32_0 : i32, i32, i32
  }
}

module attributes {stable_mosaic.version = 11 : i64} {
  func.func @_ffn_ln_kernel(%arg0: i32, %arg1: memref<64x128xf32, #tpu.memory_space<vmem>>, %arg2: memref<128x256xbf16, #tpu.memory_space<vmem>>, %arg3: memref<1x256xf32, #tpu.memory_space<vmem>>, %arg4: memref<256x128xbf16, #tpu.memory_space<vmem>>, %arg5: memref<1x128xf32, #tpu.memory_space<vmem>>, %arg6: memref<1x128xf32, #tpu.memory_space<vmem>>, %arg7: memref<1x128xf32, #tpu.memory_space<vmem>>, %arg8: memref<64x128xf32, #tpu.memory_space<vmem>>) attributes {dimension_semantics = [#tpu.dimension_semantics<parallel>], iteration_bounds = array<i64: 2>, scalar_prefetch = 0 : i64, scratch_operands = 0 : i64, tpu.core_type = #tpu.core_type<tc>, window_params = [{transform_indices = @transform_0, window_bounds = array<i64: 64, 128>}, {pipeline_mode = #tpu.pipeline_mode<synchronous>, transform_indices = @transform_1, window_bounds = array<i64: 128, 256>}, {pipeline_mode = #tpu.pipeline_mode<synchronous>, transform_indices = @transform_2, window_bounds = array<i64: 1, 256>}, {pipeline_mode = #tpu.pipeline_mode<synchronous>, transform_indices = @transform_3, window_bounds = array<i64: 256, 128>}, {pipeline_mode = #tpu.pipeline_mode<synchronous>, transform_indices = @transform_4, window_bounds = array<i64: 1, 128>}, {pipeline_mode = #tpu.pipeline_mode<synchronous>, transform_indices = @transform_5, window_bounds = array<i64: 1, 128>}, {pipeline_mode = #tpu.pipeline_mode<synchronous>, transform_indices = @transform_6, window_bounds = array<i64: 1, 128>}, {transform_indices = @transform_7, window_bounds = array<i64: 64, 128>}]} {
    %c0 = arith.constant 0 : index
    %c0_0 = arith.constant 0 : index
    %0 = vector.load %arg1[%c0, %c0_0] : memref<64x128xf32, #tpu.memory_space<vmem>>, vector<64x128xf32>
    %1 = arith.truncf %0 : vector<64x128xf32> to vector<64x128xbf16>
    %c0_1 = arith.constant 0 : index
    %c0_2 = arith.constant 0 : index
    %2 = vector.load %arg2[%c0_1, %c0_2] : memref<128x256xbf16, #tpu.memory_space<vmem>>, vector<128x256xbf16>
    %cst = arith.constant dense<0.000000e+00> : vector<64x256xf32>
    %3 = tpu.matmul %1, %2, %cst {dimension_numbers = #tpu.dot_dimension_numbers<[1], [0], [0], [1], [0, 0, 1, 1], [], []>} : vector<64x128xbf16>, vector<128x256xbf16>, vector<64x256xf32> -> vector<64x256xf32>
    %c0_3 = arith.constant 0 : index
    %c0_4 = arith.constant 0 : index
    %4 = vector.load %arg3[%c0_3, %c0_4] : memref<1x256xf32, #tpu.memory_space<vmem>>, vector<1x256xf32>
    %5 = vector.broadcast %4 : vector<1x256xf32> to vector<64x256xf32>
    %6 = arith.addf %3, %5 : vector<64x256xf32>
    %cst_5 = arith.constant 0.000000e+00 : f32
    %7 = vector.broadcast %cst_5 : f32 to vector<64x256xf32>
    %8 = arith.maximumf %6, %7 : vector<64x256xf32>
    %9 = arith.truncf %8 : vector<64x256xf32> to vector<64x256xbf16>
    %c0_6 = arith.constant 0 : index
    %c0_7 = arith.constant 0 : index
    %10 = vector.load %arg4[%c0_6, %c0_7] : memref<256x128xbf16, #tpu.memory_space<vmem>>, vector<256x128xbf16>
    %cst_8 = arith.constant dense<0.000000e+00> : vector<64x128xf32>
    %11 = tpu.matmul %9, %10, %cst_8 {dimension_numbers = #tpu.dot_dimension_numbers<[1], [0], [0], [1], [0, 0, 1, 1], [], []>} : vector<64x256xbf16>, vector<256x128xbf16>, vector<64x128xf32> -> vector<64x128xf32>
    %c0_9 = arith.constant 0 : index
    %c0_10 = arith.constant 0 : index
    %12 = vector.load %arg5[%c0_9, %c0_10] : memref<1x128xf32, #tpu.memory_space<vmem>>, vector<1x128xf32>
    %13 = vector.broadcast %12 : vector<1x128xf32> to vector<64x128xf32>
    %14 = arith.addf %11, %13 : vector<64x128xf32>
    %15 = arith.addf %0, %14 : vector<64x128xf32>
    %cst_11 = arith.constant dense<0.000000e+00> : vector<64xf32>
    %16 = vector.multi_reduction <add>, %15, %cst_11 [1] : vector<64x128xf32> to vector<64xf32>
    %17 = vector.shape_cast %16 : vector<64xf32> to vector<64x1xf32>
    %cst_12 = arith.constant 1.280000e+02 : f32
    %18 = vector.broadcast %cst_12 : f32 to vector<64x1xf32>
    %19 = arith.divf %17, %18 : vector<64x1xf32>
    %20 = vector.broadcast %19 : vector<64x1xf32> to vector<64x128xf32>
    %21 = arith.subf %15, %20 : vector<64x128xf32>
    %22 = vector.broadcast %19 : vector<64x1xf32> to vector<64x128xf32>
    %23 = arith.subf %15, %22 : vector<64x128xf32>
    %24 = arith.mulf %21, %23 : vector<64x128xf32>
    %cst_13 = arith.constant dense<0.000000e+00> : vector<64xf32>
    %25 = vector.multi_reduction <add>, %24, %cst_13 [1] : vector<64x128xf32> to vector<64xf32>
    %26 = vector.shape_cast %25 : vector<64xf32> to vector<64x1xf32>
    %cst_14 = arith.constant 1.280000e+02 : f32
    %27 = vector.broadcast %cst_14 : f32 to vector<64x1xf32>
    %28 = arith.divf %26, %27 : vector<64x1xf32>
    %29 = vector.broadcast %19 : vector<64x1xf32> to vector<64x128xf32>
    %30 = arith.subf %15, %29 : vector<64x128xf32>
    %cst_15 = arith.constant 9.99999974E-6 : f32
    %31 = vector.broadcast %cst_15 : f32 to vector<64x1xf32>
    %32 = arith.addf %28, %31 : vector<64x1xf32>
    %33 = math.rsqrt %32 : vector<64x1xf32>
    %34 = vector.broadcast %33 : vector<64x1xf32> to vector<64x128xf32>
    %35 = arith.mulf %30, %34 : vector<64x128xf32>
    %c0_16 = arith.constant 0 : index
    %c0_17 = arith.constant 0 : index
    %36 = vector.load %arg6[%c0_16, %c0_17] : memref<1x128xf32, #tpu.memory_space<vmem>>, vector<1x128xf32>
    %37 = vector.broadcast %36 : vector<1x128xf32> to vector<64x128xf32>
    %38 = arith.mulf %35, %37 : vector<64x128xf32>
    %c0_18 = arith.constant 0 : index
    %c0_19 = arith.constant 0 : index
    %39 = vector.load %arg7[%c0_18, %c0_19] : memref<1x128xf32, #tpu.memory_space<vmem>>, vector<1x128xf32>
    %40 = vector.broadcast %39 : vector<1x128xf32> to vector<64x128xf32>
    %41 = arith.addf %38, %40 : vector<64x128xf32>
    %c0_20 = arith.constant 0 : index
    %c0_21 = arith.constant 0 : index
    %42 = vector.load %arg8[%c0_20, %c0_21] : memref<64x128xf32, #tpu.memory_space<vmem>>, vector<64x128xf32>
    tpu.vector_store %arg8[%c0_20, %c0_21], %41 {strides = array<i32>} : memref<64x128xf32, #tpu.memory_space<vmem>>, vector<64x128xf32>,
    return
  }
  func.func @transform_0(%arg0: i32) -> (i32, i32) {
    %c0_i32 = arith.constant 0 : i32
    %c0_i32_0 = arith.constant 0 : i32
    return %arg0, %c0_i32 : i32, i32
  }
  func.func @transform_1(%arg0: i32) -> (i32, i32) {
    %c0_i32 = arith.constant 0 : i32
    %c0_i32_0 = arith.constant 0 : i32
    %c0_i32_1 = arith.constant 0 : i32
    return %c0_i32, %c0_i32_0 : i32, i32
  }
  func.func @transform_2(%arg0: i32) -> (i32, i32) {
    %c0_i32 = arith.constant 0 : i32
    %c0_i32_0 = arith.constant 0 : i32
    %c0_i32_1 = arith.constant 0 : i32
    return %c0_i32, %c0_i32_0 : i32, i32
  }
  func.func @transform_3(%arg0: i32) -> (i32, i32) {
    %c0_i32 = arith.constant 0 : i32
    %c0_i32_0 = arith.constant 0 : i32
    %c0_i32_1 = arith.constant 0 : i32
    return %c0_i32, %c0_i32_0 : i32, i32
  }
  func.func @transform_4(%arg0: i32) -> (i32, i32) {
    %c0_i32 = arith.constant 0 : i32
    %c0_i32_0 = arith.constant 0 : i32
    %c0_i32_1 = arith.constant 0 : i32
    return %c0_i32, %c0_i32_0 : i32, i32
  }
  func.func @transform_5(%arg0: i32) -> (i32, i32) {
    %c0_i32 = arith.constant 0 : i32
    %c0_i32_0 = arith.constant 0 : i32
    %c0_i32_1 = arith.constant 0 : i32
    return %c0_i32, %c0_i32_0 : i32, i32
  }
  func.func @transform_6(%arg0: i32) -> (i32, i32) {
    %c0_i32 = arith.constant 0 : i32
    %c0_i32_0 = arith.constant 0 : i32
    %c0_i32_1 = arith.constant 0 : i32
    return %c0_i32, %c0_i32_0 : i32, i32
  }
  func.func @transform_7(%arg0: i32) -> (i32, i32) {
    %c0_i32 = arith.constant 0 : i32
    %c0_i32_0 = arith.constant 0 : i32
    return %arg0, %c0_i32 : i32, i32
  }
}

module attributes {stable_mosaic.version = 11 : i64} {
  func.func @_mha_ln_kernel(%arg0: i32, %arg1: memref<1x64x128xf32, #tpu.memory_space<vmem>>, %arg2: memref<1x64x128xf32, #tpu.memory_space<vmem>>, %arg3: memref<128x128xbf16, #tpu.memory_space<vmem>>, %arg4: memref<1x128xf32, #tpu.memory_space<vmem>>, %arg5: memref<128x128xbf16, #tpu.memory_space<vmem>>, %arg6: memref<1x128xf32, #tpu.memory_space<vmem>>, %arg7: memref<128x128xbf16, #tpu.memory_space<vmem>>, %arg8: memref<1x128xf32, #tpu.memory_space<vmem>>, %arg9: memref<128x128xf32, #tpu.memory_space<vmem>>, %arg10: memref<1x128xf32, #tpu.memory_space<vmem>>, %arg11: memref<1x128xf32, #tpu.memory_space<vmem>>, %arg12: memref<1x128xf32, #tpu.memory_space<vmem>>, %arg13: memref<1x64x128xf32, #tpu.memory_space<vmem>>) attributes {dimension_semantics = [#tpu.dimension_semantics<parallel>], iteration_bounds = array<i64: 2>, scalar_prefetch = 0 : i64, scratch_operands = 0 : i64, tpu.core_type = #tpu.core_type<tc>, window_params = [{transform_indices = @transform_0, window_bounds = array<i64: 1, 64, 128>}, {transform_indices = @transform_1, window_bounds = array<i64: 1, 64, 128>}, {pipeline_mode = #tpu.pipeline_mode<synchronous>, transform_indices = @transform_2, window_bounds = array<i64: 128, 128>}, {pipeline_mode = #tpu.pipeline_mode<synchronous>, transform_indices = @transform_3, window_bounds = array<i64: 1, 128>}, {pipeline_mode = #tpu.pipeline_mode<synchronous>, transform_indices = @transform_4, window_bounds = array<i64: 128, 128>}, {pipeline_mode = #tpu.pipeline_mode<synchronous>, transform_indices = @transform_5, window_bounds = array<i64: 1, 128>}, {pipeline_mode = #tpu.pipeline_mode<synchronous>, transform_indices = @transform_6, window_bounds = array<i64: 128, 128>}, {pipeline_mode = #tpu.pipeline_mode<synchronous>, transform_indices = @transform_7, window_bounds = array<i64: 1, 128>}, {pipeline_mode = #tpu.pipeline_mode<synchronous>, transform_indices = @transform_8, window_bounds = array<i64: 128, 128>}, {pipeline_mode = #tpu.pipeline_mode<synchronous>, transform_indices = @transform_9, window_bounds = array<i64: 1, 128>}, {pipeline_mode = #tpu.pipeline_mode<synchronous>, transform_indices = @transform_10, window_bounds = array<i64: 1, 128>}, {pipeline_mode = #tpu.pipeline_mode<synchronous>, transform_indices = @transform_11, window_bounds = array<i64: 1, 128>}, {transform_indices = @transform_12, window_bounds = array<i64: 1, 64, 128>}]} {
    %c0 = arith.constant 0 : index
    %c0_0 = arith.constant 0 : index
    %c0_1 = arith.constant 0 : index
    %0 = vector.load %arg1[%c0, %c0_0, %c0_1] : memref<1x64x128xf32, #tpu.memory_space<vmem>>, vector<1x64x128xf32>
    %1 = vector.shape_cast %0 : vector<1x64x128xf32> to vector<64x128xf32>
    %c0_2 = arith.constant 0 : index
    %c0_3 = arith.constant 0 : index
    %c0_4 = arith.constant 0 : index
    %2 = vector.load %arg2[%c0_2, %c0_3, %c0_4] : memref<1x64x128xf32, #tpu.memory_space<vmem>>, vector<1x64x128xf32>
    %3 = vector.shape_cast %2 : vector<1x64x128xf32> to vector<64x128xf32>
    %4 = arith.truncf %1 : vector<64x128xf32> to vector<64x128xbf16>
    %5 = arith.truncf %3 : vector<64x128xf32> to vector<64x128xbf16>
    %c0_5 = arith.constant 0 : index
    %c0_6 = arith.constant 0 : index
    %6 = vector.load %arg3[%c0_5, %c0_6] : memref<128x128xbf16, #tpu.memory_space<vmem>>, vector<128x128xbf16>
    %cst = arith.constant dense<0.000000e+00> : vector<64x128xf32>
    %7 = tpu.matmul %4, %6, %cst {dimension_numbers = #tpu.dot_dimension_numbers<[1], [0], [0], [1], [0, 0, 1, 1], [], []>} : vector<64x128xbf16>, vector<128x128xbf16>, vector<64x128xf32> -> vector<64x128xf32>
    %c0_7 = arith.constant 0 : index
    %c0_8 = arith.constant 0 : index
    %8 = vector.load %arg4[%c0_7, %c0_8] : memref<1x128xf32, #tpu.memory_space<vmem>>, vector<1x128xf32>
    %9 = vector.broadcast %8 : vector<1x128xf32> to vector<64x128xf32>
    %10 = arith.addf %7, %9 : vector<64x128xf32>
    %c0_9 = arith.constant 0 : index
    %c0_10 = arith.constant 0 : index
    %11 = vector.load %arg5[%c0_9, %c0_10] : memref<128x128xbf16, #tpu.memory_space<vmem>>, vector<128x128xbf16>
    %cst_11 = arith.constant dense<0.000000e+00> : vector<64x128xf32>
    %12 = tpu.matmul %5, %11, %cst_11 {dimension_numbers = #tpu.dot_dimension_numbers<[1], [0], [0], [1], [0, 0, 1, 1], [], []>} : vector<64x128xbf16>, vector<128x128xbf16>, vector<64x128xf32> -> vector<64x128xf32>
    %c0_12 = arith.constant 0 : index
    %c0_13 = arith.constant 0 : index
    %13 = vector.load %arg6[%c0_12, %c0_13] : memref<1x128xf32, #tpu.memory_space<vmem>>, vector<1x128xf32>
    %14 = vector.broadcast %13 : vector<1x128xf32> to vector<64x128xf32>
    %15 = arith.addf %12, %14 : vector<64x128xf32>
    %c0_14 = arith.constant 0 : index
    %c0_15 = arith.constant 0 : index
    %16 = vector.load %arg7[%c0_14, %c0_15] : memref<128x128xbf16, #tpu.memory_space<vmem>>, vector<128x128xbf16>
    %cst_16 = arith.constant dense<0.000000e+00> : vector<64x128xf32>
    %17 = tpu.matmul %5, %16, %cst_16 {dimension_numbers = #tpu.dot_dimension_numbers<[1], [0], [0], [1], [0, 0, 1, 1], [], []>} : vector<64x128xbf16>, vector<128x128xbf16>, vector<64x128xf32> -> vector<64x128xf32>
    %c0_17 = arith.constant 0 : index
    %c0_18 = arith.constant 0 : index
    %18 = vector.load %arg8[%c0_17, %c0_18] : memref<1x128xf32, #tpu.memory_space<vmem>>, vector<1x128xf32>
    %19 = vector.broadcast %18 : vector<1x128xf32> to vector<64x128xf32>
    %20 = arith.addf %17, %19 : vector<64x128xf32>
    %21 = vector.extract_strided_slice %10 {offsets = [0, 0], sizes = [64, 16], strides = [1, 1]} : vector<64x128xf32> to vector<64x16xf32>
    %22 = arith.truncf %21 : vector<64x16xf32> to vector<64x16xbf16>
    %23 = vector.extract_strided_slice %15 {offsets = [0, 0], sizes = [64, 16], strides = [1, 1]} : vector<64x128xf32> to vector<64x16xf32>
    %24 = tpu.transpose %23, [1, 0] : vector<64x16xf32> -> vector<16x64xf32>
    %25 = arith.truncf %24 : vector<16x64xf32> to vector<16x64xbf16>
    %26 = vector.extract_strided_slice %20 {offsets = [0, 0], sizes = [64, 16], strides = [1, 1]} : vector<64x128xf32> to vector<64x16xf32>
    %27 = arith.truncf %26 : vector<64x16xf32> to vector<64x16xbf16>
    %cst_19 = arith.constant dense<0.000000e+00> : vector<64x64xf32>
    %28 = tpu.matmul %22, %25, %cst_19 {dimension_numbers = #tpu.dot_dimension_numbers<[1], [0], [0], [1], [0, 0, 1, 1], [], []>} : vector<64x16xbf16>, vector<16x64xbf16>, vector<64x64xf32> -> vector<64x64xf32>
    %cst_20 = arith.constant dense<0xFF800000> : vector<64xf32>
    %29 = vector.multi_reduction <maximumf>, %28, %cst_20 [1] : vector<64x64xf32> to vector<64xf32>
    %30 = vector.shape_cast %29 : vector<64xf32> to vector<64x1xf32>
    %31 = vector.broadcast %30 : vector<64x1xf32> to vector<64x64xf32>
    %32 = arith.subf %28, %31 : vector<64x64xf32>
    %33 = math.exp %32 : vector<64x64xf32>
    %cst_21 = arith.constant dense<0.000000e+00> : vector<64xf32>
    %34 = vector.multi_reduction <add>, %33, %cst_21 [1] : vector<64x64xf32> to vector<64xf32>
    %35 = vector.shape_cast %34 : vector<64xf32> to vector<64x1xf32>
    %36 = tpu.reciprocal %35 {approx = true} : vector<64x1xf32> -> vector<64x1xf32>
    %37 = vector.broadcast %36 : vector<64x1xf32> to vector<64x64xf32>
    %38 = arith.mulf %33, %37 : vector<64x64xf32>
    %39 = arith.truncf %38 : vector<64x64xf32> to vector<64x64xbf16>
    %cst_22 = arith.constant dense<0.000000e+00> : vector<64x16xf32>
    %40 = tpu.matmul %39, %27, %cst_22 {dimension_numbers = #tpu.dot_dimension_numbers<[1], [0], [0], [1], [0, 0, 1, 1], [], []>} : vector<64x64xbf16>, vector<64x16xbf16>, vector<64x16xf32> -> vector<64x16xf32>
    %c0_23 = arith.constant 0 : index
    %c0_24 = arith.constant 0 : index
    %41 = vector.load %arg9[%c0_23, %c0_24] : memref<128x128xf32, #tpu.memory_space<vmem>>, vector<16x128xf32>
    %42 = arith.truncf %41 : vector<16x128xf32> to vector<16x128xbf16>
    %43 = arith.truncf %40 : vector<64x16xf32> to vector<64x16xbf16>
    %cst_25 = arith.constant dense<0.000000e+00> : vector<64x128xf32>
    %44 = tpu.matmul %43, %42, %cst_25 {dimension_numbers = #tpu.dot_dimension_numbers<[1], [0], [0], [1], [0, 0, 1, 1], [], []>} : vector<64x16xbf16>, vector<16x128xbf16>, vector<64x128xf32> -> vector<64x128xf32>
    %45 = vector.extract_strided_slice %10 {offsets = [0, 16], sizes = [64, 16], strides = [1, 1]} : vector<64x128xf32> to vector<64x16xf32>
    %46 = arith.truncf %45 : vector<64x16xf32> to vector<64x16xbf16>
    %47 = vector.extract_strided_slice %15 {offsets = [0, 16], sizes = [64, 16], strides = [1, 1]} : vector<64x128xf32> to vector<64x16xf32>
    %48 = tpu.transpose %47, [1, 0] : vector<64x16xf32> -> vector<16x64xf32>
    %49 = arith.truncf %48 : vector<16x64xf32> to vector<16x64xbf16>
    %50 = vector.extract_strided_slice %20 {offsets = [0, 16], sizes = [64, 16], strides = [1, 1]} : vector<64x128xf32> to vector<64x16xf32>
    %51 = arith.truncf %50 : vector<64x16xf32> to vector<64x16xbf16>
    %cst_26 = arith.constant dense<0.000000e+00> : vector<64x64xf32>
    %52 = tpu.matmul %46, %49, %cst_26 {dimension_numbers = #tpu.dot_dimension_numbers<[1], [0], [0], [1], [0, 0, 1, 1], [], []>} : vector<64x16xbf16>, vector<16x64xbf16>, vector<64x64xf32> -> vector<64x64xf32>
    %cst_27 = arith.constant dense<0xFF800000> : vector<64xf32>
    %53 = vector.multi_reduction <maximumf>, %52, %cst_27 [1] : vector<64x64xf32> to vector<64xf32>
    %54 = vector.shape_cast %53 : vector<64xf32> to vector<64x1xf32>
    %55 = vector.broadcast %54 : vector<64x1xf32> to vector<64x64xf32>
    %56 = arith.subf %52, %55 : vector<64x64xf32>
    %57 = math.exp %56 : vector<64x64xf32>
    %cst_28 = arith.constant dense<0.000000e+00> : vector<64xf32>
    %58 = vector.multi_reduction <add>, %57, %cst_28 [1] : vector<64x64xf32> to vector<64xf32>
    %59 = vector.shape_cast %58 : vector<64xf32> to vector<64x1xf32>
    %60 = tpu.reciprocal %59 {approx = true} : vector<64x1xf32> -> vector<64x1xf32>
    %61 = vector.broadcast %60 : vector<64x1xf32> to vector<64x64xf32>
    %62 = arith.mulf %57, %61 : vector<64x64xf32>
    %63 = arith.truncf %62 : vector<64x64xf32> to vector<64x64xbf16>
    %cst_29 = arith.constant dense<0.000000e+00> : vector<64x16xf32>
    %64 = tpu.matmul %63, %51, %cst_29 {dimension_numbers = #tpu.dot_dimension_numbers<[1], [0], [0], [1], [0, 0, 1, 1], [], []>} : vector<64x64xbf16>, vector<64x16xbf16>, vector<64x16xf32> -> vector<64x16xf32>
    %c16 = arith.constant 16 : index
    %c0_30 = arith.constant 0 : index
    %65 = vector.load %arg9[%c16, %c0_30] : memref<128x128xf32, #tpu.memory_space<vmem>>, vector<16x128xf32>
    %66 = arith.truncf %65 : vector<16x128xf32> to vector<16x128xbf16>
    %67 = arith.truncf %64 : vector<64x16xf32> to vector<64x16xbf16>
    %cst_31 = arith.constant dense<0.000000e+00> : vector<64x128xf32>
    %68 = tpu.matmul %67, %66, %cst_31 {dimension_numbers = #tpu.dot_dimension_numbers<[1], [0], [0], [1], [0, 0, 1, 1], [], []>} : vector<64x16xbf16>, vector<16x128xbf16>, vector<64x128xf32> -> vector<64x128xf32>
    %69 = arith.addf %44, %68 : vector<64x128xf32>
    %70 = vector.extract_strided_slice %10 {offsets = [0, 32], sizes = [64, 16], strides = [1, 1]} : vector<64x128xf32> to vector<64x16xf32>
    %71 = arith.truncf %70 : vector<64x16xf32> to vector<64x16xbf16>
    %72 = vector.extract_strided_slice %15 {offsets = [0, 32], sizes = [64, 16], strides = [1, 1]} : vector<64x128xf32> to vector<64x16xf32>
    %73 = tpu.transpose %72, [1, 0] : vector<64x16xf32> -> vector<16x64xf32>
    %74 = arith.truncf %73 : vector<16x64xf32> to vector<16x64xbf16>
    %75 = vector.extract_strided_slice %20 {offsets = [0, 32], sizes = [64, 16], strides = [1, 1]} : vector<64x128xf32> to vector<64x16xf32>
    %76 = arith.truncf %75 : vector<64x16xf32> to vector<64x16xbf16>
    %cst_32 = arith.constant dense<0.000000e+00> : vector<64x64xf32>
    %77 = tpu.matmul %71, %74, %cst_32 {dimension_numbers = #tpu.dot_dimension_numbers<[1], [0], [0], [1], [0, 0, 1, 1], [], []>} : vector<64x16xbf16>, vector<16x64xbf16>, vector<64x64xf32> -> vector<64x64xf32>
    %cst_33 = arith.constant dense<0xFF800000> : vector<64xf32>
    %78 = vector.multi_reduction <maximumf>, %77, %cst_33 [1] : vector<64x64xf32> to vector<64xf32>
    %79 = vector.shape_cast %78 : vector<64xf32> to vector<64x1xf32>
    %80 = vector.broadcast %79 : vector<64x1xf32> to vector<64x64xf32>
    %81 = arith.subf %77, %80 : vector<64x64xf32>
    %82 = math.exp %81 : vector<64x64xf32>
    %cst_34 = arith.constant dense<0.000000e+00> : vector<64xf32>
    %83 = vector.multi_reduction <add>, %82, %cst_34 [1] : vector<64x64xf32> to vector<64xf32>
    %84 = vector.shape_cast %83 : vector<64xf32> to vector<64x1xf32>
    %85 = tpu.reciprocal %84 {approx = true} : vector<64x1xf32> -> vector<64x1xf32>
    %86 = vector.broadcast %85 : vector<64x1xf32> to vector<64x64xf32>
    %87 = arith.mulf %82, %86 : vector<64x64xf32>
    %88 = arith.truncf %87 : vector<64x64xf32> to vector<64x64xbf16>
    %cst_35 = arith.constant dense<0.000000e+00> : vector<64x16xf32>
    %89 = tpu.matmul %88, %76, %cst_35 {dimension_numbers = #tpu.dot_dimension_numbers<[1], [0], [0], [1], [0, 0, 1, 1], [], []>} : vector<64x64xbf16>, vector<64x16xbf16>, vector<64x16xf32> -> vector<64x16xf32>
    %c32 = arith.constant 32 : index
    %c0_36 = arith.constant 0 : index
    %90 = vector.load %arg9[%c32, %c0_36] : memref<128x128xf32, #tpu.memory_space<vmem>>, vector<16x128xf32>
    %91 = arith.truncf %90 : vector<16x128xf32> to vector<16x128xbf16>
    %92 = arith.truncf %89 : vector<64x16xf32> to vector<64x16xbf16>
    %cst_37 = arith.constant dense<0.000000e+00> : vector<64x128xf32>
    %93 = tpu.matmul %92, %91, %cst_37 {dimension_numbers = #tpu.dot_dimension_numbers<[1], [0], [0], [1], [0, 0, 1, 1], [], []>} : vector<64x16xbf16>, vector<16x128xbf16>, vector<64x128xf32> -> vector<64x128xf32>
    %94 = arith.addf %69, %93 : vector<64x128xf32>
    %95 = vector.extract_strided_slice %10 {offsets = [0, 48], sizes = [64, 16], strides = [1, 1]} : vector<64x128xf32> to vector<64x16xf32>
    %96 = arith.truncf %95 : vector<64x16xf32> to vector<64x16xbf16>
    %97 = vector.extract_strided_slice %15 {offsets = [0, 48], sizes = [64, 16], strides = [1, 1]} : vector<64x128xf32> to vector<64x16xf32>
    %98 = tpu.transpose %97, [1, 0] : vector<64x16xf32> -> vector<16x64xf32>
    %99 = arith.truncf %98 : vector<16x64xf32> to vector<16x64xbf16>
    %100 = vector.extract_strided_slice %20 {offsets = [0, 48], sizes = [64, 16], strides = [1, 1]} : vector<64x128xf32> to vector<64x16xf32>
    %101 = arith.truncf %100 : vector<64x16xf32> to vector<64x16xbf16>
    %cst_38 = arith.constant dense<0.000000e+00> : vector<64x64xf32>
    %102 = tpu.matmul %96, %99, %cst_38 {dimension_numbers = #tpu.dot_dimension_numbers<[1], [0], [0], [1], [0, 0, 1, 1], [], []>} : vector<64x16xbf16>, vector<16x64xbf16>, vector<64x64xf32> -> vector<64x64xf32>
    %cst_39 = arith.constant dense<0xFF800000> : vector<64xf32>
    %103 = vector.multi_reduction <maximumf>, %102, %cst_39 [1] : vector<64x64xf32> to vector<64xf32>
    %104 = vector.shape_cast %103 : vector<64xf32> to vector<64x1xf32>
    %105 = vector.broadcast %104 : vector<64x1xf32> to vector<64x64xf32>
    %106 = arith.subf %102, %105 : vector<64x64xf32>
    %107 = math.exp %106 : vector<64x64xf32>
    %cst_40 = arith.constant dense<0.000000e+00> : vector<64xf32>
    %108 = vector.multi_reduction <add>, %107, %cst_40 [1] : vector<64x64xf32> to vector<64xf32>
    %109 = vector.shape_cast %108 : vector<64xf32> to vector<64x1xf32>
    %110 = tpu.reciprocal %109 {approx = true} : vector<64x1xf32> -> vector<64x1xf32>
    %111 = vector.broadcast %110 : vector<64x1xf32> to vector<64x64xf32>
    %112 = arith.mulf %107, %111 : vector<64x64xf32>
    %113 = arith.truncf %112 : vector<64x64xf32> to vector<64x64xbf16>
    %cst_41 = arith.constant dense<0.000000e+00> : vector<64x16xf32>
    %114 = tpu.matmul %113, %101, %cst_41 {dimension_numbers = #tpu.dot_dimension_numbers<[1], [0], [0], [1], [0, 0, 1, 1], [], []>} : vector<64x64xbf16>, vector<64x16xbf16>, vector<64x16xf32> -> vector<64x16xf32>
    %c48 = arith.constant 48 : index
    %c0_42 = arith.constant 0 : index
    %115 = vector.load %arg9[%c48, %c0_42] : memref<128x128xf32, #tpu.memory_space<vmem>>, vector<16x128xf32>
    %116 = arith.truncf %115 : vector<16x128xf32> to vector<16x128xbf16>
    %117 = arith.truncf %114 : vector<64x16xf32> to vector<64x16xbf16>
    %cst_43 = arith.constant dense<0.000000e+00> : vector<64x128xf32>
    %118 = tpu.matmul %117, %116, %cst_43 {dimension_numbers = #tpu.dot_dimension_numbers<[1], [0], [0], [1], [0, 0, 1, 1], [], []>} : vector<64x16xbf16>, vector<16x128xbf16>, vector<64x128xf32> -> vector<64x128xf32>
    %119 = arith.addf %94, %118 : vector<64x128xf32>
    %120 = vector.extract_strided_slice %10 {offsets = [0, 64], sizes = [64, 16], strides = [1, 1]} : vector<64x128xf32> to vector<64x16xf32>
    %121 = arith.truncf %120 : vector<64x16xf32> to vector<64x16xbf16>
    %122 = vector.extract_strided_slice %15 {offsets = [0, 64], sizes = [64, 16], strides = [1, 1]} : vector<64x128xf32> to vector<64x16xf32>
    %123 = tpu.transpose %122, [1, 0] : vector<64x16xf32> -> vector<16x64xf32>
    %124 = arith.truncf %123 : vector<16x64xf32> to vector<16x64xbf16>
    %125 = vector.extract_strided_slice %20 {offsets = [0, 64], sizes = [64, 16], strides = [1, 1]} : vector<64x128xf32> to vector<64x16xf32>
    %126 = arith.truncf %125 : vector<64x16xf32> to vector<64x16xbf16>
    %cst_44 = arith.constant dense<0.000000e+00> : vector<64x64xf32>
    %127 = tpu.matmul %121, %124, %cst_44 {dimension_numbers = #tpu.dot_dimension_numbers<[1], [0], [0], [1], [0, 0, 1, 1], [], []>} : vector<64x16xbf16>, vector<16x64xbf16>, vector<64x64xf32> -> vector<64x64xf32>
    %cst_45 = arith.constant dense<0xFF800000> : vector<64xf32>
    %128 = vector.multi_reduction <maximumf>, %127, %cst_45 [1] : vector<64x64xf32> to vector<64xf32>
    %129 = vector.shape_cast %128 : vector<64xf32> to vector<64x1xf32>
    %130 = vector.broadcast %129 : vector<64x1xf32> to vector<64x64xf32>
    %131 = arith.subf %127, %130 : vector<64x64xf32>
    %132 = math.exp %131 : vector<64x64xf32>
    %cst_46 = arith.constant dense<0.000000e+00> : vector<64xf32>
    %133 = vector.multi_reduction <add>, %132, %cst_46 [1] : vector<64x64xf32> to vector<64xf32>
    %134 = vector.shape_cast %133 : vector<64xf32> to vector<64x1xf32>
    %135 = tpu.reciprocal %134 {approx = true} : vector<64x1xf32> -> vector<64x1xf32>
    %136 = vector.broadcast %135 : vector<64x1xf32> to vector<64x64xf32>
    %137 = arith.mulf %132, %136 : vector<64x64xf32>
    %138 = arith.truncf %137 : vector<64x64xf32> to vector<64x64xbf16>
    %cst_47 = arith.constant dense<0.000000e+00> : vector<64x16xf32>
    %139 = tpu.matmul %138, %126, %cst_47 {dimension_numbers = #tpu.dot_dimension_numbers<[1], [0], [0], [1], [0, 0, 1, 1], [], []>} : vector<64x64xbf16>, vector<64x16xbf16>, vector<64x16xf32> -> vector<64x16xf32>
    %c64 = arith.constant 64 : index
    %c0_48 = arith.constant 0 : index
    %140 = vector.load %arg9[%c64, %c0_48] : memref<128x128xf32, #tpu.memory_space<vmem>>, vector<16x128xf32>
    %141 = arith.truncf %140 : vector<16x128xf32> to vector<16x128xbf16>
    %142 = arith.truncf %139 : vector<64x16xf32> to vector<64x16xbf16>
    %cst_49 = arith.constant dense<0.000000e+00> : vector<64x128xf32>
    %143 = tpu.matmul %142, %141, %cst_49 {dimension_numbers = #tpu.dot_dimension_numbers<[1], [0], [0], [1], [0, 0, 1, 1], [], []>} : vector<64x16xbf16>, vector<16x128xbf16>, vector<64x128xf32> -> vector<64x128xf32>
    %144 = arith.addf %119, %143 : vector<64x128xf32>
    %145 = vector.extract_strided_slice %10 {offsets = [0, 80], sizes = [64, 16], strides = [1, 1]} : vector<64x128xf32> to vector<64x16xf32>
    %146 = arith.truncf %145 : vector<64x16xf32> to vector<64x16xbf16>
    %147 = vector.extract_strided_slice %15 {offsets = [0, 80], sizes = [64, 16], strides = [1, 1]} : vector<64x128xf32> to vector<64x16xf32>
    %148 = tpu.transpose %147, [1, 0] : vector<64x16xf32> -> vector<16x64xf32>
    %149 = arith.truncf %148 : vector<16x64xf32> to vector<16x64xbf16>
    %150 = vector.extract_strided_slice %20 {offsets = [0, 80], sizes = [64, 16], strides = [1, 1]} : vector<64x128xf32> to vector<64x16xf32>
    %151 = arith.truncf %150 : vector<64x16xf32> to vector<64x16xbf16>
    %cst_50 = arith.constant dense<0.000000e+00> : vector<64x64xf32>
    %152 = tpu.matmul %146, %149, %cst_50 {dimension_numbers = #tpu.dot_dimension_numbers<[1], [0], [0], [1], [0, 0, 1, 1], [], []>} : vector<64x16xbf16>, vector<16x64xbf16>, vector<64x64xf32> -> vector<64x64xf32>
    %cst_51 = arith.constant dense<0xFF800000> : vector<64xf32>
    %153 = vector.multi_reduction <maximumf>, %152, %cst_51 [1] : vector<64x64xf32> to vector<64xf32>
    %154 = vector.shape_cast %153 : vector<64xf32> to vector<64x1xf32>
    %155 = vector.broadcast %154 : vector<64x1xf32> to vector<64x64xf32>
    %156 = arith.subf %152, %155 : vector<64x64xf32>
    %157 = math.exp %156 : vector<64x64xf32>
    %cst_52 = arith.constant dense<0.000000e+00> : vector<64xf32>
    %158 = vector.multi_reduction <add>, %157, %cst_52 [1] : vector<64x64xf32> to vector<64xf32>
    %159 = vector.shape_cast %158 : vector<64xf32> to vector<64x1xf32>
    %160 = tpu.reciprocal %159 {approx = true} : vector<64x1xf32> -> vector<64x1xf32>
    %161 = vector.broadcast %160 : vector<64x1xf32> to vector<64x64xf32>
    %162 = arith.mulf %157, %161 : vector<64x64xf32>
    %163 = arith.truncf %162 : vector<64x64xf32> to vector<64x64xbf16>
    %cst_53 = arith.constant dense<0.000000e+00> : vector<64x16xf32>
    %164 = tpu.matmul %163, %151, %cst_53 {dimension_numbers = #tpu.dot_dimension_numbers<[1], [0], [0], [1], [0, 0, 1, 1], [], []>} : vector<64x64xbf16>, vector<64x16xbf16>, vector<64x16xf32> -> vector<64x16xf32>
    %c80 = arith.constant 80 : index
    %c0_54 = arith.constant 0 : index
    %165 = vector.load %arg9[%c80, %c0_54] : memref<128x128xf32, #tpu.memory_space<vmem>>, vector<16x128xf32>
    %166 = arith.truncf %165 : vector<16x128xf32> to vector<16x128xbf16>
    %167 = arith.truncf %164 : vector<64x16xf32> to vector<64x16xbf16>
    %cst_55 = arith.constant dense<0.000000e+00> : vector<64x128xf32>
    %168 = tpu.matmul %167, %166, %cst_55 {dimension_numbers = #tpu.dot_dimension_numbers<[1], [0], [0], [1], [0, 0, 1, 1], [], []>} : vector<64x16xbf16>, vector<16x128xbf16>, vector<64x128xf32> -> vector<64x128xf32>
    %169 = arith.addf %144, %168 : vector<64x128xf32>
    %170 = vector.extract_strided_slice %10 {offsets = [0, 96], sizes = [64, 16], strides = [1, 1]} : vector<64x128xf32> to vector<64x16xf32>
    %171 = arith.truncf %170 : vector<64x16xf32> to vector<64x16xbf16>
    %172 = vector.extract_strided_slice %15 {offsets = [0, 96], sizes = [64, 16], strides = [1, 1]} : vector<64x128xf32> to vector<64x16xf32>
    %173 = tpu.transpose %172, [1, 0] : vector<64x16xf32> -> vector<16x64xf32>
    %174 = arith.truncf %173 : vector<16x64xf32> to vector<16x64xbf16>
    %175 = vector.extract_strided_slice %20 {offsets = [0, 96], sizes = [64, 16], strides = [1, 1]} : vector<64x128xf32> to vector<64x16xf32>
    %176 = arith.truncf %175 : vector<64x16xf32> to vector<64x16xbf16>
    %cst_56 = arith.constant dense<0.000000e+00> : vector<64x64xf32>
    %177 = tpu.matmul %171, %174, %cst_56 {dimension_numbers = #tpu.dot_dimension_numbers<[1], [0], [0], [1], [0, 0, 1, 1], [], []>} : vector<64x16xbf16>, vector<16x64xbf16>, vector<64x64xf32> -> vector<64x64xf32>
    %cst_57 = arith.constant dense<0xFF800000> : vector<64xf32>
    %178 = vector.multi_reduction <maximumf>, %177, %cst_57 [1] : vector<64x64xf32> to vector<64xf32>
    %179 = vector.shape_cast %178 : vector<64xf32> to vector<64x1xf32>
    %180 = vector.broadcast %179 : vector<64x1xf32> to vector<64x64xf32>
    %181 = arith.subf %177, %180 : vector<64x64xf32>
    %182 = math.exp %181 : vector<64x64xf32>
    %cst_58 = arith.constant dense<0.000000e+00> : vector<64xf32>
    %183 = vector.multi_reduction <add>, %182, %cst_58 [1] : vector<64x64xf32> to vector<64xf32>
    %184 = vector.shape_cast %183 : vector<64xf32> to vector<64x1xf32>
    %185 = tpu.reciprocal %184 {approx = true} : vector<64x1xf32> -> vector<64x1xf32>
    %186 = vector.broadcast %185 : vector<64x1xf32> to vector<64x64xf32>
    %187 = arith.mulf %182, %186 : vector<64x64xf32>
    %188 = arith.truncf %187 : vector<64x64xf32> to vector<64x64xbf16>
    %cst_59 = arith.constant dense<0.000000e+00> : vector<64x16xf32>
    %189 = tpu.matmul %188, %176, %cst_59 {dimension_numbers = #tpu.dot_dimension_numbers<[1], [0], [0], [1], [0, 0, 1, 1], [], []>} : vector<64x64xbf16>, vector<64x16xbf16>, vector<64x16xf32> -> vector<64x16xf32>
    %c96 = arith.constant 96 : index
    %c0_60 = arith.constant 0 : index
    %190 = vector.load %arg9[%c96, %c0_60] : memref<128x128xf32, #tpu.memory_space<vmem>>, vector<16x128xf32>
    %191 = arith.truncf %190 : vector<16x128xf32> to vector<16x128xbf16>
    %192 = arith.truncf %189 : vector<64x16xf32> to vector<64x16xbf16>
    %cst_61 = arith.constant dense<0.000000e+00> : vector<64x128xf32>
    %193 = tpu.matmul %192, %191, %cst_61 {dimension_numbers = #tpu.dot_dimension_numbers<[1], [0], [0], [1], [0, 0, 1, 1], [], []>} : vector<64x16xbf16>, vector<16x128xbf16>, vector<64x128xf32> -> vector<64x128xf32>
    %194 = arith.addf %169, %193 : vector<64x128xf32>
    %195 = vector.extract_strided_slice %10 {offsets = [0, 112], sizes = [64, 16], strides = [1, 1]} : vector<64x128xf32> to vector<64x16xf32>
    %196 = arith.truncf %195 : vector<64x16xf32> to vector<64x16xbf16>
    %197 = vector.extract_strided_slice %15 {offsets = [0, 112], sizes = [64, 16], strides = [1, 1]} : vector<64x128xf32> to vector<64x16xf32>
    %198 = tpu.transpose %197, [1, 0] : vector<64x16xf32> -> vector<16x64xf32>
    %199 = arith.truncf %198 : vector<16x64xf32> to vector<16x64xbf16>
    %200 = vector.extract_strided_slice %20 {offsets = [0, 112], sizes = [64, 16], strides = [1, 1]} : vector<64x128xf32> to vector<64x16xf32>
    %201 = arith.truncf %200 : vector<64x16xf32> to vector<64x16xbf16>
    %cst_62 = arith.constant dense<0.000000e+00> : vector<64x64xf32>
    %202 = tpu.matmul %196, %199, %cst_62 {dimension_numbers = #tpu.dot_dimension_numbers<[1], [0], [0], [1], [0, 0, 1, 1], [], []>} : vector<64x16xbf16>, vector<16x64xbf16>, vector<64x64xf32> -> vector<64x64xf32>
    %cst_63 = arith.constant dense<0xFF800000> : vector<64xf32>
    %203 = vector.multi_reduction <maximumf>, %202, %cst_63 [1] : vector<64x64xf32> to vector<64xf32>
    %204 = vector.shape_cast %203 : vector<64xf32> to vector<64x1xf32>
    %205 = vector.broadcast %204 : vector<64x1xf32> to vector<64x64xf32>
    %206 = arith.subf %202, %205 : vector<64x64xf32>
    %207 = math.exp %206 : vector<64x64xf32>
    %cst_64 = arith.constant dense<0.000000e+00> : vector<64xf32>
    %208 = vector.multi_reduction <add>, %207, %cst_64 [1] : vector<64x64xf32> to vector<64xf32>
    %209 = vector.shape_cast %208 : vector<64xf32> to vector<64x1xf32>
    %210 = tpu.reciprocal %209 {approx = true} : vector<64x1xf32> -> vector<64x1xf32>
    %211 = vector.broadcast %210 : vector<64x1xf32> to vector<64x64xf32>
    %212 = arith.mulf %207, %211 : vector<64x64xf32>
    %213 = arith.truncf %212 : vector<64x64xf32> to vector<64x64xbf16>
    %cst_65 = arith.constant dense<0.000000e+00> : vector<64x16xf32>
    %214 = tpu.matmul %213, %201, %cst_65 {dimension_numbers = #tpu.dot_dimension_numbers<[1], [0], [0], [1], [0, 0, 1, 1], [], []>} : vector<64x64xbf16>, vector<64x16xbf16>, vector<64x16xf32> -> vector<64x16xf32>
    %c112 = arith.constant 112 : index
    %c0_66 = arith.constant 0 : index
    %215 = vector.load %arg9[%c112, %c0_66] : memref<128x128xf32, #tpu.memory_space<vmem>>, vector<16x128xf32>
    %216 = arith.truncf %215 : vector<16x128xf32> to vector<16x128xbf16>
    %217 = arith.truncf %214 : vector<64x16xf32> to vector<64x16xbf16>
    %cst_67 = arith.constant dense<0.000000e+00> : vector<64x128xf32>
    %218 = tpu.matmul %217, %216, %cst_67 {dimension_numbers = #tpu.dot_dimension_numbers<[1], [0], [0], [1], [0, 0, 1, 1], [], []>} : vector<64x16xbf16>, vector<16x128xbf16>, vector<64x128xf32> -> vector<64x128xf32>
    %219 = arith.addf %194, %218 : vector<64x128xf32>
    %c0_68 = arith.constant 0 : index
    %c0_69 = arith.constant 0 : index
    %220 = vector.load %arg10[%c0_68, %c0_69] : memref<1x128xf32, #tpu.memory_space<vmem>>, vector<1x128xf32>
    %221 = vector.broadcast %220 : vector<1x128xf32> to vector<64x128xf32>
    %222 = arith.addf %219, %221 : vector<64x128xf32>
    %223 = arith.addf %1, %222 : vector<64x128xf32>
    %cst_70 = arith.constant dense<0.000000e+00> : vector<64xf32>
    %224 = vector.multi_reduction <add>, %223, %cst_70 [1] : vector<64x128xf32> to vector<64xf32>
    %225 = vector.shape_cast %224 : vector<64xf32> to vector<64x1xf32>
    %cst_71 = arith.constant 1.280000e+02 : f32
    %226 = vector.broadcast %cst_71 : f32 to vector<64x1xf32>
    %227 = arith.divf %225, %226 : vector<64x1xf32>
    %228 = vector.broadcast %227 : vector<64x1xf32> to vector<64x128xf32>
    %229 = arith.subf %223, %228 : vector<64x128xf32>
    %230 = vector.broadcast %227 : vector<64x1xf32> to vector<64x128xf32>
    %231 = arith.subf %223, %230 : vector<64x128xf32>
    %232 = arith.mulf %229, %231 : vector<64x128xf32>
    %cst_72 = arith.constant dense<0.000000e+00> : vector<64xf32>
    %233 = vector.multi_reduction <add>, %232, %cst_72 [1] : vector<64x128xf32> to vector<64xf32>
    %234 = vector.shape_cast %233 : vector<64xf32> to vector<64x1xf32>
    %cst_73 = arith.constant 1.280000e+02 : f32
    %235 = vector.broadcast %cst_73 : f32 to vector<64x1xf32>
    %236 = arith.divf %234, %235 : vector<64x1xf32>
    %237 = vector.broadcast %227 : vector<64x1xf32> to vector<64x128xf32>
    %238 = arith.subf %223, %237 : vector<64x128xf32>
    %cst_74 = arith.constant 9.99999974E-6 : f32
    %239 = vector.broadcast %cst_74 : f32 to vector<64x1xf32>
    %240 = arith.addf %236, %239 : vector<64x1xf32>
    %241 = math.rsqrt %240 : vector<64x1xf32>
    %242 = vector.broadcast %241 : vector<64x1xf32> to vector<64x128xf32>
    %243 = arith.mulf %238, %242 : vector<64x128xf32>
    %c0_75 = arith.constant 0 : index
    %c0_76 = arith.constant 0 : index
    %244 = vector.load %arg11[%c0_75, %c0_76] : memref<1x128xf32, #tpu.memory_space<vmem>>, vector<1x128xf32>
    %245 = vector.broadcast %244 : vector<1x128xf32> to vector<64x128xf32>
    %246 = arith.mulf %243, %245 : vector<64x128xf32>
    %c0_77 = arith.constant 0 : index
    %c0_78 = arith.constant 0 : index
    %247 = vector.load %arg12[%c0_77, %c0_78] : memref<1x128xf32, #tpu.memory_space<vmem>>, vector<1x128xf32>
    %248 = vector.broadcast %247 : vector<1x128xf32> to vector<64x128xf32>
    %249 = arith.addf %246, %248 : vector<64x128xf32>
    %c0_79 = arith.constant 0 : index
    %c0_80 = arith.constant 0 : index
    %c0_81 = arith.constant 0 : index
    %250 = vector.load %arg13[%c0_79, %c0_80, %c0_81] : memref<1x64x128xf32, #tpu.memory_space<vmem>>, vector<1x64x128xf32>
    %251 = vector.shape_cast %250 : vector<1x64x128xf32> to vector<64x128xf32>
    %252 = vector.shape_cast %249 : vector<64x128xf32> to vector<1x64x128xf32>
    tpu.vector_store %arg13[%c0_79, %c0_80, %c0_81], %252 {strides = array<i32>} : memref<1x64x128xf32, #tpu.memory_space<vmem>>, vector<1x64x128xf32>,
    return
  }
  func.func @transform_0(%arg0: i32) -> (i32, i32, i32) {
    %c0_i32 = arith.constant 0 : i32
    %c0_i32_0 = arith.constant 0 : i32
    %c0_i32_1 = arith.constant 0 : i32
    return %arg0, %c0_i32, %c0_i32_0 : i32, i32, i32
  }
  func.func @transform_1(%arg0: i32) -> (i32, i32, i32) {
    %c0_i32 = arith.constant 0 : i32
    %c0_i32_0 = arith.constant 0 : i32
    %c0_i32_1 = arith.constant 0 : i32
    return %arg0, %c0_i32, %c0_i32_0 : i32, i32, i32
  }
  func.func @transform_2(%arg0: i32) -> (i32, i32) {
    %c0_i32 = arith.constant 0 : i32
    %c0_i32_0 = arith.constant 0 : i32
    %c0_i32_1 = arith.constant 0 : i32
    return %c0_i32, %c0_i32_0 : i32, i32
  }
  func.func @transform_3(%arg0: i32) -> (i32, i32) {
    %c0_i32 = arith.constant 0 : i32
    %c0_i32_0 = arith.constant 0 : i32
    %c0_i32_1 = arith.constant 0 : i32
    return %c0_i32, %c0_i32_0 : i32, i32
  }
  func.func @transform_4(%arg0: i32) -> (i32, i32) {
    %c0_i32 = arith.constant 0 : i32
    %c0_i32_0 = arith.constant 0 : i32
    %c0_i32_1 = arith.constant 0 : i32
    return %c0_i32, %c0_i32_0 : i32, i32
  }
  func.func @transform_5(%arg0: i32) -> (i32, i32) {
    %c0_i32 = arith.constant 0 : i32
    %c0_i32_0 = arith.constant 0 : i32
    %c0_i32_1 = arith.constant 0 : i32
    return %c0_i32, %c0_i32_0 : i32, i32
  }
  func.func @transform_6(%arg0: i32) -> (i32, i32) {
    %c0_i32 = arith.constant 0 : i32
    %c0_i32_0 = arith.constant 0 : i32
    %c0_i32_1 = arith.constant 0 : i32
    return %c0_i32, %c0_i32_0 : i32, i32
  }
  func.func @transform_7(%arg0: i32) -> (i32, i32) {
    %c0_i32 = arith.constant 0 : i32
    %c0_i32_0 = arith.constant 0 : i32
    %c0_i32_1 = arith.constant 0 : i32
    return %c0_i32, %c0_i32_0 : i32, i32
  }
  func.func @transform_8(%arg0: i32) -> (i32, i32) {
    %c0_i32 = arith.constant 0 : i32
    %c0_i32_0 = arith.constant 0 : i32
    %c0_i32_1 = arith.constant 0 : i32
    return %c0_i32, %c0_i32_0 : i32, i32
  }
  func.func @transform_9(%arg0: i32) -> (i32, i32) {
    %c0_i32 = arith.constant 0 : i32
    %c0_i32_0 = arith.constant 0 : i32
    %c0_i32_1 = arith.constant 0 : i32
    return %c0_i32, %c0_i32_0 : i32, i32
  }
  func.func @transform_10(%arg0: i32) -> (i32, i32) {
    %c0_i32 = arith.constant 0 : i32
    %c0_i32_0 = arith.constant 0 : i32
    %c0_i32_1 = arith.constant 0 : i32
    return %c0_i32, %c0_i32_0 : i32, i32
  }
  func.func @transform_11(%arg0: i32) -> (i32, i32) {
    %c0_i32 = arith.constant 0 : i32
    %c0_i32_0 = arith.constant 0 : i32
    %c0_i32_1 = arith.constant 0 : i32
    return %c0_i32, %c0_i32_0 : i32, i32
  }
  func.func @transform_12(%arg0: i32) -> (i32, i32, i32) {
    %c0_i32 = arith.constant 0 : i32
    %c0_i32_0 = arith.constant 0 : i32
    %c0_i32_1 = arith.constant 0 : i32
    return %arg0, %c0_i32, %c0_i32_0 : i32, i32, i32
  }
}

</mosaic_0001>

<llo_original>
// kernel: transformer_decoder_layer.5
$region0: #{transformer_decoder_layer.5}
  #allocation0 [shape = 'u32[]', space=smem, size = 0x4, offset = 0x4, fixed_abs, tag = 'smem constant byte address 0x4 - core index']
  #allocation1 [shape = 'u32[144,128]{1,0:T(1,128)}', space=vmem, size = 0x12000, scoped, tag = 'internal scratch']
  %s0 = inlined_call_operand.vmem [shape: f32[128,128], index: 0, kind: input, shape index: {}]
  %s1 = inlined_call_operand.vmem [shape: bf16[128,256], index: 1, kind: input, shape index: {}]
  %s2 = inlined_call_operand.vmem [shape: f32[1,256], index: 2, kind: input, shape index: {}]
  %s3 = inlined_call_operand.vmem [shape: bf16[256,128], index: 3, kind: input, shape index: {}]
  %s4 = inlined_call_operand.vmem [shape: f32[1,128], index: 4, kind: input, shape index: {}]
  %s5 = inlined_call_operand.vmem [shape: f32[1,128], index: 5, kind: input, shape index: {}]
  %s6 = inlined_call_operand.vmem [shape: f32[1,128], index: 6, kind: input, shape index: {}]
  %s7 = inlined_call_operand.hbm [shape: f32[128,128], index: 7, kind: output, shape index: {}]
  %s8 = sld [smem:[#allocation0]]
  $region61: #{transformer_decoder_layer.5} parent=0
    _
  %s10 = ssub.s32 1, %s8
  %s11 = scalar_select 0, %s10, %s8
  $region1: #{transformer_decoder_layer.5} parent=0
    #allocation2 [shape = 'u8[65536]{0}', space=vmem, size = 0x10000, scoped, tag = 'output window, operand 0']
    #allocation3 [shape = 's32[2]{0}', space=sflag, size = 0x8, scoped, tag = 'scoped memory for transformer_decoder_layer.5']
    %12 = vsyncpa [#allocation3], 0
    %s13 = scalar_lea.sflag [#allocation3], 1
    %14 = vsyncpa %s13, 0
    loop: start=0, step=1, limit=4
    $region2: #{transformer_decoder_layer.5} parent=1 // loop_pre_header
      _
    $region3: #{transformer_decoder_layer.5} parent=1 // loop_header
      %s16 = sphi 0, %s20
      %p17 = scmp.ge.s32.totalorder %s16, 4
      %s26 = sphi 0, %s28
      %s29 = sphi 0, %s26
      %s30 = sphi 0, %s29
      %s46 = sphi 0, %s30
      %s50 = sphi 0, %s50
      %s52 = sphi 0, %s50
      %s53 = sphi 0, %s52
      %s67 = sphi 0, %s53
      %s71 = sphi 0, %s71
      %s73 = sphi 0, %s71
      %s74 = sphi 0, %s73
      %s88 = sphi 0, %s74
      %s92 = sphi 0, %s92
      %s94 = sphi 0, %s92
      %s95 = sphi 0, %s94
      %s109 = sphi 0, %s95
      %s113 = sphi 0, %s113
      %s115 = sphi 0, %s113
      %s116 = sphi 0, %s115
      %s130 = sphi 0, %s116
      %s134 = sphi 0, %s134
      %s136 = sphi 0, %s134
      %s137 = sphi 0, %s136
      %s151 = sphi 0, %s137
      %s155 = sphi 0, %s155
      %s157 = sphi 0, %s155
      %s158 = sphi 0, %s157
      %s172 = sphi 0, %s158
      %s178 = sphi 0, %s180
      %s181 = sphi 0, %s178
      %s182 = sphi 0, %s181
      %s198 = sphi 0, %s182
    $region4: #{transformer_decoder_layer.5} parent=1 // loop_header_branch
      %19 = sbr.rel (%p17) target = $region8
    $region5: #{transformer_decoder_layer.5} parent=1 // loop_body
      %s21 = ssub.s32 %s16, 1
      %s22 = ssub.s32 %s16, 2
      %s23 = sadd.s32 %s16, 1
      %s24 = ssub.s32 %s16, %s23
      %p25 = scmp.eq.s32.totalorder %s24, 0
      %s27 = sadd.s32 %s26, 1
      %s28 = scalar_select %p25, %s26, %s27
      %p31 = pneg %p25
      %p32 = scmp.eq.s32.totalorder %s16, 1
      %p33 = por %p31, %p32
      %p34 = scmp.ne.s32.totalorder %s26, %s29
      %p35 = scmp.eq.s32.totalorder %s16, 0
      %p36 = por %p34, %p35
      %p37 = scmp.ne.s32.totalorder %s26, %s29
      %p38 = scmp.eq.s32.totalorder %s21, 1
      %p39 = por %p37, %p38
      %p40 = scmp.ne.s32.totalorder %s29, %s30
      %p41 = scmp.eq.s32.totalorder %s21, 0
      %p42 = por %p40, %p41
      %p43 = scmp.ne.s32.totalorder %s29, %s30
      %p44 = scmp.eq.s32.totalorder %s22, 1
      %p45 = por %p43, %p44
      %p47 = scmp.ne.s32.totalorder %s30, %s46
      %p48 = scmp.eq.s32.totalorder %s22, 0
      %p49 = por %p47, %p48
      %s51 = sadd.s32 %s50, 1
      %p54 = scmp.eq.s32.totalorder %s16, 1
      %p55 = scmp.ne.s32.totalorder %s50, %s52
      %p56 = scmp.eq.s32.totalorder %s16, 0
      %p57 = por %p55, %p56
      %p58 = scmp.ne.s32.totalorder %s50, %s52
      %p59 = scmp.eq.s32.totalorder %s21, 1
      %p60 = por %p58, %p59
      %p61 = scmp.ne.s32.totalorder %s52, %s53
      %p62 = scmp.eq.s32.totalorder %s21, 0
      %p63 = por %p61, %p62
      %p64 = scmp.ne.s32.totalorder %s52, %s53
      %p65 = scmp.eq.s32.totalorder %s22, 1
      %p66 = por %p64, %p65
      %p68 = scmp.ne.s32.totalorder %s53, %s67
      %p69 = scmp.eq.s32.totalorder %s22, 0
      %p70 = por %p68, %p69
      %s72 = sadd.s32 %s71, 1
      %p75 = scmp.eq.s32.totalorder %s16, 1
      %p76 = scmp.ne.s32.totalorder %s71, %s73
      %p77 = scmp.eq.s32.totalorder %s16, 0
      %p78 = por %p76, %p77
      %p79 = scmp.ne.s32.totalorder %s71, %s73
      %p80 = scmp.eq.s32.totalorder %s21, 1
      %p81 = por %p79, %p80
      %p82 = scmp.ne.s32.totalorder %s73, %s74
      %p83 = scmp.eq.s32.totalorder %s21, 0
      %p84 = por %p82, %p83
      %p85 = scmp.ne.s32.totalorder %s73, %s74
      %p86 = scmp.eq.s32.totalorder %s22, 1
      %p87 = por %p85, %p86
      %p89 = scmp.ne.s32.totalorder %s74, %s88
      %p90 = scmp.eq.s32.totalorder %s22, 0
      %p91 = por %p89, %p90
      %s93 = sadd.s32 %s92, 1
      %p96 = scmp.eq.s32.totalorder %s16, 1
      %p97 = scmp.ne.s32.totalorder %s92, %s94
      %p98 = scmp.eq.s32.totalorder %s16, 0
      %p99 = por %p97, %p98
      %p100 = scmp.ne.s32.totalorder %s92, %s94
      %p101 = scmp.eq.s32.totalorder %s21, 1
      %p102 = por %p100, %p101
      %p103 = scmp.ne.s32.totalorder %s94, %s95
      %p104 = scmp.eq.s32.totalorder %s21, 0
      %p105 = por %p103, %p104
      %p106 = scmp.ne.s32.totalorder %s94, %s95
      %p107 = scmp.eq.s32.totalorder %s22, 1
      %p108 = por %p106, %p107
      %p110 = scmp.ne.s32.totalorder %s95, %s109
      %p111 = scmp.eq.s32.totalorder %s22, 0
      %p112 = por %p110, %p111
      %s114 = sadd.s32 %s113, 1
      %p117 = scmp.eq.s32.totalorder %s16, 1
      %p118 = scmp.ne.s32.totalorder %s113, %s115
      %p119 = scmp.eq.s32.totalorder %s16, 0
      %p120 = por %p118, %p119
      %p121 = scmp.ne.s32.totalorder %s113, %s115
      %p122 = scmp.eq.s32.totalorder %s21, 1
      %p123 = por %p121, %p122
      %p124 = scmp.ne.s32.totalorder %s115, %s116
      %p125 = scmp.eq.s32.totalorder %s21, 0
      %p126 = por %p124, %p125
      %p127 = scmp.ne.s32.totalorder %s115, %s116
      %p128 = scmp.eq.s32.totalorder %s22, 1
      %p129 = por %p127, %p128
      %p131 = scmp.ne.s32.totalorder %s116, %s130
      %p132 = scmp.eq.s32.totalorder %s22, 0
      %p133 = por %p131, %p132
      %s135 = sadd.s32 %s134, 1
      %p138 = scmp.eq.s32.totalorder %s16, 1
      %p139 = scmp.ne.s32.totalorder %s134, %s136
      %p140 = scmp.eq.s32.totalorder %s16, 0
      %p141 = por %p139, %p140
      %p142 = scmp.ne.s32.totalorder %s134, %s136
      %p143 = scmp.eq.s32.totalorder %s21, 1
      %p144 = por %p142, %p143
      %p145 = scmp.ne.s32.totalorder %s136, %s137
      %p146 = scmp.eq.s32.totalorder %s21, 0
      %p147 = por %p145, %p146
      %p148 = scmp.ne.s32.totalorder %s136, %s137
      %p149 = scmp.eq.s32.totalorder %s22, 1
      %p150 = por %p148, %p149
      %p152 = scmp.ne.s32.totalorder %s137, %s151
      %p153 = scmp.eq.s32.totalorder %s22, 0
      %p154 = por %p152, %p153
      %s156 = sadd.s32 %s155, 1
      %p159 = scmp.eq.s32.totalorder %s16, 1
      %p160 = scmp.ne.s32.totalorder %s155, %s157
      %p161 = scmp.eq.s32.totalorder %s16, 0
      %p162 = por %p160, %p161
      %p163 = scmp.ne.s32.totalorder %s155, %s157
      %p164 = scmp.eq.s32.totalorder %s21, 1
      %p165 = por %p163, %p164
      %p166 = scmp.ne.s32.totalorder %s157, %s158
      %p167 = scmp.eq.s32.totalorder %s21, 0
      %p168 = por %p166, %p167
      %p169 = scmp.ne.s32.totalorder %s157, %s158
      %p170 = scmp.eq.s32.totalorder %s22, 1
      %p171 = por %p169, %p170
      %p173 = scmp.ne.s32.totalorder %s158, %s172
      %p174 = scmp.eq.s32.totalorder %s22, 0
      %p175 = por %p173, %p174
      %s176 = ssub.s32 %s16, %s23
      %p177 = scmp.eq.s32.totalorder %s176, 0
      %s179 = sadd.s32 %s178, 1
      %s180 = scalar_select %p177, %s178, %s179
      %p183 = pneg %p177
      %p184 = scmp.eq.s32.totalorder %s16, 1
      %p185 = por %p183, %p184
      %p186 = scmp.ne.s32.totalorder %s178, %s181
      %p187 = scmp.eq.s32.totalorder %s16, 0
      %p188 = por %p186, %p187
      %p189 = scmp.ne.s32.totalorder %s178, %s181
      %p190 = scmp.eq.s32.totalorder %s21, 1
      %p191 = por %p189, %p190
      %p192 = scmp.ne.s32.totalorder %s181, %s182
      %p193 = scmp.eq.s32.totalorder %s21, 0
      %p194 = por %p192, %p193
      %p195 = scmp.ne.s32.totalorder %s181, %s182
      %p196 = scmp.eq.s32.totalorder %s22, 1
      %p197 = por %p195, %p196
      %p199 = scmp.ne.s32.totalorder %s182, %s198
      %p200 = scmp.eq.s32.totalorder %s22, 0
      %p201 = por %p199, %p200
      %p202 = scmp.le.s32.totalorder 1, %s16
      %p203 = scmp.lt.s32.totalorder %s16, 3
      %p204 = pnand %p202, %p203
      %p205 = pneg %p204
      // Predicated region
      $region9: #{transformer_decoder_layer.5} parent=5 // pred_check
        _
      $region10: #{transformer_decoder_layer.5} parent=5 // pred_check_branch
        %207 = sbr.rel (%p204) target = $region12
      $region11: #{transformer_decoder_layer.5} parent=5 // pred_region
        %s208 = ssub.s32 %s16, 1
        // Predicated region
        $region13: #{transformer_decoder_layer.5} parent=11 // pred_check
          %p209 = pneg %p63
        $region14: #{transformer_decoder_layer.5} parent=11 // pred_check_branch
          %211 = sbr.rel (%p209) target = $region16
        $region15: #{transformer_decoder_layer.5} parent=11 // pred_region
          _
        $region16: #{transformer_decoder_layer.5} parent=11 // pred_fallthru
          _
        // Predicated region
        $region17: #{transformer_decoder_layer.5} parent=11 // pred_check
          %p212 = pneg %p84
        $region18: #{transformer_decoder_layer.5} parent=11 // pred_check_branch
          %214 = sbr.rel (%p212) target = $region20
        $region19: #{transformer_decoder_layer.5} parent=11 // pred_region
          _
        $region20: #{transformer_decoder_layer.5} parent=11 // pred_fallthru
          _
        // Predicated region
        $region21: #{transformer_decoder_layer.5} parent=11 // pred_check
          %p215 = pneg %p105
        $region22: #{transformer_decoder_layer.5} parent=11 // pred_check_branch
          %217 = sbr.rel (%p215) target = $region24
        $region23: #{transformer_decoder_layer.5} parent=11 // pred_region
          _
        $region24: #{transformer_decoder_layer.5} parent=11 // pred_fallthru
          _
        // Predicated region
        $region25: #{transformer_decoder_layer.5} parent=11 // pred_check
          %p218 = pneg %p126
        $region26: #{transformer_decoder_layer.5} parent=11 // pred_check_branch
          %220 = sbr.rel (%p218) target = $region28
        $region27: #{transformer_decoder_layer.5} parent=11 // pred_region
          _
        $region28: #{transformer_decoder_layer.5} parent=11 // pred_fallthru
          _
        // Predicated region
        $region29: #{transformer_decoder_layer.5} parent=11 // pred_check
          %p221 = pneg %p147
        $region30: #{transformer_decoder_layer.5} parent=11 // pred_check_branch
          %223 = sbr.rel (%p221) target = $region32
        $region31: #{transformer_decoder_layer.5} parent=11 // pred_region
          _
        $region32: #{transformer_decoder_layer.5} parent=11 // pred_fallthru
          _
        // Predicated region
        $region33: #{transformer_decoder_layer.5} parent=11 // pred_check
          %p224 = pneg %p168
        $region34: #{transformer_decoder_layer.5} parent=11 // pred_check_branch
          %226 = sbr.rel (%p224) target = $region36
        $region35: #{transformer_decoder_layer.5} parent=11 // pred_region
          _
        $region36: #{transformer_decoder_layer.5} parent=11 // pred_fallthru
          _
      $region12: #{transformer_decoder_layer.5} parent=5 // pred_fallthru
        _
      %p227 = scmp.lt.s32.totalorder %s16, 2
      // Predicated region
      $region37: #{transformer_decoder_layer.5} parent=5 // pred_check
        %p228 = pneg %p227
      $region38: #{transformer_decoder_layer.5} parent=5 // pred_check_branch
        %230 = sbr.rel (%p228) target = $region40
      $region39: #{transformer_decoder_layer.5} parent=5 // pred_region
        // Predicated region
        $region41: #{transformer_decoder_layer.5} parent=39 // pred_check
          %p231 = pneg %p36
        $region42: #{transformer_decoder_layer.5} parent=39 // pred_check_branch
          %233 = sbr.rel (%p231) target = $region44
        $region43: #{transformer_decoder_layer.5} parent=39 // pred_region
          %s234 = smul.u32 8, %s16
          %p235 = scmp.lt.s32.totalorder %s234, 15
          %s236 = scalar_select %p235, %s234, 15
          %s237 = smul.addr %s236, 8
          %s238 = scalar_lea.vmem %s0, %s237
          %s239 = smul.u32 8, %s16
        $region44: #{transformer_decoder_layer.5} parent=39 // pred_fallthru
          _
      $region40: #{transformer_decoder_layer.5} parent=5 // pred_fallthru
        _
      %p240 = scmp.le.s32.totalorder 1, %s16
      %p241 = scmp.lt.s32.totalorder %s16, 3
      %p242 = pnand %p240, %p241
      %p243 = pneg %p242
      // Predicated region
      $region45: #{transformer_decoder_layer.5} parent=5 // pred_check
        _
      $region46: #{transformer_decoder_layer.5} parent=5 // pred_check_branch
        %245 = sbr.rel (%p242) target = $region48
      $region47: #{transformer_decoder_layer.5} parent=5 // pred_region
        %s246 = ssub.s32 %s16, 1
        %s247 = smul.u32 8, %s21
        %p248 = scmp.lt.s32.totalorder %s247, 15
        %s249 = scalar_select %p248, %s247, 15
        %s250 = smul.addr %s249, 8
        %s251 = scalar_lea.vmem %s0, %s250
        %p252 = pneg %p42
        %p253 = pneg %p39
        %p254 = pneg %p63
        %p255 = pneg %p60
        %p256 = pneg %p84
        %p257 = pneg %p81
        %p258 = pneg %p105
        %p259 = pneg %p102
        %p260 = pneg %p126
        %p261 = pneg %p123
        %p262 = pneg %p147
        %p263 = pneg %p144
        %p264 = pneg %p168
        %p265 = pneg %p165
        %p266 = pneg %p194
        %p267 = pneg %p191
        %s268 = sand.u32 %s181, 1
        %s269 = scalar_lea.sflag [#allocation3], %s268
        %s270 = sand.u32 %s181, 1
        %s271 = smul.addr %s270, 64
        %s272 = scalar_lea.vmem [#allocation2], %s271
        %s273 = smul.u32 8, %s21
        %p274 = scmp.lt.s32.totalorder %s273, 15
        %s275 = scalar_select %p274, %s273, 15
        %s276 = smul.addr %s275, 8
        %s277 = scalar_lea.vmem %s0, %s276
        %s278 = smul.u32 8, %s21
        %s279 = smul.u32 8, %s21
        %v281 = vld [vmem:[%s277] sm:$0xff]
        %v282 = vld [vmem:[%s277 + $0x8] sm:$0xff]
        %v283 = vld [vmem:[%s277 + $0x10] sm:$0xff]
        %v284 = vld [vmem:[%s277 + $0x18] sm:$0xff]
        %v285 = vld [vmem:[%s277 + $0x20] sm:$0xff]
        %v286 = vld [vmem:[%s277 + $0x28] sm:$0xff]
        %v287 = vld [vmem:[%s277 + $0x30] sm:$0xff]
        %v288 = vld [vmem:[%s277 + $0x38] sm:$0xff]
        %v289 = vpack.c.bf16 %v282, %v281
        %v290 = vpack.c.bf16 %v284, %v283
        %v291 = vpack.c.bf16 %v286, %v285
        %v292 = vpack.c.bf16 %v288, %v287
        %v293 = vld [vmem:[%s1] sm:$0xff]
        %v294 = vld [vmem:[%s1 + $0x8] sm:$0xff]
        %v295 = vld [vmem:[%s1 + $0x10] sm:$0xff]
        %v296 = vld [vmem:[%s1 + $0x18] sm:$0xff]
        %v297 = vld [vmem:[%s1 + $0x20] sm:$0xff]
        %v298 = vld [vmem:[%s1 + $0x28] sm:$0xff]
        %v299 = vld [vmem:[%s1 + $0x30] sm:$0xff]
        %v300 = vld [vmem:[%s1 + $0x38] sm:$0xff]
        %v301 = vld [vmem:[%s1 + $0x40] sm:$0xff]
        %v302 = vld [vmem:[%s1 + $0x48] sm:$0xff]
        %v303 = vld [vmem:[%s1 + $0x50] sm:$0xff]
        %v304 = vld [vmem:[%s1 + $0x58] sm:$0xff]
        %v305 = vld [vmem:[%s1 + $0x60] sm:$0xff]
        %v306 = vld [vmem:[%s1 + $0x68] sm:$0xff]
        %v307 = vld [vmem:[%s1 + $0x70] sm:$0xff]
        %v308 = vld [vmem:[%s1 + $0x78] sm:$0xff]
        %v309 = vld [vmem:[%s2] sm:$0x3]
        %v311 = vlaneseq
        %v312 = vshrl.u32 %v311, 7
        %v313 = vsub.s32 0, %v312
        %v314 = vrot.slane %v309, %v313
        %v315 = vlaneseq
        %v316 = vshrl.u32 %v315, 7
        %v317 = vsub.s32 1, %v316
        %v318 = vrot.slane %v309, %v317
        %v337 = vunpack.c.l.b16 %v293
        %v338 = vunpack.c.h.b16 %v293
        %v339 = vunpack.c.l.b16 %v294
        %v340 = vunpack.c.h.b16 %v294
        %v341 = vunpack.c.l.b16 %v295
        %v342 = vunpack.c.h.b16 %v295
        %v343 = vunpack.c.l.b16 %v296
        %v344 = vunpack.c.h.b16 %v296
        %v345 = vunpack.c.l.b16 %v297
        %v346 = vunpack.c.h.b16 %v297
        %v347 = vunpack.c.l.b16 %v298
        %v348 = vunpack.c.h.b16 %v298
        %v349 = vunpack.c.l.b16 %v299
        %v350 = vunpack.c.h.b16 %v299
        %v351 = vunpack.c.l.b16 %v300
        %v352 = vunpack.c.h.b16 %v300
        %v353 = vunpack.c.l.b16 %v301
        %v354 = vunpack.c.h.b16 %v301
        %v355 = vunpack.c.l.b16 %v302
        %v356 = vunpack.c.h.b16 %v302
        %v357 = vunpack.c.l.b16 %v303
        %v358 = vunpack.c.h.b16 %v303
        %v359 = vunpack.c.l.b16 %v304
        %v360 = vunpack.c.h.b16 %v304
        %v361 = vunpack.c.l.b16 %v305
        %v362 = vunpack.c.h.b16 %v305
        %v363 = vunpack.c.l.b16 %v306
        %v364 = vunpack.c.h.b16 %v306
        %v365 = vunpack.c.l.b16 %v307
        %v366 = vunpack.c.h.b16 %v307
        %v367 = vunpack.c.l.b16 %v308
        %v368 = vunpack.c.h.b16 %v308
        %v369 = vpack.c.b16 %v339, %v337
        %v370 = vpack.c.b16 %v340, %v338
        %v371 = vpack.c.b16 %v343, %v341
        %v372 = vpack.c.b16 %v344, %v342
        %v373 = vpack.c.b16 %v347, %v345
        %v374 = vpack.c.b16 %v348, %v346
        %v375 = vpack.c.b16 %v351, %v349
        %v376 = vpack.c.b16 %v352, %v350
        %v377 = vpack.c.b16 %v355, %v353
        %v378 = vpack.c.b16 %v356, %v354
        %v379 = vpack.c.b16 %v359, %v357
        %v380 = vpack.c.b16 %v360, %v358
        %v381 = vpack.c.b16 %v363, %v361
        %v382 = vpack.c.b16 %v364, %v362
        %v383 = vpack.c.b16 %v367, %v365
        %v384 = vpack.c.b16 %v368, %v366
        %401 = vmatprep.subr.bf16.mxu0 %v370
        %402 = vmatpush1.bf16.msra.mxu0 %v369
        %403 = vmatprep.subr.bf16.mxu0 %v372
        %404 = vmatpush1.bf16.msra.mxu0 %v371
        %405 = vmatprep.subr.bf16.mxu0 %v374
        %406 = vmatpush1.bf16.msra.mxu0 %v373
        %407 = vmatprep.subr.bf16.mxu0 %v376
        %408 = vmatpush1.bf16.msra.mxu0 %v375
        %409 = vmatprep.subr.bf16.mxu0 %v378
        %410 = vmatpush1.bf16.msra.mxu0 %v377
        %411 = vmatprep.subr.bf16.mxu0 %v380
        %412 = vmatpush1.bf16.msra.mxu0 %v379
        %413 = vmatprep.subr.bf16.mxu0 %v382
        %414 = vmatpush1.bf16.msra.mxu0 %v381
        %415 = vmatprep.subr.bf16.mxu0 %v384
        %416 = vmatpush1.bf16.msra.mxu0 %v383
        %417 = vmatprep.subr.bf16.mxu0 0
        %418 = vmatpush1.bf16.msra.mxu0 0
        %419 = vmatprep.subr.bf16.mxu0 0
        %420 = vmatpush1.bf16.msra.mxu0 0
        %421 = vmatprep.subr.bf16.mxu0 0
        %422 = vmatpush1.bf16.msra.mxu0 0
        %423 = vmatprep.subr.bf16.mxu0 0
        %424 = vmatpush1.bf16.msra.mxu0 0
        %425 = vmatprep.subr.bf16.mxu0 0
        %426 = vmatpush1.bf16.msra.mxu0 0
        %427 = vmatprep.subr.bf16.mxu0 0
        %428 = vmatpush1.bf16.msra.mxu0 0
        %429 = vmatprep.subr.bf16.mxu0 0
        %430 = vmatpush1.bf16.msra.mxu0 0
        %431 = vmatprep.subr.bf16.mxu0 0
        %432 = vmatpush1.bf16.msra.mxu0 0
        %433 = vmatprep.mubr.bf16.mxu0 0
        %434 = vmatmul.mubr.bf16.gmra.mrb[0].mxu0 %v289
        %v435 = vpop.f32.mrb[0].mxu0
        %v436 = vadd.f32 %v314, %v435
        %v437 = vpop.f32.mrb[0].mxu0
        %v438 = vadd.f32 %v318, %v437
        %v439 = vpop.f32.mrb[0].mxu0
        %v440 = vadd.f32 %v314, %v439
        %v441 = vpop.f32.mrb[0].mxu0
        %v442 = vadd.f32 %v318, %v441
        %443 = vmatprep.mubr.bf16.mxu0 0
        %444 = vmatmul.mubr.bf16.gmra.mrb[0].mxu0 %v290
        %v445 = vpop.f32.mrb[0].mxu0
        %v446 = vadd.f32 %v314, %v445
        %v447 = vpop.f32.mrb[0].mxu0
        %v448 = vadd.f32 %v318, %v447
        %v449 = vpop.f32.mrb[0].mxu0
        %v450 = vadd.f32 %v314, %v449
        %v451 = vpop.f32.mrb[0].mxu0
        %v452 = vadd.f32 %v318, %v451
        %453 = vmatprep.mubr.bf16.mxu0 0
        %454 = vmatmul.mubr.bf16.gmra.mrb[0].mxu0 %v291
        %v455 = vpop.f32.mrb[0].mxu0
        %v456 = vadd.f32 %v314, %v455
        %v457 = vpop.f32.mrb[0].mxu0
        %v458 = vadd.f32 %v318, %v457
        %v459 = vpop.f32.mrb[0].mxu0
        %v460 = vadd.f32 %v314, %v459
        %v461 = vpop.f32.mrb[0].mxu0
        %v462 = vadd.f32 %v318, %v461
        %463 = vmatprep.mubr.bf16.mxu0 0
        %464 = vmatmul.mubr.bf16.gmra.mrb[0].mxu0 %v292
        %v465 = vpop.f32.mrb[0].mxu0
        %v466 = vadd.f32 %v314, %v465
        %v467 = vpop.f32.mrb[0].mxu0
        %v468 = vadd.f32 %v318, %v467
        %v469 = vpop.f32.mrb[0].mxu0
        %v470 = vadd.f32 %v314, %v469
        %v471 = vpop.f32.mrb[0].mxu0
        %v472 = vadd.f32 %v318, %v471
        %473 = vdwg.mxu0
        %v474 = vmax.f32 %v436, 0.0
        %v475 = vmax.f32 %v438, 0.0
        %v476 = vmax.f32 %v440, 0.0
        %v477 = vmax.f32 %v442, 0.0
        %v478 = vmax.f32 %v446, 0.0
        %v479 = vmax.f32 %v448, 0.0
        %v480 = vmax.f32 %v450, 0.0
        %v481 = vmax.f32 %v452, 0.0
        %v482 = vmax.f32 %v456, 0.0
        %v483 = vmax.f32 %v458, 0.0
        %v484 = vmax.f32 %v460, 0.0
        %v485 = vmax.f32 %v462, 0.0
        %v486 = vmax.f32 %v466, 0.0
        %v487 = vmax.f32 %v468, 0.0
        %v488 = vmax.f32 %v470, 0.0
        %v489 = vmax.f32 %v472, 0.0
        %v490 = vpack.c.bf16 %v476, %v474
        %v491 = vpack.c.bf16 %v477, %v475
        %v492 = vpack.c.bf16 %v480, %v478
        %v493 = vpack.c.bf16 %v481, %v479
        %v494 = vpack.c.bf16 %v484, %v482
        %v495 = vpack.c.bf16 %v485, %v483
        %v496 = vpack.c.bf16 %v488, %v486
        %v497 = vpack.c.bf16 %v489, %v487
        %v498 = vld [vmem:[%s3] sm:$0xf]
        %v499 = vld [vmem:[%s3 + $0x4] sm:$0xf]
        %v500 = vld [vmem:[%s3 + $0x8] sm:$0xf]
        %v501 = vld [vmem:[%s3 + $0xc] sm:$0xf]
        %v502 = vld [vmem:[%s3 + $0x10] sm:$0xf]
        %v503 = vld [vmem:[%s3 + $0x14] sm:$0xf]
        %v504 = vld [vmem:[%s3 + $0x18] sm:$0xf]
        %v505 = vld [vmem:[%s3 + $0x1c] sm:$0xf]
        %v506 = vld [vmem:[%s3 + $0x20] sm:$0xf]
        %v507 = vld [vmem:[%s3 + $0x24] sm:$0xf]
        %v508 = vld [vmem:[%s3 + $0x28] sm:$0xf]
        %v509 = vld [vmem:[%s3 + $0x2c] sm:$0xf]
        %v510 = vld [vmem:[%s3 + $0x30] sm:$0xf]
        %v511 = vld [vmem:[%s3 + $0x34] sm:$0xf]
        %v512 = vld [vmem:[%s3 + $0x38] sm:$0xf]
        %v513 = vld [vmem:[%s3 + $0x3c] sm:$0xf]
        %v514 = vld [vmem:[%s3 + $0x40] sm:$0xf]
        %v515 = vld [vmem:[%s3 + $0x44] sm:$0xf]
        %v516 = vld [vmem:[%s3 + $0x48] sm:$0xf]
        %v517 = vld [vmem:[%s3 + $0x4c] sm:$0xf]
        %v518 = vld [vmem:[%s3 + $0x50] sm:$0xf]
        %v519 = vld [vmem:[%s3 + $0x54] sm:$0xf]
        %v520 = vld [vmem:[%s3 + $0x58] sm:$0xf]
        %v521 = vld [vmem:[%s3 + $0x5c] sm:$0xf]
        %v522 = vld [vmem:[%s3 + $0x60] sm:$0xf]
        %v523 = vld [vmem:[%s3 + $0x64] sm:$0xf]
        %v524 = vld [vmem:[%s3 + $0x68] sm:$0xf]
        %v525 = vld [vmem:[%s3 + $0x6c] sm:$0xf]
        %v526 = vld [vmem:[%s3 + $0x70] sm:$0xf]
        %v527 = vld [vmem:[%s3 + $0x74] sm:$0xf]
        %v528 = vld [vmem:[%s3 + $0x78] sm:$0xf]
        %v529 = vld [vmem:[%s3 + $0x7c] sm:$0xf]
        %v530 = vld [vmem:[%s4] sm:$0x1]
        %v532 = vlaneseq
        %v533 = vshrl.u32 %v532, 7
        %v534 = vsub.s32 0, %v533
        %v535 = vrot.slane %v530, %v534
        %v569 = vunpack.c.l.b16 %v498
        %v570 = vunpack.c.l.b16 %v499
        %v571 = vunpack.c.l.b16 %v500
        %v572 = vunpack.c.l.b16 %v501
        %v573 = vunpack.c.l.b16 %v502
        %v574 = vunpack.c.l.b16 %v503
        %v575 = vunpack.c.l.b16 %v504
        %v576 = vunpack.c.l.b16 %v505
        %v577 = vunpack.c.l.b16 %v506
        %v578 = vunpack.c.l.b16 %v507
        %v579 = vunpack.c.l.b16 %v508
        %v580 = vunpack.c.l.b16 %v509
        %v581 = vunpack.c.l.b16 %v510
        %v582 = vunpack.c.l.b16 %v511
        %v583 = vunpack.c.l.b16 %v512
        %v584 = vunpack.c.l.b16 %v513
        %v585 = vunpack.c.l.b16 %v514
        %v586 = vunpack.c.l.b16 %v515
        %v587 = vunpack.c.l.b16 %v516
        %v588 = vunpack.c.l.b16 %v517
        %v589 = vunpack.c.l.b16 %v518
        %v590 = vunpack.c.l.b16 %v519
        %v591 = vunpack.c.l.b16 %v520
        %v592 = vunpack.c.l.b16 %v521
        %v593 = vunpack.c.l.b16 %v522
        %v594 = vunpack.c.l.b16 %v523
        %v595 = vunpack.c.l.b16 %v524
        %v596 = vunpack.c.l.b16 %v525
        %v597 = vunpack.c.l.b16 %v526
        %v598 = vunpack.c.l.b16 %v527
        %v599 = vunpack.c.l.b16 %v528
        %v600 = vunpack.c.l.b16 %v529
        %v601 = vpack.c.b16 %v570, %v569
        %v602 = vpack.c.b16 %v572, %v571
        %v603 = vpack.c.b16 %v574, %v573
        %v604 = vpack.c.b16 %v576, %v575
        %v605 = vpack.c.b16 %v578, %v577
        %v606 = vpack.c.b16 %v580, %v579
        %v607 = vpack.c.b16 %v582, %v581
        %v608 = vpack.c.b16 %v584, %v583
        %v609 = vpack.c.b16 %v586, %v585
        %v610 = vpack.c.b16 %v588, %v587
        %v611 = vpack.c.b16 %v590, %v589
        %v612 = vpack.c.b16 %v592, %v591
        %v613 = vpack.c.b16 %v594, %v593
        %v614 = vpack.c.b16 %v596, %v595
        %v615 = vpack.c.b16 %v598, %v597
        %v616 = vpack.c.b16 %v600, %v599
        %633 = vmatprep.subr.bf16.mxu0 0
        %634 = vmatpush1.bf16.msra.mxu0 %v601
        %635 = vmatprep.subr.bf16.mxu0 0
        %636 = vmatpush1.bf16.msra.mxu0 %v602
        %637 = vmatprep.subr.bf16.mxu0 0
        %638 = vmatpush1.bf16.msra.mxu0 %v603
        %639 = vmatprep.subr.bf16.mxu0 0
        %640 = vmatpush1.bf16.msra.mxu0 %v604
        %641 = vmatprep.subr.bf16.mxu0 0
        %642 = vmatpush1.bf16.msra.mxu0 %v605
        %643 = vmatprep.subr.bf16.mxu0 0
        %644 = vmatpush1.bf16.msra.mxu0 %v606
        %645 = vmatprep.subr.bf16.mxu0 0
        %646 = vmatpush1.bf16.msra.mxu0 %v607
        %647 = vmatprep.subr.bf16.mxu0 0
        %648 = vmatpush1.bf16.msra.mxu0 %v608
        %649 = vmatprep.subr.bf16.mxu0 0
        %650 = vmatpush1.bf16.msra.mxu0 %v609
        %651 = vmatprep.subr.bf16.mxu0 0
        %652 = vmatpush1.bf16.msra.mxu0 %v610
        %653 = vmatprep.subr.bf16.mxu0 0
        %654 = vmatpush1.bf16.msra.mxu0 %v611
        %655 = vmatprep.subr.bf16.mxu0 0
        %656 = vmatpush1.bf16.msra.mxu0 %v612
        %657 = vmatprep.subr.bf16.mxu0 0
        %658 = vmatpush1.bf16.msra.mxu0 %v613
        %659 = vmatprep.subr.bf16.mxu0 0
        %660 = vmatpush1.bf16.msra.mxu0 %v614
        %661 = vmatprep.subr.bf16.mxu0 0
        %662 = vmatpush1.bf16.msra.mxu0 %v615
        %663 = vmatprep.subr.bf16.mxu0 0
        %664 = vmatpush1.bf16.msra.mxu0 %v616
        %665 = vmatprep.mubr.bf16.mxu0 %v491
        %666 = vmatmul.mubr.bf16.gmra.mrb[0].mxu0 %v490
        %v667 = vpop.f32.mrb[0].mxu0
        %v668 = vadd.f32 %v535, %v667
        %v669 = vpop.f32.mrb[0].mxu0
        %v670 = vpop.f32.mrb[0].mxu0
        %v671 = vadd.f32 %v535, %v670
        %v672 = vpop.f32.mrb[0].mxu0
        %673 = vmatprep.mubr.bf16.mxu0 %v493
        %674 = vmatmul.mubr.bf16.gmra.mrb[0].mxu0 %v492
        %v675 = vpop.f32.mrb[0].mxu0
        %v676 = vadd.f32 %v535, %v675
        %v677 = vpop.f32.mrb[0].mxu0
        %v678 = vpop.f32.mrb[0].mxu0
        %v679 = vadd.f32 %v535, %v678
        %v680 = vpop.f32.mrb[0].mxu0
        %681 = vmatprep.mubr.bf16.mxu0 %v495
        %682 = vmatmul.mubr.bf16.gmra.mrb[0].mxu0 %v494
        %v683 = vpop.f32.mrb[0].mxu0
        %v684 = vadd.f32 %v535, %v683
        %v685 = vpop.f32.mrb[0].mxu0
        %v686 = vpop.f32.mrb[0].mxu0
        %v687 = vadd.f32 %v535, %v686
        %v688 = vpop.f32.mrb[0].mxu0
        %689 = vmatprep.mubr.bf16.mxu0 %v497
        %690 = vmatmul.mubr.bf16.gmra.mrb[0].mxu0 %v496
        %v691 = vpop.f32.mrb[0].mxu0
        %v692 = vadd.f32 %v535, %v691
        %v693 = vpop.f32.mrb[0].mxu0
        %v694 = vpop.f32.mrb[0].mxu0
        %v695 = vadd.f32 %v535, %v694
        %v696 = vpop.f32.mrb[0].mxu0
        %697 = vdwg.mxu0
        %v698 = vadd.f32 %v281, %v668
        %v699 = vadd.f32 %v282, %v671
        %v700 = vadd.f32 %v283, %v676
        %v701 = vadd.f32 %v284, %v679
        %v702 = vadd.f32 %v285, %v684
        %v703 = vadd.f32 %v286, %v687
        %v704 = vadd.f32 %v287, %v692
        %v705 = vadd.f32 %v288, %v695
        %706 = vadd.xlane.f32.xlu0 %v698
        %v707 = vpop.xlane.xlu0 %706
        %708 = vadd.xlane.f32.xlu0 %v699
        %v709 = vpop.xlane.xlu0 %708
        %710 = vadd.xlane.f32.xlu0 %v700
        %v711 = vpop.xlane.xlu0 %710
        %712 = vadd.xlane.f32.xlu0 %v701
        %v713 = vpop.xlane.xlu0 %712
        %714 = vadd.xlane.f32.xlu0 %v702
        %v715 = vpop.xlane.xlu0 %714
        %716 = vadd.xlane.f32.xlu0 %v703
        %v717 = vpop.xlane.xlu0 %716
        %718 = vadd.xlane.f32.xlu0 %v704
        %v719 = vpop.xlane.xlu0 %718
        %720 = vadd.xlane.f32.xlu0 %v705
        %v721 = vpop.xlane.xlu0 %720
        %v722 = vrcp.pop 128.0
        %v723 = vmul.f32 %v707, %v722
        %v724 = vmul.f32 %v709, %v722
        %v725 = vmul.f32 %v711, %v722
        %v726 = vmul.f32 %v713, %v722
        %v727 = vmul.f32 %v715, %v722
        %v728 = vmul.f32 %v717, %v722
        %v729 = vmul.f32 %v719, %v722
        %v730 = vmul.f32 %v721, %v722
        %v731 = vsub.f32 %v698, %v723
        %v732 = vsub.f32 %v699, %v724
        %v733 = vsub.f32 %v700, %v725
        %v734 = vsub.f32 %v701, %v726
        %v735 = vsub.f32 %v702, %v727
        %v736 = vsub.f32 %v703, %v728
        %v737 = vsub.f32 %v704, %v729
        %v738 = vsub.f32 %v705, %v730
        %v739 = vmul.f32 %v731, %v731
        %v740 = vmul.f32 %v732, %v732
        %v741 = vmul.f32 %v733, %v733
        %v742 = vmul.f32 %v734, %v734
        %v743 = vmul.f32 %v735, %v735
        %v744 = vmul.f32 %v736, %v736
        %v745 = vmul.f32 %v737, %v737
        %v746 = vmul.f32 %v738, %v738
        %747 = vadd.xlane.f32.xlu0 %v739
        %v748 = vpop.xlane.xlu0 %747
        %749 = vadd.xlane.f32.xlu0 %v740
        %v750 = vpop.xlane.xlu0 %749
        %751 = vadd.xlane.f32.xlu0 %v741
        %v752 = vpop.xlane.xlu0 %751
        %753 = vadd.xlane.f32.xlu0 %v742
        %v754 = vpop.xlane.xlu0 %753
        %755 = vadd.xlane.f32.xlu0 %v743
        %v756 = vpop.xlane.xlu0 %755
        %757 = vadd.xlane.f32.xlu0 %v744
        %v758 = vpop.xlane.xlu0 %757
        %759 = vadd.xlane.f32.xlu0 %v745
        %v760 = vpop.xlane.xlu0 %759
        %761 = vadd.xlane.f32.xlu0 %v746
        %v762 = vpop.xlane.xlu0 %761
        %v763 = vmul.f32 %v748, %v722
        %v764 = vmul.f32 %v750, %v722
        %v765 = vmul.f32 %v752, %v722
        %v766 = vmul.f32 %v754, %v722
        %v767 = vmul.f32 %v756, %v722
        %v768 = vmul.f32 %v758, %v722
        %v769 = vmul.f32 %v760, %v722
        %v770 = vmul.f32 %v762, %v722
        %v771 = vadd.f32 %v763, 1e-05
        %v772 = vadd.f32 %v764, 1e-05
        %v773 = vadd.f32 %v765, 1e-05
        %v774 = vadd.f32 %v766, 1e-05
        %v775 = vadd.f32 %v767, 1e-05
        %v776 = vadd.f32 %v768, 1e-05
        %v777 = vadd.f32 %v769, 1e-05
        %v778 = vadd.f32 %v770, 1e-05
        %v779 = vrsqrt.pop %v771
        %v780 = vrsqrt.pop %v772
        %v781 = vrsqrt.pop %v773
        %v782 = vrsqrt.pop %v774
        %v783 = vrsqrt.pop %v775
        %v784 = vrsqrt.pop %v776
        %v785 = vrsqrt.pop %v777
        %v786 = vrsqrt.pop %v778
        %v787 = vmul.f32 %v731, %v779
        %v788 = vmul.f32 %v732, %v780
        %v789 = vmul.f32 %v733, %v781
        %v790 = vmul.f32 %v734, %v782
        %v791 = vmul.f32 %v735, %v783
        %v792 = vmul.f32 %v736, %v784
        %v793 = vmul.f32 %v737, %v785
        %v794 = vmul.f32 %v738, %v786
        %v795 = vld [vmem:[%s5] sm:$0x1]
        %v797 = vlaneseq
        %v798 = vshrl.u32 %v797, 7
        %v799 = vsub.s32 0, %v798
        %v800 = vrot.slane %v795, %v799
        %v802 = vmul.f32 %v787, %v800
        %v803 = vmul.f32 %v788, %v800
        %v804 = vmul.f32 %v789, %v800
        %v805 = vmul.f32 %v790, %v800
        %v806 = vmul.f32 %v791, %v800
        %v807 = vmul.f32 %v792, %v800
        %v808 = vmul.f32 %v793, %v800
        %v809 = vmul.f32 %v794, %v800
        %v810 = vld [vmem:[%s6] sm:$0x1]
        %v812 = vlaneseq
        %v813 = vshrl.u32 %v812, 7
        %v814 = vsub.s32 0, %v813
        %v815 = vrot.slane %v810, %v814
        %v817 = vadd.f32 %v802, %v815
        %v818 = vadd.f32 %v803, %v815
        %v819 = vadd.f32 %v804, %v815
        %v820 = vadd.f32 %v805, %v815
        %v821 = vadd.f32 %v806, %v815
        %v822 = vadd.f32 %v807, %v815
        %v823 = vadd.f32 %v808, %v815
        %v824 = vadd.f32 %v809, %v815
        %825 = vst [vmem:[%s272] sm:$0xff] %v817
        %826 = vst [vmem:[%s272 + $0x8] sm:$0xff] %v818
        %827 = vst [vmem:[%s272 + $0x10] sm:$0xff] %v819
        %828 = vst [vmem:[%s272 + $0x18] sm:$0xff] %v820
        %829 = vst [vmem:[%s272 + $0x20] sm:$0xff] %v821
        %830 = vst [vmem:[%s272 + $0x28] sm:$0xff] %v822
        %831 = vst [vmem:[%s272 + $0x30] sm:$0xff] %v823
        %832 = vst [vmem:[%s272 + $0x38] sm:$0xff] %v824
        %s833 = sand.u32 %s181, 1
        %s834 = scalar_lea.sflag [#allocation3], %s833
        %s835 = sand.u32 %s181, 1
        %s836 = smul.addr %s835, 64
        %s837 = scalar_lea.vmem [#allocation2], %s836
        // Predicated region
        $region49: #{transformer_decoder_layer.5} parent=47 // pred_check
          %p838 = pneg %p191
        $region50: #{transformer_decoder_layer.5} parent=47 // pred_check_branch
          %840 = sbr.rel (%p838) target = $region52
        $region51: #{transformer_decoder_layer.5} parent=47 // pred_region
          %s841 = smul.u32 8, %s21
          %s843 = ssub.s32 1024, 1024
          %844 = vsyncadd %s834, %s843
          %s845 = smul.addr %s841, 128
          %s846 = scalar_lea.hbm %s7, %s845
          %s847 = sshll.u32 %s837, 4
          %s848 = int_to_ptr.vmem [resolvable:$true] %s847
          %853 = dma.vmem_to_hbm [thread:$0]  %s848, 1024, %s846, %s834, 128, 128, 8
        $region52: #{transformer_decoder_layer.5} parent=47 // pred_fallthru
          _
      $region48: #{transformer_decoder_layer.5} parent=5 // pred_fallthru
        _
      %p854 = scmp.le.s32.totalorder 2, %s16
      // Predicated region
      $region53: #{transformer_decoder_layer.5} parent=5 // pred_check
        %p855 = pneg %p854
      $region54: #{transformer_decoder_layer.5} parent=5 // pred_check_branch
        %857 = sbr.rel (%p855) target = $region56
      $region55: #{transformer_decoder_layer.5} parent=5 // pred_region
        %s858 = ssub.s32 %s16, 2
        // Predicated region
        $region57: #{transformer_decoder_layer.5} parent=55 // pred_check
          %p859 = pneg %p197
        $region58: #{transformer_decoder_layer.5} parent=55 // pred_check_branch
          %861 = sbr.rel (%p859) target = $region60
        $region59: #{transformer_decoder_layer.5} parent=55 // pred_region
          %s862 = sand.u32 %s182, 1
          %s863 = scalar_lea.sflag [#allocation3], %s862
          %s864 = sand.u32 %s182, 1
          %s865 = smul.addr %s864, 64
          %s866 = scalar_lea.vmem [#allocation2], %s865
          %867 = dma.done %s863, 1024
        $region60: #{transformer_decoder_layer.5} parent=55 // pred_fallthru
          _
      $region56: #{transformer_decoder_layer.5} parent=5 // pred_fallthru
        _
    $region6: #{transformer_decoder_layer.5} parent=1 // loop_footer
      %s20 = sadd.s32 1, %s16
    $region7: #{transformer_decoder_layer.5} parent=1 // loop_footer_branch
      %15 = sbr.rel target = $region3
    $region8: #{transformer_decoder_layer.5} parent=1 // loop_exit
      _
    %868 = vsyncpa [#allocation3], 1
    %s869 = scalar_lea.sflag [#allocation3], 1
    %870 = vsyncpa %s869, 1

// kernel: transformer_decoder_layer.4
$region0: #{transformer_decoder_layer.4}
  #allocation0 [shape = 'u32[]', space=smem, size = 0x4, offset = 0x4, fixed_abs, tag = 'smem constant byte address 0x4 - core index']
  #allocation1 [shape = 'u32[144,128]{1,0:T(1,128)}', space=vmem, size = 0x12000, scoped, tag = 'internal scratch']
  %s0 = inlined_call_operand.vmem [shape: f32[2,64,128], index: 0, kind: input, shape index: {}]
  %s1 = inlined_call_operand.vmem [shape: f32[2,128,128], index: 1, kind: input, shape index: {}]
  %s2 = inlined_call_operand.vmem [shape: bf16[128,128], index: 2, kind: input, shape index: {}]
  %s3 = inlined_call_operand.vmem [shape: f32[1,128], index: 3, kind: input, shape index: {}]
  %s4 = inlined_call_operand.vmem [shape: bf16[128,128], index: 4, kind: input, shape index: {}]
  %s5 = inlined_call_operand.vmem [shape: f32[1,128], index: 5, kind: input, shape index: {}]
  %s6 = inlined_call_operand.vmem [shape: bf16[128,128], index: 6, kind: input, shape index: {}]
  %s7 = inlined_call_operand.vmem [shape: f32[1,128], index: 7, kind: input, shape index: {}]
  %s8 = inlined_call_operand.vmem [shape: f32[128,128], index: 8, kind: input, shape index: {}]
  %s9 = inlined_call_operand.vmem [shape: f32[1,128], index: 9, kind: input, shape index: {}]
  %s10 = inlined_call_operand.vmem [shape: f32[1,128], index: 10, kind: input, shape index: {}]
  %s11 = inlined_call_operand.vmem [shape: f32[1,128], index: 11, kind: input, shape index: {}]
  %s12 = inlined_call_operand.vmem [shape: f32[2,64,128], index: 12, kind: output, shape index: {}]
  %s13 = sld [smem:[#allocation0]]
  $region81: #{transformer_decoder_layer.4} parent=0
    _
  %s15 = ssub.s32 1, %s13
  %s16 = scalar_select 0, %s15, %s13
  loop: start=0, step=1, limit=4
  $region2: #{transformer_decoder_layer.4} parent=0 // loop_pre_header
    _
  $region3: #{transformer_decoder_layer.4} parent=0 // loop_header
    %s18 = sphi 0, %s22
    %p19 = scmp.ge.s32.totalorder %s18, 4
    %s28 = sphi 0, %s30
    %s31 = sphi 0, %s28
    %s32 = sphi 0, %s31
    %s48 = sphi 0, %s32
    %s54 = sphi 0, %s56
    %s57 = sphi 0, %s54
    %s58 = sphi 0, %s57
    %s74 = sphi 0, %s58
    %s78 = sphi 0, %s78
    %s80 = sphi 0, %s78
    %s81 = sphi 0, %s80
    %s95 = sphi 0, %s81
    %s99 = sphi 0, %s99
    %s101 = sphi 0, %s99
    %s102 = sphi 0, %s101
    %s116 = sphi 0, %s102
    %s120 = sphi 0, %s120
    %s122 = sphi 0, %s120
    %s123 = sphi 0, %s122
    %s137 = sphi 0, %s123
    %s141 = sphi 0, %s141
    %s143 = sphi 0, %s141
    %s144 = sphi 0, %s143
    %s158 = sphi 0, %s144
    %s162 = sphi 0, %s162
    %s164 = sphi 0, %s162
    %s165 = sphi 0, %s164
    %s179 = sphi 0, %s165
    %s183 = sphi 0, %s183
    %s185 = sphi 0, %s183
    %s186 = sphi 0, %s185
    %s200 = sphi 0, %s186
    %s204 = sphi 0, %s204
    %s206 = sphi 0, %s204
    %s207 = sphi 0, %s206
    %s221 = sphi 0, %s207
    %s225 = sphi 0, %s225
    %s227 = sphi 0, %s225
    %s228 = sphi 0, %s227
    %s242 = sphi 0, %s228
    %s246 = sphi 0, %s246
    %s248 = sphi 0, %s246
    %s249 = sphi 0, %s248
    %s263 = sphi 0, %s249
    %s267 = sphi 0, %s267
    %s269 = sphi 0, %s267
    %s270 = sphi 0, %s269
    %s284 = sphi 0, %s270
    %s290 = sphi 0, %s292
    %s293 = sphi 0, %s290
    %s294 = sphi 0, %s293
    %s310 = sphi 0, %s294
  $region4: #{transformer_decoder_layer.4} parent=0 // loop_header_branch
    %21 = sbr.rel (%p19) target = $region8
  $region5: #{transformer_decoder_layer.4} parent=0 // loop_body
    %s23 = ssub.s32 %s18, 1
    %s24 = ssub.s32 %s18, 2
    %s25 = sadd.s32 %s18, 1
    %s26 = ssub.s32 %s18, %s25
    %p27 = scmp.eq.s32.totalorder %s26, 0
    %s29 = sadd.s32 %s28, 1
    %s30 = scalar_select %p27, %s28, %s29
    %p33 = pneg %p27
    %p34 = scmp.eq.s32.totalorder %s18, 1
    %p35 = por %p33, %p34
    %p36 = scmp.ne.s32.totalorder %s28, %s31
    %p37 = scmp.eq.s32.totalorder %s18, 0
    %p38 = por %p36, %p37
    %p39 = scmp.ne.s32.totalorder %s28, %s31
    %p40 = scmp.eq.s32.totalorder %s23, 1
    %p41 = por %p39, %p40
    %p42 = scmp.ne.s32.totalorder %s31, %s32
    %p43 = scmp.eq.s32.totalorder %s23, 0
    %p44 = por %p42, %p43
    %p45 = scmp.ne.s32.totalorder %s31, %s32
    %p46 = scmp.eq.s32.totalorder %s24, 1
    %p47 = por %p45, %p46
    %p49 = scmp.ne.s32.totalorder %s32, %s48
    %p50 = scmp.eq.s32.totalorder %s24, 0
    %p51 = por %p49, %p50
    %s52 = ssub.s32 %s18, %s25
    %p53 = scmp.eq.s32.totalorder %s52, 0
    %s55 = sadd.s32 %s54, 1
    %s56 = scalar_select %p53, %s54, %s55
    %p59 = pneg %p53
    %p60 = scmp.eq.s32.totalorder %s18, 1
    %p61 = por %p59, %p60
    %p62 = scmp.ne.s32.totalorder %s54, %s57
    %p63 = scmp.eq.s32.totalorder %s18, 0
    %p64 = por %p62, %p63
    %p65 = scmp.ne.s32.totalorder %s54, %s57
    %p66 = scmp.eq.s32.totalorder %s23, 1
    %p67 = por %p65, %p66
    %p68 = scmp.ne.s32.totalorder %s57, %s58
    %p69 = scmp.eq.s32.totalorder %s23, 0
    %p70 = por %p68, %p69
    %p71 = scmp.ne.s32.totalorder %s57, %s58
    %p72 = scmp.eq.s32.totalorder %s24, 1
    %p73 = por %p71, %p72
    %p75 = scmp.ne.s32.totalorder %s58, %s74
    %p76 = scmp.eq.s32.totalorder %s24, 0
    %p77 = por %p75, %p76
    %s79 = sadd.s32 %s78, 1
    %p82 = scmp.eq.s32.totalorder %s18, 1
    %p83 = scmp.ne.s32.totalorder %s78, %s80
    %p84 = scmp.eq.s32.totalorder %s18, 0
    %p85 = por %p83, %p84
    %p86 = scmp.ne.s32.totalorder %s78, %s80
    %p87 = scmp.eq.s32.totalorder %s23, 1
    %p88 = por %p86, %p87
    %p89 = scmp.ne.s32.totalorder %s80, %s81
    %p90 = scmp.eq.s32.totalorder %s23, 0
    %p91 = por %p89, %p90
    %p92 = scmp.ne.s32.totalorder %s80, %s81
    %p93 = scmp.eq.s32.totalorder %s24, 1
    %p94 = por %p92, %p93
    %p96 = scmp.ne.s32.totalorder %s81, %s95
    %p97 = scmp.eq.s32.totalorder %s24, 0
    %p98 = por %p96, %p97
    %s100 = sadd.s32 %s99, 1
    %p103 = scmp.eq.s32.totalorder %s18, 1
    %p104 = scmp.ne.s32.totalorder %s99, %s101
    %p105 = scmp.eq.s32.totalorder %s18, 0
    %p106 = por %p104, %p105
    %p107 = scmp.ne.s32.totalorder %s99, %s101
    %p108 = scmp.eq.s32.totalorder %s23, 1
    %p109 = por %p107, %p108
    %p110 = scmp.ne.s32.totalorder %s101, %s102
    %p111 = scmp.eq.s32.totalorder %s23, 0
    %p112 = por %p110, %p111
    %p113 = scmp.ne.s32.totalorder %s101, %s102
    %p114 = scmp.eq.s32.totalorder %s24, 1
    %p115 = por %p113, %p114
    %p117 = scmp.ne.s32.totalorder %s102, %s116
    %p118 = scmp.eq.s32.totalorder %s24, 0
    %p119 = por %p117, %p118
    %s121 = sadd.s32 %s120, 1
    %p124 = scmp.eq.s32.totalorder %s18, 1
    %p125 = scmp.ne.s32.totalorder %s120, %s122
    %p126 = scmp.eq.s32.totalorder %s18, 0
    %p127 = por %p125, %p126
    %p128 = scmp.ne.s32.totalorder %s120, %s122
    %p129 = scmp.eq.s32.totalorder %s23, 1
    %p130 = por %p128, %p129
    %p131 = scmp.ne.s32.totalorder %s122, %s123
    %p132 = scmp.eq.s32.totalorder %s23, 0
    %p133 = por %p131, %p132
    %p134 = scmp.ne.s32.totalorder %s122, %s123
    %p135 = scmp.eq.s32.totalorder %s24, 1
    %p136 = por %p134, %p135
    %p138 = scmp.ne.s32.totalorder %s123, %s137
    %p139 = scmp.eq.s32.totalorder %s24, 0
    %p140 = por %p138, %p139
    %s142 = sadd.s32 %s141, 1
    %p145 = scmp.eq.s32.totalorder %s18, 1
    %p146 = scmp.ne.s32.totalorder %s141, %s143
    %p147 = scmp.eq.s32.totalorder %s18, 0
    %p148 = por %p146, %p147
    %p149 = scmp.ne.s32.totalorder %s141, %s143
    %p150 = scmp.eq.s32.totalorder %s23, 1
    %p151 = por %p149, %p150
    %p152 = scmp.ne.s32.totalorder %s143, %s144
    %p153 = scmp.eq.s32.totalorder %s23, 0
    %p154 = por %p152, %p153
    %p155 = scmp.ne.s32.totalorder %s143, %s144
    %p156 = scmp.eq.s32.totalorder %s24, 1
    %p157 = por %p155, %p156
    %p159 = scmp.ne.s32.totalorder %s144, %s158
    %p160 = scmp.eq.s32.totalorder %s24, 0
    %p161 = por %p159, %p160
    %s163 = sadd.s32 %s162, 1
    %p166 = scmp.eq.s32.totalorder %s18, 1
    %p167 = scmp.ne.s32.totalorder %s162, %s164
    %p168 = scmp.eq.s32.totalorder %s18, 0
    %p169 = por %p167, %p168
    %p170 = scmp.ne.s32.totalorder %s162, %s164
    %p171 = scmp.eq.s32.totalorder %s23, 1
    %p172 = por %p170, %p171
    %p173 = scmp.ne.s32.totalorder %s164, %s165
    %p174 = scmp.eq.s32.totalorder %s23, 0
    %p175 = por %p173, %p174
    %p176 = scmp.ne.s32.totalorder %s164, %s165
    %p177 = scmp.eq.s32.totalorder %s24, 1
    %p178 = por %p176, %p177
    %p180 = scmp.ne.s32.totalorder %s165, %s179
    %p181 = scmp.eq.s32.totalorder %s24, 0
    %p182 = por %p180, %p181
    %s184 = sadd.s32 %s183, 1
    %p187 = scmp.eq.s32.totalorder %s18, 1
    %p188 = scmp.ne.s32.totalorder %s183, %s185
    %p189 = scmp.eq.s32.totalorder %s18, 0
    %p190 = por %p188, %p189
    %p191 = scmp.ne.s32.totalorder %s183, %s185
    %p192 = scmp.eq.s32.totalorder %s23, 1
    %p193 = por %p191, %p192
    %p194 = scmp.ne.s32.totalorder %s185, %s186
    %p195 = scmp.eq.s32.totalorder %s23, 0
    %p196 = por %p194, %p195
    %p197 = scmp.ne.s32.totalorder %s185, %s186
    %p198 = scmp.eq.s32.totalorder %s24, 1
    %p199 = por %p197, %p198
    %p201 = scmp.ne.s32.totalorder %s186, %s200
    %p202 = scmp.eq.s32.totalorder %s24, 0
    %p203 = por %p201, %p202
    %s205 = sadd.s32 %s204, 1
    %p208 = scmp.eq.s32.totalorder %s18, 1
    %p209 = scmp.ne.s32.totalorder %s204, %s206
    %p210 = scmp.eq.s32.totalorder %s18, 0
    %p211 = por %p209, %p210
    %p212 = scmp.ne.s32.totalorder %s204, %s206
    %p213 = scmp.eq.s32.totalorder %s23, 1
    %p214 = por %p212, %p213
    %p215 = scmp.ne.s32.totalorder %s206, %s207
    %p216 = scmp.eq.s32.totalorder %s23, 0
    %p217 = por %p215, %p216
    %p218 = scmp.ne.s32.totalorder %s206, %s207
    %p219 = scmp.eq.s32.totalorder %s24, 1
    %p220 = por %p218, %p219
    %p222 = scmp.ne.s32.totalorder %s207, %s221
    %p223 = scmp.eq.s32.totalorder %s24, 0
    %p224 = por %p222, %p223
    %s226 = sadd.s32 %s225, 1
    %p229 = scmp.eq.s32.totalorder %s18, 1
    %p230 = scmp.ne.s32.totalorder %s225, %s227
    %p231 = scmp.eq.s32.totalorder %s18, 0
    %p232 = por %p230, %p231
    %p233 = scmp.ne.s32.totalorder %s225, %s227
    %p234 = scmp.eq.s32.totalorder %s23, 1
    %p235 = por %p233, %p234
    %p236 = scmp.ne.s32.totalorder %s227, %s228
    %p237 = scmp.eq.s32.totalorder %s23, 0
    %p238 = por %p236, %p237
    %p239 = scmp.ne.s32.totalorder %s227, %s228
    %p240 = scmp.eq.s32.totalorder %s24, 1
    %p241 = por %p239, %p240
    %p243 = scmp.ne.s32.totalorder %s228, %s242
    %p244 = scmp.eq.s32.totalorder %s24, 0
    %p245 = por %p243, %p244
    %s247 = sadd.s32 %s246, 1
    %p250 = scmp.eq.s32.totalorder %s18, 1
    %p251 = scmp.ne.s32.totalorder %s246, %s248
    %p252 = scmp.eq.s32.totalorder %s18, 0
    %p253 = por %p251, %p252
    %p254 = scmp.ne.s32.totalorder %s246, %s248
    %p255 = scmp.eq.s32.totalorder %s23, 1
    %p256 = por %p254, %p255
    %p257 = scmp.ne.s32.totalorder %s248, %s249
    %p258 = scmp.eq.s32.totalorder %s23, 0
    %p259 = por %p257, %p258
    %p260 = scmp.ne.s32.totalorder %s248, %s249
    %p261 = scmp.eq.s32.totalorder %s24, 1
    %p262 = por %p260, %p261
    %p264 = scmp.ne.s32.totalorder %s249, %s263
    %p265 = scmp.eq.s32.totalorder %s24, 0
    %p266 = por %p264, %p265
    %s268 = sadd.s32 %s267, 1
    %p271 = scmp.eq.s32.totalorder %s18, 1
    %p272 = scmp.ne.s32.totalorder %s267, %s269
    %p273 = scmp.eq.s32.totalorder %s18, 0
    %p274 = por %p272, %p273
    %p275 = scmp.ne.s32.totalorder %s267, %s269
    %p276 = scmp.eq.s32.totalorder %s23, 1
    %p277 = por %p275, %p276
    %p278 = scmp.ne.s32.totalorder %s269, %s270
    %p279 = scmp.eq.s32.totalorder %s23, 0
    %p280 = por %p278, %p279
    %p281 = scmp.ne.s32.totalorder %s269, %s270
    %p282 = scmp.eq.s32.totalorder %s24, 1
    %p283 = por %p281, %p282
    %p285 = scmp.ne.s32.totalorder %s270, %s284
    %p286 = scmp.eq.s32.totalorder %s24, 0
    %p287 = por %p285, %p286
    %s288 = ssub.s32 %s18, %s25
    %p289 = scmp.eq.s32.totalorder %s288, 0
    %s291 = sadd.s32 %s290, 1
    %s292 = scalar_select %p289, %s290, %s291
    %p295 = pneg %p289
    %p296 = scmp.eq.s32.totalorder %s18, 1
    %p297 = por %p295, %p296
    %p298 = scmp.ne.s32.totalorder %s290, %s293
    %p299 = scmp.eq.s32.totalorder %s18, 0
    %p300 = por %p298, %p299
    %p301 = scmp.ne.s32.totalorder %s290, %s293
    %p302 = scmp.eq.s32.totalorder %s23, 1
    %p303 = por %p301, %p302
    %p304 = scmp.ne.s32.totalorder %s293, %s294
    %p305 = scmp.eq.s32.totalorder %s23, 0
    %p306 = por %p304, %p305
    %p307 = scmp.ne.s32.totalorder %s293, %s294
    %p308 = scmp.eq.s32.totalorder %s24, 1
    %p309 = por %p307, %p308
    %p311 = scmp.ne.s32.totalorder %s294, %s310
    %p312 = scmp.eq.s32.totalorder %s24, 0
    %p313 = por %p311, %p312
    %p314 = scmp.le.s32.totalorder 1, %s18
    %p315 = scmp.lt.s32.totalorder %s18, 3
    %p316 = pnand %p314, %p315
    %p317 = pneg %p316
    // Predicated region
    $region9: #{transformer_decoder_layer.4} parent=5 // pred_check
      _
    $region10: #{transformer_decoder_layer.4} parent=5 // pred_check_branch
      %319 = sbr.rel (%p316) target = $region12
    $region11: #{transformer_decoder_layer.4} parent=5 // pred_region
      %s320 = ssub.s32 %s18, 1
      // Predicated region
      $region13: #{transformer_decoder_layer.4} parent=11 // pred_check
        %p321 = pneg %p91
      $region14: #{transformer_decoder_layer.4} parent=11 // pred_check_branch
        %323 = sbr.rel (%p321) target = $region16
      $region15: #{transformer_decoder_layer.4} parent=11 // pred_region
        _
      $region16: #{transformer_decoder_layer.4} parent=11 // pred_fallthru
        _
      // Predicated region
      $region17: #{transformer_decoder_layer.4} parent=11 // pred_check
        %p324 = pneg %p112
      $region18: #{transformer_decoder_layer.4} parent=11 // pred_check_branch
        %326 = sbr.rel (%p324) target = $region20
      $region19: #{transformer_decoder_layer.4} parent=11 // pred_region
        _
      $region20: #{transformer_decoder_layer.4} parent=11 // pred_fallthru
        _
      // Predicated region
      $region21: #{transformer_decoder_layer.4} parent=11 // pred_check
        %p327 = pneg %p133
      $region22: #{transformer_decoder_layer.4} parent=11 // pred_check_branch
        %329 = sbr.rel (%p327) target = $region24
      $region23: #{transformer_decoder_layer.4} parent=11 // pred_region
        _
      $region24: #{transformer_decoder_layer.4} parent=11 // pred_fallthru
        _
      // Predicated region
      $region25: #{transformer_decoder_layer.4} parent=11 // pred_check
        %p330 = pneg %p154
      $region26: #{transformer_decoder_layer.4} parent=11 // pred_check_branch
        %332 = sbr.rel (%p330) target = $region28
      $region27: #{transformer_decoder_layer.4} parent=11 // pred_region
        _
      $region28: #{transformer_decoder_layer.4} parent=11 // pred_fallthru
        _
      // Predicated region
      $region29: #{transformer_decoder_layer.4} parent=11 // pred_check
        %p333 = pneg %p175
      $region30: #{transformer_decoder_layer.4} parent=11 // pred_check_branch
        %335 = sbr.rel (%p333) target = $region32
      $region31: #{transformer_decoder_layer.4} parent=11 // pred_region
        _
      $region32: #{transformer_decoder_layer.4} parent=11 // pred_fallthru
        _
      // Predicated region
      $region33: #{transformer_decoder_layer.4} parent=11 // pred_check
        %p336 = pneg %p196
      $region34: #{transformer_decoder_layer.4} parent=11 // pred_check_branch
        %338 = sbr.rel (%p336) target = $region36
      $region35: #{transformer_decoder_layer.4} parent=11 // pred_region
        _
      $region36: #{transformer_decoder_layer.4} parent=11 // pred_fallthru
        _
      // Predicated region
      $region37: #{transformer_decoder_layer.4} parent=11 // pred_check
        %p339 = pneg %p217
      $region38: #{transformer_decoder_layer.4} parent=11 // pred_check_branch
        %341 = sbr.rel (%p339) target = $region40
      $region39: #{transformer_decoder_layer.4} parent=11 // pred_region
        _
      $region40: #{transformer_decoder_layer.4} parent=11 // pred_fallthru
        _
      // Predicated region
      $region41: #{transformer_decoder_layer.4} parent=11 // pred_check
        %p342 = pneg %p238
      $region42: #{transformer_decoder_layer.4} parent=11 // pred_check_branch
        %344 = sbr.rel (%p342) target = $region44
      $region43: #{transformer_decoder_layer.4} parent=11 // pred_region
        _
      $region44: #{transformer_decoder_layer.4} parent=11 // pred_fallthru
        _
      // Predicated region
      $region45: #{transformer_decoder_layer.4} parent=11 // pred_check
        %p345 = pneg %p259
      $region46: #{transformer_decoder_layer.4} parent=11 // pred_check_branch
        %347 = sbr.rel (%p345) target = $region48
      $region47: #{transformer_decoder_layer.4} parent=11 // pred_region
        _
      $region48: #{transformer_decoder_layer.4} parent=11 // pred_fallthru
        _
      // Predicated region
      $region49: #{transformer_decoder_layer.4} parent=11 // pred_check
        %p348 = pneg %p280
      $region50: #{transformer_decoder_layer.4} parent=11 // pred_check_branch
        %350 = sbr.rel (%p348) target = $region52
      $region51: #{transformer_decoder_layer.4} parent=11 // pred_region
        _
      $region52: #{transformer_decoder_layer.4} parent=11 // pred_fallthru
        _
    $region12: #{transformer_decoder_layer.4} parent=5 // pred_fallthru
      _
    %p351 = scmp.lt.s32.totalorder %s18, 2
    // Predicated region
    $region53: #{transformer_decoder_layer.4} parent=5 // pred_check
      %p352 = pneg %p351
    $region54: #{transformer_decoder_layer.4} parent=5 // pred_check_branch
      %354 = sbr.rel (%p352) target = $region56
    $region55: #{transformer_decoder_layer.4} parent=5 // pred_region
      // Predicated region
      $region57: #{transformer_decoder_layer.4} parent=55 // pred_check
        %p355 = pneg %p38
      $region58: #{transformer_decoder_layer.4} parent=55 // pred_check_branch
        %357 = sbr.rel (%p355) target = $region60
      $region59: #{transformer_decoder_layer.4} parent=55 // pred_region
        %p358 = scmp.lt.s32.totalorder %s18, 1
        %s359 = scalar_select %p358, %s18, 1
        %s360 = smul.addr %s359, 8
        %s361 = smul.addr %s360, 8
        %s362 = scalar_lea.vmem %s0, %s361
      $region60: #{transformer_decoder_layer.4} parent=55 // pred_fallthru
        _
      // Predicated region
      $region61: #{transformer_decoder_layer.4} parent=55 // pred_check
        %p363 = pneg %p64
      $region62: #{transformer_decoder_layer.4} parent=55 // pred_check_branch
        %365 = sbr.rel (%p363) target = $region64
      $region63: #{transformer_decoder_layer.4} parent=55 // pred_region
        %p366 = scmp.lt.s32.totalorder %s18, 1
        %s367 = scalar_select %p366, %s18, 1
        %s368 = smul.addr %s367, 16
        %s369 = smul.addr %s368, 8
        %s370 = scalar_lea.vmem %s1, %s369
      $region64: #{transformer_decoder_layer.4} parent=55 // pred_fallthru
        _
    $region56: #{transformer_decoder_layer.4} parent=5 // pred_fallthru
      _
    %p371 = scmp.le.s32.totalorder 1, %s18
    %p372 = scmp.lt.s32.totalorder %s18, 3
    %p373 = pnand %p371, %p372
    %p374 = pneg %p373
    // Predicated region
    $region65: #{transformer_decoder_layer.4} parent=5 // pred_check
      _
    $region66: #{transformer_decoder_layer.4} parent=5 // pred_check_branch
      %376 = sbr.rel (%p373) target = $region68
    $region67: #{transformer_decoder_layer.4} parent=5 // pred_region
      %s377 = ssub.s32 %s18, 1
      %p378 = scmp.lt.s32.totalorder %s23, 1
      %s379 = scalar_select %p378, %s23, 1
      %s380 = smul.addr %s379, 8
      %s381 = smul.addr %s380, 8
      %s382 = scalar_lea.vmem %s0, %s381
      %p383 = pneg %p44
      %p384 = pneg %p41
      %p385 = scmp.lt.s32.totalorder %s23, 1
      %s386 = scalar_select %p385, %s23, 1
      %s387 = smul.addr %s386, 16
      %s388 = smul.addr %s387, 8
      %s389 = scalar_lea.vmem %s1, %s388
      %p390 = pneg %p70
      %p391 = pneg %p67
      %p392 = pneg %p91
      %p393 = pneg %p88
      %p394 = pneg %p112
      %p395 = pneg %p109
      %p396 = pneg %p133
      %p397 = pneg %p130
      %p398 = pneg %p154
      %p399 = pneg %p151
      %p400 = pneg %p175
      %p401 = pneg %p172
      %p402 = pneg %p196
      %p403 = pneg %p193
      %p404 = pneg %p217
      %p405 = pneg %p214
      %p406 = pneg %p238
      %p407 = pneg %p235
      %p408 = pneg %p259
      %p409 = pneg %p256
      %p410 = pneg %p280
      %p411 = pneg %p277
      %p412 = pneg %p306
      %p413 = pneg %p303
      %p414 = scmp.lt.s32.totalorder %s23, 1
      %s415 = scalar_select %p414, %s23, 1
      %s416 = smul.addr %s415, 8
      %s417 = smul.addr %s416, 8
      %s418 = scalar_lea.vmem %s12, %s417
      %p419 = scmp.lt.s32.totalorder %s23, 1
      %s420 = scalar_select %p419, %s23, 1
      %s421 = smul.addr %s420, 8
      %s422 = smul.addr %s421, 8
      %s423 = scalar_lea.vmem %s0, %s422
      %p424 = scmp.lt.s32.totalorder %s23, 1
      %s425 = scalar_select %p424, %s23, 1
      %s426 = smul.addr %s425, 16
      %s427 = smul.addr %s426, 8
      %s428 = scalar_lea.vmem %s1, %s427
      %p429 = scmp.lt.s32.totalorder %s23, 1
      %s430 = scalar_select %p429, %s23, 1
      %s431 = smul.addr %s430, 8
      %s432 = smul.addr %s431, 8
      %s433 = scalar_lea.vmem %s12, %s432
      %v435 = vld [vmem:[%s423] sm:$0xff]
      %v436 = vld [vmem:[%s423 + $0x8] sm:$0xff]
      %v437 = vld [vmem:[%s423 + $0x10] sm:$0xff]
      %v438 = vld [vmem:[%s423 + $0x18] sm:$0xff]
      %v439 = vld [vmem:[%s423 + $0x20] sm:$0xff]
      %v440 = vld [vmem:[%s423 + $0x28] sm:$0xff]
      %v441 = vld [vmem:[%s423 + $0x30] sm:$0xff]
      %v442 = vld [vmem:[%s423 + $0x38] sm:$0xff]
      %v443 = vld [vmem:[%s428] sm:$0xff]
      %v444 = vld [vmem:[%s428 + $0x8] sm:$0xff]
      %v445 = vld [vmem:[%s428 + $0x10] sm:$0xff]
      %v446 = vld [vmem:[%s428 + $0x18] sm:$0xff]
      %v447 = vld [vmem:[%s428 + $0x20] sm:$0xff]
      %v448 = vld [vmem:[%s428 + $0x28] sm:$0xff]
      %v449 = vld [vmem:[%s428 + $0x30] sm:$0xff]
      %v450 = vld [vmem:[%s428 + $0x38] sm:$0xff]
      %v451 = vld [vmem:[%s428 + $0x40] sm:$0xff]
      %v452 = vld [vmem:[%s428 + $0x48] sm:$0xff]
      %v453 = vld [vmem:[%s428 + $0x50] sm:$0xff]
      %v454 = vld [vmem:[%s428 + $0x58] sm:$0xff]
      %v455 = vld [vmem:[%s428 + $0x60] sm:$0xff]
      %v456 = vld [vmem:[%s428 + $0x68] sm:$0xff]
      %v457 = vld [vmem:[%s428 + $0x70] sm:$0xff]
      %v458 = vld [vmem:[%s428 + $0x78] sm:$0xff]
      %v459 = vpack.c.bf16 %v436, %v435
      %v460 = vpack.c.bf16 %v438, %v437
      %v461 = vpack.c.bf16 %v440, %v439
      %v462 = vpack.c.bf16 %v442, %v441
      %v463 = vpack.c.bf16 %v444, %v443
      %v464 = vpack.c.bf16 %v446, %v445
      %v465 = vpack.c.bf16 %v448, %v447
      %v466 = vpack.c.bf16 %v450, %v449
      %v467 = vpack.c.bf16 %v452, %v451
      %v468 = vpack.c.bf16 %v454, %v453
      %v469 = vpack.c.bf16 %v456, %v455
      %v470 = vpack.c.bf16 %v458, %v457
      %v471 = vld [vmem:[%s2] sm:$0xf]
      %v472 = vld [vmem:[%s2 + $0x4] sm:$0xf]
      %v473 = vld [vmem:[%s2 + $0x8] sm:$0xf]
      %v474 = vld [vmem:[%s2 + $0xc] sm:$0xf]
      %v475 = vld [vmem:[%s2 + $0x10] sm:$0xf]
      %v476 = vld [vmem:[%s2 + $0x14] sm:$0xf]
      %v477 = vld [vmem:[%s2 + $0x18] sm:$0xf]
      %v478 = vld [vmem:[%s2 + $0x1c] sm:$0xf]
      %v479 = vld [vmem:[%s2 + $0x20] sm:$0xf]
      %v480 = vld [vmem:[%s2 + $0x24] sm:$0xf]
      %v481 = vld [vmem:[%s2 + $0x28] sm:$0xf]
      %v482 = vld [vmem:[%s2 + $0x2c] sm:$0xf]
      %v483 = vld [vmem:[%s2 + $0x30] sm:$0xf]
      %v484 = vld [vmem:[%s2 + $0x34] sm:$0xf]
      %v485 = vld [vmem:[%s2 + $0x38] sm:$0xf]
      %v486 = vld [vmem:[%s2 + $0x3c] sm:$0xf]
      %v487 = vld [vmem:[%s3] sm:$0x1]
      %v489 = vlaneseq
      %v490 = vshrl.u32 %v489, 7
      %v491 = vsub.s32 0, %v490
      %v492 = vrot.slane %v487, %v491
      %v510 = vunpack.c.l.b16 %v471
      %v511 = vunpack.c.l.b16 %v472
      %v512 = vunpack.c.l.b16 %v473
      %v513 = vunpack.c.l.b16 %v474
      %v514 = vunpack.c.l.b16 %v475
      %v515 = vunpack.c.l.b16 %v476
      %v516 = vunpack.c.l.b16 %v477
      %v517 = vunpack.c.l.b16 %v478
      %v518 = vunpack.c.l.b16 %v479
      %v519 = vunpack.c.l.b16 %v480
      %v520 = vunpack.c.l.b16 %v481
      %v521 = vunpack.c.l.b16 %v482
      %v522 = vunpack.c.l.b16 %v483
      %v523 = vunpack.c.l.b16 %v484
      %v524 = vunpack.c.l.b16 %v485
      %v525 = vunpack.c.l.b16 %v486
      %v526 = vpack.c.b16 %v511, %v510
      %v527 = vpack.c.b16 %v513, %v512
      %v528 = vpack.c.b16 %v515, %v514
      %v529 = vpack.c.b16 %v517, %v516
      %v530 = vpack.c.b16 %v519, %v518
      %v531 = vpack.c.b16 %v521, %v520
      %v532 = vpack.c.b16 %v523, %v522
      %v533 = vpack.c.b16 %v525, %v524
      %542 = vmatprep.subr.bf16.mxu0 0
      %543 = vmatpush1.bf16.msra.mxu0 %v526
      %544 = vmatprep.subr.bf16.mxu0 0
      %545 = vmatpush1.bf16.msra.mxu0 %v527
      %546 = vmatprep.subr.bf16.mxu0 0
      %547 = vmatpush1.bf16.msra.mxu0 %v528
      %548 = vmatprep.subr.bf16.mxu0 0
      %549 = vmatpush1.bf16.msra.mxu0 %v529
      %550 = vmatprep.subr.bf16.mxu0 0
      %551 = vmatpush1.bf16.msra.mxu0 %v530
      %552 = vmatprep.subr.bf16.mxu0 0
      %553 = vmatpush1.bf16.msra.mxu0 %v531
      %554 = vmatprep.subr.bf16.mxu0 0
      %555 = vmatpush1.bf16.msra.mxu0 %v532
      %556 = vmatprep.subr.bf16.mxu0 0
      %557 = vmatpush1.bf16.msra.mxu0 %v533
      %558 = vmatprep.subr.bf16.mxu0 0
      %559 = vmatpush1.bf16.msra.mxu0 0
      %560 = vmatprep.subr.bf16.mxu0 0
      %561 = vmatpush1.bf16.msra.mxu0 0
      %562 = vmatprep.subr.bf16.mxu0 0
      %563 = vmatpush1.bf16.msra.mxu0 0
      %564 = vmatprep.subr.bf16.mxu0 0
      %565 = vmatpush1.bf16.msra.mxu0 0
      %566 = vmatprep.subr.bf16.mxu0 0
      %567 = vmatpush1.bf16.msra.mxu0 0
      %568 = vmatprep.subr.bf16.mxu0 0
      %569 = vmatpush1.bf16.msra.mxu0 0
      %570 = vmatprep.subr.bf16.mxu0 0
      %571 = vmatpush1.bf16.msra.mxu0 0
      %572 = vmatprep.subr.bf16.mxu0 0
      %573 = vmatpush1.bf16.msra.mxu0 0
      %574 = vmatprep.mubr.bf16.mxu0 0
      %575 = vmatmul.mubr.bf16.gmra.mrb[0].mxu0 %v459
      %v576 = vpop.f32.mrb[0].mxu0
      %v577 = vadd.f32 %v492, %v576
      %v578 = vpop.f32.mrb[0].mxu0
      %v579 = vpop.f32.mrb[0].mxu0
      %v580 = vadd.f32 %v492, %v579
      %v581 = vpop.f32.mrb[0].mxu0
      %582 = vmatprep.mubr.bf16.mxu0 0
      %583 = vmatmul.mubr.bf16.gmra.mrb[0].mxu0 %v460
      %v584 = vpop.f32.mrb[0].mxu0
      %v585 = vadd.f32 %v492, %v584
      %v586 = vpop.f32.mrb[0].mxu0
      %v587 = vpop.f32.mrb[0].mxu0
      %v588 = vadd.f32 %v492, %v587
      %v589 = vpop.f32.mrb[0].mxu0
      %590 = vmatprep.mubr.bf16.mxu0 0
      %591 = vmatmul.mubr.bf16.gmra.mrb[0].mxu0 %v461
      %v592 = vpop.f32.mrb[0].mxu0
      %v593 = vadd.f32 %v492, %v592
      %v594 = vpop.f32.mrb[0].mxu0
      %v595 = vpop.f32.mrb[0].mxu0
      %v596 = vadd.f32 %v492, %v595
      %v597 = vpop.f32.mrb[0].mxu0
      %598 = vmatprep.mubr.bf16.mxu0 0
      %599 = vmatmul.mubr.bf16.gmra.mrb[0].mxu0 %v462
      %v600 = vpop.f32.mrb[0].mxu0
      %v601 = vadd.f32 %v492, %v600
      %v602 = vpop.f32.mrb[0].mxu0
      %v603 = vpop.f32.mrb[0].mxu0
      %v604 = vadd.f32 %v492, %v603
      %v605 = vpop.f32.mrb[0].mxu0
      %606 = vdwg.mxu0
      %v607 = vld [vmem:[%s4] sm:$0xf]
      %v608 = vld [vmem:[%s4 + $0x4] sm:$0xf]
      %v609 = vld [vmem:[%s4 + $0x8] sm:$0xf]
      %v610 = vld [vmem:[%s4 + $0xc] sm:$0xf]
      %v611 = vld [vmem:[%s4 + $0x10] sm:$0xf]
      %v612 = vld [vmem:[%s4 + $0x14] sm:$0xf]
      %v613 = vld [vmem:[%s4 + $0x18] sm:$0xf]
      %v614 = vld [vmem:[%s4 + $0x1c] sm:$0xf]
      %v615 = vld [vmem:[%s4 + $0x20] sm:$0xf]
      %v616 = vld [vmem:[%s4 + $0x24] sm:$0xf]
      %v617 = vld [vmem:[%s4 + $0x28] sm:$0xf]
      %v618 = vld [vmem:[%s4 + $0x2c] sm:$0xf]
      %v619 = vld [vmem:[%s4 + $0x30] sm:$0xf]
      %v620 = vld [vmem:[%s4 + $0x34] sm:$0xf]
      %v621 = vld [vmem:[%s4 + $0x38] sm:$0xf]
      %v622 = vld [vmem:[%s4 + $0x3c] sm:$0xf]
      %v623 = vld [vmem:[%s5] sm:$0x1]
      %v625 = vlaneseq
      %v626 = vshrl.u32 %v625, 7
      %v627 = vsub.s32 0, %v626
      %v628 = vrot.slane %v623, %v627
      %v646 = vunpack.c.l.b16 %v607
      %v647 = vunpack.c.l.b16 %v608
      %v648 = vunpack.c.l.b16 %v609
      %v649 = vunpack.c.l.b16 %v610
      %v650 = vunpack.c.l.b16 %v611
      %v651 = vunpack.c.l.b16 %v612
      %v652 = vunpack.c.l.b16 %v613
      %v653 = vunpack.c.l.b16 %v614
      %v654 = vunpack.c.l.b16 %v615
      %v655 = vunpack.c.l.b16 %v616
      %v656 = vunpack.c.l.b16 %v617
      %v657 = vunpack.c.l.b16 %v618
      %v658 = vunpack.c.l.b16 %v619
      %v659 = vunpack.c.l.b16 %v620
      %v660 = vunpack.c.l.b16 %v621
      %v661 = vunpack.c.l.b16 %v622
      %v662 = vpack.c.b16 %v647, %v646
      %v663 = vpack.c.b16 %v649, %v648
      %v664 = vpack.c.b16 %v651, %v650
      %v665 = vpack.c.b16 %v653, %v652
      %v666 = vpack.c.b16 %v655, %v654
      %v667 = vpack.c.b16 %v657, %v656
      %v668 = vpack.c.b16 %v659, %v658
      %v669 = vpack.c.b16 %v661, %v660
      %678 = vmatprep.subr.bf16.mxu0 0
      %679 = vmatpush1.bf16.msra.mxu0 %v662
      %680 = vmatprep.subr.bf16.mxu0 0
      %681 = vmatpush1.bf16.msra.mxu0 %v663
      %682 = vmatprep.subr.bf16.mxu0 0
      %683 = vmatpush1.bf16.msra.mxu0 %v664
      %684 = vmatprep.subr.bf16.mxu0 0
      %685 = vmatpush1.bf16.msra.mxu0 %v665
      %686 = vmatprep.subr.bf16.mxu0 0
      %687 = vmatpush1.bf16.msra.mxu0 %v666
      %688 = vmatprep.subr.bf16.mxu0 0
      %689 = vmatpush1.bf16.msra.mxu0 %v667
      %690 = vmatprep.subr.bf16.mxu0 0
      %691 = vmatpush1.bf16.msra.mxu0 %v668
      %692 = vmatprep.subr.bf16.mxu0 0
      %693 = vmatpush1.bf16.msra.mxu0 %v669
      %694 = vmatprep.subr.bf16.mxu0 0
      %695 = vmatpush1.bf16.msra.mxu0 0
      %696 = vmatprep.subr.bf16.mxu0 0
      %697 = vmatpush1.bf16.msra.mxu0 0
      %698 = vmatprep.subr.bf16.mxu0 0
      %699 = vmatpush1.bf16.msra.mxu0 0
      %700 = vmatprep.subr.bf16.mxu0 0
      %701 = vmatpush1.bf16.msra.mxu0 0
      %702 = vmatprep.subr.bf16.mxu0 0
      %703 = vmatpush1.bf16.msra.mxu0 0
      %704 = vmatprep.subr.bf16.mxu0 0
      %705 = vmatpush1.bf16.msra.mxu0 0
      %706 = vmatprep.subr.bf16.mxu0 0
      %707 = vmatpush1.bf16.msra.mxu0 0
      %708 = vmatprep.subr.bf16.mxu0 0
      %709 = vmatpush1.bf16.msra.mxu0 0
      %710 = vmatprep.mubr.bf16.mxu0 0
      %711 = vmatmul.mubr.bf16.gmra.mrb[0].mxu0 %v463
      %v712 = vpop.f32.mrb[0].mxu0
      %v713 = vadd.f32 %v628, %v712
      %v714 = vpop.f32.mrb[0].mxu0
      %v715 = vpop.f32.mrb[0].mxu0
      %v716 = vadd.f32 %v628, %v715
      %v717 = vpop.f32.mrb[0].mxu0
      %718 = vmatprep.mubr.bf16.mxu0 0
      %719 = vmatmul.mubr.bf16.gmra.mrb[0].mxu0 %v464
      %v720 = vpop.f32.mrb[0].mxu0
      %v721 = vadd.f32 %v628, %v720
      %v722 = vpop.f32.mrb[0].mxu0
      %v723 = vpop.f32.mrb[0].mxu0
      %v724 = vadd.f32 %v628, %v723
      %v725 = vpop.f32.mrb[0].mxu0
      %726 = vmatprep.mubr.bf16.mxu0 0
      %727 = vmatmul.mubr.bf16.gmra.mrb[0].mxu0 %v465
      %v728 = vpop.f32.mrb[0].mxu0
      %v729 = vadd.f32 %v628, %v728
      %v730 = vpop.f32.mrb[0].mxu0
      %v731 = vpop.f32.mrb[0].mxu0
      %v732 = vadd.f32 %v628, %v731
      %v733 = vpop.f32.mrb[0].mxu0
      %734 = vmatprep.mubr.bf16.mxu0 0
      %735 = vmatmul.mubr.bf16.gmra.mrb[0].mxu0 %v466
      %v736 = vpop.f32.mrb[0].mxu0
      %v737 = vadd.f32 %v628, %v736
      %v738 = vpop.f32.mrb[0].mxu0
      %v739 = vpop.f32.mrb[0].mxu0
      %v740 = vadd.f32 %v628, %v739
      %v741 = vpop.f32.mrb[0].mxu0
      %742 = vmatprep.mubr.bf16.mxu0 0
      %743 = vmatmul.mubr.bf16.gmra.mrb[0].mxu0 %v467
      %v744 = vpop.f32.mrb[0].mxu0
      %v745 = vadd.f32 %v628, %v744
      %v746 = vpop.f32.mrb[0].mxu0
      %v747 = vpop.f32.mrb[0].mxu0
      %v748 = vadd.f32 %v628, %v747
      %v749 = vpop.f32.mrb[0].mxu0
      %750 = vmatprep.mubr.bf16.mxu0 0
      %751 = vmatmul.mubr.bf16.gmra.mrb[0].mxu0 %v468
      %v752 = vpop.f32.mrb[0].mxu0
      %v753 = vadd.f32 %v628, %v752
      %v754 = vpop.f32.mrb[0].mxu0
      %v755 = vpop.f32.mrb[0].mxu0
      %v756 = vadd.f32 %v628, %v755
      %v757 = vpop.f32.mrb[0].mxu0
      %758 = vmatprep.mubr.bf16.mxu0 0
      %759 = vmatmul.mubr.bf16.gmra.mrb[0].mxu0 %v469
      %v760 = vpop.f32.mrb[0].mxu0
      %v761 = vadd.f32 %v628, %v760
      %v762 = vpop.f32.mrb[0].mxu0
      %v763 = vpop.f32.mrb[0].mxu0
      %v764 = vadd.f32 %v628, %v763
      %v765 = vpop.f32.mrb[0].mxu0
      %766 = vmatprep.mubr.bf16.mxu0 0
      %767 = vmatmul.mubr.bf16.gmra.mrb[0].mxu0 %v470
      %v768 = vpop.f32.mrb[0].mxu0
      %v769 = vadd.f32 %v628, %v768
      %v770 = vpop.f32.mrb[0].mxu0
      %v771 = vpop.f32.mrb[0].mxu0
      %v772 = vadd.f32 %v628, %v771
      %v773 = vpop.f32.mrb[0].mxu0
      %774 = vdwg.mxu0
      %v775 = vld [vmem:[%s6] sm:$0xf]
      %v776 = vld [vmem:[%s6 + $0x4] sm:$0xf]
      %v777 = vld [vmem:[%s6 + $0x8] sm:$0xf]
      %v778 = vld [vmem:[%s6 + $0xc] sm:$0xf]
      %v779 = vld [vmem:[%s6 + $0x10] sm:$0xf]
      %v780 = vld [vmem:[%s6 + $0x14] sm:$0xf]
      %v781 = vld [vmem:[%s6 + $0x18] sm:$0xf]
      %v782 = vld [vmem:[%s6 + $0x1c] sm:$0xf]
      %v783 = vld [vmem:[%s6 + $0x20] sm:$0xf]
      %v784 = vld [vmem:[%s6 + $0x24] sm:$0xf]
      %v785 = vld [vmem:[%s6 + $0x28] sm:$0xf]
      %v786 = vld [vmem:[%s6 + $0x2c] sm:$0xf]
      %v787 = vld [vmem:[%s6 + $0x30] sm:$0xf]
      %v788 = vld [vmem:[%s6 + $0x34] sm:$0xf]
      %v789 = vld [vmem:[%s6 + $0x38] sm:$0xf]
      %v790 = vld [vmem:[%s6 + $0x3c] sm:$0xf]
      %v791 = vld [vmem:[%s7] sm:$0x1]
      %v793 = vlaneseq
      %v794 = vshrl.u32 %v793, 7
      %v795 = vsub.s32 0, %v794
      %v796 = vrot.slane %v791, %v795
      %v814 = vunpack.c.l.b16 %v775
      %v815 = vunpack.c.l.b16 %v776
      %v816 = vunpack.c.l.b16 %v777
      %v817 = vunpack.c.l.b16 %v778
      %v818 = vunpack.c.l.b16 %v779
      %v819 = vunpack.c.l.b16 %v780
      %v820 = vunpack.c.l.b16 %v781
      %v821 = vunpack.c.l.b16 %v782
      %v822 = vunpack.c.l.b16 %v783
      %v823 = vunpack.c.l.b16 %v784
      %v824 = vunpack.c.l.b16 %v785
      %v825 = vunpack.c.l.b16 %v786
      %v826 = vunpack.c.l.b16 %v787
      %v827 = vunpack.c.l.b16 %v788
      %v828 = vunpack.c.l.b16 %v789
      %v829 = vunpack.c.l.b16 %v790
      %v830 = vpack.c.b16 %v815, %v814
      %v831 = vpack.c.b16 %v817, %v816
      %v832 = vpack.c.b16 %v819, %v818
      %v833 = vpack.c.b16 %v821, %v820
      %v834 = vpack.c.b16 %v823, %v822
      %v835 = vpack.c.b16 %v825, %v824
      %v836 = vpack.c.b16 %v827, %v826
      %v837 = vpack.c.b16 %v829, %v828
      %846 = vmatprep.subr.bf16.mxu0 0
      %847 = vmatpush1.bf16.msra.mxu0 %v830
      %848 = vmatprep.subr.bf16.mxu0 0
      %849 = vmatpush1.bf16.msra.mxu0 %v831
      %850 = vmatprep.subr.bf16.mxu0 0
      %851 = vmatpush1.bf16.msra.mxu0 %v832
      %852 = vmatprep.subr.bf16.mxu0 0
      %853 = vmatpush1.bf16.msra.mxu0 %v833
      %854 = vmatprep.subr.bf16.mxu0 0
      %855 = vmatpush1.bf16.msra.mxu0 %v834
      %856 = vmatprep.subr.bf16.mxu0 0
      %857 = vmatpush1.bf16.msra.mxu0 %v835
      %858 = vmatprep.subr.bf16.mxu0 0
      %859 = vmatpush1.bf16.msra.mxu0 %v836
      %860 = vmatprep.subr.bf16.mxu0 0
      %861 = vmatpush1.bf16.msra.mxu0 %v837
      %862 = vmatprep.subr.bf16.mxu0 0
      %863 = vmatpush1.bf16.msra.mxu0 0
      %864 = vmatprep.subr.bf16.mxu0 0
      %865 = vmatpush1.bf16.msra.mxu0 0
      %866 = vmatprep.subr.bf16.mxu0 0
      %867 = vmatpush1.bf16.msra.mxu0 0
      %868 = vmatprep.subr.bf16.mxu0 0
      %869 = vmatpush1.bf16.msra.mxu0 0
      %870 = vmatprep.subr.bf16.mxu0 0
      %871 = vmatpush1.bf16.msra.mxu0 0
      %872 = vmatprep.subr.bf16.mxu0 0
      %873 = vmatpush1.bf16.msra.mxu0 0
      %874 = vmatprep.subr.bf16.mxu0 0
      %875 = vmatpush1.bf16.msra.mxu0 0
      %876 = vmatprep.subr.bf16.mxu0 0
      %877 = vmatpush1.bf16.msra.mxu0 0
      %878 = vmatprep.mubr.bf16.mxu0 0
      %879 = vmatmul.mubr.bf16.gmra.mrb[0].mxu0 %v463
      %v880 = vpop.f32.mrb[0].mxu0
      %v881 = vadd.f32 %v796, %v880
      %v882 = vpop.f32.mrb[0].mxu0
      %v883 = vpop.f32.mrb[0].mxu0
      %v884 = vadd.f32 %v796, %v883
      %v885 = vpop.f32.mrb[0].mxu0
      %886 = vmatprep.mubr.bf16.mxu0 0
      %887 = vmatmul.mubr.bf16.gmra.mrb[0].mxu0 %v464
      %v888 = vpop.f32.mrb[0].mxu0
      %v889 = vadd.f32 %v796, %v888
      %v890 = vpop.f32.mrb[0].mxu0
      %v891 = vpop.f32.mrb[0].mxu0
      %v892 = vadd.f32 %v796, %v891
      %v893 = vpop.f32.mrb[0].mxu0
      %894 = vmatprep.mubr.bf16.mxu0 0
      %895 = vmatmul.mubr.bf16.gmra.mrb[0].mxu0 %v465
      %v896 = vpop.f32.mrb[0].mxu0
      %v897 = vadd.f32 %v796, %v896
      %v898 = vpop.f32.mrb[0].mxu0
      %v899 = vpop.f32.mrb[0].mxu0
      %v900 = vadd.f32 %v796, %v899
      %v901 = vpop.f32.mrb[0].mxu0
      %902 = vmatprep.mubr.bf16.mxu0 0
      %903 = vmatmul.mubr.bf16.gmra.mrb[0].mxu0 %v466
      %v904 = vpop.f32.mrb[0].mxu0
      %v905 = vadd.f32 %v796, %v904
      %v906 = vpop.f32.mrb[0].mxu0
      %v907 = vpop.f32.mrb[0].mxu0
      %v908 = vadd.f32 %v796, %v907
      %v909 = vpop.f32.mrb[0].mxu0
      %910 = vmatprep.mubr.bf16.mxu0 0
      %911 = vmatmul.mubr.bf16.gmra.mrb[0].mxu0 %v467
      %v912 = vpop.f32.mrb[0].mxu0
      %v913 = vadd.f32 %v796, %v912
      %v914 = vpop.f32.mrb[0].mxu0
      %v915 = vpop.f32.mrb[0].mxu0
      %v916 = vadd.f32 %v796, %v915
      %v917 = vpop.f32.mrb[0].mxu0
      %918 = vmatprep.mubr.bf16.mxu0 0
      %919 = vmatmul.mubr.bf16.gmra.mrb[0].mxu0 %v468
      %v920 = vpop.f32.mrb[0].mxu0
      %v921 = vadd.f32 %v796, %v920
      %v922 = vpop.f32.mrb[0].mxu0
      %v923 = vpop.f32.mrb[0].mxu0
      %v924 = vadd.f32 %v796, %v923
      %v925 = vpop.f32.mrb[0].mxu0
      %926 = vmatprep.mubr.bf16.mxu0 0
      %927 = vmatmul.mubr.bf16.gmra.mrb[0].mxu0 %v469
      %v928 = vpop.f32.mrb[0].mxu0
      %v929 = vadd.f32 %v796, %v928
      %v930 = vpop.f32.mrb[0].mxu0
      %v931 = vpop.f32.mrb[0].mxu0
      %v932 = vadd.f32 %v796, %v931
      %v933 = vpop.f32.mrb[0].mxu0
      %934 = vmatprep.mubr.bf16.mxu0 0
      %935 = vmatmul.mubr.bf16.gmra.mrb[0].mxu0 %v470
      %v936 = vpop.f32.mrb[0].mxu0
      %v937 = vadd.f32 %v796, %v936
      %v938 = vpop.f32.mrb[0].mxu0
      %v939 = vpop.f32.mrb[0].mxu0
      %v940 = vadd.f32 %v796, %v939
      %v941 = vpop.f32.mrb[0].mxu0
      %942 = vdwg.mxu0
      %v943 = vpack.c.bf16 %v580, %v577
      %v944 = vpack.c.bf16 %v588, %v585
      %v945 = vpack.c.bf16 %v596, %v593
      %v946 = vpack.c.bf16 %v604, %v601
      %947 = vxpose.xlu0.b32.start [1/16] %v713, 128
      %948 = vxpose.xlu0.b32.cont [2/16] %v716, 128
      %949 = vxpose.xlu0.b32.cont [3/16] %v721, 128
      %950 = vxpose.xlu0.b32.cont [4/16] %v724, 128
      %951 = vxpose.xlu0.b32.cont [5/16] %v729, 128
      %952 = vxpose.xlu0.b32.cont [6/16] %v732, 128
      %953 = vxpose.xlu0.b32.cont [7/16] %v737, 128
      %954 = vxpose.xlu0.b32.cont [8/16] %v740, 128
      %955 = vxpose.xlu0.b32.cont [9/16] %v745, 128
      %956 = vxpose.xlu0.b32.cont [10/16] %v748, 128
      %957 = vxpose.xlu0.b32.cont [11/16] %v753, 128
      %958 = vxpose.xlu0.b32.cont [12/16] %v756, 128
      %959 = vxpose.xlu0.b32.cont [13/16] %v761, 128
      %960 = vxpose.xlu0.b32.cont [14/16] %v764, 128
      %961 = vxpose.xlu0.b32.cont [15/16] %v769, 128
      %962 = vxpose.xlu0.b32.end [16/16] %v772, 128
      %v963 = vpop.trf.xlu0
      %v964 = vpop.trf.xlu0
      %v965 = vpop.trf.xlu0
      %v966 = vpop.trf.xlu0
      %v967 = vpop.trf.xlu0
      %v968 = vpop.trf.xlu0
      %v969 = vpop.trf.xlu0
      %v970 = vpop.trf.xlu0
      %v971 = vpop.trf.xlu0
      %v972 = vpop.trf.xlu0
      %v973 = vpop.trf.xlu0
      %v974 = vpop.trf.xlu0
      %v975 = vpop.trf.xlu0
      %v976 = vpop.trf.xlu0
      %v977 = vpop.trf.xlu0
      %v978 = vpop.trf.xlu0
      %v979 = vpack.c.bf16 %v964, %v963
      %v980 = vpack.c.bf16 %v884, %v881
      %v981 = vpack.c.bf16 %v892, %v889
      %v982 = vpack.c.bf16 %v900, %v897
      %v983 = vpack.c.bf16 %v908, %v905
      %v984 = vpack.c.bf16 %v916, %v913
      %v985 = vpack.c.bf16 %v924, %v921
      %v986 = vpack.c.bf16 %v932, %v929
      %v987 = vpack.c.bf16 %v940, %v937
      %vm988 = vcmask 130048
      %v990 = vsel %vm988, %v943, 0
      %v993 = vsel %vm988, %v944, 0
      %v996 = vsel %vm988, %v945, 0
      %v999 = vsel %vm988, %v946, 0
      %1001 = vmatprep.subr.bf16.mxu0 0
      %1002 = vmatpush1.bf16.msra.mxu0 %v979
      %1003 = vmatprep.subr.bf16.mxu0 0
      %1004 = vmatpush1.bf16.msra.mxu0 0
      %1005 = vmatprep.subr.bf16.mxu0 0
      %1006 = vmatpush1.bf16.msra.mxu0 0
      %1007 = vmatprep.subr.bf16.mxu0 0
      %1008 = vmatpush1.bf16.msra.mxu0 0
      %1009 = vmatprep.subr.bf16.mxu0 0
      %1010 = vmatpush1.bf16.msra.mxu0 0
      %1011 = vmatprep.subr.bf16.mxu0 0
      %1012 = vmatpush1.bf16.msra.mxu0 0
      %1013 = vmatprep.subr.bf16.mxu0 0
      %1014 = vmatpush1.bf16.msra.mxu0 0
      %1015 = vmatprep.subr.bf16.mxu0 0
      %1016 = vmatpush1.bf16.msra.mxu0 0
      %1017 = vmatprep.subr.bf16.mxu0 0
      %1018 = vmatpush1.bf16.msra.mxu0 0
      %1019 = vmatprep.subr.bf16.mxu0 0
      %1020 = vmatpush1.bf16.msra.mxu0 0
      %1021 = vmatprep.subr.bf16.mxu0 0
      %1022 = vmatpush1.bf16.msra.mxu0 0
      %1023 = vmatprep.subr.bf16.mxu0 0
      %1024 = vmatpush1.bf16.msra.mxu0 0
      %1025 = vmatprep.subr.bf16.mxu0 0
      %1026 = vmatpush1.bf16.msra.mxu0 0
      %1027 = vmatprep.subr.bf16.mxu0 0
      %1028 = vmatpush1.bf16.msra.mxu0 0
      %1029 = vmatprep.subr.bf16.mxu0 0
      %1030 = vmatpush1.bf16.msra.mxu0 0
      %1031 = vmatprep.subr.bf16.mxu0 0
      %1032 = vmatpush1.bf16.msra.mxu0 0
      %1033 = vmatprep.mubr.bf16.mxu0 0
      %1034 = vmatmul.mubr.bf16.gmra.mrb[0].mxu0 %v990
      %v1035 = vpop.f32.mrb[0].mxu0
      %v1036 = vadd.f32 0.0, %v1035
      %v1037 = vpop.f32.mrb[0].mxu0
      %v1038 = vpop.f32.mrb[0].mxu0
      %v1039 = vadd.f32 0.0, %v1038
      %v1040 = vpop.f32.mrb[0].mxu0
      %1041 = vmatprep.mubr.bf16.mxu0 0
      %1042 = vmatmul.mubr.bf16.gmra.mrb[0].mxu0 %v993
      %v1043 = vpop.f32.mrb[0].mxu0
      %v1044 = vadd.f32 0.0, %v1043
      %v1045 = vpop.f32.mrb[0].mxu0
      %v1046 = vpop.f32.mrb[0].mxu0
      %v1047 = vadd.f32 0.0, %v1046
      %v1048 = vpop.f32.mrb[0].mxu0
      %1049 = vmatprep.mubr.bf16.mxu0 0
      %1050 = vmatmul.mubr.bf16.gmra.mrb[0].mxu0 %v996
      %v1051 = vpop.f32.mrb[0].mxu0
      %v1052 = vadd.f32 0.0, %v1051
      %v1053 = vpop.f32.mrb[0].mxu0
      %v1054 = vpop.f32.mrb[0].mxu0
      %v1055 = vadd.f32 0.0, %v1054
      %v1056 = vpop.f32.mrb[0].mxu0
      %1057 = vmatprep.mubr.bf16.mxu0 0
      %1058 = vmatmul.mubr.bf16.gmra.mrb[0].mxu0 %v999
      %v1059 = vpop.f32.mrb[0].mxu0
      %v1060 = vadd.f32 0.0, %v1059
      %v1061 = vpop.f32.mrb[0].mxu0
      %v1062 = vpop.f32.mrb[0].mxu0
      %v1063 = vadd.f32 0.0, %v1062
      %v1064 = vpop.f32.mrb[0].mxu0
      %1065 = vdwg.mxu0
      %1066 = vmax.xlane.f32.xlu0 %v1036
      %v1067 = vpop.xlane.xlu0 %1066
      %1068 = vmax.xlane.f32.xlu0 %v1039
      %v1069 = vpop.xlane.xlu0 %1068
      %1070 = vmax.xlane.f32.xlu0 %v1044
      %v1071 = vpop.xlane.xlu0 %1070
      %1072 = vmax.xlane.f32.xlu0 %v1047
      %v1073 = vpop.xlane.xlu0 %1072
      %1074 = vmax.xlane.f32.xlu0 %v1052
      %v1075 = vpop.xlane.xlu0 %1074
      %1076 = vmax.xlane.f32.xlu0 %v1055
      %v1077 = vpop.xlane.xlu0 %1076
      %1078 = vmax.xlane.f32.xlu0 %v1060
      %v1079 = vpop.xlane.xlu0 %1078
      %1080 = vmax.xlane.f32.xlu0 %v1063
      %v1081 = vpop.xlane.xlu0 %1080
      %v1082 = vsub.f32 %v1036, %v1067
      %v1083 = vsub.f32 %v1039, %v1069
      %v1084 = vsub.f32 %v1044, %v1071
      %v1085 = vsub.f32 %v1047, %v1073
      %v1086 = vsub.f32 %v1052, %v1075
      %v1087 = vsub.f32 %v1055, %v1077
      %v1088 = vsub.f32 %v1060, %v1079
      %v1089 = vsub.f32 %v1063, %v1081
      %v1090 = vmul.f32 %v1082, 1.442695
      %v1091 = vpow.pop %v1090
      %v1092 = vmul.f32 %v1083, 1.442695
      %v1093 = vpow.pop %v1092
      %v1094 = vmul.f32 %v1084, 1.442695
      %v1095 = vpow.pop %v1094
      %v1096 = vmul.f32 %v1085, 1.442695
      %v1097 = vpow.pop %v1096
      %v1098 = vmul.f32 %v1086, 1.442695
      %v1099 = vpow.pop %v1098
      %v1100 = vmul.f32 %v1087, 1.442695
      %v1101 = vpow.pop %v1100
      %v1102 = vmul.f32 %v1088, 1.442695
      %v1103 = vpow.pop %v1102
      %v1104 = vmul.f32 %v1089, 1.442695
      %v1105 = vpow.pop %v1104
      %1106 = vadd.xlane.f32.xlu0 %v1091
      %v1107 = vpop.xlane.xlu0 %1106
      %1108 = vadd.xlane.f32.xlu0 %v1093
      %v1109 = vpop.xlane.xlu0 %1108
      %1110 = vadd.xlane.f32.xlu0 %v1095
      %v1111 = vpop.xlane.xlu0 %1110
      %1112 = vadd.xlane.f32.xlu0 %v1097
      %v1113 = vpop.xlane.xlu0 %1112
      %1114 = vadd.xlane.f32.xlu0 %v1099
      %v1115 = vpop.xlane.xlu0 %1114
      %1116 = vadd.xlane.f32.xlu0 %v1101
      %v1117 = vpop.xlane.xlu0 %1116
      %1118 = vadd.xlane.f32.xlu0 %v1103
      %v1119 = vpop.xlane.xlu0 %1118
      %1120 = vadd.xlane.f32.xlu0 %v1105
      %v1121 = vpop.xlane.xlu0 %1120
      %v1122 = vrcp.pop %v1107
      %v1123 = vrcp.pop %v1109
      %v1124 = vrcp.pop %v1111
      %v1125 = vrcp.pop %v1113
      %v1126 = vrcp.pop %v1115
      %v1127 = vrcp.pop %v1117
      %v1128 = vrcp.pop %v1119
      %v1129 = vrcp.pop %v1121
      %v1130 = vmul.f32 %v1091, %v1122
      %v1131 = vmul.f32 %v1093, %v1123
      %v1132 = vmul.f32 %v1095, %v1124
      %v1133 = vmul.f32 %v1097, %v1125
      %v1134 = vmul.f32 %v1099, %v1126
      %v1135 = vmul.f32 %v1101, %v1127
      %v1136 = vmul.f32 %v1103, %v1128
      %v1137 = vmul.f32 %v1105, %v1129
      %v1138 = vpack.c.bf16 %v1131, %v1130
      %v1139 = vpack.c.bf16 %v1133, %v1132
      %v1140 = vpack.c.bf16 %v1135, %v1134
      %v1141 = vpack.c.bf16 %v1137, %v1136
      %1142 = vmatprep.subr.bf16.mxu0 0
      %1143 = vmatpush1.bf16.msra.mxu0 %v980
      %1144 = vmatprep.subr.bf16.mxu0 0
      %1145 = vmatpush1.bf16.msra.mxu0 %v981
      %1146 = vmatprep.subr.bf16.mxu0 0
      %1147 = vmatpush1.bf16.msra.mxu0 %v982
      %1148 = vmatprep.subr.bf16.mxu0 0
      %1149 = vmatpush1.bf16.msra.mxu0 %v983
      %1150 = vmatprep.subr.bf16.mxu0 0
      %1151 = vmatpush1.bf16.msra.mxu0 %v984
      %1152 = vmatprep.subr.bf16.mxu0 0
      %1153 = vmatpush1.bf16.msra.mxu0 %v985
      %1154 = vmatprep.subr.bf16.mxu0 0
      %1155 = vmatpush1.bf16.msra.mxu0 %v986
      %1156 = vmatprep.subr.bf16.mxu0 0
      %1157 = vmatpush1.bf16.msra.mxu0 %v987
      %1158 = vmatprep.subr.bf16.mxu0 0
      %1159 = vmatpush1.bf16.msra.mxu0 0
      %1160 = vmatprep.subr.bf16.mxu0 0
      %1161 = vmatpush1.bf16.msra.mxu0 0
      %1162 = vmatprep.subr.bf16.mxu0 0
      %1163 = vmatpush1.bf16.msra.mxu0 0
      %1164 = vmatprep.subr.bf16.mxu0 0
      %1165 = vmatpush1.bf16.msra.mxu0 0
      %1166 = vmatprep.subr.bf16.mxu0 0
      %1167 = vmatpush1.bf16.msra.mxu0 0
      %1168 = vmatprep.subr.bf16.mxu0 0
      %1169 = vmatpush1.bf16.msra.mxu0 0
      %1170 = vmatprep.subr.bf16.mxu0 0
      %1171 = vmatpush1.bf16.msra.mxu0 0
      %1172 = vmatprep.subr.bf16.mxu0 0
      %1173 = vmatpush1.bf16.msra.mxu0 0
      %1174 = vmatprep.mubr.bf16.mxu0 0
      %1175 = vmatmul.mubr.bf16.gmra.mrb[0].mxu0 %v1138
      %v1176 = vpop.f32.mrb[0].mxu0
      %v1177 = vadd.f32 0.0, %v1176
      %v1178 = vpop.f32.mrb[0].mxu0
      %v1179 = vpop.f32.mrb[0].mxu0
      %v1180 = vadd.f32 0.0, %v1179
      %v1181 = vpop.f32.mrb[0].mxu0
      %1182 = vmatprep.mubr.bf16.mxu0 0
      %1183 = vmatmul.mubr.bf16.gmra.mrb[0].mxu0 %v1139
      %v1184 = vpop.f32.mrb[0].mxu0
      %v1185 = vadd.f32 0.0, %v1184
      %v1186 = vpop.f32.mrb[0].mxu0
      %v1187 = vpop.f32.mrb[0].mxu0
      %v1188 = vadd.f32 0.0, %v1187
      %v1189 = vpop.f32.mrb[0].mxu0
      %1190 = vmatprep.mubr.bf16.mxu0 0
      %1191 = vmatmul.mubr.bf16.gmra.mrb[0].mxu0 %v1140
      %v1192 = vpop.f32.mrb[0].mxu0
      %v1193 = vadd.f32 0.0, %v1192
      %v1194 = vpop.f32.mrb[0].mxu0
      %v1195 = vpop.f32.mrb[0].mxu0
      %v1196 = vadd.f32 0.0, %v1195
      %v1197 = vpop.f32.mrb[0].mxu0
      %1198 = vmatprep.mubr.bf16.mxu0 0
      %1199 = vmatmul.mubr.bf16.gmra.mrb[0].mxu0 %v1141
      %v1200 = vpop.f32.mrb[0].mxu0
      %v1201 = vadd.f32 0.0, %v1200
      %v1202 = vpop.f32.mrb[0].mxu0
      %v1203 = vpop.f32.mrb[0].mxu0
      %v1204 = vadd.f32 0.0, %v1203
      %v1205 = vpop.f32.mrb[0].mxu0
      %1206 = vdwg.mxu0
      %v1207 = vld [vmem:[%s8] sm:$0xff]
      %v1208 = vld [vmem:[%s8 + $0x8] sm:$0xff]
      %v1209 = vpack.c.bf16 %v1208, %v1207
      %v1210 = vpack.c.bf16 %v1180, %v1177
      %v1211 = vpack.c.bf16 %v1188, %v1185
      %v1212 = vpack.c.bf16 %v1196, %v1193
      %v1213 = vpack.c.bf16 %v1204, %v1201
      %1230 = vrot.lane.b32.xlu0 %v713, 112
      %v1231 = vpop.permute.xlu0 %1230
      %1232 = vrot.lane.b32.xlu0 %v716, 112
      %v1233 = vpop.permute.xlu0 %1232
      %1234 = vrot.lane.b32.xlu0 %v721, 112
      %v1235 = vpop.permute.xlu0 %1234
      %1236 = vrot.lane.b32.xlu0 %v724, 112
      %v1237 = vpop.permute.xlu0 %1236
      %1238 = vrot.lane.b32.xlu0 %v729, 112
      %v1239 = vpop.permute.xlu0 %1238
      %1240 = vrot.lane.b32.xlu0 %v732, 112
      %v1241 = vpop.permute.xlu0 %1240
      %1242 = vrot.lane.b32.xlu0 %v737, 112
      %v1243 = vpop.permute.xlu0 %1242
      %1244 = vrot.lane.b32.xlu0 %v740, 112
      %v1245 = vpop.permute.xlu0 %1244
      %1246 = vrot.lane.b32.xlu0 %v745, 112
      %v1247 = vpop.permute.xlu0 %1246
      %1248 = vrot.lane.b32.xlu0 %v748, 112
      %v1249 = vpop.permute.xlu0 %1248
      %1250 = vrot.lane.b32.xlu0 %v753, 112
      %v1251 = vpop.permute.xlu0 %1250
      %1252 = vrot.lane.b32.xlu0 %v756, 112
      %v1253 = vpop.permute.xlu0 %1252
      %1254 = vrot.lane.b32.xlu0 %v761, 112
      %v1255 = vpop.permute.xlu0 %1254
      %1256 = vrot.lane.b32.xlu0 %v764, 112
      %v1257 = vpop.permute.xlu0 %1256
      %1258 = vrot.lane.b32.xlu0 %v769, 112
      %v1259 = vpop.permute.xlu0 %1258
      %1260 = vrot.lane.b32.xlu0 %v772, 112
      %v1261 = vpop.permute.xlu0 %1260
      %1278 = vxpose.xlu0.b32.start [1/16] %v1231, 128
      %1279 = vxpose.xlu0.b32.cont [2/16] %v1233, 128
      %1280 = vxpose.xlu0.b32.cont [3/16] %v1235, 128
      %1281 = vxpose.xlu0.b32.cont [4/16] %v1237, 128
      %1282 = vxpose.xlu0.b32.cont [5/16] %v1239, 128
      %1283 = vxpose.xlu0.b32.cont [6/16] %v1241, 128
      %1284 = vxpose.xlu0.b32.cont [7/16] %v1243, 128
      %1285 = vxpose.xlu0.b32.cont [8/16] %v1245, 128
      %1286 = vxpose.xlu0.b32.cont [9/16] %v1247, 128
      %1287 = vxpose.xlu0.b32.cont [10/16] %v1249, 128
      %1288 = vxpose.xlu0.b32.cont [11/16] %v1251, 128
      %1289 = vxpose.xlu0.b32.cont [12/16] %v1253, 128
      %1290 = vxpose.xlu0.b32.cont [13/16] %v1255, 128
      %1291 = vxpose.xlu0.b32.cont [14/16] %v1257, 128
      %1292 = vxpose.xlu0.b32.cont [15/16] %v1259, 128
      %1293 = vxpose.xlu0.b32.end [16/16] %v1261, 128
      %v1294 = vpop.trf.xlu0
      %v1295 = vpop.trf.xlu0
      %v1296 = vpop.trf.xlu0
      %v1297 = vpop.trf.xlu0
      %v1298 = vpop.trf.xlu0
      %v1299 = vpop.trf.xlu0
      %v1300 = vpop.trf.xlu0
      %v1301 = vpop.trf.xlu0
      %v1302 = vpop.trf.xlu0
      %v1303 = vpop.trf.xlu0
      %v1304 = vpop.trf.xlu0
      %v1305 = vpop.trf.xlu0
      %v1306 = vpop.trf.xlu0
      %v1307 = vpop.trf.xlu0
      %v1308 = vpop.trf.xlu0
      %v1309 = vpop.trf.xlu0
      %v1310 = vpack.c.bf16 %v1295, %v1294
      %1315 = vrot.lane.b32.xlu0 %v943, 112
      %v1316 = vpop.permute.xlu0 %1315
      %1317 = vrot.lane.b32.xlu0 %v944, 112
      %v1318 = vpop.permute.xlu0 %1317
      %1319 = vrot.lane.b32.xlu0 %v945, 112
      %v1320 = vpop.permute.xlu0 %1319
      %1321 = vrot.lane.b32.xlu0 %v946, 112
      %v1322 = vpop.permute.xlu0 %1321
      %v1324 = vsel %vm988, %v1316, 0
      %v1327 = vsel %vm988, %v1318, 0
      %v1330 = vsel %vm988, %v1320, 0
      %v1333 = vsel %vm988, %v1322, 0
      %1335 = vmatprep.subr.bf16.mxu0 0
      %1336 = vmatpush1.bf16.msra.mxu0 %v1310
      %1337 = vmatprep.subr.bf16.mxu0 0
      %1338 = vmatpush1.bf16.msra.mxu0 0
      %1339 = vmatprep.subr.bf16.mxu0 0
      %1340 = vmatpush1.bf16.msra.mxu0 0
      %1341 = vmatprep.subr.bf16.mxu0 0
      %1342 = vmatpush1.bf16.msra.mxu0 0
      %1343 = vmatprep.subr.bf16.mxu0 0
      %1344 = vmatpush1.bf16.msra.mxu0 0
      %1345 = vmatprep.subr.bf16.mxu0 0
      %1346 = vmatpush1.bf16.msra.mxu0 0
      %1347 = vmatprep.subr.bf16.mxu0 0
      %1348 = vmatpush1.bf16.msra.mxu0 0
      %1349 = vmatprep.subr.bf16.mxu0 0
      %1350 = vmatpush1.bf16.msra.mxu0 0
      %1351 = vmatprep.subr.bf16.mxu0 0
      %1352 = vmatpush1.bf16.msra.mxu0 0
      %1353 = vmatprep.subr.bf16.mxu0 0
      %1354 = vmatpush1.bf16.msra.mxu0 0
      %1355 = vmatprep.subr.bf16.mxu0 0
      %1356 = vmatpush1.bf16.msra.mxu0 0
      %1357 = vmatprep.subr.bf16.mxu0 0
      %1358 = vmatpush1.bf16.msra.mxu0 0
      %1359 = vmatprep.subr.bf16.mxu0 0
      %1360 = vmatpush1.bf16.msra.mxu0 0
      %1361 = vmatprep.subr.bf16.mxu0 0
      %1362 = vmatpush1.bf16.msra.mxu0 0
      %1363 = vmatprep.subr.bf16.mxu0 0
      %1364 = vmatpush1.bf16.msra.mxu0 0
      %1365 = vmatprep.subr.bf16.mxu0 0
      %1366 = vmatpush1.bf16.msra.mxu0 0
      %1367 = vmatprep.mubr.bf16.mxu0 0
      %1368 = vmatmul.mubr.bf16.gmra.mrb[0].mxu0 %v1324
      %v1369 = vpop.f32.mrb[0].mxu0
      %v1370 = vadd.f32 0.0, %v1369
      %v1371 = vpop.f32.mrb[0].mxu0
      %v1372 = vpop.f32.mrb[0].mxu0
      %v1373 = vadd.f32 0.0, %v1372
      %v1374 = vpop.f32.mrb[0].mxu0
      %1375 = vmatprep.mubr.bf16.mxu0 0
      %1376 = vmatmul.mubr.bf16.gmra.mrb[0].mxu0 %v1327
      %v1377 = vpop.f32.mrb[0].mxu0
      %v1378 = vadd.f32 0.0, %v1377
      %v1379 = vpop.f32.mrb[0].mxu0
      %v1380 = vpop.f32.mrb[0].mxu0
      %v1381 = vadd.f32 0.0, %v1380
      %v1382 = vpop.f32.mrb[0].mxu0
      %1383 = vmatprep.mubr.bf16.mxu0 0
      %1384 = vmatmul.mubr.bf16.gmra.mrb[0].mxu0 %v1330
      %v1385 = vpop.f32.mrb[0].mxu0
      %v1386 = vadd.f32 0.0, %v1385
      %v1387 = vpop.f32.mrb[0].mxu0
      %v1388 = vpop.f32.mrb[0].mxu0
      %v1389 = vadd.f32 0.0, %v1388
      %v1390 = vpop.f32.mrb[0].mxu0
      %1391 = vmatprep.mubr.bf16.mxu0 0
      %1392 = vmatmul.mubr.bf16.gmra.mrb[0].mxu0 %v1333
      %v1393 = vpop.f32.mrb[0].mxu0
      %v1394 = vadd.f32 0.0, %v1393
      %v1395 = vpop.f32.mrb[0].mxu0
      %v1396 = vpop.f32.mrb[0].mxu0
      %v1397 = vadd.f32 0.0, %v1396
      %v1398 = vpop.f32.mrb[0].mxu0
      %1399 = vdwg.mxu0
      %1400 = vmax.xlane.f32.xlu0 %v1370
      %v1401 = vpop.xlane.xlu0 %1400
      %1402 = vmax.xlane.f32.xlu0 %v1373
      %v1403 = vpop.xlane.xlu0 %1402
      %1404 = vmax.xlane.f32.xlu0 %v1378
      %v1405 = vpop.xlane.xlu0 %1404
      %1406 = vmax.xlane.f32.xlu0 %v1381
      %v1407 = vpop.xlane.xlu0 %1406
      %1408 = vmax.xlane.f32.xlu0 %v1386
      %v1409 = vpop.xlane.xlu0 %1408
      %1410 = vmax.xlane.f32.xlu0 %v1389
      %v1411 = vpop.xlane.xlu0 %1410
      %1412 = vmax.xlane.f32.xlu0 %v1394
      %v1413 = vpop.xlane.xlu0 %1412
      %1414 = vmax.xlane.f32.xlu0 %v1397
      %v1415 = vpop.xlane.xlu0 %1414
      %v1416 = vsub.f32 %v1370, %v1401
      %v1417 = vsub.f32 %v1373, %v1403
      %v1418 = vsub.f32 %v1378, %v1405
      %v1419 = vsub.f32 %v1381, %v1407
      %v1420 = vsub.f32 %v1386, %v1409
      %v1421 = vsub.f32 %v1389, %v1411
      %v1422 = vsub.f32 %v1394, %v1413
      %v1423 = vsub.f32 %v1397, %v1415
      %v1424 = vmul.f32 %v1416, 1.442695
      %v1425 = vpow.pop %v1424
      %v1426 = vmul.f32 %v1417, 1.442695
      %v1427 = vpow.pop %v1426
      %v1428 = vmul.f32 %v1418, 1.442695
      %v1429 = vpow.pop %v1428
      %v1430 = vmul.f32 %v1419, 1.442695
      %v1431 = vpow.pop %v1430
      %v1432 = vmul.f32 %v1420, 1.442695
      %v1433 = vpow.pop %v1432
      %v1434 = vmul.f32 %v1421, 1.442695
      %v1435 = vpow.pop %v1434
      %v1436 = vmul.f32 %v1422, 1.442695
      %v1437 = vpow.pop %v1436
      %v1438 = vmul.f32 %v1423, 1.442695
      %v1439 = vpow.pop %v1438
      %1440 = vadd.xlane.f32.xlu0 %v1425
      %v1441 = vpop.xlane.xlu0 %1440
      %1442 = vadd.xlane.f32.xlu0 %v1427
      %v1443 = vpop.xlane.xlu0 %1442
      %1444 = vadd.xlane.f32.xlu0 %v1429
      %v1445 = vpop.xlane.xlu0 %1444
      %1446 = vadd.xlane.f32.xlu0 %v1431
      %v1447 = vpop.xlane.xlu0 %1446
      %1448 = vadd.xlane.f32.xlu0 %v1433
      %v1449 = vpop.xlane.xlu0 %1448
      %1450 = vadd.xlane.f32.xlu0 %v1435
      %v1451 = vpop.xlane.xlu0 %1450
      %1452 = vadd.xlane.f32.xlu0 %v1437
      %v1453 = vpop.xlane.xlu0 %1452
      %1454 = vadd.xlane.f32.xlu0 %v1439
      %v1455 = vpop.xlane.xlu0 %1454
      %v1456 = vrcp.pop %v1441
      %v1457 = vrcp.pop %v1443
      %v1458 = vrcp.pop %v1445
      %v1459 = vrcp.pop %v1447
      %v1460 = vrcp.pop %v1449
      %v1461 = vrcp.pop %v1451
      %v1462 = vrcp.pop %v1453
      %v1463 = vrcp.pop %v1455
      %v1464 = vmul.f32 %v1425, %v1456
      %v1465 = vmul.f32 %v1427, %v1457
      %v1466 = vmul.f32 %v1429, %v1458
      %v1467 = vmul.f32 %v1431, %v1459
      %v1468 = vmul.f32 %v1433, %v1460
      %v1469 = vmul.f32 %v1435, %v1461
      %v1470 = vmul.f32 %v1437, %v1462
      %v1471 = vmul.f32 %v1439, %v1463
      %v1472 = vpack.c.bf16 %v1465, %v1464
      %v1473 = vpack.c.bf16 %v1467, %v1466
      %v1474 = vpack.c.bf16 %v1469, %v1468
      %v1475 = vpack.c.bf16 %v1471, %v1470
      %1484 = vrot.lane.b32.xlu0 %v980, 112
      %v1485 = vpop.permute.xlu0 %1484
      %1486 = vrot.lane.b32.xlu0 %v981, 112
      %v1487 = vpop.permute.xlu0 %1486
      %1488 = vrot.lane.b32.xlu0 %v982, 112
      %v1489 = vpop.permute.xlu0 %1488
      %1490 = vrot.lane.b32.xlu0 %v983, 112
      %v1491 = vpop.permute.xlu0 %1490
      %1492 = vrot.lane.b32.xlu0 %v984, 112
      %v1493 = vpop.permute.xlu0 %1492
      %1494 = vrot.lane.b32.xlu0 %v985, 112
      %v1495 = vpop.permute.xlu0 %1494
      %1496 = vrot.lane.b32.xlu0 %v986, 112
      %v1497 = vpop.permute.xlu0 %1496
      %1498 = vrot.lane.b32.xlu0 %v987, 112
      %v1499 = vpop.permute.xlu0 %1498
      %1508 = vmatprep.subr.bf16.mxu0 0
      %1509 = vmatpush1.bf16.msra.mxu0 %v1485
      %1510 = vmatprep.subr.bf16.mxu0 0
      %1511 = vmatpush1.bf16.msra.mxu0 %v1487
      %1512 = vmatprep.subr.bf16.mxu0 0
      %1513 = vmatpush1.bf16.msra.mxu0 %v1489
      %1514 = vmatprep.subr.bf16.mxu0 0
      %1515 = vmatpush1.bf16.msra.mxu0 %v1491
      %1516 = vmatprep.subr.bf16.mxu0 0
      %1517 = vmatpush1.bf16.msra.mxu0 %v1493
      %1518 = vmatprep.subr.bf16.mxu0 0
      %1519 = vmatpush1.bf16.msra.mxu0 %v1495
      %1520 = vmatprep.subr.bf16.mxu0 0
      %1521 = vmatpush1.bf16.msra.mxu0 %v1497
      %1522 = vmatprep.subr.bf16.mxu0 0
      %1523 = vmatpush1.bf16.msra.mxu0 %v1499
      %1524 = vmatprep.subr.bf16.mxu0 0
      %1525 = vmatpush1.bf16.msra.mxu0 0
      %1526 = vmatprep.subr.bf16.mxu0 0
      %1527 = vmatpush1.bf16.msra.mxu0 0
      %1528 = vmatprep.subr.bf16.mxu0 0
      %1529 = vmatpush1.bf16.msra.mxu0 0
      %1530 = vmatprep.subr.bf16.mxu0 0
      %1531 = vmatpush1.bf16.msra.mxu0 0
      %1532 = vmatprep.subr.bf16.mxu0 0
      %1533 = vmatpush1.bf16.msra.mxu0 0
      %1534 = vmatprep.subr.bf16.mxu0 0
      %1535 = vmatpush1.bf16.msra.mxu0 0
      %1536 = vmatprep.subr.bf16.mxu0 0
      %1537 = vmatpush1.bf16.msra.mxu0 0
      %1538 = vmatprep.subr.bf16.mxu0 0
      %1539 = vmatpush1.bf16.msra.mxu0 0
      %1540 = vmatprep.mubr.bf16.mxu0 0
      %1541 = vmatmul.mubr.bf16.gmra.mrb[0].mxu0 %v1472
      %v1542 = vpop.f32.mrb[0].mxu0
      %v1543 = vadd.f32 0.0, %v1542
      %v1544 = vpop.f32.mrb[0].mxu0
      %v1545 = vpop.f32.mrb[0].mxu0
      %v1546 = vadd.f32 0.0, %v1545
      %v1547 = vpop.f32.mrb[0].mxu0
      %1548 = vmatprep.mubr.bf16.mxu0 0
      %1549 = vmatmul.mubr.bf16.gmra.mrb[0].mxu0 %v1473
      %v1550 = vpop.f32.mrb[0].mxu0
      %v1551 = vadd.f32 0.0, %v1550
      %v1552 = vpop.f32.mrb[0].mxu0
      %v1553 = vpop.f32.mrb[0].mxu0
      %v1554 = vadd.f32 0.0, %v1553
      %v1555 = vpop.f32.mrb[0].mxu0
      %1556 = vmatprep.mubr.bf16.mxu0 0
      %1557 = vmatmul.mubr.bf16.gmra.mrb[0].mxu0 %v1474
      %v1558 = vpop.f32.mrb[0].mxu0
      %v1559 = vadd.f32 0.0, %v1558
      %v1560 = vpop.f32.mrb[0].mxu0
      %v1561 = vpop.f32.mrb[0].mxu0
      %v1562 = vadd.f32 0.0, %v1561
      %v1563 = vpop.f32.mrb[0].mxu0
      %1564 = vmatprep.mubr.bf16.mxu0 0
      %1565 = vmatmul.mubr.bf16.gmra.mrb[0].mxu0 %v1475
      %v1566 = vpop.f32.mrb[0].mxu0
      %v1567 = vadd.f32 0.0, %v1566
      %v1568 = vpop.f32.mrb[0].mxu0
      %v1569 = vpop.f32.mrb[0].mxu0
      %v1570 = vadd.f32 0.0, %v1569
      %v1571 = vpop.f32.mrb[0].mxu0
      %1572 = vdwg.mxu0
      %v1573 = vld [vmem:[%s8 + $0x10] sm:$0xff]
      %v1574 = vld [vmem:[%s8 + $0x18] sm:$0xff]
      %v1575 = vpack.c.bf16 %v1574, %v1573
      %v1576 = vpack.c.bf16 %v1546, %v1543
      %v1577 = vpack.c.bf16 %v1554, %v1551
      %v1578 = vpack.c.bf16 %v1562, %v1559
      %v1579 = vpack.c.bf16 %v1570, %v1567
      %v1581 = vsel %vm988, %v1576, 0
      %v1584 = vsel %vm988, %v1577, 0
      %v1587 = vsel %vm988, %v1578, 0
      %v1590 = vsel %vm988, %v1579, 0
      %1592 = vmatprep.subr.bf16.mxu0 0
      %1593 = vmatpush1.bf16.msra.mxu0 %v1575
      %1594 = vmatprep.subr.bf16.mxu0 0
      %1595 = vmatpush1.bf16.msra.mxu0 0
      %1596 = vmatprep.subr.bf16.mxu0 0
      %1597 = vmatpush1.bf16.msra.mxu0 0
      %1598 = vmatprep.subr.bf16.mxu0 0
      %1599 = vmatpush1.bf16.msra.mxu0 0
      %1600 = vmatprep.subr.bf16.mxu0 0
      %1601 = vmatpush1.bf16.msra.mxu0 0
      %1602 = vmatprep.subr.bf16.mxu0 0
      %1603 = vmatpush1.bf16.msra.mxu0 0
      %1604 = vmatprep.subr.bf16.mxu0 0
      %1605 = vmatpush1.bf16.msra.mxu0 0
      %1606 = vmatprep.subr.bf16.mxu0 0
      %1607 = vmatpush1.bf16.msra.mxu0 0
      %1608 = vmatprep.subr.bf16.mxu0 0
      %1609 = vmatpush1.bf16.msra.mxu0 0
      %1610 = vmatprep.subr.bf16.mxu0 0
      %1611 = vmatpush1.bf16.msra.mxu0 0
      %1612 = vmatprep.subr.bf16.mxu0 0
      %1613 = vmatpush1.bf16.msra.mxu0 0
      %1614 = vmatprep.subr.bf16.mxu0 0
      %1615 = vmatpush1.bf16.msra.mxu0 0
      %1616 = vmatprep.subr.bf16.mxu0 0
      %1617 = vmatpush1.bf16.msra.mxu0 0
      %1618 = vmatprep.subr.bf16.mxu0 0
      %1619 = vmatpush1.bf16.msra.mxu0 0
      %1620 = vmatprep.subr.bf16.mxu0 0
      %1621 = vmatpush1.bf16.msra.mxu0 0
      %1622 = vmatprep.subr.bf16.mxu0 0
      %1623 = vmatpush1.bf16.msra.mxu0 0
      %1624 = vmatprep.mubr.bf16.mxu0 0
      %1625 = vmatmul.mubr.bf16.gmra.mrb[0].mxu0 %v1581
      %v1626 = vpop.f32.mrb[0].mxu0
      %v1627 = vadd.f32 0.0, %v1626
      %v1628 = vpop.f32.mrb[0].mxu0
      %v1629 = vpop.f32.mrb[0].mxu0
      %v1630 = vadd.f32 0.0, %v1629
      %v1631 = vpop.f32.mrb[0].mxu0
      %1632 = vmatprep.mubr.bf16.mxu0 0
      %1633 = vmatmul.mubr.bf16.gmra.mrb[0].mxu0 %v1584
      %v1634 = vpop.f32.mrb[0].mxu0
      %v1635 = vadd.f32 0.0, %v1634
      %v1636 = vpop.f32.mrb[0].mxu0
      %v1637 = vpop.f32.mrb[0].mxu0
      %v1638 = vadd.f32 0.0, %v1637
      %v1639 = vpop.f32.mrb[0].mxu0
      %1640 = vmatprep.mubr.bf16.mxu0 0
      %1641 = vmatmul.mubr.bf16.gmra.mrb[0].mxu0 %v1587
      %v1642 = vpop.f32.mrb[0].mxu0
      %v1643 = vadd.f32 0.0, %v1642
      %v1644 = vpop.f32.mrb[0].mxu0
      %v1645 = vpop.f32.mrb[0].mxu0
      %v1646 = vadd.f32 0.0, %v1645
      %v1647 = vpop.f32.mrb[0].mxu0
      %1648 = vmatprep.mubr.bf16.mxu0 0
      %1649 = vmatmul.mubr.bf16.gmra.mrb[0].mxu0 %v1590
      %v1650 = vpop.f32.mrb[0].mxu0
      %v1651 = vadd.f32 0.0, %v1650
      %v1652 = vpop.f32.mrb[0].mxu0
      %v1653 = vpop.f32.mrb[0].mxu0
      %v1654 = vadd.f32 0.0, %v1653
      %v1655 = vpop.f32.mrb[0].mxu0
      %1656 = vdwg.mxu0
      %v1658 = vsel %vm988, %v1210, 0
      %v1661 = vsel %vm988, %v1211, 0
      %v1664 = vsel %vm988, %v1212, 0
      %v1667 = vsel %vm988, %v1213, 0
      %1669 = vmatprep.subr.bf16.mxu0 0
      %1670 = vmatpush1.bf16.msra.mxu0 %v1209
      %1671 = vmatprep.subr.bf16.mxu0 0
      %1672 = vmatpush1.bf16.msra.mxu0 0
      %1673 = vmatprep.subr.bf16.mxu0 0
      %1674 = vmatpush1.bf16.msra.mxu0 0
      %1675 = vmatprep.subr.bf16.mxu0 0
      %1676 = vmatpush1.bf16.msra.mxu0 0
      %1677 = vmatprep.subr.bf16.mxu0 0
      %1678 = vmatpush1.bf16.msra.mxu0 0
      %1679 = vmatprep.subr.bf16.mxu0 0
      %1680 = vmatpush1.bf16.msra.mxu0 0
      %1681 = vmatprep.subr.bf16.mxu0 0
      %1682 = vmatpush1.bf16.msra.mxu0 0
      %1683 = vmatprep.subr.bf16.mxu0 0
      %1684 = vmatpush1.bf16.msra.mxu0 0
      %1685 = vmatprep.subr.bf16.mxu0 0
      %1686 = vmatpush1.bf16.msra.mxu0 0
      %1687 = vmatprep.subr.bf16.mxu0 0
      %1688 = vmatpush1.bf16.msra.mxu0 0
      %1689 = vmatprep.subr.bf16.mxu0 0
      %1690 = vmatpush1.bf16.msra.mxu0 0
      %1691 = vmatprep.subr.bf16.mxu0 0
      %1692 = vmatpush1.bf16.msra.mxu0 0
      %1693 = vmatprep.subr.bf16.mxu0 0
      %1694 = vmatpush1.bf16.msra.mxu0 0
      %1695 = vmatprep.subr.bf16.mxu0 0
      %1696 = vmatpush1.bf16.msra.mxu0 0
      %1697 = vmatprep.subr.bf16.mxu0 0
      %1698 = vmatpush1.bf16.msra.mxu0 0
      %1699 = vmatprep.subr.bf16.mxu0 0
      %1700 = vmatpush1.bf16.msra.mxu0 0
      %1701 = vmatprep.mubr.bf16.mxu0 0
      %1702 = vmatmul.mubr.bf16.gmra.mrb[0].mxu0 %v1658
      %v1703 = vpop.f32.mrb[0].mxu0
      %v1704 = vadd.f32 %v1627, %v1703
      %v1705 = vpop.f32.mrb[0].mxu0
      %v1706 = vpop.f32.mrb[0].mxu0
      %v1707 = vadd.f32 %v1630, %v1706
      %v1708 = vpop.f32.mrb[0].mxu0
      %1709 = vmatprep.mubr.bf16.mxu0 0
      %1710 = vmatmul.mubr.bf16.gmra.mrb[0].mxu0 %v1661
      %v1711 = vpop.f32.mrb[0].mxu0
      %v1712 = vadd.f32 %v1635, %v1711
      %v1713 = vpop.f32.mrb[0].mxu0
      %v1714 = vpop.f32.mrb[0].mxu0
      %v1715 = vadd.f32 %v1638, %v1714
      %v1716 = vpop.f32.mrb[0].mxu0
      %1717 = vmatprep.mubr.bf16.mxu0 0
      %1718 = vmatmul.mubr.bf16.gmra.mrb[0].mxu0 %v1664
      %v1719 = vpop.f32.mrb[0].mxu0
      %v1720 = vadd.f32 %v1643, %v1719
      %v1721 = vpop.f32.mrb[0].mxu0
      %v1722 = vpop.f32.mrb[0].mxu0
      %v1723 = vadd.f32 %v1646, %v1722
      %v1724 = vpop.f32.mrb[0].mxu0
      %1725 = vmatprep.mubr.bf16.mxu0 0
      %1726 = vmatmul.mubr.bf16.gmra.mrb[0].mxu0 %v1667
      %v1727 = vpop.f32.mrb[0].mxu0
      %v1728 = vadd.f32 %v1651, %v1727
      %v1729 = vpop.f32.mrb[0].mxu0
      %v1730 = vpop.f32.mrb[0].mxu0
      %v1731 = vadd.f32 %v1654, %v1730
      %v1732 = vpop.f32.mrb[0].mxu0
      %1733 = vdwg.mxu0
      %1734 = vrot.lane.b32.xlu0 %v713, 96
      %v1735 = vpop.permute.xlu0 %1734
      %1736 = vrot.lane.b32.xlu0 %v716, 96
      %v1737 = vpop.permute.xlu0 %1736
      %1738 = vrot.lane.b32.xlu0 %v721, 96
      %v1739 = vpop.permute.xlu0 %1738
      %1740 = vrot.lane.b32.xlu0 %v724, 96
      %v1741 = vpop.permute.xlu0 %1740
      %1742 = vrot.lane.b32.xlu0 %v729, 96
      %v1743 = vpop.permute.xlu0 %1742
      %1744 = vrot.lane.b32.xlu0 %v732, 96
      %v1745 = vpop.permute.xlu0 %1744
      %1746 = vrot.lane.b32.xlu0 %v737, 96
      %v1747 = vpop.permute.xlu0 %1746
      %1748 = vrot.lane.b32.xlu0 %v740, 96
      %v1749 = vpop.permute.xlu0 %1748
      %1750 = vrot.lane.b32.xlu0 %v745, 96
      %v1751 = vpop.permute.xlu0 %1750
      %1752 = vrot.lane.b32.xlu0 %v748, 96
      %v1753 = vpop.permute.xlu0 %1752
      %1754 = vrot.lane.b32.xlu0 %v753, 96
      %v1755 = vpop.permute.xlu0 %1754
      %1756 = vrot.lane.b32.xlu0 %v756, 96
      %v1757 = vpop.permute.xlu0 %1756
      %1758 = vrot.lane.b32.xlu0 %v761, 96
      %v1759 = vpop.permute.xlu0 %1758
      %1760 = vrot.lane.b32.xlu0 %v764, 96
      %v1761 = vpop.permute.xlu0 %1760
      %1762 = vrot.lane.b32.xlu0 %v769, 96
      %v1763 = vpop.permute.xlu0 %1762
      %1764 = vrot.lane.b32.xlu0 %v772, 96
      %v1765 = vpop.permute.xlu0 %1764
      %1782 = vxpose.xlu0.b32.start [1/16] %v1735, 128
      %1783 = vxpose.xlu0.b32.cont [2/16] %v1737, 128
      %1784 = vxpose.xlu0.b32.cont [3/16] %v1739, 128
      %1785 = vxpose.xlu0.b32.cont [4/16] %v1741, 128
      %1786 = vxpose.xlu0.b32.cont [5/16] %v1743, 128
      %1787 = vxpose.xlu0.b32.cont [6/16] %v1745, 128
      %1788 = vxpose.xlu0.b32.cont [7/16] %v1747, 128
      %1789 = vxpose.xlu0.b32.cont [8/16] %v1749, 128
      %1790 = vxpose.xlu0.b32.cont [9/16] %v1751, 128
      %1791 = vxpose.xlu0.b32.cont [10/16] %v1753, 128
      %1792 = vxpose.xlu0.b32.cont [11/16] %v1755, 128
      %1793 = vxpose.xlu0.b32.cont [12/16] %v1757, 128
      %1794 = vxpose.xlu0.b32.cont [13/16] %v1759, 128
      %1795 = vxpose.xlu0.b32.cont [14/16] %v1761, 128
      %1796 = vxpose.xlu0.b32.cont [15/16] %v1763, 128
      %1797 = vxpose.xlu0.b32.end [16/16] %v1765, 128
      %v1798 = vpop.trf.xlu0
      %v1799 = vpop.trf.xlu0
      %v1800 = vpop.trf.xlu0
      %v1801 = vpop.trf.xlu0
      %v1802 = vpop.trf.xlu0
      %v1803 = vpop.trf.xlu0
      %v1804 = vpop.trf.xlu0
      %v1805 = vpop.trf.xlu0
      %v1806 = vpop.trf.xlu0
      %v1807 = vpop.trf.xlu0
      %v1808 = vpop.trf.xlu0
      %v1809 = vpop.trf.xlu0
      %v1810 = vpop.trf.xlu0
      %v1811 = vpop.trf.xlu0
      %v1812 = vpop.trf.xlu0
      %v1813 = vpop.trf.xlu0
      %v1814 = vpack.c.bf16 %v1799, %v1798
      %1815 = vrot.lane.b32.xlu0 %v943, 96
      %v1816 = vpop.permute.xlu0 %1815
      %1817 = vrot.lane.b32.xlu0 %v944, 96
      %v1818 = vpop.permute.xlu0 %1817
      %1819 = vrot.lane.b32.xlu0 %v945, 96
      %v1820 = vpop.permute.xlu0 %1819
      %1821 = vrot.lane.b32.xlu0 %v946, 96
      %v1822 = vpop.permute.xlu0 %1821
      %v1824 = vsel %vm988, %v1816, 0
      %v1827 = vsel %vm988, %v1818, 0
      %v1830 = vsel %vm988, %v1820, 0
      %v1833 = vsel %vm988, %v1822, 0
      %1835 = vmatprep.subr.bf16.mxu0 0
      %1836 = vmatpush1.bf16.msra.mxu0 %v1814
      %1837 = vmatprep.subr.bf16.mxu0 0
      %1838 = vmatpush1.bf16.msra.mxu0 0
      %1839 = vmatprep.subr.bf16.mxu0 0
      %1840 = vmatpush1.bf16.msra.mxu0 0
      %1841 = vmatprep.subr.bf16.mxu0 0
      %1842 = vmatpush1.bf16.msra.mxu0 0
      %1843 = vmatprep.subr.bf16.mxu0 0
      %1844 = vmatpush1.bf16.msra.mxu0 0
      %1845 = vmatprep.subr.bf16.mxu0 0
      %1846 = vmatpush1.bf16.msra.mxu0 0
      %1847 = vmatprep.subr.bf16.mxu0 0
      %1848 = vmatpush1.bf16.msra.mxu0 0
      %1849 = vmatprep.subr.bf16.mxu0 0
      %1850 = vmatpush1.bf16.msra.mxu0 0
      %1851 = vmatprep.subr.bf16.mxu0 0
      %1852 = vmatpush1.bf16.msra.mxu0 0
      %1853 = vmatprep.subr.bf16.mxu0 0
      %1854 = vmatpush1.bf16.msra.mxu0 0
      %1855 = vmatprep.subr.bf16.mxu0 0
      %1856 = vmatpush1.bf16.msra.mxu0 0
      %1857 = vmatprep.subr.bf16.mxu0 0
      %1858 = vmatpush1.bf16.msra.mxu0 0
      %1859 = vmatprep.subr.bf16.mxu0 0
      %1860 = vmatpush1.bf16.msra.mxu0 0
      %1861 = vmatprep.subr.bf16.mxu0 0
      %1862 = vmatpush1.bf16.msra.mxu0 0
      %1863 = vmatprep.subr.bf16.mxu0 0
      %1864 = vmatpush1.bf16.msra.mxu0 0
      %1865 = vmatprep.subr.bf16.mxu0 0
      %1866 = vmatpush1.bf16.msra.mxu0 0
      %1867 = vmatprep.mubr.bf16.mxu0 0
      %1868 = vmatmul.mubr.bf16.gmra.mrb[0].mxu0 %v1824
      %v1869 = vpop.f32.mrb[0].mxu0
      %v1870 = vadd.f32 0.0, %v1869
      %v1871 = vpop.f32.mrb[0].mxu0
      %v1872 = vpop.f32.mrb[0].mxu0
      %v1873 = vadd.f32 0.0, %v1872
      %v1874 = vpop.f32.mrb[0].mxu0
      %1875 = vmatprep.mubr.bf16.mxu0 0
      %1876 = vmatmul.mubr.bf16.gmra.mrb[0].mxu0 %v1827
      %v1877 = vpop.f32.mrb[0].mxu0
      %v1878 = vadd.f32 0.0, %v1877
      %v1879 = vpop.f32.mrb[0].mxu0
      %v1880 = vpop.f32.mrb[0].mxu0
      %v1881 = vadd.f32 0.0, %v1880
      %v1882 = vpop.f32.mrb[0].mxu0
      %1883 = vmatprep.mubr.bf16.mxu0 0
      %1884 = vmatmul.mubr.bf16.gmra.mrb[0].mxu0 %v1830
      %v1885 = vpop.f32.mrb[0].mxu0
      %v1886 = vadd.f32 0.0, %v1885
      %v1887 = vpop.f32.mrb[0].mxu0
      %v1888 = vpop.f32.mrb[0].mxu0
      %v1889 = vadd.f32 0.0, %v1888
      %v1890 = vpop.f32.mrb[0].mxu0
      %1891 = vmatprep.mubr.bf16.mxu0 0
      %1892 = vmatmul.mubr.bf16.gmra.mrb[0].mxu0 %v1833
      %v1893 = vpop.f32.mrb[0].mxu0
      %v1894 = vadd.f32 0.0, %v1893
      %v1895 = vpop.f32.mrb[0].mxu0
      %v1896 = vpop.f32.mrb[0].mxu0
      %v1897 = vadd.f32 0.0, %v1896
      %v1898 = vpop.f32.mrb[0].mxu0
      %1899 = vdwg.mxu0
      %1900 = vmax.xlane.f32.xlu0 %v1870
      %v1901 = vpop.xlane.xlu0 %1900
      %1902 = vmax.xlane.f32.xlu0 %v1873
      %v1903 = vpop.xlane.xlu0 %1902
      %1904 = vmax.xlane.f32.xlu0 %v1878
      %v1905 = vpop.xlane.xlu0 %1904
      %1906 = vmax.xlane.f32.xlu0 %v1881
      %v1907 = vpop.xlane.xlu0 %1906
      %1908 = vmax.xlane.f32.xlu0 %v1886
      %v1909 = vpop.xlane.xlu0 %1908
      %1910 = vmax.xlane.f32.xlu0 %v1889
      %v1911 = vpop.xlane.xlu0 %1910
      %1912 = vmax.xlane.f32.xlu0 %v1894
      %v1913 = vpop.xlane.xlu0 %1912
      %1914 = vmax.xlane.f32.xlu0 %v1897
      %v1915 = vpop.xlane.xlu0 %1914
      %v1916 = vsub.f32 %v1870, %v1901
      %v1917 = vsub.f32 %v1873, %v1903
      %v1918 = vsub.f32 %v1878, %v1905
      %v1919 = vsub.f32 %v1881, %v1907
      %v1920 = vsub.f32 %v1886, %v1909
      %v1921 = vsub.f32 %v1889, %v1911
      %v1922 = vsub.f32 %v1894, %v1913
      %v1923 = vsub.f32 %v1897, %v1915
      %v1924 = vmul.f32 %v1916, 1.442695
      %v1925 = vpow.pop %v1924
      %v1926 = vmul.f32 %v1917, 1.442695
      %v1927 = vpow.pop %v1926
      %v1928 = vmul.f32 %v1918, 1.442695
      %v1929 = vpow.pop %v1928
      %v1930 = vmul.f32 %v1919, 1.442695
      %v1931 = vpow.pop %v1930
      %v1932 = vmul.f32 %v1920, 1.442695
      %v1933 = vpow.pop %v1932
      %v1934 = vmul.f32 %v1921, 1.442695
      %v1935 = vpow.pop %v1934
      %v1936 = vmul.f32 %v1922, 1.442695
      %v1937 = vpow.pop %v1936
      %v1938 = vmul.f32 %v1923, 1.442695
      %v1939 = vpow.pop %v1938
      %1940 = vadd.xlane.f32.xlu0 %v1925
      %v1941 = vpop.xlane.xlu0 %1940
      %1942 = vadd.xlane.f32.xlu0 %v1927
      %v1943 = vpop.xlane.xlu0 %1942
      %1944 = vadd.xlane.f32.xlu0 %v1929
      %v1945 = vpop.xlane.xlu0 %1944
      %1946 = vadd.xlane.f32.xlu0 %v1931
      %v1947 = vpop.xlane.xlu0 %1946
      %1948 = vadd.xlane.f32.xlu0 %v1933
      %v1949 = vpop.xlane.xlu0 %1948
      %1950 = vadd.xlane.f32.xlu0 %v1935
      %v1951 = vpop.xlane.xlu0 %1950
      %1952 = vadd.xlane.f32.xlu0 %v1937
      %v1953 = vpop.xlane.xlu0 %1952
      %1954 = vadd.xlane.f32.xlu0 %v1939
      %v1955 = vpop.xlane.xlu0 %1954
      %v1956 = vrcp.pop %v1941
      %v1957 = vrcp.pop %v1943
      %v1958 = vrcp.pop %v1945
      %v1959 = vrcp.pop %v1947
      %v1960 = vrcp.pop %v1949
      %v1961 = vrcp.pop %v1951
      %v1962 = vrcp.pop %v1953
      %v1963 = vrcp.pop %v1955
      %v1964 = vmul.f32 %v1925, %v1956
      %v1965 = vmul.f32 %v1927, %v1957
      %v1966 = vmul.f32 %v1929, %v1958
      %v1967 = vmul.f32 %v1931, %v1959
      %v1968 = vmul.f32 %v1933, %v1960
      %v1969 = vmul.f32 %v1935, %v1961
      %v1970 = vmul.f32 %v1937, %v1962
      %v1971 = vmul.f32 %v1939, %v1963
      %v1972 = vpack.c.bf16 %v1965, %v1964
      %v1973 = vpack.c.bf16 %v1967, %v1966
      %v1974 = vpack.c.bf16 %v1969, %v1968
      %v1975 = vpack.c.bf16 %v1971, %v1970
      %1976 = vrot.lane.b32.xlu0 %v980, 96
      %v1977 = vpop.permute.xlu0 %1976
      %1978 = vrot.lane.b32.xlu0 %v981, 96
      %v1979 = vpop.permute.xlu0 %1978
      %1980 = vrot.lane.b32.xlu0 %v982, 96
      %v1981 = vpop.permute.xlu0 %1980
      %1982 = vrot.lane.b32.xlu0 %v983, 96
      %v1983 = vpop.permute.xlu0 %1982
      %1984 = vrot.lane.b32.xlu0 %v984, 96
      %v1985 = vpop.permute.xlu0 %1984
      %1986 = vrot.lane.b32.xlu0 %v985, 96
      %v1987 = vpop.permute.xlu0 %1986
      %1988 = vrot.lane.b32.xlu0 %v986, 96
      %v1989 = vpop.permute.xlu0 %1988
      %1990 = vrot.lane.b32.xlu0 %v987, 96
      %v1991 = vpop.permute.xlu0 %1990
      %2000 = vmatprep.subr.bf16.mxu0 0
      %2001 = vmatpush1.bf16.msra.mxu0 %v1977
      %2002 = vmatprep.subr.bf16.mxu0 0
      %2003 = vmatpush1.bf16.msra.mxu0 %v1979
      %2004 = vmatprep.subr.bf16.mxu0 0
      %2005 = vmatpush1.bf16.msra.mxu0 %v1981
      %2006 = vmatprep.subr.bf16.mxu0 0
      %2007 = vmatpush1.bf16.msra.mxu0 %v1983
      %2008 = vmatprep.subr.bf16.mxu0 0
      %2009 = vmatpush1.bf16.msra.mxu0 %v1985
      %2010 = vmatprep.subr.bf16.mxu0 0
      %2011 = vmatpush1.bf16.msra.mxu0 %v1987
      %2012 = vmatprep.subr.bf16.mxu0 0
      %2013 = vmatpush1.bf16.msra.mxu0 %v1989
      %2014 = vmatprep.subr.bf16.mxu0 0
      %2015 = vmatpush1.bf16.msra.mxu0 %v1991
      %2016 = vmatprep.subr.bf16.mxu0 0
      %2017 = vmatpush1.bf16.msra.mxu0 0
      %2018 = vmatprep.subr.bf16.mxu0 0
      %2019 = vmatpush1.bf16.msra.mxu0 0
      %2020 = vmatprep.subr.bf16.mxu0 0
      %2021 = vmatpush1.bf16.msra.mxu0 0
      %2022 = vmatprep.subr.bf16.mxu0 0
      %2023 = vmatpush1.bf16.msra.mxu0 0
      %2024 = vmatprep.subr.bf16.mxu0 0
      %2025 = vmatpush1.bf16.msra.mxu0 0
      %2026 = vmatprep.subr.bf16.mxu0 0
      %2027 = vmatpush1.bf16.msra.mxu0 0
      %2028 = vmatprep.subr.bf16.mxu0 0
      %2029 = vmatpush1.bf16.msra.mxu0 0
      %2030 = vmatprep.subr.bf16.mxu0 0
      %2031 = vmatpush1.bf16.msra.mxu0 0
      %2032 = vmatprep.mubr.bf16.mxu0 0
      %2033 = vmatmul.mubr.bf16.gmra.mrb[0].mxu0 %v1972
      %v2034 = vpop.f32.mrb[0].mxu0
      %v2035 = vadd.f32 0.0, %v2034
      %v2036 = vpop.f32.mrb[0].mxu0
      %v2037 = vpop.f32.mrb[0].mxu0
      %v2038 = vadd.f32 0.0, %v2037
      %v2039 = vpop.f32.mrb[0].mxu0
      %2040 = vmatprep.mubr.bf16.mxu0 0
      %2041 = vmatmul.mubr.bf16.gmra.mrb[0].mxu0 %v1973
      %v2042 = vpop.f32.mrb[0].mxu0
      %v2043 = vadd.f32 0.0, %v2042
      %v2044 = vpop.f32.mrb[0].mxu0
      %v2045 = vpop.f32.mrb[0].mxu0
      %v2046 = vadd.f32 0.0, %v2045
      %v2047 = vpop.f32.mrb[0].mxu0
      %2048 = vmatprep.mubr.bf16.mxu0 0
      %2049 = vmatmul.mubr.bf16.gmra.mrb[0].mxu0 %v1974
      %v2050 = vpop.f32.mrb[0].mxu0
      %v2051 = vadd.f32 0.0, %v2050
      %v2052 = vpop.f32.mrb[0].mxu0
      %v2053 = vpop.f32.mrb[0].mxu0
      %v2054 = vadd.f32 0.0, %v2053
      %v2055 = vpop.f32.mrb[0].mxu0
      %2056 = vmatprep.mubr.bf16.mxu0 0
      %2057 = vmatmul.mubr.bf16.gmra.mrb[0].mxu0 %v1975
      %v2058 = vpop.f32.mrb[0].mxu0
      %v2059 = vadd.f32 0.0, %v2058
      %v2060 = vpop.f32.mrb[0].mxu0
      %v2061 = vpop.f32.mrb[0].mxu0
      %v2062 = vadd.f32 0.0, %v2061
      %v2063 = vpop.f32.mrb[0].mxu0
      %2064 = vdwg.mxu0
      %v2065 = vld [vmem:[%s8 + $0x20] sm:$0xff]
      %v2066 = vld [vmem:[%s8 + $0x28] sm:$0xff]
      %v2067 = vpack.c.bf16 %v2066, %v2065
      %v2068 = vpack.c.bf16 %v2038, %v2035
      %v2069 = vpack.c.bf16 %v2046, %v2043
      %v2070 = vpack.c.bf16 %v2054, %v2051
      %v2071 = vpack.c.bf16 %v2062, %v2059
      %v2073 = vsel %vm988, %v2068, 0
      %v2076 = vsel %vm988, %v2069, 0
      %v2079 = vsel %vm988, %v2070, 0
      %v2082 = vsel %vm988, %v2071, 0
      %2084 = vmatprep.subr.bf16.mxu0 0
      %2085 = vmatpush1.bf16.msra.mxu0 %v2067
      %2086 = vmatprep.subr.bf16.mxu0 0
      %2087 = vmatpush1.bf16.msra.mxu0 0
      %2088 = vmatprep.subr.bf16.mxu0 0
      %2089 = vmatpush1.bf16.msra.mxu0 0
      %2090 = vmatprep.subr.bf16.mxu0 0
      %2091 = vmatpush1.bf16.msra.mxu0 0
      %2092 = vmatprep.subr.bf16.mxu0 0
      %2093 = vmatpush1.bf16.msra.mxu0 0
      %2094 = vmatprep.subr.bf16.mxu0 0
      %2095 = vmatpush1.bf16.msra.mxu0 0
      %2096 = vmatprep.subr.bf16.mxu0 0
      %2097 = vmatpush1.bf16.msra.mxu0 0
      %2098 = vmatprep.subr.bf16.mxu0 0
      %2099 = vmatpush1.bf16.msra.mxu0 0
      %2100 = vmatprep.subr.bf16.mxu0 0
      %2101 = vmatpush1.bf16.msra.mxu0 0
      %2102 = vmatprep.subr.bf16.mxu0 0
      %2103 = vmatpush1.bf16.msra.mxu0 0
      %2104 = vmatprep.subr.bf16.mxu0 0
      %2105 = vmatpush1.bf16.msra.mxu0 0
      %2106 = vmatprep.subr.bf16.mxu0 0
      %2107 = vmatpush1.bf16.msra.mxu0 0
      %2108 = vmatprep.subr.bf16.mxu0 0
      %2109 = vmatpush1.bf16.msra.mxu0 0
      %2110 = vmatprep.subr.bf16.mxu0 0
      %2111 = vmatpush1.bf16.msra.mxu0 0
      %2112 = vmatprep.subr.bf16.mxu0 0
      %2113 = vmatpush1.bf16.msra.mxu0 0
      %2114 = vmatprep.subr.bf16.mxu0 0
      %2115 = vmatpush1.bf16.msra.mxu0 0
      %2116 = vmatprep.mubr.bf16.mxu0 0
      %2117 = vmatmul.mubr.bf16.gmra.mrb[0].mxu0 %v2073
      %v2118 = vpop.f32.mrb[0].mxu0
      %v2119 = vadd.f32 0.0, %v2118
      %v2120 = vpop.f32.mrb[0].mxu0
      %v2121 = vpop.f32.mrb[0].mxu0
      %v2122 = vadd.f32 0.0, %v2121
      %v2123 = vpop.f32.mrb[0].mxu0
      %2124 = vmatprep.mubr.bf16.mxu0 0
      %2125 = vmatmul.mubr.bf16.gmra.mrb[0].mxu0 %v2076
      %v2126 = vpop.f32.mrb[0].mxu0
      %v2127 = vadd.f32 0.0, %v2126
      %v2128 = vpop.f32.mrb[0].mxu0
      %v2129 = vpop.f32.mrb[0].mxu0
      %v2130 = vadd.f32 0.0, %v2129
      %v2131 = vpop.f32.mrb[0].mxu0
      %2132 = vmatprep.mubr.bf16.mxu0 0
      %2133 = vmatmul.mubr.bf16.gmra.mrb[0].mxu0 %v2079
      %v2134 = vpop.f32.mrb[0].mxu0
      %v2135 = vadd.f32 0.0, %v2134
      %v2136 = vpop.f32.mrb[0].mxu0
      %v2137 = vpop.f32.mrb[0].mxu0
      %v2138 = vadd.f32 0.0, %v2137
      %v2139 = vpop.f32.mrb[0].mxu0
      %2140 = vmatprep.mubr.bf16.mxu0 0
      %2141 = vmatmul.mubr.bf16.gmra.mrb[0].mxu0 %v2082
      %v2142 = vpop.f32.mrb[0].mxu0
      %v2143 = vadd.f32 0.0, %v2142
      %v2144 = vpop.f32.mrb[0].mxu0
      %v2145 = vpop.f32.mrb[0].mxu0
      %v2146 = vadd.f32 0.0, %v2145
      %v2147 = vpop.f32.mrb[0].mxu0
      %2148 = vdwg.mxu0
      %v2149 = vadd.f32 %v1704, %v2119
      %v2150 = vadd.f32 %v1707, %v2122
      %v2151 = vadd.f32 %v1712, %v2127
      %v2152 = vadd.f32 %v1715, %v2130
      %v2153 = vadd.f32 %v1720, %v2135
      %v2154 = vadd.f32 %v1723, %v2138
      %v2155 = vadd.f32 %v1728, %v2143
      %v2156 = vadd.f32 %v1731, %v2146
      %2157 = vrot.lane.b32.xlu0 %v713, 80
      %v2158 = vpop.permute.xlu0 %2157
      %2159 = vrot.lane.b32.xlu0 %v716, 80
      %v2160 = vpop.permute.xlu0 %2159
      %2161 = vrot.lane.b32.xlu0 %v721, 80
      %v2162 = vpop.permute.xlu0 %2161
      %2163 = vrot.lane.b32.xlu0 %v724, 80
      %v2164 = vpop.permute.xlu0 %2163
      %2165 = vrot.lane.b32.xlu0 %v729, 80
      %v2166 = vpop.permute.xlu0 %2165
      %2167 = vrot.lane.b32.xlu0 %v732, 80
      %v2168 = vpop.permute.xlu0 %2167
      %2169 = vrot.lane.b32.xlu0 %v737, 80
      %v2170 = vpop.permute.xlu0 %2169
      %2171 = vrot.lane.b32.xlu0 %v740, 80
      %v2172 = vpop.permute.xlu0 %2171
      %2173 = vrot.lane.b32.xlu0 %v745, 80
      %v2174 = vpop.permute.xlu0 %2173
      %2175 = vrot.lane.b32.xlu0 %v748, 80
      %v2176 = vpop.permute.xlu0 %2175
      %2177 = vrot.lane.b32.xlu0 %v753, 80
      %v2178 = vpop.permute.xlu0 %2177
      %2179 = vrot.lane.b32.xlu0 %v756, 80
      %v2180 = vpop.permute.xlu0 %2179
      %2181 = vrot.lane.b32.xlu0 %v761, 80
      %v2182 = vpop.permute.xlu0 %2181
      %2183 = vrot.lane.b32.xlu0 %v764, 80
      %v2184 = vpop.permute.xlu0 %2183
      %2185 = vrot.lane.b32.xlu0 %v769, 80
      %v2186 = vpop.permute.xlu0 %2185
      %2187 = vrot.lane.b32.xlu0 %v772, 80
      %v2188 = vpop.permute.xlu0 %2187
      %2205 = vxpose.xlu0.b32.start [1/16] %v2158, 128
      %2206 = vxpose.xlu0.b32.cont [2/16] %v2160, 128
      %2207 = vxpose.xlu0.b32.cont [3/16] %v2162, 128
      %2208 = vxpose.xlu0.b32.cont [4/16] %v2164, 128
      %2209 = vxpose.xlu0.b32.cont [5/16] %v2166, 128
      %2210 = vxpose.xlu0.b32.cont [6/16] %v2168, 128
      %2211 = vxpose.xlu0.b32.cont [7/16] %v2170, 128
      %2212 = vxpose.xlu0.b32.cont [8/16] %v2172, 128
      %2213 = vxpose.xlu0.b32.cont [9/16] %v2174, 128
      %2214 = vxpose.xlu0.b32.cont [10/16] %v2176, 128
      %2215 = vxpose.xlu0.b32.cont [11/16] %v2178, 128
      %2216 = vxpose.xlu0.b32.cont [12/16] %v2180, 128
      %2217 = vxpose.xlu0.b32.cont [13/16] %v2182, 128
      %2218 = vxpose.xlu0.b32.cont [14/16] %v2184, 128
      %2219 = vxpose.xlu0.b32.cont [15/16] %v2186, 128
      %2220 = vxpose.xlu0.b32.end [16/16] %v2188, 128
      %v2221 = vpop.trf.xlu0
      %v2222 = vpop.trf.xlu0
      %v2223 = vpop.trf.xlu0
      %v2224 = vpop.trf.xlu0
      %v2225 = vpop.trf.xlu0
      %v2226 = vpop.trf.xlu0
      %v2227 = vpop.trf.xlu0
      %v2228 = vpop.trf.xlu0
      %v2229 = vpop.trf.xlu0
      %v2230 = vpop.trf.xlu0
      %v2231 = vpop.trf.xlu0
      %v2232 = vpop.trf.xlu0
      %v2233 = vpop.trf.xlu0
      %v2234 = vpop.trf.xlu0
      %v2235 = vpop.trf.xlu0
      %v2236 = vpop.trf.xlu0
      %v2237 = vpack.c.bf16 %v2222, %v2221
      %2238 = vrot.lane.b32.xlu0 %v943, 80
      %v2239 = vpop.permute.xlu0 %2238
      %2240 = vrot.lane.b32.xlu0 %v944, 80
      %v2241 = vpop.permute.xlu0 %2240
      %2242 = vrot.lane.b32.xlu0 %v945, 80
      %v2243 = vpop.permute.xlu0 %2242
      %2244 = vrot.lane.b32.xlu0 %v946, 80
      %v2245 = vpop.permute.xlu0 %2244
      %v2247 = vsel %vm988, %v2239, 0
      %v2250 = vsel %vm988, %v2241, 0
      %v2253 = vsel %vm988, %v2243, 0
      %v2256 = vsel %vm988, %v2245, 0
      %2258 = vmatprep.subr.bf16.mxu0 0
      %2259 = vmatpush1.bf16.msra.mxu0 %v2237
      %2260 = vmatprep.subr.bf16.mxu0 0
      %2261 = vmatpush1.bf16.msra.mxu0 0
      %2262 = vmatprep.subr.bf16.mxu0 0
      %2263 = vmatpush1.bf16.msra.mxu0 0
      %2264 = vmatprep.subr.bf16.mxu0 0
      %2265 = vmatpush1.bf16.msra.mxu0 0
      %2266 = vmatprep.subr.bf16.mxu0 0
      %2267 = vmatpush1.bf16.msra.mxu0 0
      %2268 = vmatprep.subr.bf16.mxu0 0
      %2269 = vmatpush1.bf16.msra.mxu0 0
      %2270 = vmatprep.subr.bf16.mxu0 0
      %2271 = vmatpush1.bf16.msra.mxu0 0
      %2272 = vmatprep.subr.bf16.mxu0 0
      %2273 = vmatpush1.bf16.msra.mxu0 0
      %2274 = vmatprep.subr.bf16.mxu0 0
      %2275 = vmatpush1.bf16.msra.mxu0 0
      %2276 = vmatprep.subr.bf16.mxu0 0
      %2277 = vmatpush1.bf16.msra.mxu0 0
      %2278 = vmatprep.subr.bf16.mxu0 0
      %2279 = vmatpush1.bf16.msra.mxu0 0
      %2280 = vmatprep.subr.bf16.mxu0 0
      %2281 = vmatpush1.bf16.msra.mxu0 0
      %2282 = vmatprep.subr.bf16.mxu0 0
      %2283 = vmatpush1.bf16.msra.mxu0 0
      %2284 = vmatprep.subr.bf16.mxu0 0
      %2285 = vmatpush1.bf16.msra.mxu0 0
      %2286 = vmatprep.subr.bf16.mxu0 0
      %2287 = vmatpush1.bf16.msra.mxu0 0
      %2288 = vmatprep.subr.bf16.mxu0 0
      %2289 = vmatpush1.bf16.msra.mxu0 0
      %2290 = vmatprep.mubr.bf16.mxu0 0
      %2291 = vmatmul.mubr.bf16.gmra.mrb[0].mxu0 %v2247
      %v2292 = vpop.f32.mrb[0].mxu0
      %v2293 = vadd.f32 0.0, %v2292
      %v2294 = vpop.f32.mrb[0].mxu0
      %v2295 = vpop.f32.mrb[0].mxu0
      %v2296 = vadd.f32 0.0, %v2295
      %v2297 = vpop.f32.mrb[0].mxu0
      %2298 = vmatprep.mubr.bf16.mxu0 0
      %2299 = vmatmul.mubr.bf16.gmra.mrb[0].mxu0 %v2250
      %v2300 = vpop.f32.mrb[0].mxu0
      %v2301 = vadd.f32 0.0, %v2300
      %v2302 = vpop.f32.mrb[0].mxu0
      %v2303 = vpop.f32.mrb[0].mxu0
      %v2304 = vadd.f32 0.0, %v2303
      %v2305 = vpop.f32.mrb[0].mxu0
      %2306 = vmatprep.mubr.bf16.mxu0 0
      %2307 = vmatmul.mubr.bf16.gmra.mrb[0].mxu0 %v2253
      %v2308 = vpop.f32.mrb[0].mxu0
      %v2309 = vadd.f32 0.0, %v2308
      %v2310 = vpop.f32.mrb[0].mxu0
      %v2311 = vpop.f32.mrb[0].mxu0
      %v2312 = vadd.f32 0.0, %v2311
      %v2313 = vpop.f32.mrb[0].mxu0
      %2314 = vmatprep.mubr.bf16.mxu0 0
      %2315 = vmatmul.mubr.bf16.gmra.mrb[0].mxu0 %v2256
      %v2316 = vpop.f32.mrb[0].mxu0
      %v2317 = vadd.f32 0.0, %v2316
      %v2318 = vpop.f32.mrb[0].mxu0
      %v2319 = vpop.f32.mrb[0].mxu0
      %v2320 = vadd.f32 0.0, %v2319
      %v2321 = vpop.f32.mrb[0].mxu0
      %2322 = vdwg.mxu0
      %2323 = vmax.xlane.f32.xlu0 %v2293
      %v2324 = vpop.xlane.xlu0 %2323
      %2325 = vmax.xlane.f32.xlu0 %v2296
      %v2326 = vpop.xlane.xlu0 %2325
      %2327 = vmax.xlane.f32.xlu0 %v2301
      %v2328 = vpop.xlane.xlu0 %2327
      %2329 = vmax.xlane.f32.xlu0 %v2304
      %v2330 = vpop.xlane.xlu0 %2329
      %2331 = vmax.xlane.f32.xlu0 %v2309
      %v2332 = vpop.xlane.xlu0 %2331
      %2333 = vmax.xlane.f32.xlu0 %v2312
      %v2334 = vpop.xlane.xlu0 %2333
      %2335 = vmax.xlane.f32.xlu0 %v2317
      %v2336 = vpop.xlane.xlu0 %2335
      %2337 = vmax.xlane.f32.xlu0 %v2320
      %v2338 = vpop.xlane.xlu0 %2337
      %v2339 = vsub.f32 %v2293, %v2324
      %v2340 = vsub.f32 %v2296, %v2326
      %v2341 = vsub.f32 %v2301, %v2328
      %v2342 = vsub.f32 %v2304, %v2330
      %v2343 = vsub.f32 %v2309, %v2332
      %v2344 = vsub.f32 %v2312, %v2334
      %v2345 = vsub.f32 %v2317, %v2336
      %v2346 = vsub.f32 %v2320, %v2338
      %v2347 = vmul.f32 %v2339, 1.442695
      %v2348 = vpow.pop %v2347
      %v2349 = vmul.f32 %v2340, 1.442695
      %v2350 = vpow.pop %v2349
      %v2351 = vmul.f32 %v2341, 1.442695
      %v2352 = vpow.pop %v2351
      %v2353 = vmul.f32 %v2342, 1.442695
      %v2354 = vpow.pop %v2353
      %v2355 = vmul.f32 %v2343, 1.442695
      %v2356 = vpow.pop %v2355
      %v2357 = vmul.f32 %v2344, 1.442695
      %v2358 = vpow.pop %v2357
      %v2359 = vmul.f32 %v2345, 1.442695
      %v2360 = vpow.pop %v2359
      %v2361 = vmul.f32 %v2346, 1.442695
      %v2362 = vpow.pop %v2361
      %2363 = vadd.xlane.f32.xlu0 %v2348
      %v2364 = vpop.xlane.xlu0 %2363
      %2365 = vadd.xlane.f32.xlu0 %v2350
      %v2366 = vpop.xlane.xlu0 %2365
      %2367 = vadd.xlane.f32.xlu0 %v2352
      %v2368 = vpop.xlane.xlu0 %2367
      %2369 = vadd.xlane.f32.xlu0 %v2354
      %v2370 = vpop.xlane.xlu0 %2369
      %2371 = vadd.xlane.f32.xlu0 %v2356
      %v2372 = vpop.xlane.xlu0 %2371
      %2373 = vadd.xlane.f32.xlu0 %v2358
      %v2374 = vpop.xlane.xlu0 %2373
      %2375 = vadd.xlane.f32.xlu0 %v2360
      %v2376 = vpop.xlane.xlu0 %2375
      %2377 = vadd.xlane.f32.xlu0 %v2362
      %v2378 = vpop.xlane.xlu0 %2377
      %v2379 = vrcp.pop %v2364
      %v2380 = vrcp.pop %v2366
      %v2381 = vrcp.pop %v2368
      %v2382 = vrcp.pop %v2370
      %v2383 = vrcp.pop %v2372
      %v2384 = vrcp.pop %v2374
      %v2385 = vrcp.pop %v2376
      %v2386 = vrcp.pop %v2378
      %v2387 = vmul.f32 %v2348, %v2379
      %v2388 = vmul.f32 %v2350, %v2380
      %v2389 = vmul.f32 %v2352, %v2381
      %v2390 = vmul.f32 %v2354, %v2382
      %v2391 = vmul.f32 %v2356, %v2383
      %v2392 = vmul.f32 %v2358, %v2384
      %v2393 = vmul.f32 %v2360, %v2385
      %v2394 = vmul.f32 %v2362, %v2386
      %v2395 = vpack.c.bf16 %v2388, %v2387
      %v2396 = vpack.c.bf16 %v2390, %v2389
      %v2397 = vpack.c.bf16 %v2392, %v2391
      %v2398 = vpack.c.bf16 %v2394, %v2393
      %2399 = vrot.lane.b32.xlu0 %v980, 80
      %v2400 = vpop.permute.xlu0 %2399
      %2401 = vrot.lane.b32.xlu0 %v981, 80
      %v2402 = vpop.permute.xlu0 %2401
      %2403 = vrot.lane.b32.xlu0 %v982, 80
      %v2404 = vpop.permute.xlu0 %2403
      %2405 = vrot.lane.b32.xlu0 %v983, 80
      %v2406 = vpop.permute.xlu0 %2405
      %2407 = vrot.lane.b32.xlu0 %v984, 80
      %v2408 = vpop.permute.xlu0 %2407
      %2409 = vrot.lane.b32.xlu0 %v985, 80
      %v2410 = vpop.permute.xlu0 %2409
      %2411 = vrot.lane.b32.xlu0 %v986, 80
      %v2412 = vpop.permute.xlu0 %2411
      %2413 = vrot.lane.b32.xlu0 %v987, 80
      %v2414 = vpop.permute.xlu0 %2413
      %2423 = vmatprep.subr.bf16.mxu0 0
      %2424 = vmatpush1.bf16.msra.mxu0 %v2400
      %2425 = vmatprep.subr.bf16.mxu0 0
      %2426 = vmatpush1.bf16.msra.mxu0 %v2402
      %2427 = vmatprep.subr.bf16.mxu0 0
      %2428 = vmatpush1.bf16.msra.mxu0 %v2404
      %2429 = vmatprep.subr.bf16.mxu0 0
      %2430 = vmatpush1.bf16.msra.mxu0 %v2406
      %2431 = vmatprep.subr.bf16.mxu0 0
      %2432 = vmatpush1.bf16.msra.mxu0 %v2408
      %2433 = vmatprep.subr.bf16.mxu0 0
      %2434 = vmatpush1.bf16.msra.mxu0 %v2410
      %2435 = vmatprep.subr.bf16.mxu0 0
      %2436 = vmatpush1.bf16.msra.mxu0 %v2412
      %2437 = vmatprep.subr.bf16.mxu0 0
      %2438 = vmatpush1.bf16.msra.mxu0 %v2414
      %2439 = vmatprep.subr.bf16.mxu0 0
      %2440 = vmatpush1.bf16.msra.mxu0 0
      %2441 = vmatprep.subr.bf16.mxu0 0
      %2442 = vmatpush1.bf16.msra.mxu0 0
      %2443 = vmatprep.subr.bf16.mxu0 0
      %2444 = vmatpush1.bf16.msra.mxu0 0
      %2445 = vmatprep.subr.bf16.mxu0 0
      %2446 = vmatpush1.bf16.msra.mxu0 0
      %2447 = vmatprep.subr.bf16.mxu0 0
      %2448 = vmatpush1.bf16.msra.mxu0 0
      %2449 = vmatprep.subr.bf16.mxu0 0
      %2450 = vmatpush1.bf16.msra.mxu0 0
      %2451 = vmatprep.subr.bf16.mxu0 0
      %2452 = vmatpush1.bf16.msra.mxu0 0
      %2453 = vmatprep.subr.bf16.mxu0 0
      %2454 = vmatpush1.bf16.msra.mxu0 0
      %2455 = vmatprep.mubr.bf16.mxu0 0
      %2456 = vmatmul.mubr.bf16.gmra.mrb[0].mxu0 %v2395
      %v2457 = vpop.f32.mrb[0].mxu0
      %v2458 = vadd.f32 0.0, %v2457
      %v2459 = vpop.f32.mrb[0].mxu0
      %v2460 = vpop.f32.mrb[0].mxu0
      %v2461 = vadd.f32 0.0, %v2460
      %v2462 = vpop.f32.mrb[0].mxu0
      %2463 = vmatprep.mubr.bf16.mxu0 0
      %2464 = vmatmul.mubr.bf16.gmra.mrb[0].mxu0 %v2396
      %v2465 = vpop.f32.mrb[0].mxu0
      %v2466 = vadd.f32 0.0, %v2465
      %v2467 = vpop.f32.mrb[0].mxu0
      %v2468 = vpop.f32.mrb[0].mxu0
      %v2469 = vadd.f32 0.0, %v2468
      %v2470 = vpop.f32.mrb[0].mxu0
      %2471 = vmatprep.mubr.bf16.mxu0 0
      %2472 = vmatmul.mubr.bf16.gmra.mrb[0].mxu0 %v2397
      %v2473 = vpop.f32.mrb[0].mxu0
      %v2474 = vadd.f32 0.0, %v2473
      %v2475 = vpop.f32.mrb[0].mxu0
      %v2476 = vpop.f32.mrb[0].mxu0
      %v2477 = vadd.f32 0.0, %v2476
      %v2478 = vpop.f32.mrb[0].mxu0
      %2479 = vmatprep.mubr.bf16.mxu0 0
      %2480 = vmatmul.mubr.bf16.gmra.mrb[0].mxu0 %v2398
      %v2481 = vpop.f32.mrb[0].mxu0
      %v2482 = vadd.f32 0.0, %v2481
      %v2483 = vpop.f32.mrb[0].mxu0
      %v2484 = vpop.f32.mrb[0].mxu0
      %v2485 = vadd.f32 0.0, %v2484
      %v2486 = vpop.f32.mrb[0].mxu0
      %2487 = vdwg.mxu0
      %v2488 = vld [vmem:[%s8 + $0x30] sm:$0xff]
      %v2489 = vld [vmem:[%s8 + $0x38] sm:$0xff]
      %v2490 = vpack.c.bf16 %v2489, %v2488
      %v2491 = vpack.c.bf16 %v2461, %v2458
      %v2492 = vpack.c.bf16 %v2469, %v2466
      %v2493 = vpack.c.bf16 %v2477, %v2474
      %v2494 = vpack.c.bf16 %v2485, %v2482
      %v2496 = vsel %vm988, %v2491, 0
      %v2499 = vsel %vm988, %v2492, 0
      %v2502 = vsel %vm988, %v2493, 0
      %v2505 = vsel %vm988, %v2494, 0
      %2507 = vmatprep.subr.bf16.mxu0 0
      %2508 = vmatpush1.bf16.msra.mxu0 %v2490
      %2509 = vmatprep.subr.bf16.mxu0 0
      %2510 = vmatpush1.bf16.msra.mxu0 0
      %2511 = vmatprep.subr.bf16.mxu0 0
      %2512 = vmatpush1.bf16.msra.mxu0 0
      %2513 = vmatprep.subr.bf16.mxu0 0
      %2514 = vmatpush1.bf16.msra.mxu0 0
      %2515 = vmatprep.subr.bf16.mxu0 0
      %2516 = vmatpush1.bf16.msra.mxu0 0
      %2517 = vmatprep.subr.bf16.mxu0 0
      %2518 = vmatpush1.bf16.msra.mxu0 0
      %2519 = vmatprep.subr.bf16.mxu0 0
      %2520 = vmatpush1.bf16.msra.mxu0 0
      %2521 = vmatprep.subr.bf16.mxu0 0
      %2522 = vmatpush1.bf16.msra.mxu0 0
      %2523 = vmatprep.subr.bf16.mxu0 0
      %2524 = vmatpush1.bf16.msra.mxu0 0
      %2525 = vmatprep.subr.bf16.mxu0 0
      %2526 = vmatpush1.bf16.msra.mxu0 0
      %2527 = vmatprep.subr.bf16.mxu0 0
      %2528 = vmatpush1.bf16.msra.mxu0 0
      %2529 = vmatprep.subr.bf16.mxu0 0
      %2530 = vmatpush1.bf16.msra.mxu0 0
      %2531 = vmatprep.subr.bf16.mxu0 0
      %2532 = vmatpush1.bf16.msra.mxu0 0
      %2533 = vmatprep.subr.bf16.mxu0 0
      %2534 = vmatpush1.bf16.msra.mxu0 0
      %2535 = vmatprep.subr.bf16.mxu0 0
      %2536 = vmatpush1.bf16.msra.mxu0 0
      %2537 = vmatprep.subr.bf16.mxu0 0
      %2538 = vmatpush1.bf16.msra.mxu0 0
      %2539 = vmatprep.mubr.bf16.mxu0 0
      %2540 = vmatmul.mubr.bf16.gmra.mrb[0].mxu0 %v2496
      %v2541 = vpop.f32.mrb[0].mxu0
      %v2542 = vadd.f32 0.0, %v2541
      %v2543 = vpop.f32.mrb[0].mxu0
      %v2544 = vpop.f32.mrb[0].mxu0
      %v2545 = vadd.f32 0.0, %v2544
      %v2546 = vpop.f32.mrb[0].mxu0
      %2547 = vmatprep.mubr.bf16.mxu0 0
      %2548 = vmatmul.mubr.bf16.gmra.mrb[0].mxu0 %v2499
      %v2549 = vpop.f32.mrb[0].mxu0
      %v2550 = vadd.f32 0.0, %v2549
      %v2551 = vpop.f32.mrb[0].mxu0
      %v2552 = vpop.f32.mrb[0].mxu0
      %v2553 = vadd.f32 0.0, %v2552
      %v2554 = vpop.f32.mrb[0].mxu0
      %2555 = vmatprep.mubr.bf16.mxu0 0
      %2556 = vmatmul.mubr.bf16.gmra.mrb[0].mxu0 %v2502
      %v2557 = vpop.f32.mrb[0].mxu0
      %v2558 = vadd.f32 0.0, %v2557
      %v2559 = vpop.f32.mrb[0].mxu0
      %v2560 = vpop.f32.mrb[0].mxu0
      %v2561 = vadd.f32 0.0, %v2560
      %v2562 = vpop.f32.mrb[0].mxu0
      %2563 = vmatprep.mubr.bf16.mxu0 0
      %2564 = vmatmul.mubr.bf16.gmra.mrb[0].mxu0 %v2505
      %v2565 = vpop.f32.mrb[0].mxu0
      %v2566 = vadd.f32 0.0, %v2565
      %v2567 = vpop.f32.mrb[0].mxu0
      %v2568 = vpop.f32.mrb[0].mxu0
      %v2569 = vadd.f32 0.0, %v2568
      %v2570 = vpop.f32.mrb[0].mxu0
      %2571 = vdwg.mxu0
      %v2572 = vadd.f32 %v2149, %v2542
      %v2573 = vadd.f32 %v2150, %v2545
      %v2574 = vadd.f32 %v2151, %v2550
      %v2575 = vadd.f32 %v2152, %v2553
      %v2576 = vadd.f32 %v2153, %v2558
      %v2577 = vadd.f32 %v2154, %v2561
      %v2578 = vadd.f32 %v2155, %v2566
      %v2579 = vadd.f32 %v2156, %v2569
      %2580 = vrot.lane.b32.xlu0 %v713, 64
      %v2581 = vpop.permute.xlu0 %2580
      %2582 = vrot.lane.b32.xlu0 %v716, 64
      %v2583 = vpop.permute.xlu0 %2582
      %2584 = vrot.lane.b32.xlu0 %v721, 64
      %v2585 = vpop.permute.xlu0 %2584
      %2586 = vrot.lane.b32.xlu0 %v724, 64
      %v2587 = vpop.permute.xlu0 %2586
      %2588 = vrot.lane.b32.xlu0 %v729, 64
      %v2589 = vpop.permute.xlu0 %2588
      %2590 = vrot.lane.b32.xlu0 %v732, 64
      %v2591 = vpop.permute.xlu0 %2590
      %2592 = vrot.lane.b32.xlu0 %v737, 64
      %v2593 = vpop.permute.xlu0 %2592
      %2594 = vrot.lane.b32.xlu0 %v740, 64
      %v2595 = vpop.permute.xlu0 %2594
      %2596 = vrot.lane.b32.xlu0 %v745, 64
      %v2597 = vpop.permute.xlu0 %2596
      %2598 = vrot.lane.b32.xlu0 %v748, 64
      %v2599 = vpop.permute.xlu0 %2598
      %2600 = vrot.lane.b32.xlu0 %v753, 64
      %v2601 = vpop.permute.xlu0 %2600
      %2602 = vrot.lane.b32.xlu0 %v756, 64
      %v2603 = vpop.permute.xlu0 %2602
      %2604 = vrot.lane.b32.xlu0 %v761, 64
      %v2605 = vpop.permute.xlu0 %2604
      %2606 = vrot.lane.b32.xlu0 %v764, 64
      %v2607 = vpop.permute.xlu0 %2606
      %2608 = vrot.lane.b32.xlu0 %v769, 64
      %v2609 = vpop.permute.xlu0 %2608
      %2610 = vrot.lane.b32.xlu0 %v772, 64
      %v2611 = vpop.permute.xlu0 %2610
      %2628 = vxpose.xlu0.b32.start [1/16] %v2581, 128
      %2629 = vxpose.xlu0.b32.cont [2/16] %v2583, 128
      %2630 = vxpose.xlu0.b32.cont [3/16] %v2585, 128
      %2631 = vxpose.xlu0.b32.cont [4/16] %v2587, 128
      %2632 = vxpose.xlu0.b32.cont [5/16] %v2589, 128
      %2633 = vxpose.xlu0.b32.cont [6/16] %v2591, 128
      %2634 = vxpose.xlu0.b32.cont [7/16] %v2593, 128
      %2635 = vxpose.xlu0.b32.cont [8/16] %v2595, 128
      %2636 = vxpose.xlu0.b32.cont [9/16] %v2597, 128
      %2637 = vxpose.xlu0.b32.cont [10/16] %v2599, 128
      %2638 = vxpose.xlu0.b32.cont [11/16] %v2601, 128
      %2639 = vxpose.xlu0.b32.cont [12/16] %v2603, 128
      %2640 = vxpose.xlu0.b32.cont [13/16] %v2605, 128
      %2641 = vxpose.xlu0.b32.cont [14/16] %v2607, 128
      %2642 = vxpose.xlu0.b32.cont [15/16] %v2609, 128
      %2643 = vxpose.xlu0.b32.end [16/16] %v2611, 128
      %v2644 = vpop.trf.xlu0
      %v2645 = vpop.trf.xlu0
      %v2646 = vpop.trf.xlu0
      %v2647 = vpop.trf.xlu0
      %v2648 = vpop.trf.xlu0
      %v2649 = vpop.trf.xlu0
      %v2650 = vpop.trf.xlu0
      %v2651 = vpop.trf.xlu0
      %v2652 = vpop.trf.xlu0
      %v2653 = vpop.trf.xlu0
      %v2654 = vpop.trf.xlu0
      %v2655 = vpop.trf.xlu0
      %v2656 = vpop.trf.xlu0
      %v2657 = vpop.trf.xlu0
      %v2658 = vpop.trf.xlu0
      %v2659 = vpop.trf.xlu0
      %v2660 = vpack.c.bf16 %v2645, %v2644
      %2661 = vrot.lane.b32.xlu0 %v943, 64
      %v2662 = vpop.permute.xlu0 %2661
      %2663 = vrot.lane.b32.xlu0 %v944, 64
      %v2664 = vpop.permute.xlu0 %2663
      %2665 = vrot.lane.b32.xlu0 %v945, 64
      %v2666 = vpop.permute.xlu0 %2665
      %2667 = vrot.lane.b32.xlu0 %v946, 64
      %v2668 = vpop.permute.xlu0 %2667
      %v2670 = vsel %vm988, %v2662, 0
      %v2673 = vsel %vm988, %v2664, 0
      %v2676 = vsel %vm988, %v2666, 0
      %v2679 = vsel %vm988, %v2668, 0
      %2681 = vmatprep.subr.bf16.mxu0 0
      %2682 = vmatpush1.bf16.msra.mxu0 %v2660
      %2683 = vmatprep.subr.bf16.mxu0 0
      %2684 = vmatpush1.bf16.msra.mxu0 0
      %2685 = vmatprep.subr.bf16.mxu0 0
      %2686 = vmatpush1.bf16.msra.mxu0 0
      %2687 = vmatprep.subr.bf16.mxu0 0
      %2688 = vmatpush1.bf16.msra.mxu0 0
      %2689 = vmatprep.subr.bf16.mxu0 0
      %2690 = vmatpush1.bf16.msra.mxu0 0
      %2691 = vmatprep.subr.bf16.mxu0 0
      %2692 = vmatpush1.bf16.msra.mxu0 0
      %2693 = vmatprep.subr.bf16.mxu0 0
      %2694 = vmatpush1.bf16.msra.mxu0 0
      %2695 = vmatprep.subr.bf16.mxu0 0
      %2696 = vmatpush1.bf16.msra.mxu0 0
      %2697 = vmatprep.subr.bf16.mxu0 0
      %2698 = vmatpush1.bf16.msra.mxu0 0
      %2699 = vmatprep.subr.bf16.mxu0 0
      %2700 = vmatpush1.bf16.msra.mxu0 0
      %2701 = vmatprep.subr.bf16.mxu0 0
      %2702 = vmatpush1.bf16.msra.mxu0 0
      %2703 = vmatprep.subr.bf16.mxu0 0
      %2704 = vmatpush1.bf16.msra.mxu0 0
      %2705 = vmatprep.subr.bf16.mxu0 0
      %2706 = vmatpush1.bf16.msra.mxu0 0
      %2707 = vmatprep.subr.bf16.mxu0 0
      %2708 = vmatpush1.bf16.msra.mxu0 0
      %2709 = vmatprep.subr.bf16.mxu0 0
      %2710 = vmatpush1.bf16.msra.mxu0 0
      %2711 = vmatprep.subr.bf16.mxu0 0
      %2712 = vmatpush1.bf16.msra.mxu0 0
      %2713 = vmatprep.mubr.bf16.mxu0 0
      %2714 = vmatmul.mubr.bf16.gmra.mrb[0].mxu0 %v2670
      %v2715 = vpop.f32.mrb[0].mxu0
      %v2716 = vadd.f32 0.0, %v2715
      %v2717 = vpop.f32.mrb[0].mxu0
      %v2718 = vpop.f32.mrb[0].mxu0
      %v2719 = vadd.f32 0.0, %v2718
      %v2720 = vpop.f32.mrb[0].mxu0
      %2721 = vmatprep.mubr.bf16.mxu0 0
      %2722 = vmatmul.mubr.bf16.gmra.mrb[0].mxu0 %v2673
      %v2723 = vpop.f32.mrb[0].mxu0
      %v2724 = vadd.f32 0.0, %v2723
      %v2725 = vpop.f32.mrb[0].mxu0
      %v2726 = vpop.f32.mrb[0].mxu0
      %v2727 = vadd.f32 0.0, %v2726
      %v2728 = vpop.f32.mrb[0].mxu0
      %2729 = vmatprep.mubr.bf16.mxu0 0
      %2730 = vmatmul.mubr.bf16.gmra.mrb[0].mxu0 %v2676
      %v2731 = vpop.f32.mrb[0].mxu0
      %v2732 = vadd.f32 0.0, %v2731
      %v2733 = vpop.f32.mrb[0].mxu0
      %v2734 = vpop.f32.mrb[0].mxu0
      %v2735 = vadd.f32 0.0, %v2734
      %v2736 = vpop.f32.mrb[0].mxu0
      %2737 = vmatprep.mubr.bf16.mxu0 0
      %2738 = vmatmul.mubr.bf16.gmra.mrb[0].mxu0 %v2679
      %v2739 = vpop.f32.mrb[0].mxu0
      %v2740 = vadd.f32 0.0, %v2739
      %v2741 = vpop.f32.mrb[0].mxu0
      %v2742 = vpop.f32.mrb[0].mxu0
      %v2743 = vadd.f32 0.0, %v2742
      %v2744 = vpop.f32.mrb[0].mxu0
      %2745 = vdwg.mxu0
      %2746 = vmax.xlane.f32.xlu0 %v2716
      %v2747 = vpop.xlane.xlu0 %2746
      %2748 = vmax.xlane.f32.xlu0 %v2719
      %v2749 = vpop.xlane.xlu0 %2748
      %2750 = vmax.xlane.f32.xlu0 %v2724
      %v2751 = vpop.xlane.xlu0 %2750
      %2752 = vmax.xlane.f32.xlu0 %v2727
      %v2753 = vpop.xlane.xlu0 %2752
      %2754 = vmax.xlane.f32.xlu0 %v2732
      %v2755 = vpop.xlane.xlu0 %2754
      %2756 = vmax.xlane.f32.xlu0 %v2735
      %v2757 = vpop.xlane.xlu0 %2756
      %2758 = vmax.xlane.f32.xlu0 %v2740
      %v2759 = vpop.xlane.xlu0 %2758
      %2760 = vmax.xlane.f32.xlu0 %v2743
      %v2761 = vpop.xlane.xlu0 %2760
      %v2762 = vsub.f32 %v2716, %v2747
      %v2763 = vsub.f32 %v2719, %v2749
      %v2764 = vsub.f32 %v2724, %v2751
      %v2765 = vsub.f32 %v2727, %v2753
      %v2766 = vsub.f32 %v2732, %v2755
      %v2767 = vsub.f32 %v2735, %v2757
      %v2768 = vsub.f32 %v2740, %v2759
      %v2769 = vsub.f32 %v2743, %v2761
      %v2770 = vmul.f32 %v2762, 1.442695
      %v2771 = vpow.pop %v2770
      %v2772 = vmul.f32 %v2763, 1.442695
      %v2773 = vpow.pop %v2772
      %v2774 = vmul.f32 %v2764, 1.442695
      %v2775 = vpow.pop %v2774
      %v2776 = vmul.f32 %v2765, 1.442695
      %v2777 = vpow.pop %v2776
      %v2778 = vmul.f32 %v2766, 1.442695
      %v2779 = vpow.pop %v2778
      %v2780 = vmul.f32 %v2767, 1.442695
      %v2781 = vpow.pop %v2780
      %v2782 = vmul.f32 %v2768, 1.442695
      %v2783 = vpow.pop %v2782
      %v2784 = vmul.f32 %v2769, 1.442695
      %v2785 = vpow.pop %v2784
      %2786 = vadd.xlane.f32.xlu0 %v2771
      %v2787 = vpop.xlane.xlu0 %2786
      %2788 = vadd.xlane.f32.xlu0 %v2773
      %v2789 = vpop.xlane.xlu0 %2788
      %2790 = vadd.xlane.f32.xlu0 %v2775
      %v2791 = vpop.xlane.xlu0 %2790
      %2792 = vadd.xlane.f32.xlu0 %v2777
      %v2793 = vpop.xlane.xlu0 %2792
      %2794 = vadd.xlane.f32.xlu0 %v2779
      %v2795 = vpop.xlane.xlu0 %2794
      %2796 = vadd.xlane.f32.xlu0 %v2781
      %v2797 = vpop.xlane.xlu0 %2796
      %2798 = vadd.xlane.f32.xlu0 %v2783
      %v2799 = vpop.xlane.xlu0 %2798
      %2800 = vadd.xlane.f32.xlu0 %v2785
      %v2801 = vpop.xlane.xlu0 %2800
      %v2802 = vrcp.pop %v2787
      %v2803 = vrcp.pop %v2789
      %v2804 = vrcp.pop %v2791
      %v2805 = vrcp.pop %v2793
      %v2806 = vrcp.pop %v2795
      %v2807 = vrcp.pop %v2797
      %v2808 = vrcp.pop %v2799
      %v2809 = vrcp.pop %v2801
      %v2810 = vmul.f32 %v2771, %v2802
      %v2811 = vmul.f32 %v2773, %v2803
      %v2812 = vmul.f32 %v2775, %v2804
      %v2813 = vmul.f32 %v2777, %v2805
      %v2814 = vmul.f32 %v2779, %v2806
      %v2815 = vmul.f32 %v2781, %v2807
      %v2816 = vmul.f32 %v2783, %v2808
      %v2817 = vmul.f32 %v2785, %v2809
      %v2818 = vpack.c.bf16 %v2811, %v2810
      %v2819 = vpack.c.bf16 %v2813, %v2812
      %v2820 = vpack.c.bf16 %v2815, %v2814
      %v2821 = vpack.c.bf16 %v2817, %v2816
      %2822 = vrot.lane.b32.xlu0 %v980, 64
      %v2823 = vpop.permute.xlu0 %2822
      %2824 = vrot.lane.b32.xlu0 %v981, 64
      %v2825 = vpop.permute.xlu0 %2824
      %2826 = vrot.lane.b32.xlu0 %v982, 64
      %v2827 = vpop.permute.xlu0 %2826
      %2828 = vrot.lane.b32.xlu0 %v983, 64
      %v2829 = vpop.permute.xlu0 %2828
      %2830 = vrot.lane.b32.xlu0 %v984, 64
      %v2831 = vpop.permute.xlu0 %2830
      %2832 = vrot.lane.b32.xlu0 %v985, 64
      %v2833 = vpop.permute.xlu0 %2832
      %2834 = vrot.lane.b32.xlu0 %v986, 64
      %v2835 = vpop.permute.xlu0 %2834
      %2836 = vrot.lane.b32.xlu0 %v987, 64
      %v2837 = vpop.permute.xlu0 %2836
      %2846 = vmatprep.subr.bf16.mxu0 0
      %2847 = vmatpush1.bf16.msra.mxu0 %v2823
      %2848 = vmatprep.subr.bf16.mxu0 0
      %2849 = vmatpush1.bf16.msra.mxu0 %v2825
      %2850 = vmatprep.subr.bf16.mxu0 0
      %2851 = vmatpush1.bf16.msra.mxu0 %v2827
      %2852 = vmatprep.subr.bf16.mxu0 0
      %2853 = vmatpush1.bf16.msra.mxu0 %v2829
      %2854 = vmatprep.subr.bf16.mxu0 0
      %2855 = vmatpush1.bf16.msra.mxu0 %v2831
      %2856 = vmatprep.subr.bf16.mxu0 0
      %2857 = vmatpush1.bf16.msra.mxu0 %v2833
      %2858 = vmatprep.subr.bf16.mxu0 0
      %2859 = vmatpush1.bf16.msra.mxu0 %v2835
      %2860 = vmatprep.subr.bf16.mxu0 0
      %2861 = vmatpush1.bf16.msra.mxu0 %v2837
      %2862 = vmatprep.subr.bf16.mxu0 0
      %2863 = vmatpush1.bf16.msra.mxu0 0
      %2864 = vmatprep.subr.bf16.mxu0 0
      %2865 = vmatpush1.bf16.msra.mxu0 0
      %2866 = vmatprep.subr.bf16.mxu0 0
      %2867 = vmatpush1.bf16.msra.mxu0 0
      %2868 = vmatprep.subr.bf16.mxu0 0
      %2869 = vmatpush1.bf16.msra.mxu0 0
      %2870 = vmatprep.subr.bf16.mxu0 0
      %2871 = vmatpush1.bf16.msra.mxu0 0
      %2872 = vmatprep.subr.bf16.mxu0 0
      %2873 = vmatpush1.bf16.msra.mxu0 0
      %2874 = vmatprep.subr.bf16.mxu0 0
      %2875 = vmatpush1.bf16.msra.mxu0 0
      %2876 = vmatprep.subr.bf16.mxu0 0
      %2877 = vmatpush1.bf16.msra.mxu0 0
      %2878 = vmatprep.mubr.bf16.mxu0 0
      %2879 = vmatmul.mubr.bf16.gmra.mrb[0].mxu0 %v2818
      %v2880 = vpop.f32.mrb[0].mxu0
      %v2881 = vadd.f32 0.0, %v2880
      %v2882 = vpop.f32.mrb[0].mxu0
      %v2883 = vpop.f32.mrb[0].mxu0
      %v2884 = vadd.f32 0.0, %v2883
      %v2885 = vpop.f32.mrb[0].mxu0
      %2886 = vmatprep.mubr.bf16.mxu0 0
      %2887 = vmatmul.mubr.bf16.gmra.mrb[0].mxu0 %v2819
      %v2888 = vpop.f32.mrb[0].mxu0
      %v2889 = vadd.f32 0.0, %v2888
      %v2890 = vpop.f32.mrb[0].mxu0
      %v2891 = vpop.f32.mrb[0].mxu0
      %v2892 = vadd.f32 0.0, %v2891
      %v2893 = vpop.f32.mrb[0].mxu0
      %2894 = vmatprep.mubr.bf16.mxu0 0
      %2895 = vmatmul.mubr.bf16.gmra.mrb[0].mxu0 %v2820
      %v2896 = vpop.f32.mrb[0].mxu0
      %v2897 = vadd.f32 0.0, %v2896
      %v2898 = vpop.f32.mrb[0].mxu0
      %v2899 = vpop.f32.mrb[0].mxu0
      %v2900 = vadd.f32 0.0, %v2899
      %v2901 = vpop.f32.mrb[0].mxu0
      %2902 = vmatprep.mubr.bf16.mxu0 0
      %2903 = vmatmul.mubr.bf16.gmra.mrb[0].mxu0 %v2821
      %v2904 = vpop.f32.mrb[0].mxu0
      %v2905 = vadd.f32 0.0, %v2904
      %v2906 = vpop.f32.mrb[0].mxu0
      %v2907 = vpop.f32.mrb[0].mxu0
      %v2908 = vadd.f32 0.0, %v2907
      %v2909 = vpop.f32.mrb[0].mxu0
      %2910 = vdwg.mxu0
      %v2911 = vld [vmem:[%s8 + $0x40] sm:$0xff]
      %v2912 = vld [vmem:[%s8 + $0x48] sm:$0xff]
      %v2913 = vpack.c.bf16 %v2912, %v2911
      %v2914 = vpack.c.bf16 %v2884, %v2881
      %v2915 = vpack.c.bf16 %v2892, %v2889
      %v2916 = vpack.c.bf16 %v2900, %v2897
      %v2917 = vpack.c.bf16 %v2908, %v2905
      %v2919 = vsel %vm988, %v2914, 0
      %v2922 = vsel %vm988, %v2915, 0
      %v2925 = vsel %vm988, %v2916, 0
      %v2928 = vsel %vm988, %v2917, 0
      %2930 = vmatprep.subr.bf16.mxu0 0
      %2931 = vmatpush1.bf16.msra.mxu0 %v2913
      %2932 = vmatprep.subr.bf16.mxu0 0
      %2933 = vmatpush1.bf16.msra.mxu0 0
      %2934 = vmatprep.subr.bf16.mxu0 0
      %2935 = vmatpush1.bf16.msra.mxu0 0
      %2936 = vmatprep.subr.bf16.mxu0 0
      %2937 = vmatpush1.bf16.msra.mxu0 0
      %2938 = vmatprep.subr.bf16.mxu0 0
      %2939 = vmatpush1.bf16.msra.mxu0 0
      %2940 = vmatprep.subr.bf16.mxu0 0
      %2941 = vmatpush1.bf16.msra.mxu0 0
      %2942 = vmatprep.subr.bf16.mxu0 0
      %2943 = vmatpush1.bf16.msra.mxu0 0
      %2944 = vmatprep.subr.bf16.mxu0 0
      %2945 = vmatpush1.bf16.msra.mxu0 0
      %2946 = vmatprep.subr.bf16.mxu0 0
      %2947 = vmatpush1.bf16.msra.mxu0 0
      %2948 = vmatprep.subr.bf16.mxu0 0
      %2949 = vmatpush1.bf16.msra.mxu0 0
      %2950 = vmatprep.subr.bf16.mxu0 0
      %2951 = vmatpush1.bf16.msra.mxu0 0
      %2952 = vmatprep.subr.bf16.mxu0 0
      %2953 = vmatpush1.bf16.msra.mxu0 0
      %2954 = vmatprep.subr.bf16.mxu0 0
      %2955 = vmatpush1.bf16.msra.mxu0 0
      %2956 = vmatprep.subr.bf16.mxu0 0
      %2957 = vmatpush1.bf16.msra.mxu0 0
      %2958 = vmatprep.subr.bf16.mxu0 0
      %2959 = vmatpush1.bf16.msra.mxu0 0
      %2960 = vmatprep.subr.bf16.mxu0 0
      %2961 = vmatpush1.bf16.msra.mxu0 0
      %2962 = vmatprep.mubr.bf16.mxu0 0
      %2963 = vmatmul.mubr.bf16.gmra.mrb[0].mxu0 %v2919
      %v2964 = vpop.f32.mrb[0].mxu0
      %v2965 = vadd.f32 0.0, %v2964
      %v2966 = vpop.f32.mrb[0].mxu0
      %v2967 = vpop.f32.mrb[0].mxu0
      %v2968 = vadd.f32 0.0, %v2967
      %v2969 = vpop.f32.mrb[0].mxu0
      %2970 = vmatprep.mubr.bf16.mxu0 0
      %2971 = vmatmul.mubr.bf16.gmra.mrb[0].mxu0 %v2922
      %v2972 = vpop.f32.mrb[0].mxu0
      %v2973 = vadd.f32 0.0, %v2972
      %v2974 = vpop.f32.mrb[0].mxu0
      %v2975 = vpop.f32.mrb[0].mxu0
      %v2976 = vadd.f32 0.0, %v2975
      %v2977 = vpop.f32.mrb[0].mxu0
      %2978 = vmatprep.mubr.bf16.mxu0 0
      %2979 = vmatmul.mubr.bf16.gmra.mrb[0].mxu0 %v2925
      %v2980 = vpop.f32.mrb[0].mxu0
      %v2981 = vadd.f32 0.0, %v2980
      %v2982 = vpop.f32.mrb[0].mxu0
      %v2983 = vpop.f32.mrb[0].mxu0
      %v2984 = vadd.f32 0.0, %v2983
      %v2985 = vpop.f32.mrb[0].mxu0
      %2986 = vmatprep.mubr.bf16.mxu0 0
      %2987 = vmatmul.mubr.bf16.gmra.mrb[0].mxu0 %v2928
      %v2988 = vpop.f32.mrb[0].mxu0
      %v2989 = vadd.f32 0.0, %v2988
      %v2990 = vpop.f32.mrb[0].mxu0
      %v2991 = vpop.f32.mrb[0].mxu0
      %v2992 = vadd.f32 0.0, %v2991
      %v2993 = vpop.f32.mrb[0].mxu0
      %2994 = vdwg.mxu0
      %v2995 = vadd.f32 %v2572, %v2965
      %v2996 = vadd.f32 %v2573, %v2968
      %v2997 = vadd.f32 %v2574, %v2973
      %v2998 = vadd.f32 %v2575, %v2976
      %v2999 = vadd.f32 %v2576, %v2981
      %v3000 = vadd.f32 %v2577, %v2984
      %v3001 = vadd.f32 %v2578, %v2989
      %v3002 = vadd.f32 %v2579, %v2992
      %3003 = vrot.lane.b32.xlu0 %v713, 48
      %v3004 = vpop.permute.xlu0 %3003
      %3005 = vrot.lane.b32.xlu0 %v716, 48
      %v3006 = vpop.permute.xlu0 %3005
      %3007 = vrot.lane.b32.xlu0 %v721, 48
      %v3008 = vpop.permute.xlu0 %3007
      %3009 = vrot.lane.b32.xlu0 %v724, 48
      %v3010 = vpop.permute.xlu0 %3009
      %3011 = vrot.lane.b32.xlu0 %v729, 48
      %v3012 = vpop.permute.xlu0 %3011
      %3013 = vrot.lane.b32.xlu0 %v732, 48
      %v3014 = vpop.permute.xlu0 %3013
      %3015 = vrot.lane.b32.xlu0 %v737, 48
      %v3016 = vpop.permute.xlu0 %3015
      %3017 = vrot.lane.b32.xlu0 %v740, 48
      %v3018 = vpop.permute.xlu0 %3017
      %3019 = vrot.lane.b32.xlu0 %v745, 48
      %v3020 = vpop.permute.xlu0 %3019
      %3021 = vrot.lane.b32.xlu0 %v748, 48
      %v3022 = vpop.permute.xlu0 %3021
      %3023 = vrot.lane.b32.xlu0 %v753, 48
      %v3024 = vpop.permute.xlu0 %3023
      %3025 = vrot.lane.b32.xlu0 %v756, 48
      %v3026 = vpop.permute.xlu0 %3025
      %3027 = vrot.lane.b32.xlu0 %v761, 48
      %v3028 = vpop.permute.xlu0 %3027
      %3029 = vrot.lane.b32.xlu0 %v764, 48
      %v3030 = vpop.permute.xlu0 %3029
      %3031 = vrot.lane.b32.xlu0 %v769, 48
      %v3032 = vpop.permute.xlu0 %3031
      %3033 = vrot.lane.b32.xlu0 %v772, 48
      %v3034 = vpop.permute.xlu0 %3033
      %3051 = vxpose.xlu0.b32.start [1/16] %v3004, 128
      %3052 = vxpose.xlu0.b32.cont [2/16] %v3006, 128
      %3053 = vxpose.xlu0.b32.cont [3/16] %v3008, 128
      %3054 = vxpose.xlu0.b32.cont [4/16] %v3010, 128
      %3055 = vxpose.xlu0.b32.cont [5/16] %v3012, 128
      %3056 = vxpose.xlu0.b32.cont [6/16] %v3014, 128
      %3057 = vxpose.xlu0.b32.cont [7/16] %v3016, 128
      %3058 = vxpose.xlu0.b32.cont [8/16] %v3018, 128
      %3059 = vxpose.xlu0.b32.cont [9/16] %v3020, 128
      %3060 = vxpose.xlu0.b32.cont [10/16] %v3022, 128
      %3061 = vxpose.xlu0.b32.cont [11/16] %v3024, 128
      %3062 = vxpose.xlu0.b32.cont [12/16] %v3026, 128
      %3063 = vxpose.xlu0.b32.cont [13/16] %v3028, 128
      %3064 = vxpose.xlu0.b32.cont [14/16] %v3030, 128
      %3065 = vxpose.xlu0.b32.cont [15/16] %v3032, 128
      %3066 = vxpose.xlu0.b32.end [16/16] %v3034, 128
      %v3067 = vpop.trf.xlu0
      %v3068 = vpop.trf.xlu0
      %v3069 = vpop.trf.xlu0
      %v3070 = vpop.trf.xlu0
      %v3071 = vpop.trf.xlu0
      %v3072 = vpop.trf.xlu0
      %v3073 = vpop.trf.xlu0
      %v3074 = vpop.trf.xlu0
      %v3075 = vpop.trf.xlu0
      %v3076 = vpop.trf.xlu0
      %v3077 = vpop.trf.xlu0
      %v3078 = vpop.trf.xlu0
      %v3079 = vpop.trf.xlu0
      %v3080 = vpop.trf.xlu0
      %v3081 = vpop.trf.xlu0
      %v3082 = vpop.trf.xlu0
      %v3083 = vpack.c.bf16 %v3068, %v3067
      %3084 = vrot.lane.b32.xlu0 %v943, 48
      %v3085 = vpop.permute.xlu0 %3084
      %3086 = vrot.lane.b32.xlu0 %v944, 48
      %v3087 = vpop.permute.xlu0 %3086
      %3088 = vrot.lane.b32.xlu0 %v945, 48
      %v3089 = vpop.permute.xlu0 %3088
      %3090 = vrot.lane.b32.xlu0 %v946, 48
      %v3091 = vpop.permute.xlu0 %3090
      %v3093 = vsel %vm988, %v3085, 0
      %v3096 = vsel %vm988, %v3087, 0
      %v3099 = vsel %vm988, %v3089, 0
      %v3102 = vsel %vm988, %v3091, 0
      %3104 = vmatprep.subr.bf16.mxu0 0
      %3105 = vmatpush1.bf16.msra.mxu0 %v3083
      %3106 = vmatprep.subr.bf16.mxu0 0
      %3107 = vmatpush1.bf16.msra.mxu0 0
      %3108 = vmatprep.subr.bf16.mxu0 0
      %3109 = vmatpush1.bf16.msra.mxu0 0
      %3110 = vmatprep.subr.bf16.mxu0 0
      %3111 = vmatpush1.bf16.msra.mxu0 0
      %3112 = vmatprep.subr.bf16.mxu0 0
      %3113 = vmatpush1.bf16.msra.mxu0 0
      %3114 = vmatprep.subr.bf16.mxu0 0
      %3115 = vmatpush1.bf16.msra.mxu0 0
      %3116 = vmatprep.subr.bf16.mxu0 0
      %3117 = vmatpush1.bf16.msra.mxu0 0
      %3118 = vmatprep.subr.bf16.mxu0 0
      %3119 = vmatpush1.bf16.msra.mxu0 0
      %3120 = vmatprep.subr.bf16.mxu0 0
      %3121 = vmatpush1.bf16.msra.mxu0 0
      %3122 = vmatprep.subr.bf16.mxu0 0
      %3123 = vmatpush1.bf16.msra.mxu0 0
      %3124 = vmatprep.subr.bf16.mxu0 0
      %3125 = vmatpush1.bf16.msra.mxu0 0
      %3126 = vmatprep.subr.bf16.mxu0 0
      %3127 = vmatpush1.bf16.msra.mxu0 0
      %3128 = vmatprep.subr.bf16.mxu0 0
      %3129 = vmatpush1.bf16.msra.mxu0 0
      %3130 = vmatprep.subr.bf16.mxu0 0
      %3131 = vmatpush1.bf16.msra.mxu0 0
      %3132 = vmatprep.subr.bf16.mxu0 0
      %3133 = vmatpush1.bf16.msra.mxu0 0
      %3134 = vmatprep.subr.bf16.mxu0 0
      %3135 = vmatpush1.bf16.msra.mxu0 0
      %3136 = vmatprep.mubr.bf16.mxu0 0
      %3137 = vmatmul.mubr.bf16.gmra.mrb[0].mxu0 %v3093
      %v3138 = vpop.f32.mrb[0].mxu0
      %v3139 = vadd.f32 0.0, %v3138
      %v3140 = vpop.f32.mrb[0].mxu0
      %v3141 = vpop.f32.mrb[0].mxu0
      %v3142 = vadd.f32 0.0, %v3141
      %v3143 = vpop.f32.mrb[0].mxu0
      %3144 = vmatprep.mubr.bf16.mxu0 0
      %3145 = vmatmul.mubr.bf16.gmra.mrb[0].mxu0 %v3096
      %v3146 = vpop.f32.mrb[0].mxu0
      %v3147 = vadd.f32 0.0, %v3146
      %v3148 = vpop.f32.mrb[0].mxu0
      %v3149 = vpop.f32.mrb[0].mxu0
      %v3150 = vadd.f32 0.0, %v3149
      %v3151 = vpop.f32.mrb[0].mxu0
      %3152 = vmatprep.mubr.bf16.mxu0 0
      %3153 = vmatmul.mubr.bf16.gmra.mrb[0].mxu0 %v3099
      %v3154 = vpop.f32.mrb[0].mxu0
      %v3155 = vadd.f32 0.0, %v3154
      %v3156 = vpop.f32.mrb[0].mxu0
      %v3157 = vpop.f32.mrb[0].mxu0
      %v3158 = vadd.f32 0.0, %v3157
      %v3159 = vpop.f32.mrb[0].mxu0
      %3160 = vmatprep.mubr.bf16.mxu0 0
      %3161 = vmatmul.mubr.bf16.gmra.mrb[0].mxu0 %v3102
      %v3162 = vpop.f32.mrb[0].mxu0
      %v3163 = vadd.f32 0.0, %v3162
      %v3164 = vpop.f32.mrb[0].mxu0
      %v3165 = vpop.f32.mrb[0].mxu0
      %v3166 = vadd.f32 0.0, %v3165
      %v3167 = vpop.f32.mrb[0].mxu0
      %3168 = vdwg.mxu0
      %3169 = vmax.xlane.f32.xlu0 %v3139
      %v3170 = vpop.xlane.xlu0 %3169
      %3171 = vmax.xlane.f32.xlu0 %v3142
      %v3172 = vpop.xlane.xlu0 %3171
      %3173 = vmax.xlane.f32.xlu0 %v3147
      %v3174 = vpop.xlane.xlu0 %3173
      %3175 = vmax.xlane.f32.xlu0 %v3150
      %v3176 = vpop.xlane.xlu0 %3175
      %3177 = vmax.xlane.f32.xlu0 %v3155
      %v3178 = vpop.xlane.xlu0 %3177
      %3179 = vmax.xlane.f32.xlu0 %v3158
      %v3180 = vpop.xlane.xlu0 %3179
      %3181 = vmax.xlane.f32.xlu0 %v3163
      %v3182 = vpop.xlane.xlu0 %3181
      %3183 = vmax.xlane.f32.xlu0 %v3166
      %v3184 = vpop.xlane.xlu0 %3183
      %v3185 = vsub.f32 %v3139, %v3170
      %v3186 = vsub.f32 %v3142, %v3172
      %v3187 = vsub.f32 %v3147, %v3174
      %v3188 = vsub.f32 %v3150, %v3176
      %v3189 = vsub.f32 %v3155, %v3178
      %v3190 = vsub.f32 %v3158, %v3180
      %v3191 = vsub.f32 %v3163, %v3182
      %v3192 = vsub.f32 %v3166, %v3184
      %v3193 = vmul.f32 %v3185, 1.442695
      %v3194 = vpow.pop %v3193
      %v3195 = vmul.f32 %v3186, 1.442695
      %v3196 = vpow.pop %v3195
      %v3197 = vmul.f32 %v3187, 1.442695
      %v3198 = vpow.pop %v3197
      %v3199 = vmul.f32 %v3188, 1.442695
      %v3200 = vpow.pop %v3199
      %v3201 = vmul.f32 %v3189, 1.442695
      %v3202 = vpow.pop %v3201
      %v3203 = vmul.f32 %v3190, 1.442695
      %v3204 = vpow.pop %v3203
      %v3205 = vmul.f32 %v3191, 1.442695
      %v3206 = vpow.pop %v3205
      %v3207 = vmul.f32 %v3192, 1.442695
      %v3208 = vpow.pop %v3207
      %3209 = vadd.xlane.f32.xlu0 %v3194
      %v3210 = vpop.xlane.xlu0 %3209
      %3211 = vadd.xlane.f32.xlu0 %v3196
      %v3212 = vpop.xlane.xlu0 %3211
      %3213 = vadd.xlane.f32.xlu0 %v3198
      %v3214 = vpop.xlane.xlu0 %3213
      %3215 = vadd.xlane.f32.xlu0 %v3200
      %v3216 = vpop.xlane.xlu0 %3215
      %3217 = vadd.xlane.f32.xlu0 %v3202
      %v3218 = vpop.xlane.xlu0 %3217
      %3219 = vadd.xlane.f32.xlu0 %v3204
      %v3220 = vpop.xlane.xlu0 %3219
      %3221 = vadd.xlane.f32.xlu0 %v3206
      %v3222 = vpop.xlane.xlu0 %3221
      %3223 = vadd.xlane.f32.xlu0 %v3208
      %v3224 = vpop.xlane.xlu0 %3223
      %v3225 = vrcp.pop %v3210
      %v3226 = vrcp.pop %v3212
      %v3227 = vrcp.pop %v3214
      %v3228 = vrcp.pop %v3216
      %v3229 = vrcp.pop %v3218
      %v3230 = vrcp.pop %v3220
      %v3231 = vrcp.pop %v3222
      %v3232 = vrcp.pop %v3224
      %v3233 = vmul.f32 %v3194, %v3225
      %v3234 = vmul.f32 %v3196, %v3226
      %v3235 = vmul.f32 %v3198, %v3227
      %v3236 = vmul.f32 %v3200, %v3228
      %v3237 = vmul.f32 %v3202, %v3229
      %v3238 = vmul.f32 %v3204, %v3230
      %v3239 = vmul.f32 %v3206, %v3231
      %v3240 = vmul.f32 %v3208, %v3232
      %v3241 = vpack.c.bf16 %v3234, %v3233
      %v3242 = vpack.c.bf16 %v3236, %v3235
      %v3243 = vpack.c.bf16 %v3238, %v3237
      %v3244 = vpack.c.bf16 %v3240, %v3239
      %3245 = vrot.lane.b32.xlu0 %v980, 48
      %v3246 = vpop.permute.xlu0 %3245
      %3247 = vrot.lane.b32.xlu0 %v981, 48
      %v3248 = vpop.permute.xlu0 %3247
      %3249 = vrot.lane.b32.xlu0 %v982, 48
      %v3250 = vpop.permute.xlu0 %3249
      %3251 = vrot.lane.b32.xlu0 %v983, 48
      %v3252 = vpop.permute.xlu0 %3251
      %3253 = vrot.lane.b32.xlu0 %v984, 48
      %v3254 = vpop.permute.xlu0 %3253
      %3255 = vrot.lane.b32.xlu0 %v985, 48
      %v3256 = vpop.permute.xlu0 %3255
      %3257 = vrot.lane.b32.xlu0 %v986, 48
      %v3258 = vpop.permute.xlu0 %3257
      %3259 = vrot.lane.b32.xlu0 %v987, 48
      %v3260 = vpop.permute.xlu0 %3259
      %3269 = vmatprep.subr.bf16.mxu0 0
      %3270 = vmatpush1.bf16.msra.mxu0 %v3246
      %3271 = vmatprep.subr.bf16.mxu0 0
      %3272 = vmatpush1.bf16.msra.mxu0 %v3248
      %3273 = vmatprep.subr.bf16.mxu0 0
      %3274 = vmatpush1.bf16.msra.mxu0 %v3250
      %3275 = vmatprep.subr.bf16.mxu0 0
      %3276 = vmatpush1.bf16.msra.mxu0 %v3252
      %3277 = vmatprep.subr.bf16.mxu0 0
      %3278 = vmatpush1.bf16.msra.mxu0 %v3254
      %3279 = vmatprep.subr.bf16.mxu0 0
      %3280 = vmatpush1.bf16.msra.mxu0 %v3256
      %3281 = vmatprep.subr.bf16.mxu0 0
      %3282 = vmatpush1.bf16.msra.mxu0 %v3258
      %3283 = vmatprep.subr.bf16.mxu0 0
      %3284 = vmatpush1.bf16.msra.mxu0 %v3260
      %3285 = vmatprep.subr.bf16.mxu0 0
      %3286 = vmatpush1.bf16.msra.mxu0 0
      %3287 = vmatprep.subr.bf16.mxu0 0
      %3288 = vmatpush1.bf16.msra.mxu0 0
      %3289 = vmatprep.subr.bf16.mxu0 0
      %3290 = vmatpush1.bf16.msra.mxu0 0
      %3291 = vmatprep.subr.bf16.mxu0 0
      %3292 = vmatpush1.bf16.msra.mxu0 0
      %3293 = vmatprep.subr.bf16.mxu0 0
      %3294 = vmatpush1.bf16.msra.mxu0 0
      %3295 = vmatprep.subr.bf16.mxu0 0
      %3296 = vmatpush1.bf16.msra.mxu0 0
      %3297 = vmatprep.subr.bf16.mxu0 0
      %3298 = vmatpush1.bf16.msra.mxu0 0
      %3299 = vmatprep.subr.bf16.mxu0 0
      %3300 = vmatpush1.bf16.msra.mxu0 0
      %3301 = vmatprep.mubr.bf16.mxu0 0
      %3302 = vmatmul.mubr.bf16.gmra.mrb[0].mxu0 %v3241
      %v3303 = vpop.f32.mrb[0].mxu0
      %v3304 = vadd.f32 0.0, %v3303
      %v3305 = vpop.f32.mrb[0].mxu0
      %v3306 = vpop.f32.mrb[0].mxu0
      %v3307 = vadd.f32 0.0, %v3306
      %v3308 = vpop.f32.mrb[0].mxu0
      %3309 = vmatprep.mubr.bf16.mxu0 0
      %3310 = vmatmul.mubr.bf16.gmra.mrb[0].mxu0 %v3242
      %v3311 = vpop.f32.mrb[0].mxu0
      %v3312 = vadd.f32 0.0, %v3311
      %v3313 = vpop.f32.mrb[0].mxu0
      %v3314 = vpop.f32.mrb[0].mxu0
      %v3315 = vadd.f32 0.0, %v3314
      %v3316 = vpop.f32.mrb[0].mxu0
      %3317 = vmatprep.mubr.bf16.mxu0 0
      %3318 = vmatmul.mubr.bf16.gmra.mrb[0].mxu0 %v3243
      %v3319 = vpop.f32.mrb[0].mxu0
      %v3320 = vadd.f32 0.0, %v3319
      %v3321 = vpop.f32.mrb[0].mxu0
      %v3322 = vpop.f32.mrb[0].mxu0
      %v3323 = vadd.f32 0.0, %v3322
      %v3324 = vpop.f32.mrb[0].mxu0
      %3325 = vmatprep.mubr.bf16.mxu0 0
      %3326 = vmatmul.mubr.bf16.gmra.mrb[0].mxu0 %v3244
      %v3327 = vpop.f32.mrb[0].mxu0
      %v3328 = vadd.f32 0.0, %v3327
      %v3329 = vpop.f32.mrb[0].mxu0
      %v3330 = vpop.f32.mrb[0].mxu0
      %v3331 = vadd.f32 0.0, %v3330
      %v3332 = vpop.f32.mrb[0].mxu0
      %3333 = vdwg.mxu0
      %v3334 = vld [vmem:[%s8 + $0x50] sm:$0xff]
      %v3335 = vld [vmem:[%s8 + $0x58] sm:$0xff]
      %v3336 = vpack.c.bf16 %v3335, %v3334
      %v3337 = vpack.c.bf16 %v3307, %v3304
      %v3338 = vpack.c.bf16 %v3315, %v3312
      %v3339 = vpack.c.bf16 %v3323, %v3320
      %v3340 = vpack.c.bf16 %v3331, %v3328
      %v3342 = vsel %vm988, %v3337, 0
      %v3345 = vsel %vm988, %v3338, 0
      %v3348 = vsel %vm988, %v3339, 0
      %v3351 = vsel %vm988, %v3340, 0
      %3353 = vmatprep.subr.bf16.mxu0 0
      %3354 = vmatpush1.bf16.msra.mxu0 %v3336
      %3355 = vmatprep.subr.bf16.mxu0 0
      %3356 = vmatpush1.bf16.msra.mxu0 0
      %3357 = vmatprep.subr.bf16.mxu0 0
      %3358 = vmatpush1.bf16.msra.mxu0 0
      %3359 = vmatprep.subr.bf16.mxu0 0
      %3360 = vmatpush1.bf16.msra.mxu0 0
      %3361 = vmatprep.subr.bf16.mxu0 0
      %3362 = vmatpush1.bf16.msra.mxu0 0
      %3363 = vmatprep.subr.bf16.mxu0 0
      %3364 = vmatpush1.bf16.msra.mxu0 0
      %3365 = vmatprep.subr.bf16.mxu0 0
      %3366 = vmatpush1.bf16.msra.mxu0 0
      %3367 = vmatprep.subr.bf16.mxu0 0
      %3368 = vmatpush1.bf16.msra.mxu0 0
      %3369 = vmatprep.subr.bf16.mxu0 0
      %3370 = vmatpush1.bf16.msra.mxu0 0
      %3371 = vmatprep.subr.bf16.mxu0 0
      %3372 = vmatpush1.bf16.msra.mxu0 0
      %3373 = vmatprep.subr.bf16.mxu0 0
      %3374 = vmatpush1.bf16.msra.mxu0 0
      %3375 = vmatprep.subr.bf16.mxu0 0
      %3376 = vmatpush1.bf16.msra.mxu0 0
      %3377 = vmatprep.subr.bf16.mxu0 0
      %3378 = vmatpush1.bf16.msra.mxu0 0
      %3379 = vmatprep.subr.bf16.mxu0 0
      %3380 = vmatpush1.bf16.msra.mxu0 0
      %3381 = vmatprep.subr.bf16.mxu0 0
      %3382 = vmatpush1.bf16.msra.mxu0 0
      %3383 = vmatprep.subr.bf16.mxu0 0
      %3384 = vmatpush1.bf16.msra.mxu0 0
      %3385 = vmatprep.mubr.bf16.mxu0 0
      %3386 = vmatmul.mubr.bf16.gmra.mrb[0].mxu0 %v3342
      %v3387 = vpop.f32.mrb[0].mxu0
      %v3388 = vadd.f32 0.0, %v3387
      %v3389 = vpop.f32.mrb[0].mxu0
      %v3390 = vpop.f32.mrb[0].mxu0
      %v3391 = vadd.f32 0.0, %v3390
      %v3392 = vpop.f32.mrb[0].mxu0
      %3393 = vmatprep.mubr.bf16.mxu0 0
      %3394 = vmatmul.mubr.bf16.gmra.mrb[0].mxu0 %v3345
      %v3395 = vpop.f32.mrb[0].mxu0
      %v3396 = vadd.f32 0.0, %v3395
      %v3397 = vpop.f32.mrb[0].mxu0
      %v3398 = vpop.f32.mrb[0].mxu0
      %v3399 = vadd.f32 0.0, %v3398
      %v3400 = vpop.f32.mrb[0].mxu0
      %3401 = vmatprep.mubr.bf16.mxu0 0
      %3402 = vmatmul.mubr.bf16.gmra.mrb[0].mxu0 %v3348
      %v3403 = vpop.f32.mrb[0].mxu0
      %v3404 = vadd.f32 0.0, %v3403
      %v3405 = vpop.f32.mrb[0].mxu0
      %v3406 = vpop.f32.mrb[0].mxu0
      %v3407 = vadd.f32 0.0, %v3406
      %v3408 = vpop.f32.mrb[0].mxu0
      %3409 = vmatprep.mubr.bf16.mxu0 0
      %3410 = vmatmul.mubr.bf16.gmra.mrb[0].mxu0 %v3351
      %v3411 = vpop.f32.mrb[0].mxu0
      %v3412 = vadd.f32 0.0, %v3411
      %v3413 = vpop.f32.mrb[0].mxu0
      %v3414 = vpop.f32.mrb[0].mxu0
      %v3415 = vadd.f32 0.0, %v3414
      %v3416 = vpop.f32.mrb[0].mxu0
      %3417 = vdwg.mxu0
      %v3418 = vadd.f32 %v2995, %v3388
      %v3419 = vadd.f32 %v2996, %v3391
      %v3420 = vadd.f32 %v2997, %v3396
      %v3421 = vadd.f32 %v2998, %v3399
      %v3422 = vadd.f32 %v2999, %v3404
      %v3423 = vadd.f32 %v3000, %v3407
      %v3424 = vadd.f32 %v3001, %v3412
      %v3425 = vadd.f32 %v3002, %v3415
      %3426 = vrot.lane.b32.xlu0 %v713, 32
      %v3427 = vpop.permute.xlu0 %3426
      %3428 = vrot.lane.b32.xlu0 %v716, 32
      %v3429 = vpop.permute.xlu0 %3428
      %3430 = vrot.lane.b32.xlu0 %v721, 32
      %v3431 = vpop.permute.xlu0 %3430
      %3432 = vrot.lane.b32.xlu0 %v724, 32
      %v3433 = vpop.permute.xlu0 %3432
      %3434 = vrot.lane.b32.xlu0 %v729, 32
      %v3435 = vpop.permute.xlu0 %3434
      %3436 = vrot.lane.b32.xlu0 %v732, 32
      %v3437 = vpop.permute.xlu0 %3436
      %3438 = vrot.lane.b32.xlu0 %v737, 32
      %v3439 = vpop.permute.xlu0 %3438
      %3440 = vrot.lane.b32.xlu0 %v740, 32
      %v3441 = vpop.permute.xlu0 %3440
      %3442 = vrot.lane.b32.xlu0 %v745, 32
      %v3443 = vpop.permute.xlu0 %3442
      %3444 = vrot.lane.b32.xlu0 %v748, 32
      %v3445 = vpop.permute.xlu0 %3444
      %3446 = vrot.lane.b32.xlu0 %v753, 32
      %v3447 = vpop.permute.xlu0 %3446
      %3448 = vrot.lane.b32.xlu0 %v756, 32
      %v3449 = vpop.permute.xlu0 %3448
      %3450 = vrot.lane.b32.xlu0 %v761, 32
      %v3451 = vpop.permute.xlu0 %3450
      %3452 = vrot.lane.b32.xlu0 %v764, 32
      %v3453 = vpop.permute.xlu0 %3452
      %3454 = vrot.lane.b32.xlu0 %v769, 32
      %v3455 = vpop.permute.xlu0 %3454
      %3456 = vrot.lane.b32.xlu0 %v772, 32
      %v3457 = vpop.permute.xlu0 %3456
      %3474 = vxpose.xlu0.b32.start [1/16] %v3427, 128
      %3475 = vxpose.xlu0.b32.cont [2/16] %v3429, 128
      %3476 = vxpose.xlu0.b32.cont [3/16] %v3431, 128
      %3477 = vxpose.xlu0.b32.cont [4/16] %v3433, 128
      %3478 = vxpose.xlu0.b32.cont [5/16] %v3435, 128
      %3479 = vxpose.xlu0.b32.cont [6/16] %v3437, 128
      %3480 = vxpose.xlu0.b32.cont [7/16] %v3439, 128
      %3481 = vxpose.xlu0.b32.cont [8/16] %v3441, 128
      %3482 = vxpose.xlu0.b32.cont [9/16] %v3443, 128
      %3483 = vxpose.xlu0.b32.cont [10/16] %v3445, 128
      %3484 = vxpose.xlu0.b32.cont [11/16] %v3447, 128
      %3485 = vxpose.xlu0.b32.cont [12/16] %v3449, 128
      %3486 = vxpose.xlu0.b32.cont [13/16] %v3451, 128
      %3487 = vxpose.xlu0.b32.cont [14/16] %v3453, 128
      %3488 = vxpose.xlu0.b32.cont [15/16] %v3455, 128
      %3489 = vxpose.xlu0.b32.end [16/16] %v3457, 128
      %v3490 = vpop.trf.xlu0
      %v3491 = vpop.trf.xlu0
      %v3492 = vpop.trf.xlu0
      %v3493 = vpop.trf.xlu0
      %v3494 = vpop.trf.xlu0
      %v3495 = vpop.trf.xlu0
      %v3496 = vpop.trf.xlu0
      %v3497 = vpop.trf.xlu0
      %v3498 = vpop.trf.xlu0
      %v3499 = vpop.trf.xlu0
      %v3500 = vpop.trf.xlu0
      %v3501 = vpop.trf.xlu0
      %v3502 = vpop.trf.xlu0
      %v3503 = vpop.trf.xlu0
      %v3504 = vpop.trf.xlu0
      %v3505 = vpop.trf.xlu0
      %v3506 = vpack.c.bf16 %v3491, %v3490
      %3507 = vrot.lane.b32.xlu0 %v943, 32
      %v3508 = vpop.permute.xlu0 %3507
      %3509 = vrot.lane.b32.xlu0 %v944, 32
      %v3510 = vpop.permute.xlu0 %3509
      %3511 = vrot.lane.b32.xlu0 %v945, 32
      %v3512 = vpop.permute.xlu0 %3511
      %3513 = vrot.lane.b32.xlu0 %v946, 32
      %v3514 = vpop.permute.xlu0 %3513
      %v3516 = vsel %vm988, %v3508, 0
      %v3519 = vsel %vm988, %v3510, 0
      %v3522 = vsel %vm988, %v3512, 0
      %v3525 = vsel %vm988, %v3514, 0
      %3527 = vmatprep.subr.bf16.mxu0 0
      %3528 = vmatpush1.bf16.msra.mxu0 %v3506
      %3529 = vmatprep.subr.bf16.mxu0 0
      %3530 = vmatpush1.bf16.msra.mxu0 0
      %3531 = vmatprep.subr.bf16.mxu0 0
      %3532 = vmatpush1.bf16.msra.mxu0 0
      %3533 = vmatprep.subr.bf16.mxu0 0
      %3534 = vmatpush1.bf16.msra.mxu0 0
      %3535 = vmatprep.subr.bf16.mxu0 0
      %3536 = vmatpush1.bf16.msra.mxu0 0
      %3537 = vmatprep.subr.bf16.mxu0 0
      %3538 = vmatpush1.bf16.msra.mxu0 0
      %3539 = vmatprep.subr.bf16.mxu0 0
      %3540 = vmatpush1.bf16.msra.mxu0 0
      %3541 = vmatprep.subr.bf16.mxu0 0
      %3542 = vmatpush1.bf16.msra.mxu0 0
      %3543 = vmatprep.subr.bf16.mxu0 0
      %3544 = vmatpush1.bf16.msra.mxu0 0
      %3545 = vmatprep.subr.bf16.mxu0 0
      %3546 = vmatpush1.bf16.msra.mxu0 0
      %3547 = vmatprep.subr.bf16.mxu0 0
      %3548 = vmatpush1.bf16.msra.mxu0 0
      %3549 = vmatprep.subr.bf16.mxu0 0
      %3550 = vmatpush1.bf16.msra.mxu0 0
      %3551 = vmatprep.subr.bf16.mxu0 0
      %3552 = vmatpush1.bf16.msra.mxu0 0
      %3553 = vmatprep.subr.bf16.mxu0 0
      %3554 = vmatpush1.bf16.msra.mxu0 0
      %3555 = vmatprep.subr.bf16.mxu0 0
      %3556 = vmatpush1.bf16.msra.mxu0 0
      %3557 = vmatprep.subr.bf16.mxu0 0
      %3558 = vmatpush1.bf16.msra.mxu0 0
      %3559 = vmatprep.mubr.bf16.mxu0 0
      %3560 = vmatmul.mubr.bf16.gmra.mrb[0].mxu0 %v3516
      %v3561 = vpop.f32.mrb[0].mxu0
      %v3562 = vadd.f32 0.0, %v3561
      %v3563 = vpop.f32.mrb[0].mxu0
      %v3564 = vpop.f32.mrb[0].mxu0
      %v3565 = vadd.f32 0.0, %v3564
      %v3566 = vpop.f32.mrb[0].mxu0
      %3567 = vmatprep.mubr.bf16.mxu0 0
      %3568 = vmatmul.mubr.bf16.gmra.mrb[0].mxu0 %v3519
      %v3569 = vpop.f32.mrb[0].mxu0
      %v3570 = vadd.f32 0.0, %v3569
      %v3571 = vpop.f32.mrb[0].mxu0
      %v3572 = vpop.f32.mrb[0].mxu0
      %v3573 = vadd.f32 0.0, %v3572
      %v3574 = vpop.f32.mrb[0].mxu0
      %3575 = vmatprep.mubr.bf16.mxu0 0
      %3576 = vmatmul.mubr.bf16.gmra.mrb[0].mxu0 %v3522
      %v3577 = vpop.f32.mrb[0].mxu0
      %v3578 = vadd.f32 0.0, %v3577
      %v3579 = vpop.f32.mrb[0].mxu0
      %v3580 = vpop.f32.mrb[0].mxu0
      %v3581 = vadd.f32 0.0, %v3580
      %v3582 = vpop.f32.mrb[0].mxu0
      %3583 = vmatprep.mubr.bf16.mxu0 0
      %3584 = vmatmul.mubr.bf16.gmra.mrb[0].mxu0 %v3525
      %v3585 = vpop.f32.mrb[0].mxu0
      %v3586 = vadd.f32 0.0, %v3585
      %v3587 = vpop.f32.mrb[0].mxu0
      %v3588 = vpop.f32.mrb[0].mxu0
      %v3589 = vadd.f32 0.0, %v3588
      %v3590 = vpop.f32.mrb[0].mxu0
      %3591 = vdwg.mxu0
      %3592 = vmax.xlane.f32.xlu0 %v3562
      %v3593 = vpop.xlane.xlu0 %3592
      %3594 = vmax.xlane.f32.xlu0 %v3565
      %v3595 = vpop.xlane.xlu0 %3594
      %3596 = vmax.xlane.f32.xlu0 %v3570
      %v3597 = vpop.xlane.xlu0 %3596
      %3598 = vmax.xlane.f32.xlu0 %v3573
      %v3599 = vpop.xlane.xlu0 %3598
      %3600 = vmax.xlane.f32.xlu0 %v3578
      %v3601 = vpop.xlane.xlu0 %3600
      %3602 = vmax.xlane.f32.xlu0 %v3581
      %v3603 = vpop.xlane.xlu0 %3602
      %3604 = vmax.xlane.f32.xlu0 %v3586
      %v3605 = vpop.xlane.xlu0 %3604
      %3606 = vmax.xlane.f32.xlu0 %v3589
      %v3607 = vpop.xlane.xlu0 %3606
      %v3608 = vsub.f32 %v3562, %v3593
      %v3609 = vsub.f32 %v3565, %v3595
      %v3610 = vsub.f32 %v3570, %v3597
      %v3611 = vsub.f32 %v3573, %v3599
      %v3612 = vsub.f32 %v3578, %v3601
      %v3613 = vsub.f32 %v3581, %v3603
      %v3614 = vsub.f32 %v3586, %v3605
      %v3615 = vsub.f32 %v3589, %v3607
      %v3616 = vmul.f32 %v3608, 1.442695
      %v3617 = vpow.pop %v3616
      %v3618 = vmul.f32 %v3609, 1.442695
      %v3619 = vpow.pop %v3618
      %v3620 = vmul.f32 %v3610, 1.442695
      %v3621 = vpow.pop %v3620
      %v3622 = vmul.f32 %v3611, 1.442695
      %v3623 = vpow.pop %v3622
      %v3624 = vmul.f32 %v3612, 1.442695
      %v3625 = vpow.pop %v3624
      %v3626 = vmul.f32 %v3613, 1.442695
      %v3627 = vpow.pop %v3626
      %v3628 = vmul.f32 %v3614, 1.442695
      %v3629 = vpow.pop %v3628
      %v3630 = vmul.f32 %v3615, 1.442695
      %v3631 = vpow.pop %v3630
      %3632 = vadd.xlane.f32.xlu0 %v3617
      %v3633 = vpop.xlane.xlu0 %3632
      %3634 = vadd.xlane.f32.xlu0 %v3619
      %v3635 = vpop.xlane.xlu0 %3634
      %3636 = vadd.xlane.f32.xlu0 %v3621
      %v3637 = vpop.xlane.xlu0 %3636
      %3638 = vadd.xlane.f32.xlu0 %v3623
      %v3639 = vpop.xlane.xlu0 %3638
      %3640 = vadd.xlane.f32.xlu0 %v3625
      %v3641 = vpop.xlane.xlu0 %3640
      %3642 = vadd.xlane.f32.xlu0 %v3627
      %v3643 = vpop.xlane.xlu0 %3642
      %3644 = vadd.xlane.f32.xlu0 %v3629
      %v3645 = vpop.xlane.xlu0 %3644
      %3646 = vadd.xlane.f32.xlu0 %v3631
      %v3647 = vpop.xlane.xlu0 %3646
      %v3648 = vrcp.pop %v3633
      %v3649 = vrcp.pop %v3635
      %v3650 = vrcp.pop %v3637
      %v3651 = vrcp.pop %v3639
      %v3652 = vrcp.pop %v3641
      %v3653 = vrcp.pop %v3643
      %v3654 = vrcp.pop %v3645
      %v3655 = vrcp.pop %v3647
      %v3656 = vmul.f32 %v3617, %v3648
      %v3657 = vmul.f32 %v3619, %v3649
      %v3658 = vmul.f32 %v3621, %v3650
      %v3659 = vmul.f32 %v3623, %v3651
      %v3660 = vmul.f32 %v3625, %v3652
      %v3661 = vmul.f32 %v3627, %v3653
      %v3662 = vmul.f32 %v3629, %v3654
      %v3663 = vmul.f32 %v3631, %v3655
      %v3664 = vpack.c.bf16 %v3657, %v3656
      %v3665 = vpack.c.bf16 %v3659, %v3658
      %v3666 = vpack.c.bf16 %v3661, %v3660
      %v3667 = vpack.c.bf16 %v3663, %v3662
      %3668 = vrot.lane.b32.xlu0 %v980, 32
      %v3669 = vpop.permute.xlu0 %3668
      %3670 = vrot.lane.b32.xlu0 %v981, 32
      %v3671 = vpop.permute.xlu0 %3670
      %3672 = vrot.lane.b32.xlu0 %v982, 32
      %v3673 = vpop.permute.xlu0 %3672
      %3674 = vrot.lane.b32.xlu0 %v983, 32
      %v3675 = vpop.permute.xlu0 %3674
      %3676 = vrot.lane.b32.xlu0 %v984, 32
      %v3677 = vpop.permute.xlu0 %3676
      %3678 = vrot.lane.b32.xlu0 %v985, 32
      %v3679 = vpop.permute.xlu0 %3678
      %3680 = vrot.lane.b32.xlu0 %v986, 32
      %v3681 = vpop.permute.xlu0 %3680
      %3682 = vrot.lane.b32.xlu0 %v987, 32
      %v3683 = vpop.permute.xlu0 %3682
      %3692 = vmatprep.subr.bf16.mxu0 0
      %3693 = vmatpush1.bf16.msra.mxu0 %v3669
      %3694 = vmatprep.subr.bf16.mxu0 0
      %3695 = vmatpush1.bf16.msra.mxu0 %v3671
      %3696 = vmatprep.subr.bf16.mxu0 0
      %3697 = vmatpush1.bf16.msra.mxu0 %v3673
      %3698 = vmatprep.subr.bf16.mxu0 0
      %3699 = vmatpush1.bf16.msra.mxu0 %v3675
      %3700 = vmatprep.subr.bf16.mxu0 0
      %3701 = vmatpush1.bf16.msra.mxu0 %v3677
      %3702 = vmatprep.subr.bf16.mxu0 0
      %3703 = vmatpush1.bf16.msra.mxu0 %v3679
      %3704 = vmatprep.subr.bf16.mxu0 0
      %3705 = vmatpush1.bf16.msra.mxu0 %v3681
      %3706 = vmatprep.subr.bf16.mxu0 0
      %3707 = vmatpush1.bf16.msra.mxu0 %v3683
      %3708 = vmatprep.subr.bf16.mxu0 0
      %3709 = vmatpush1.bf16.msra.mxu0 0
      %3710 = vmatprep.subr.bf16.mxu0 0
      %3711 = vmatpush1.bf16.msra.mxu0 0
      %3712 = vmatprep.subr.bf16.mxu0 0
      %3713 = vmatpush1.bf16.msra.mxu0 0
      %3714 = vmatprep.subr.bf16.mxu0 0
      %3715 = vmatpush1.bf16.msra.mxu0 0
      %3716 = vmatprep.subr.bf16.mxu0 0
      %3717 = vmatpush1.bf16.msra.mxu0 0
      %3718 = vmatprep.subr.bf16.mxu0 0
      %3719 = vmatpush1.bf16.msra.mxu0 0
      %3720 = vmatprep.subr.bf16.mxu0 0
      %3721 = vmatpush1.bf16.msra.mxu0 0
      %3722 = vmatprep.subr.bf16.mxu0 0
      %3723 = vmatpush1.bf16.msra.mxu0 0
      %3724 = vmatprep.mubr.bf16.mxu0 0
      %3725 = vmatmul.mubr.bf16.gmra.mrb[0].mxu0 %v3664
      %v3726 = vpop.f32.mrb[0].mxu0
      %v3727 = vadd.f32 0.0, %v3726
      %v3728 = vpop.f32.mrb[0].mxu0
      %v3729 = vpop.f32.mrb[0].mxu0
      %v3730 = vadd.f32 0.0, %v3729
      %v3731 = vpop.f32.mrb[0].mxu0
      %3732 = vmatprep.mubr.bf16.mxu0 0
      %3733 = vmatmul.mubr.bf16.gmra.mrb[0].mxu0 %v3665
      %v3734 = vpop.f32.mrb[0].mxu0
      %v3735 = vadd.f32 0.0, %v3734
      %v3736 = vpop.f32.mrb[0].mxu0
      %v3737 = vpop.f32.mrb[0].mxu0
      %v3738 = vadd.f32 0.0, %v3737
      %v3739 = vpop.f32.mrb[0].mxu0
      %3740 = vmatprep.mubr.bf16.mxu0 0
      %3741 = vmatmul.mubr.bf16.gmra.mrb[0].mxu0 %v3666
      %v3742 = vpop.f32.mrb[0].mxu0
      %v3743 = vadd.f32 0.0, %v3742
      %v3744 = vpop.f32.mrb[0].mxu0
      %v3745 = vpop.f32.mrb[0].mxu0
      %v3746 = vadd.f32 0.0, %v3745
      %v3747 = vpop.f32.mrb[0].mxu0
      %3748 = vmatprep.mubr.bf16.mxu0 0
      %3749 = vmatmul.mubr.bf16.gmra.mrb[0].mxu0 %v3667
      %v3750 = vpop.f32.mrb[0].mxu0
      %v3751 = vadd.f32 0.0, %v3750
      %v3752 = vpop.f32.mrb[0].mxu0
      %v3753 = vpop.f32.mrb[0].mxu0
      %v3754 = vadd.f32 0.0, %v3753
      %v3755 = vpop.f32.mrb[0].mxu0
      %3756 = vdwg.mxu0
      %v3757 = vld [vmem:[%s8 + $0x60] sm:$0xff]
      %v3758 = vld [vmem:[%s8 + $0x68] sm:$0xff]
      %v3759 = vpack.c.bf16 %v3758, %v3757
      %v3760 = vpack.c.bf16 %v3730, %v3727
      %v3761 = vpack.c.bf16 %v3738, %v3735
      %v3762 = vpack.c.bf16 %v3746, %v3743
      %v3763 = vpack.c.bf16 %v3754, %v3751
      %v3765 = vsel %vm988, %v3760, 0
      %v3768 = vsel %vm988, %v3761, 0
      %v3771 = vsel %vm988, %v3762, 0
      %v3774 = vsel %vm988, %v3763, 0
      %3776 = vmatprep.subr.bf16.mxu0 0
      %3777 = vmatpush1.bf16.msra.mxu0 %v3759
      %3778 = vmatprep.subr.bf16.mxu0 0
      %3779 = vmatpush1.bf16.msra.mxu0 0
      %3780 = vmatprep.subr.bf16.mxu0 0
      %3781 = vmatpush1.bf16.msra.mxu0 0
      %3782 = vmatprep.subr.bf16.mxu0 0
      %3783 = vmatpush1.bf16.msra.mxu0 0
      %3784 = vmatprep.subr.bf16.mxu0 0
      %3785 = vmatpush1.bf16.msra.mxu0 0
      %3786 = vmatprep.subr.bf16.mxu0 0
      %3787 = vmatpush1.bf16.msra.mxu0 0
      %3788 = vmatprep.subr.bf16.mxu0 0
      %3789 = vmatpush1.bf16.msra.mxu0 0
      %3790 = vmatprep.subr.bf16.mxu0 0
      %3791 = vmatpush1.bf16.msra.mxu0 0
      %3792 = vmatprep.subr.bf16.mxu0 0
      %3793 = vmatpush1.bf16.msra.mxu0 0
      %3794 = vmatprep.subr.bf16.mxu0 0
      %3795 = vmatpush1.bf16.msra.mxu0 0
      %3796 = vmatprep.subr.bf16.mxu0 0
      %3797 = vmatpush1.bf16.msra.mxu0 0
      %3798 = vmatprep.subr.bf16.mxu0 0
      %3799 = vmatpush1.bf16.msra.mxu0 0
      %3800 = vmatprep.subr.bf16.mxu0 0
      %3801 = vmatpush1.bf16.msra.mxu0 0
      %3802 = vmatprep.subr.bf16.mxu0 0
      %3803 = vmatpush1.bf16.msra.mxu0 0
      %3804 = vmatprep.subr.bf16.mxu0 0
      %3805 = vmatpush1.bf16.msra.mxu0 0
      %3806 = vmatprep.subr.bf16.mxu0 0
      %3807 = vmatpush1.bf16.msra.mxu0 0
      %3808 = vmatprep.mubr.bf16.mxu0 0
      %3809 = vmatmul.mubr.bf16.gmra.mrb[0].mxu0 %v3765
      %v3810 = vpop.f32.mrb[0].mxu0
      %v3811 = vadd.f32 0.0, %v3810
      %v3812 = vpop.f32.mrb[0].mxu0
      %v3813 = vpop.f32.mrb[0].mxu0
      %v3814 = vadd.f32 0.0, %v3813
      %v3815 = vpop.f32.mrb[0].mxu0
      %3816 = vmatprep.mubr.bf16.mxu0 0
      %3817 = vmatmul.mubr.bf16.gmra.mrb[0].mxu0 %v3768
      %v3818 = vpop.f32.mrb[0].mxu0
      %v3819 = vadd.f32 0.0, %v3818
      %v3820 = vpop.f32.mrb[0].mxu0
      %v3821 = vpop.f32.mrb[0].mxu0
      %v3822 = vadd.f32 0.0, %v3821
      %v3823 = vpop.f32.mrb[0].mxu0
      %3824 = vmatprep.mubr.bf16.mxu0 0
      %3825 = vmatmul.mubr.bf16.gmra.mrb[0].mxu0 %v3771
      %v3826 = vpop.f32.mrb[0].mxu0
      %v3827 = vadd.f32 0.0, %v3826
      %v3828 = vpop.f32.mrb[0].mxu0
      %v3829 = vpop.f32.mrb[0].mxu0
      %v3830 = vadd.f32 0.0, %v3829
      %v3831 = vpop.f32.mrb[0].mxu0
      %3832 = vmatprep.mubr.bf16.mxu0 0
      %3833 = vmatmul.mubr.bf16.gmra.mrb[0].mxu0 %v3774
      %v3834 = vpop.f32.mrb[0].mxu0
      %v3835 = vadd.f32 0.0, %v3834
      %v3836 = vpop.f32.mrb[0].mxu0
      %v3837 = vpop.f32.mrb[0].mxu0
      %v3838 = vadd.f32 0.0, %v3837
      %v3839 = vpop.f32.mrb[0].mxu0
      %3840 = vdwg.mxu0
      %v3841 = vadd.f32 %v3418, %v3811
      %v3842 = vadd.f32 %v3419, %v3814
      %v3843 = vadd.f32 %v3420, %v3819
      %v3844 = vadd.f32 %v3421, %v3822
      %v3845 = vadd.f32 %v3422, %v3827
      %v3846 = vadd.f32 %v3423, %v3830
      %v3847 = vadd.f32 %v3424, %v3835
      %v3848 = vadd.f32 %v3425, %v3838
      %3849 = vrot.lane.b32.xlu0 %v713, 16
      %v3850 = vpop.permute.xlu0 %3849
      %3851 = vrot.lane.b32.xlu0 %v716, 16
      %v3852 = vpop.permute.xlu0 %3851
      %3853 = vrot.lane.b32.xlu0 %v721, 16
      %v3854 = vpop.permute.xlu0 %3853
      %3855 = vrot.lane.b32.xlu0 %v724, 16
      %v3856 = vpop.permute.xlu0 %3855
      %3857 = vrot.lane.b32.xlu0 %v729, 16
      %v3858 = vpop.permute.xlu0 %3857
      %3859 = vrot.lane.b32.xlu0 %v732, 16
      %v3860 = vpop.permute.xlu0 %3859
      %3861 = vrot.lane.b32.xlu0 %v737, 16
      %v3862 = vpop.permute.xlu0 %3861
      %3863 = vrot.lane.b32.xlu0 %v740, 16
      %v3864 = vpop.permute.xlu0 %3863
      %3865 = vrot.lane.b32.xlu0 %v745, 16
      %v3866 = vpop.permute.xlu0 %3865
      %3867 = vrot.lane.b32.xlu0 %v748, 16
      %v3868 = vpop.permute.xlu0 %3867
      %3869 = vrot.lane.b32.xlu0 %v753, 16
      %v3870 = vpop.permute.xlu0 %3869
      %3871 = vrot.lane.b32.xlu0 %v756, 16
      %v3872 = vpop.permute.xlu0 %3871
      %3873 = vrot.lane.b32.xlu0 %v761, 16
      %v3874 = vpop.permute.xlu0 %3873
      %3875 = vrot.lane.b32.xlu0 %v764, 16
      %v3876 = vpop.permute.xlu0 %3875
      %3877 = vrot.lane.b32.xlu0 %v769, 16
      %v3878 = vpop.permute.xlu0 %3877
      %3879 = vrot.lane.b32.xlu0 %v772, 16
      %v3880 = vpop.permute.xlu0 %3879
      %3897 = vxpose.xlu0.b32.start [1/16] %v3850, 128
      %3898 = vxpose.xlu0.b32.cont [2/16] %v3852, 128
      %3899 = vxpose.xlu0.b32.cont [3/16] %v3854, 128
      %3900 = vxpose.xlu0.b32.cont [4/16] %v3856, 128
      %3901 = vxpose.xlu0.b32.cont [5/16] %v3858, 128
      %3902 = vxpose.xlu0.b32.cont [6/16] %v3860, 128
      %3903 = vxpose.xlu0.b32.cont [7/16] %v3862, 128
      %3904 = vxpose.xlu0.b32.cont [8/16] %v3864, 128
      %3905 = vxpose.xlu0.b32.cont [9/16] %v3866, 128
      %3906 = vxpose.xlu0.b32.cont [10/16] %v3868, 128
      %3907 = vxpose.xlu0.b32.cont [11/16] %v3870, 128
      %3908 = vxpose.xlu0.b32.cont [12/16] %v3872, 128
      %3909 = vxpose.xlu0.b32.cont [13/16] %v3874, 128
      %3910 = vxpose.xlu0.b32.cont [14/16] %v3876, 128
      %3911 = vxpose.xlu0.b32.cont [15/16] %v3878, 128
      %3912 = vxpose.xlu0.b32.end [16/16] %v3880, 128
      %v3913 = vpop.trf.xlu0
      %v3914 = vpop.trf.xlu0
      %v3915 = vpop.trf.xlu0
      %v3916 = vpop.trf.xlu0
      %v3917 = vpop.trf.xlu0
      %v3918 = vpop.trf.xlu0
      %v3919 = vpop.trf.xlu0
      %v3920 = vpop.trf.xlu0
      %v3921 = vpop.trf.xlu0
      %v3922 = vpop.trf.xlu0
      %v3923 = vpop.trf.xlu0
      %v3924 = vpop.trf.xlu0
      %v3925 = vpop.trf.xlu0
      %v3926 = vpop.trf.xlu0
      %v3927 = vpop.trf.xlu0
      %v3928 = vpop.trf.xlu0
      %v3929 = vpack.c.bf16 %v3914, %v3913
      %3930 = vrot.lane.b32.xlu0 %v943, 16
      %v3931 = vpop.permute.xlu0 %3930
      %3932 = vrot.lane.b32.xlu0 %v944, 16
      %v3933 = vpop.permute.xlu0 %3932
      %3934 = vrot.lane.b32.xlu0 %v945, 16
      %v3935 = vpop.permute.xlu0 %3934
      %3936 = vrot.lane.b32.xlu0 %v946, 16
      %v3937 = vpop.permute.xlu0 %3936
      %v3939 = vsel %vm988, %v3931, 0
      %v3942 = vsel %vm988, %v3933, 0
      %v3945 = vsel %vm988, %v3935, 0
      %v3948 = vsel %vm988, %v3937, 0
      %3950 = vmatprep.subr.bf16.mxu0 0
      %3951 = vmatpush1.bf16.msra.mxu0 %v3929
      %3952 = vmatprep.subr.bf16.mxu0 0
      %3953 = vmatpush1.bf16.msra.mxu0 0
      %3954 = vmatprep.subr.bf16.mxu0 0
      %3955 = vmatpush1.bf16.msra.mxu0 0
      %3956 = vmatprep.subr.bf16.mxu0 0
      %3957 = vmatpush1.bf16.msra.mxu0 0
      %3958 = vmatprep.subr.bf16.mxu0 0
      %3959 = vmatpush1.bf16.msra.mxu0 0
      %3960 = vmatprep.subr.bf16.mxu0 0
      %3961 = vmatpush1.bf16.msra.mxu0 0
      %3962 = vmatprep.subr.bf16.mxu0 0
      %3963 = vmatpush1.bf16.msra.mxu0 0
      %3964 = vmatprep.subr.bf16.mxu0 0
      %3965 = vmatpush1.bf16.msra.mxu0 0
      %3966 = vmatprep.subr.bf16.mxu0 0
      %3967 = vmatpush1.bf16.msra.mxu0 0
      %3968 = vmatprep.subr.bf16.mxu0 0
      %3969 = vmatpush1.bf16.msra.mxu0 0
      %3970 = vmatprep.subr.bf16.mxu0 0
      %3971 = vmatpush1.bf16.msra.mxu0 0
      %3972 = vmatprep.subr.bf16.mxu0 0
      %3973 = vmatpush1.bf16.msra.mxu0 0
      %3974 = vmatprep.subr.bf16.mxu0 0
      %3975 = vmatpush1.bf16.msra.mxu0 0
      %3976 = vmatprep.subr.bf16.mxu0 0
      %3977 = vmatpush1.bf16.msra.mxu0 0
      %3978 = vmatprep.subr.bf16.mxu0 0
      %3979 = vmatpush1.bf16.msra.mxu0 0
      %3980 = vmatprep.subr.bf16.mxu0 0
      %3981 = vmatpush1.bf16.msra.mxu0 0
      %3982 = vmatprep.mubr.bf16.mxu0 0
      %3983 = vmatmul.mubr.bf16.gmra.mrb[0].mxu0 %v3939
      %v3984 = vpop.f32.mrb[0].mxu0
      %v3985 = vadd.f32 0.0, %v3984
      %v3986 = vpop.f32.mrb[0].mxu0
      %v3987 = vpop.f32.mrb[0].mxu0
      %v3988 = vadd.f32 0.0, %v3987
      %v3989 = vpop.f32.mrb[0].mxu0
      %3990 = vmatprep.mubr.bf16.mxu0 0
      %3991 = vmatmul.mubr.bf16.gmra.mrb[0].mxu0 %v3942
      %v3992 = vpop.f32.mrb[0].mxu0
      %v3993 = vadd.f32 0.0, %v3992
      %v3994 = vpop.f32.mrb[0].mxu0
      %v3995 = vpop.f32.mrb[0].mxu0
      %v3996 = vadd.f32 0.0, %v3995
      %v3997 = vpop.f32.mrb[0].mxu0
      %3998 = vmatprep.mubr.bf16.mxu0 0
      %3999 = vmatmul.mubr.bf16.gmra.mrb[0].mxu0 %v3945
      %v4000 = vpop.f32.mrb[0].mxu0
      %v4001 = vadd.f32 0.0, %v4000
      %v4002 = vpop.f32.mrb[0].mxu0
      %v4003 = vpop.f32.mrb[0].mxu0
      %v4004 = vadd.f32 0.0, %v4003
      %v4005 = vpop.f32.mrb[0].mxu0
      %4006 = vmatprep.mubr.bf16.mxu0 0
      %4007 = vmatmul.mubr.bf16.gmra.mrb[0].mxu0 %v3948
      %v4008 = vpop.f32.mrb[0].mxu0
      %v4009 = vadd.f32 0.0, %v4008
      %v4010 = vpop.f32.mrb[0].mxu0
      %v4011 = vpop.f32.mrb[0].mxu0
      %v4012 = vadd.f32 0.0, %v4011
      %v4013 = vpop.f32.mrb[0].mxu0
      %4014 = vdwg.mxu0
      %4015 = vmax.xlane.f32.xlu0 %v3985
      %v4016 = vpop.xlane.xlu0 %4015
      %4017 = vmax.xlane.f32.xlu0 %v3988
      %v4018 = vpop.xlane.xlu0 %4017
      %4019 = vmax.xlane.f32.xlu0 %v3993
      %v4020 = vpop.xlane.xlu0 %4019
      %4021 = vmax.xlane.f32.xlu0 %v3996
      %v4022 = vpop.xlane.xlu0 %4021
      %4023 = vmax.xlane.f32.xlu0 %v4001
      %v4024 = vpop.xlane.xlu0 %4023
      %4025 = vmax.xlane.f32.xlu0 %v4004
      %v4026 = vpop.xlane.xlu0 %4025
      %4027 = vmax.xlane.f32.xlu0 %v4009
      %v4028 = vpop.xlane.xlu0 %4027
      %4029 = vmax.xlane.f32.xlu0 %v4012
      %v4030 = vpop.xlane.xlu0 %4029
      %v4031 = vsub.f32 %v3985, %v4016
      %v4032 = vsub.f32 %v3988, %v4018
      %v4033 = vsub.f32 %v3993, %v4020
      %v4034 = vsub.f32 %v3996, %v4022
      %v4035 = vsub.f32 %v4001, %v4024
      %v4036 = vsub.f32 %v4004, %v4026
      %v4037 = vsub.f32 %v4009, %v4028
      %v4038 = vsub.f32 %v4012, %v4030
      %v4039 = vmul.f32 %v4031, 1.442695
      %v4040 = vpow.pop %v4039
      %v4041 = vmul.f32 %v4032, 1.442695
      %v4042 = vpow.pop %v4041
      %v4043 = vmul.f32 %v4033, 1.442695
      %v4044 = vpow.pop %v4043
      %v4045 = vmul.f32 %v4034, 1.442695
      %v4046 = vpow.pop %v4045
      %v4047 = vmul.f32 %v4035, 1.442695
      %v4048 = vpow.pop %v4047
      %v4049 = vmul.f32 %v4036, 1.442695
      %v4050 = vpow.pop %v4049
      %v4051 = vmul.f32 %v4037, 1.442695
      %v4052 = vpow.pop %v4051
      %v4053 = vmul.f32 %v4038, 1.442695
      %v4054 = vpow.pop %v4053
      %4055 = vadd.xlane.f32.xlu0 %v4040
      %v4056 = vpop.xlane.xlu0 %4055
      %4057 = vadd.xlane.f32.xlu0 %v4042
      %v4058 = vpop.xlane.xlu0 %4057
      %4059 = vadd.xlane.f32.xlu0 %v4044
      %v4060 = vpop.xlane.xlu0 %4059
      %4061 = vadd.xlane.f32.xlu0 %v4046
      %v4062 = vpop.xlane.xlu0 %4061
      %4063 = vadd.xlane.f32.xlu0 %v4048
      %v4064 = vpop.xlane.xlu0 %4063
      %4065 = vadd.xlane.f32.xlu0 %v4050
      %v4066 = vpop.xlane.xlu0 %4065
      %4067 = vadd.xlane.f32.xlu0 %v4052
      %v4068 = vpop.xlane.xlu0 %4067
      %4069 = vadd.xlane.f32.xlu0 %v4054
      %v4070 = vpop.xlane.xlu0 %4069
      %v4071 = vrcp.pop %v4056
      %v4072 = vrcp.pop %v4058
      %v4073 = vrcp.pop %v4060
      %v4074 = vrcp.pop %v4062
      %v4075 = vrcp.pop %v4064
      %v4076 = vrcp.pop %v4066
      %v4077 = vrcp.pop %v4068
      %v4078 = vrcp.pop %v4070
      %v4079 = vmul.f32 %v4040, %v4071
      %v4080 = vmul.f32 %v4042, %v4072
      %v4081 = vmul.f32 %v4044, %v4073
      %v4082 = vmul.f32 %v4046, %v4074
      %v4083 = vmul.f32 %v4048, %v4075
      %v4084 = vmul.f32 %v4050, %v4076
      %v4085 = vmul.f32 %v4052, %v4077
      %v4086 = vmul.f32 %v4054, %v4078
      %v4087 = vpack.c.bf16 %v4080, %v4079
      %v4088 = vpack.c.bf16 %v4082, %v4081
      %v4089 = vpack.c.bf16 %v4084, %v4083
      %v4090 = vpack.c.bf16 %v4086, %v4085
      %4091 = vrot.lane.b32.xlu0 %v980, 16
      %v4092 = vpop.permute.xlu0 %4091
      %4093 = vrot.lane.b32.xlu0 %v981, 16
      %v4094 = vpop.permute.xlu0 %4093
      %4095 = vrot.lane.b32.xlu0 %v982, 16
      %v4096 = vpop.permute.xlu0 %4095
      %4097 = vrot.lane.b32.xlu0 %v983, 16
      %v4098 = vpop.permute.xlu0 %4097
      %4099 = vrot.lane.b32.xlu0 %v984, 16
      %v4100 = vpop.permute.xlu0 %4099
      %4101 = vrot.lane.b32.xlu0 %v985, 16
      %v4102 = vpop.permute.xlu0 %4101
      %4103 = vrot.lane.b32.xlu0 %v986, 16
      %v4104 = vpop.permute.xlu0 %4103
      %4105 = vrot.lane.b32.xlu0 %v987, 16
      %v4106 = vpop.permute.xlu0 %4105
      %4115 = vmatprep.subr.bf16.mxu0 0
      %4116 = vmatpush1.bf16.msra.mxu0 %v4092
      %4117 = vmatprep.subr.bf16.mxu0 0
      %4118 = vmatpush1.bf16.msra.mxu0 %v4094
      %4119 = vmatprep.subr.bf16.mxu0 0
      %4120 = vmatpush1.bf16.msra.mxu0 %v4096
      %4121 = vmatprep.subr.bf16.mxu0 0
      %4122 = vmatpush1.bf16.msra.mxu0 %v4098
      %4123 = vmatprep.subr.bf16.mxu0 0
      %4124 = vmatpush1.bf16.msra.mxu0 %v4100
      %4125 = vmatprep.subr.bf16.mxu0 0
      %4126 = vmatpush1.bf16.msra.mxu0 %v4102
      %4127 = vmatprep.subr.bf16.mxu0 0
      %4128 = vmatpush1.bf16.msra.mxu0 %v4104
      %4129 = vmatprep.subr.bf16.mxu0 0
      %4130 = vmatpush1.bf16.msra.mxu0 %v4106
      %4131 = vmatprep.subr.bf16.mxu0 0
      %4132 = vmatpush1.bf16.msra.mxu0 0
      %4133 = vmatprep.subr.bf16.mxu0 0
      %4134 = vmatpush1.bf16.msra.mxu0 0
      %4135 = vmatprep.subr.bf16.mxu0 0
      %4136 = vmatpush1.bf16.msra.mxu0 0
      %4137 = vmatprep.subr.bf16.mxu0 0
      %4138 = vmatpush1.bf16.msra.mxu0 0
      %4139 = vmatprep.subr.bf16.mxu0 0
      %4140 = vmatpush1.bf16.msra.mxu0 0
      %4141 = vmatprep.subr.bf16.mxu0 0
      %4142 = vmatpush1.bf16.msra.mxu0 0
      %4143 = vmatprep.subr.bf16.mxu0 0
      %4144 = vmatpush1.bf16.msra.mxu0 0
      %4145 = vmatprep.subr.bf16.mxu0 0
      %4146 = vmatpush1.bf16.msra.mxu0 0
      %4147 = vmatprep.mubr.bf16.mxu0 0
      %4148 = vmatmul.mubr.bf16.gmra.mrb[0].mxu0 %v4087
      %v4149 = vpop.f32.mrb[0].mxu0
      %v4150 = vadd.f32 0.0, %v4149
      %v4151 = vpop.f32.mrb[0].mxu0
      %v4152 = vpop.f32.mrb[0].mxu0
      %v4153 = vadd.f32 0.0, %v4152
      %v4154 = vpop.f32.mrb[0].mxu0
      %4155 = vmatprep.mubr.bf16.mxu0 0
      %4156 = vmatmul.mubr.bf16.gmra.mrb[0].mxu0 %v4088
      %v4157 = vpop.f32.mrb[0].mxu0
      %v4158 = vadd.f32 0.0, %v4157
      %v4159 = vpop.f32.mrb[0].mxu0
      %v4160 = vpop.f32.mrb[0].mxu0
      %v4161 = vadd.f32 0.0, %v4160
      %v4162 = vpop.f32.mrb[0].mxu0
      %4163 = vmatprep.mubr.bf16.mxu0 0
      %4164 = vmatmul.mubr.bf16.gmra.mrb[0].mxu0 %v4089
      %v4165 = vpop.f32.mrb[0].mxu0
      %v4166 = vadd.f32 0.0, %v4165
      %v4167 = vpop.f32.mrb[0].mxu0
      %v4168 = vpop.f32.mrb[0].mxu0
      %v4169 = vadd.f32 0.0, %v4168
      %v4170 = vpop.f32.mrb[0].mxu0
      %4171 = vmatprep.mubr.bf16.mxu0 0
      %4172 = vmatmul.mubr.bf16.gmra.mrb[0].mxu0 %v4090
      %v4173 = vpop.f32.mrb[0].mxu0
      %v4174 = vadd.f32 0.0, %v4173
      %v4175 = vpop.f32.mrb[0].mxu0
      %v4176 = vpop.f32.mrb[0].mxu0
      %v4177 = vadd.f32 0.0, %v4176
      %v4178 = vpop.f32.mrb[0].mxu0
      %4179 = vdwg.mxu0
      %v4180 = vld [vmem:[%s8 + $0x70] sm:$0xff]
      %v4181 = vld [vmem:[%s8 + $0x78] sm:$0xff]
      %v4182 = vpack.c.bf16 %v4181, %v4180
      %v4183 = vpack.c.bf16 %v4153, %v4150
      %v4184 = vpack.c.bf16 %v4161, %v4158
      %v4185 = vpack.c.bf16 %v4169, %v4166
      %v4186 = vpack.c.bf16 %v4177, %v4174
      %v4188 = vsel %vm988, %v4183, 0
      %v4191 = vsel %vm988, %v4184, 0
      %v4194 = vsel %vm988, %v4185, 0
      %v4197 = vsel %vm988, %v4186, 0
      %4199 = vmatprep.subr.bf16.mxu0 0
      %4200 = vmatpush1.bf16.msra.mxu0 %v4182
      %4201 = vmatprep.subr.bf16.mxu0 0
      %4202 = vmatpush1.bf16.msra.mxu0 0
      %4203 = vmatprep.subr.bf16.mxu0 0
      %4204 = vmatpush1.bf16.msra.mxu0 0
      %4205 = vmatprep.subr.bf16.mxu0 0
      %4206 = vmatpush1.bf16.msra.mxu0 0
      %4207 = vmatprep.subr.bf16.mxu0 0
      %4208 = vmatpush1.bf16.msra.mxu0 0
      %4209 = vmatprep.subr.bf16.mxu0 0
      %4210 = vmatpush1.bf16.msra.mxu0 0
      %4211 = vmatprep.subr.bf16.mxu0 0
      %4212 = vmatpush1.bf16.msra.mxu0 0
      %4213 = vmatprep.subr.bf16.mxu0 0
      %4214 = vmatpush1.bf16.msra.mxu0 0
      %4215 = vmatprep.subr.bf16.mxu0 0
      %4216 = vmatpush1.bf16.msra.mxu0 0
      %4217 = vmatprep.subr.bf16.mxu0 0
      %4218 = vmatpush1.bf16.msra.mxu0 0
      %4219 = vmatprep.subr.bf16.mxu0 0
      %4220 = vmatpush1.bf16.msra.mxu0 0
      %4221 = vmatprep.subr.bf16.mxu0 0
      %4222 = vmatpush1.bf16.msra.mxu0 0
      %4223 = vmatprep.subr.bf16.mxu0 0
      %4224 = vmatpush1.bf16.msra.mxu0 0
      %4225 = vmatprep.subr.bf16.mxu0 0
      %4226 = vmatpush1.bf16.msra.mxu0 0
      %4227 = vmatprep.subr.bf16.mxu0 0
      %4228 = vmatpush1.bf16.msra.mxu0 0
      %4229 = vmatprep.subr.bf16.mxu0 0
      %4230 = vmatpush1.bf16.msra.mxu0 0
      %4231 = vmatprep.mubr.bf16.mxu0 0
      %4232 = vmatmul.mubr.bf16.gmra.mrb[0].mxu0 %v4188
      %v4233 = vpop.f32.mrb[0].mxu0
      %v4234 = vadd.f32 0.0, %v4233
      %v4235 = vpop.f32.mrb[0].mxu0
      %v4236 = vpop.f32.mrb[0].mxu0
      %v4237 = vadd.f32 0.0, %v4236
      %v4238 = vpop.f32.mrb[0].mxu0
      %4239 = vmatprep.mubr.bf16.mxu0 0
      %4240 = vmatmul.mubr.bf16.gmra.mrb[0].mxu0 %v4191
      %v4241 = vpop.f32.mrb[0].mxu0
      %v4242 = vadd.f32 0.0, %v4241
      %v4243 = vpop.f32.mrb[0].mxu0
      %v4244 = vpop.f32.mrb[0].mxu0
      %v4245 = vadd.f32 0.0, %v4244
      %v4246 = vpop.f32.mrb[0].mxu0
      %4247 = vmatprep.mubr.bf16.mxu0 0
      %4248 = vmatmul.mubr.bf16.gmra.mrb[0].mxu0 %v4194
      %v4249 = vpop.f32.mrb[0].mxu0
      %v4250 = vadd.f32 0.0, %v4249
      %v4251 = vpop.f32.mrb[0].mxu0
      %v4252 = vpop.f32.mrb[0].mxu0
      %v4253 = vadd.f32 0.0, %v4252
      %v4254 = vpop.f32.mrb[0].mxu0
      %4255 = vmatprep.mubr.bf16.mxu0 0
      %4256 = vmatmul.mubr.bf16.gmra.mrb[0].mxu0 %v4197
      %v4257 = vpop.f32.mrb[0].mxu0
      %v4258 = vadd.f32 0.0, %v4257
      %v4259 = vpop.f32.mrb[0].mxu0
      %v4260 = vpop.f32.mrb[0].mxu0
      %v4261 = vadd.f32 0.0, %v4260
      %v4262 = vpop.f32.mrb[0].mxu0
      %4263 = vdwg.mxu0
      %v4264 = vadd.f32 %v3841, %v4234
      %v4265 = vadd.f32 %v3842, %v4237
      %v4266 = vadd.f32 %v3843, %v4242
      %v4267 = vadd.f32 %v3844, %v4245
      %v4268 = vadd.f32 %v3845, %v4250
      %v4269 = vadd.f32 %v3846, %v4253
      %v4270 = vadd.f32 %v3847, %v4258
      %v4271 = vadd.f32 %v3848, %v4261
      %v4272 = vld [vmem:[%s9] sm:$0x1]
      %v4274 = vlaneseq
      %v4275 = vshrl.u32 %v4274, 7
      %v4276 = vsub.s32 0, %v4275
      %v4277 = vrot.slane %v4272, %v4276
      %v4279 = vadd.f32 %v4264, %v4277
      %v4280 = vadd.f32 %v4265, %v4277
      %v4281 = vadd.f32 %v4266, %v4277
      %v4282 = vadd.f32 %v4267, %v4277
      %v4283 = vadd.f32 %v4268, %v4277
      %v4284 = vadd.f32 %v4269, %v4277
      %v4285 = vadd.f32 %v4270, %v4277
      %v4286 = vadd.f32 %v4271, %v4277
      %v4287 = vadd.f32 %v435, %v4279
      %v4288 = vadd.f32 %v436, %v4280
      %v4289 = vadd.f32 %v437, %v4281
      %v4290 = vadd.f32 %v438, %v4282
      %v4291 = vadd.f32 %v439, %v4283
      %v4292 = vadd.f32 %v440, %v4284
      %v4293 = vadd.f32 %v441, %v4285
      %v4294 = vadd.f32 %v442, %v4286
      %4295 = vadd.xlane.f32.xlu0 %v4287
      %v4296 = vpop.xlane.xlu0 %4295
      %4297 = vadd.xlane.f32.xlu0 %v4288
      %v4298 = vpop.xlane.xlu0 %4297
      %4299 = vadd.xlane.f32.xlu0 %v4289
      %v4300 = vpop.xlane.xlu0 %4299
      %4301 = vadd.xlane.f32.xlu0 %v4290
      %v4302 = vpop.xlane.xlu0 %4301
      %4303 = vadd.xlane.f32.xlu0 %v4291
      %v4304 = vpop.xlane.xlu0 %4303
      %4305 = vadd.xlane.f32.xlu0 %v4292
      %v4306 = vpop.xlane.xlu0 %4305
      %4307 = vadd.xlane.f32.xlu0 %v4293
      %v4308 = vpop.xlane.xlu0 %4307
      %4309 = vadd.xlane.f32.xlu0 %v4294
      %v4310 = vpop.xlane.xlu0 %4309
      %v4311 = vrcp.pop 128.0
      %v4312 = vmul.f32 %v4296, %v4311
      %v4313 = vmul.f32 %v4298, %v4311
      %v4314 = vmul.f32 %v4300, %v4311
      %v4315 = vmul.f32 %v4302, %v4311
      %v4316 = vmul.f32 %v4304, %v4311
      %v4317 = vmul.f32 %v4306, %v4311
      %v4318 = vmul.f32 %v4308, %v4311
      %v4319 = vmul.f32 %v4310, %v4311
      %v4320 = vsub.f32 %v4287, %v4312
      %v4321 = vsub.f32 %v4288, %v4313
      %v4322 = vsub.f32 %v4289, %v4314
      %v4323 = vsub.f32 %v4290, %v4315
      %v4324 = vsub.f32 %v4291, %v4316
      %v4325 = vsub.f32 %v4292, %v4317
      %v4326 = vsub.f32 %v4293, %v4318
      %v4327 = vsub.f32 %v4294, %v4319
      %v4328 = vmul.f32 %v4320, %v4320
      %v4329 = vmul.f32 %v4321, %v4321
      %v4330 = vmul.f32 %v4322, %v4322
      %v4331 = vmul.f32 %v4323, %v4323
      %v4332 = vmul.f32 %v4324, %v4324
      %v4333 = vmul.f32 %v4325, %v4325
      %v4334 = vmul.f32 %v4326, %v4326
      %v4335 = vmul.f32 %v4327, %v4327
      %4336 = vadd.xlane.f32.xlu0 %v4328
      %v4337 = vpop.xlane.xlu0 %4336
      %4338 = vadd.xlane.f32.xlu0 %v4329
      %v4339 = vpop.xlane.xlu0 %4338
      %4340 = vadd.xlane.f32.xlu0 %v4330
      %v4341 = vpop.xlane.xlu0 %4340
      %4342 = vadd.xlane.f32.xlu0 %v4331
      %v4343 = vpop.xlane.xlu0 %4342
      %4344 = vadd.xlane.f32.xlu0 %v4332
      %v4345 = vpop.xlane.xlu0 %4344
      %4346 = vadd.xlane.f32.xlu0 %v4333
      %v4347 = vpop.xlane.xlu0 %4346
      %4348 = vadd.xlane.f32.xlu0 %v4334
      %v4349 = vpop.xlane.xlu0 %4348
      %4350 = vadd.xlane.f32.xlu0 %v4335
      %v4351 = vpop.xlane.xlu0 %4350
      %v4352 = vmul.f32 %v4337, %v4311
      %v4353 = vmul.f32 %v4339, %v4311
      %v4354 = vmul.f32 %v4341, %v4311
      %v4355 = vmul.f32 %v4343, %v4311
      %v4356 = vmul.f32 %v4345, %v4311
      %v4357 = vmul.f32 %v4347, %v4311
      %v4358 = vmul.f32 %v4349, %v4311
      %v4359 = vmul.f32 %v4351, %v4311
      %v4360 = vadd.f32 %v4352, 1e-05
      %v4361 = vadd.f32 %v4353, 1e-05
      %v4362 = vadd.f32 %v4354, 1e-05
      %v4363 = vadd.f32 %v4355, 1e-05
      %v4364 = vadd.f32 %v4356, 1e-05
      %v4365 = vadd.f32 %v4357, 1e-05
      %v4366 = vadd.f32 %v4358, 1e-05
      %v4367 = vadd.f32 %v4359, 1e-05
      %v4368 = vrsqrt.pop %v4360
      %v4369 = vrsqrt.pop %v4361
      %v4370 = vrsqrt.pop %v4362
      %v4371 = vrsqrt.pop %v4363
      %v4372 = vrsqrt.pop %v4364
      %v4373 = vrsqrt.pop %v4365
      %v4374 = vrsqrt.pop %v4366
      %v4375 = vrsqrt.pop %v4367
      %v4376 = vmul.f32 %v4320, %v4368
      %v4377 = vmul.f32 %v4321, %v4369
      %v4378 = vmul.f32 %v4322, %v4370
      %v4379 = vmul.f32 %v4323, %v4371
      %v4380 = vmul.f32 %v4324, %v4372
      %v4381 = vmul.f32 %v4325, %v4373
      %v4382 = vmul.f32 %v4326, %v4374
      %v4383 = vmul.f32 %v4327, %v4375
      %v4384 = vld [vmem:[%s10] sm:$0x1]
      %v4386 = vlaneseq
      %v4387 = vshrl.u32 %v4386, 7
      %v4388 = vsub.s32 0, %v4387
      %v4389 = vrot.slane %v4384, %v4388
      %v4391 = vmul.f32 %v4376, %v4389
      %v4392 = vmul.f32 %v4377, %v4389
      %v4393 = vmul.f32 %v4378, %v4389
      %v4394 = vmul.f32 %v4379, %v4389
      %v4395 = vmul.f32 %v4380, %v4389
      %v4396 = vmul.f32 %v4381, %v4389
      %v4397 = vmul.f32 %v4382, %v4389
      %v4398 = vmul.f32 %v4383, %v4389
      %v4399 = vld [vmem:[%s11] sm:$0x1]
      %v4401 = vlaneseq
      %v4402 = vshrl.u32 %v4401, 7
      %v4403 = vsub.s32 0, %v4402
      %v4404 = vrot.slane %v4399, %v4403
      %v4406 = vadd.f32 %v4391, %v4404
      %v4407 = vadd.f32 %v4392, %v4404
      %v4408 = vadd.f32 %v4393, %v4404
      %v4409 = vadd.f32 %v4394, %v4404
      %v4410 = vadd.f32 %v4395, %v4404
      %v4411 = vadd.f32 %v4396, %v4404
      %v4412 = vadd.f32 %v4397, %v4404
      %v4413 = vadd.f32 %v4398, %v4404
      %4414 = vst [vmem:[%s433] sm:$0xff] %v4406
      %4415 = vst [vmem:[%s433 + $0x8] sm:$0xff] %v4407
      %4416 = vst [vmem:[%s433 + $0x10] sm:$0xff] %v4408
      %4417 = vst [vmem:[%s433 + $0x18] sm:$0xff] %v4409
      %4418 = vst [vmem:[%s433 + $0x20] sm:$0xff] %v4410
      %4419 = vst [vmem:[%s433 + $0x28] sm:$0xff] %v4411
      %4420 = vst [vmem:[%s433 + $0x30] sm:$0xff] %v4412
      %4421 = vst [vmem:[%s433 + $0x38] sm:$0xff] %v4413
      %p4422 = scmp.lt.s32.totalorder %s23, 1
      %s4423 = scalar_select %p4422, %s23, 1
      %s4424 = smul.addr %s4423, 8
      %s4425 = smul.addr %s4424, 8
      %s4426 = scalar_lea.vmem %s12, %s4425
      // Predicated region
      $region69: #{transformer_decoder_layer.4} parent=67 // pred_check
        %p4427 = pneg %p303
      $region70: #{transformer_decoder_layer.4} parent=67 // pred_check_branch
        %4429 = sbr.rel (%p4427) target = $region72
      $region71: #{transformer_decoder_layer.4} parent=67 // pred_region
        _
      $region72: #{transformer_decoder_layer.4} parent=67 // pred_fallthru
        _
    $region68: #{transformer_decoder_layer.4} parent=5 // pred_fallthru
      _
    %p4430 = scmp.le.s32.totalorder 2, %s18
    // Predicated region
    $region73: #{transformer_decoder_layer.4} parent=5 // pred_check
      %p4431 = pneg %p4430
    $region74: #{transformer_decoder_layer.4} parent=5 // pred_check_branch
      %4433 = sbr.rel (%p4431) target = $region76
    $region75: #{transformer_decoder_layer.4} parent=5 // pred_region
      %s4434 = ssub.s32 %s18, 2
      // Predicated region
      $region77: #{transformer_decoder_layer.4} parent=75 // pred_check
        %p4435 = pneg %p309
      $region78: #{transformer_decoder_layer.4} parent=75 // pred_check_branch
        %4437 = sbr.rel (%p4435) target = $region80
      $region79: #{transformer_decoder_layer.4} parent=75 // pred_region
        %p4438 = scmp.lt.s32.totalorder %s24, 1
        %s4439 = scalar_select %p4438, %s24, 1
        %s4440 = smul.addr %s4439, 8
        %s4441 = smul.addr %s4440, 8
        %s4442 = scalar_lea.vmem %s12, %s4441
      $region80: #{transformer_decoder_layer.4} parent=75 // pred_fallthru
        _
    $region76: #{transformer_decoder_layer.4} parent=5 // pred_fallthru
      _
  $region6: #{transformer_decoder_layer.4} parent=0 // loop_footer
    %s22 = sadd.s32 1, %s18
  $region7: #{transformer_decoder_layer.4} parent=0 // loop_footer_branch
    %17 = sbr.rel target = $region3
  $region8: #{transformer_decoder_layer.4} parent=0 // loop_exit
    _

// kernel: transformer_decoder_layer.3
$region0: #{transformer_decoder_layer.3}
  #allocation0 [shape = 'u32[]', space=smem, size = 0x4, offset = 0x4, fixed_abs, tag = 'smem constant byte address 0x4 - core index']
  #allocation1 [shape = 'u32[144,128]{1,0:T(1,128)}', space=vmem, size = 0x12000, scoped, tag = 'internal scratch']
  %s0 = inlined_call_operand.vmem [shape: f32[2,64,128], index: 0, kind: input, shape index: {}, may-alias: {0,1}]
  %s1 = inlined_call_operand.vmem [shape: f32[2,64,128], index: 1, kind: input, shape index: {}, may-alias: {0,1}]
  %s2 = inlined_call_operand.vmem [shape: bf16[128,128], index: 2, kind: input, shape index: {}]
  %s3 = inlined_call_operand.vmem [shape: f32[1,128], index: 3, kind: input, shape index: {}]
  %s4 = inlined_call_operand.vmem [shape: bf16[128,128], index: 4, kind: input, shape index: {}]
  %s5 = inlined_call_operand.vmem [shape: f32[1,128], index: 5, kind: input, shape index: {}]
  %s6 = inlined_call_operand.vmem [shape: bf16[128,128], index: 6, kind: input, shape index: {}]
  %s7 = inlined_call_operand.vmem [shape: f32[1,128], index: 7, kind: input, shape index: {}]
  %s8 = inlined_call_operand.vmem [shape: f32[128,128], index: 8, kind: input, shape index: {}]
  %s9 = inlined_call_operand.vmem [shape: f32[1,128], index: 9, kind: input, shape index: {}]
  %s10 = inlined_call_operand.vmem [shape: f32[1,128], index: 10, kind: input, shape index: {}]
  %s11 = inlined_call_operand.vmem [shape: f32[1,128], index: 11, kind: input, shape index: {}]
  %s12 = inlined_call_operand.vmem [shape: f32[2,64,128], index: 12, kind: output, shape index: {}]
  %s13 = sld [smem:[#allocation0]]
  $region81: #{transformer_decoder_layer.3} parent=0
    _
  %s15 = ssub.s32 1, %s13
  %s16 = scalar_select 0, %s15, %s13
  loop: start=0, step=1, limit=4
  $region2: #{transformer_decoder_layer.3} parent=0 // loop_pre_header
    _
  $region3: #{transformer_decoder_layer.3} parent=0 // loop_header
    %s18 = sphi 0, %s22
    %p19 = scmp.ge.s32.totalorder %s18, 4
    %s28 = sphi 0, %s30
    %s31 = sphi 0, %s28
    %s32 = sphi 0, %s31
    %s48 = sphi 0, %s32
    %s54 = sphi 0, %s56
    %s57 = sphi 0, %s54
    %s58 = sphi 0, %s57
    %s74 = sphi 0, %s58
    %s78 = sphi 0, %s78
    %s80 = sphi 0, %s78
    %s81 = sphi 0, %s80
    %s95 = sphi 0, %s81
    %s99 = sphi 0, %s99
    %s101 = sphi 0, %s99
    %s102 = sphi 0, %s101
    %s116 = sphi 0, %s102
    %s120 = sphi 0, %s120
    %s122 = sphi 0, %s120
    %s123 = sphi 0, %s122
    %s137 = sphi 0, %s123
    %s141 = sphi 0, %s141
    %s143 = sphi 0, %s141
    %s144 = sphi 0, %s143
    %s158 = sphi 0, %s144
    %s162 = sphi 0, %s162
    %s164 = sphi 0, %s162
    %s165 = sphi 0, %s164
    %s179 = sphi 0, %s165
    %s183 = sphi 0, %s183
    %s185 = sphi 0, %s183
    %s186 = sphi 0, %s185
    %s200 = sphi 0, %s186
    %s204 = sphi 0, %s204
    %s206 = sphi 0, %s204
    %s207 = sphi 0, %s206
    %s221 = sphi 0, %s207
    %s225 = sphi 0, %s225
    %s227 = sphi 0, %s225
    %s228 = sphi 0, %s227
    %s242 = sphi 0, %s228
    %s246 = sphi 0, %s246
    %s248 = sphi 0, %s246
    %s249 = sphi 0, %s248
    %s263 = sphi 0, %s249
    %s267 = sphi 0, %s267
    %s269 = sphi 0, %s267
    %s270 = sphi 0, %s269
    %s284 = sphi 0, %s270
    %s290 = sphi 0, %s292
    %s293 = sphi 0, %s290
    %s294 = sphi 0, %s293
    %s310 = sphi 0, %s294
  $region4: #{transformer_decoder_layer.3} parent=0 // loop_header_branch
    %21 = sbr.rel (%p19) target = $region8
  $region5: #{transformer_decoder_layer.3} parent=0 // loop_body
    %s23 = ssub.s32 %s18, 1
    %s24 = ssub.s32 %s18, 2
    %s25 = sadd.s32 %s18, 1
    %s26 = ssub.s32 %s18, %s25
    %p27 = scmp.eq.s32.totalorder %s26, 0
    %s29 = sadd.s32 %s28, 1
    %s30 = scalar_select %p27, %s28, %s29
    %p33 = pneg %p27
    %p34 = scmp.eq.s32.totalorder %s18, 1
    %p35 = por %p33, %p34
    %p36 = scmp.ne.s32.totalorder %s28, %s31
    %p37 = scmp.eq.s32.totalorder %s18, 0
    %p38 = por %p36, %p37
    %p39 = scmp.ne.s32.totalorder %s28, %s31
    %p40 = scmp.eq.s32.totalorder %s23, 1
    %p41 = por %p39, %p40
    %p42 = scmp.ne.s32.totalorder %s31, %s32
    %p43 = scmp.eq.s32.totalorder %s23, 0
    %p44 = por %p42, %p43
    %p45 = scmp.ne.s32.totalorder %s31, %s32
    %p46 = scmp.eq.s32.totalorder %s24, 1
    %p47 = por %p45, %p46
    %p49 = scmp.ne.s32.totalorder %s32, %s48
    %p50 = scmp.eq.s32.totalorder %s24, 0
    %p51 = por %p49, %p50
    %s52 = ssub.s32 %s18, %s25
    %p53 = scmp.eq.s32.totalorder %s52, 0
    %s55 = sadd.s32 %s54, 1
    %s56 = scalar_select %p53, %s54, %s55
    %p59 = pneg %p53
    %p60 = scmp.eq.s32.totalorder %s18, 1
    %p61 = por %p59, %p60
    %p62 = scmp.ne.s32.totalorder %s54, %s57
    %p63 = scmp.eq.s32.totalorder %s18, 0
    %p64 = por %p62, %p63
    %p65 = scmp.ne.s32.totalorder %s54, %s57
    %p66 = scmp.eq.s32.totalorder %s23, 1
    %p67 = por %p65, %p66
    %p68 = scmp.ne.s32.totalorder %s57, %s58
    %p69 = scmp.eq.s32.totalorder %s23, 0
    %p70 = por %p68, %p69
    %p71 = scmp.ne.s32.totalorder %s57, %s58
    %p72 = scmp.eq.s32.totalorder %s24, 1
    %p73 = por %p71, %p72
    %p75 = scmp.ne.s32.totalorder %s58, %s74
    %p76 = scmp.eq.s32.totalorder %s24, 0
    %p77 = por %p75, %p76
    %s79 = sadd.s32 %s78, 1
    %p82 = scmp.eq.s32.totalorder %s18, 1
    %p83 = scmp.ne.s32.totalorder %s78, %s80
    %p84 = scmp.eq.s32.totalorder %s18, 0
    %p85 = por %p83, %p84
    %p86 = scmp.ne.s32.totalorder %s78, %s80
    %p87 = scmp.eq.s32.totalorder %s23, 1
    %p88 = por %p86, %p87
    %p89 = scmp.ne.s32.totalorder %s80, %s81
    %p90 = scmp.eq.s32.totalorder %s23, 0
    %p91 = por %p89, %p90
    %p92 = scmp.ne.s32.totalorder %s80, %s81
    %p93 = scmp.eq.s32.totalorder %s24, 1
    %p94 = por %p92, %p93
    %p96 = scmp.ne.s32.totalorder %s81, %s95
    %p97 = scmp.eq.s32.totalorder %s24, 0
    %p98 = por %p96, %p97
    %s100 = sadd.s32 %s99, 1
    %p103 = scmp.eq.s32.totalorder %s18, 1
    %p104 = scmp.ne.s32.totalorder %s99, %s101
    %p105 = scmp.eq.s32.totalorder %s18, 0
    %p106 = por %p104, %p105
    %p107 = scmp.ne.s32.totalorder %s99, %s101
    %p108 = scmp.eq.s32.totalorder %s23, 1
    %p109 = por %p107, %p108
    %p110 = scmp.ne.s32.totalorder %s101, %s102
    %p111 = scmp.eq.s32.totalorder %s23, 0
    %p112 = por %p110, %p111
    %p113 = scmp.ne.s32.totalorder %s101, %s102
    %p114 = scmp.eq.s32.totalorder %s24, 1
    %p115 = por %p113, %p114
    %p117 = scmp.ne.s32.totalorder %s102, %s116
    %p118 = scmp.eq.s32.totalorder %s24, 0
    %p119 = por %p117, %p118
    %s121 = sadd.s32 %s120, 1
    %p124 = scmp.eq.s32.totalorder %s18, 1
    %p125 = scmp.ne.s32.totalorder %s120, %s122
    %p126 = scmp.eq.s32.totalorder %s18, 0
    %p127 = por %p125, %p126
    %p128 = scmp.ne.s32.totalorder %s120, %s122
    %p129 = scmp.eq.s32.totalorder %s23, 1
    %p130 = por %p128, %p129
    %p131 = scmp.ne.s32.totalorder %s122, %s123
    %p132 = scmp.eq.s32.totalorder %s23, 0
    %p133 = por %p131, %p132
    %p134 = scmp.ne.s32.totalorder %s122, %s123
    %p135 = scmp.eq.s32.totalorder %s24, 1
    %p136 = por %p134, %p135
    %p138 = scmp.ne.s32.totalorder %s123, %s137
    %p139 = scmp.eq.s32.totalorder %s24, 0
    %p140 = por %p138, %p139
    %s142 = sadd.s32 %s141, 1
    %p145 = scmp.eq.s32.totalorder %s18, 1
    %p146 = scmp.ne.s32.totalorder %s141, %s143
    %p147 = scmp.eq.s32.totalorder %s18, 0
    %p148 = por %p146, %p147
    %p149 = scmp.ne.s32.totalorder %s141, %s143
    %p150 = scmp.eq.s32.totalorder %s23, 1
    %p151 = por %p149, %p150
    %p152 = scmp.ne.s32.totalorder %s143, %s144
    %p153 = scmp.eq.s32.totalorder %s23, 0
    %p154 = por %p152, %p153
    %p155 = scmp.ne.s32.totalorder %s143, %s144
    %p156 = scmp.eq.s32.totalorder %s24, 1
    %p157 = por %p155, %p156
    %p159 = scmp.ne.s32.totalorder %s144, %s158
    %p160 = scmp.eq.s32.totalorder %s24, 0
    %p161 = por %p159, %p160
    %s163 = sadd.s32 %s162, 1
    %p166 = scmp.eq.s32.totalorder %s18, 1
    %p167 = scmp.ne.s32.totalorder %s162, %s164
    %p168 = scmp.eq.s32.totalorder %s18, 0
    %p169 = por %p167, %p168
    %p170 = scmp.ne.s32.totalorder %s162, %s164
    %p171 = scmp.eq.s32.totalorder %s23, 1
    %p172 = por %p170, %p171
    %p173 = scmp.ne.s32.totalorder %s164, %s165
    %p174 = scmp.eq.s32.totalorder %s23, 0
    %p175 = por %p173, %p174
    %p176 = scmp.ne.s32.totalorder %s164, %s165
    %p177 = scmp.eq.s32.totalorder %s24, 1
    %p178 = por %p176, %p177
    %p180 = scmp.ne.s32.totalorder %s165, %s179
    %p181 = scmp.eq.s32.totalorder %s24, 0
    %p182 = por %p180, %p181
    %s184 = sadd.s32 %s183, 1
    %p187 = scmp.eq.s32.totalorder %s18, 1
    %p188 = scmp.ne.s32.totalorder %s183, %s185
    %p189 = scmp.eq.s32.totalorder %s18, 0
    %p190 = por %p188, %p189
    %p191 = scmp.ne.s32.totalorder %s183, %s185
    %p192 = scmp.eq.s32.totalorder %s23, 1
    %p193 = por %p191, %p192
    %p194 = scmp.ne.s32.totalorder %s185, %s186
    %p195 = scmp.eq.s32.totalorder %s23, 0
    %p196 = por %p194, %p195
    %p197 = scmp.ne.s32.totalorder %s185, %s186
    %p198 = scmp.eq.s32.totalorder %s24, 1
    %p199 = por %p197, %p198
    %p201 = scmp.ne.s32.totalorder %s186, %s200
    %p202 = scmp.eq.s32.totalorder %s24, 0
    %p203 = por %p201, %p202
    %s205 = sadd.s32 %s204, 1
    %p208 = scmp.eq.s32.totalorder %s18, 1
    %p209 = scmp.ne.s32.totalorder %s204, %s206
    %p210 = scmp.eq.s32.totalorder %s18, 0
    %p211 = por %p209, %p210
    %p212 = scmp.ne.s32.totalorder %s204, %s206
    %p213 = scmp.eq.s32.totalorder %s23, 1
    %p214 = por %p212, %p213
    %p215 = scmp.ne.s32.totalorder %s206, %s207
    %p216 = scmp.eq.s32.totalorder %s23, 0
    %p217 = por %p215, %p216
    %p218 = scmp.ne.s32.totalorder %s206, %s207
    %p219 = scmp.eq.s32.totalorder %s24, 1
    %p220 = por %p218, %p219
    %p222 = scmp.ne.s32.totalorder %s207, %s221
    %p223 = scmp.eq.s32.totalorder %s24, 0
    %p224 = por %p222, %p223
    %s226 = sadd.s32 %s225, 1
    %p229 = scmp.eq.s32.totalorder %s18, 1
    %p230 = scmp.ne.s32.totalorder %s225, %s227
    %p231 = scmp.eq.s32.totalorder %s18, 0
    %p232 = por %p230, %p231
    %p233 = scmp.ne.s32.totalorder %s225, %s227
    %p234 = scmp.eq.s32.totalorder %s23, 1
    %p235 = por %p233, %p234
    %p236 = scmp.ne.s32.totalorder %s227, %s228
    %p237 = scmp.eq.s32.totalorder %s23, 0
    %p238 = por %p236, %p237
    %p239 = scmp.ne.s32.totalorder %s227, %s228
    %p240 = scmp.eq.s32.totalorder %s24, 1
    %p241 = por %p239, %p240
    %p243 = scmp.ne.s32.totalorder %s228, %s242
    %p244 = scmp.eq.s32.totalorder %s24, 0
    %p245 = por %p243, %p244
    %s247 = sadd.s32 %s246, 1
    %p250 = scmp.eq.s32.totalorder %s18, 1
    %p251 = scmp.ne.s32.totalorder %s246, %s248
    %p252 = scmp.eq.s32.totalorder %s18, 0
    %p253 = por %p251, %p252
    %p254 = scmp.ne.s32.totalorder %s246, %s248
    %p255 = scmp.eq.s32.totalorder %s23, 1
    %p256 = por %p254, %p255
    %p257 = scmp.ne.s32.totalorder %s248, %s249
    %p258 = scmp.eq.s32.totalorder %s23, 0
    %p259 = por %p257, %p258
    %p260 = scmp.ne.s32.totalorder %s248, %s249
    %p261 = scmp.eq.s32.totalorder %s24, 1
    %p262 = por %p260, %p261
    %p264 = scmp.ne.s32.totalorder %s249, %s263
    %p265 = scmp.eq.s32.totalorder %s24, 0
    %p266 = por %p264, %p265
    %s268 = sadd.s32 %s267, 1
    %p271 = scmp.eq.s32.totalorder %s18, 1
    %p272 = scmp.ne.s32.totalorder %s267, %s269
    %p273 = scmp.eq.s32.totalorder %s18, 0
    %p274 = por %p272, %p273
    %p275 = scmp.ne.s32.totalorder %s267, %s269
    %p276 = scmp.eq.s32.totalorder %s23, 1
    %p277 = por %p275, %p276
    %p278 = scmp.ne.s32.totalorder %s269, %s270
    %p279 = scmp.eq.s32.totalorder %s23, 0
    %p280 = por %p278, %p279
    %p281 = scmp.ne.s32.totalorder %s269, %s270
    %p282 = scmp.eq.s32.totalorder %s24, 1
    %p283 = por %p281, %p282
    %p285 = scmp.ne.s32.totalorder %s270, %s284
    %p286 = scmp.eq.s32.totalorder %s24, 0
    %p287 = por %p285, %p286
    %s288 = ssub.s32 %s18, %s25
    %p289 = scmp.eq.s32.totalorder %s288, 0
    %s291 = sadd.s32 %s290, 1
    %s292 = scalar_select %p289, %s290, %s291
    %p295 = pneg %p289
    %p296 = scmp.eq.s32.totalorder %s18, 1
    %p297 = por %p295, %p296
    %p298 = scmp.ne.s32.totalorder %s290, %s293
    %p299 = scmp.eq.s32.totalorder %s18, 0
    %p300 = por %p298, %p299
    %p301 = scmp.ne.s32.totalorder %s290, %s293
    %p302 = scmp.eq.s32.totalorder %s23, 1
    %p303 = por %p301, %p302
    %p304 = scmp.ne.s32.totalorder %s293, %s294
    %p305 = scmp.eq.s32.totalorder %s23, 0
    %p306 = por %p304, %p305
    %p307 = scmp.ne.s32.totalorder %s293, %s294
    %p308 = scmp.eq.s32.totalorder %s24, 1
    %p309 = por %p307, %p308
    %p311 = scmp.ne.s32.totalorder %s294, %s310
    %p312 = scmp.eq.s32.totalorder %s24, 0
    %p313 = por %p311, %p312
    %p314 = scmp.le.s32.totalorder 1, %s18
    %p315 = scmp.lt.s32.totalorder %s18, 3
    %p316 = pnand %p314, %p315
    %p317 = pneg %p316
    // Predicated region
    $region9: #{transformer_decoder_layer.3} parent=5 // pred_check
      _
    $region10: #{transformer_decoder_layer.3} parent=5 // pred_check_branch
      %319 = sbr.rel (%p316) target = $region12
    $region11: #{transformer_decoder_layer.3} parent=5 // pred_region
      %s320 = ssub.s32 %s18, 1
      // Predicated region
      $region13: #{transformer_decoder_layer.3} parent=11 // pred_check
        %p321 = pneg %p91
      $region14: #{transformer_decoder_layer.3} parent=11 // pred_check_branch
        %323 = sbr.rel (%p321) target = $region16
      $region15: #{transformer_decoder_layer.3} parent=11 // pred_region
        _
      $region16: #{transformer_decoder_layer.3} parent=11 // pred_fallthru
        _
      // Predicated region
      $region17: #{transformer_decoder_layer.3} parent=11 // pred_check
        %p324 = pneg %p112
      $region18: #{transformer_decoder_layer.3} parent=11 // pred_check_branch
        %326 = sbr.rel (%p324) target = $region20
      $region19: #{transformer_decoder_layer.3} parent=11 // pred_region
        _
      $region20: #{transformer_decoder_layer.3} parent=11 // pred_fallthru
        _
      // Predicated region
      $region21: #{transformer_decoder_layer.3} parent=11 // pred_check
        %p327 = pneg %p133
      $region22: #{transformer_decoder_layer.3} parent=11 // pred_check_branch
        %329 = sbr.rel (%p327) target = $region24
      $region23: #{transformer_decoder_layer.3} parent=11 // pred_region
        _
      $region24: #{transformer_decoder_layer.3} parent=11 // pred_fallthru
        _
      // Predicated region
      $region25: #{transformer_decoder_layer.3} parent=11 // pred_check
        %p330 = pneg %p154
      $region26: #{transformer_decoder_layer.3} parent=11 // pred_check_branch
        %332 = sbr.rel (%p330) target = $region28
      $region27: #{transformer_decoder_layer.3} parent=11 // pred_region
        _
      $region28: #{transformer_decoder_layer.3} parent=11 // pred_fallthru
        _
      // Predicated region
      $region29: #{transformer_decoder_layer.3} parent=11 // pred_check
        %p333 = pneg %p175
      $region30: #{transformer_decoder_layer.3} parent=11 // pred_check_branch
        %335 = sbr.rel (%p333) target = $region32
      $region31: #{transformer_decoder_layer.3} parent=11 // pred_region
        _
      $region32: #{transformer_decoder_layer.3} parent=11 // pred_fallthru
        _
      // Predicated region
      $region33: #{transformer_decoder_layer.3} parent=11 // pred_check
        %p336 = pneg %p196
      $region34: #{transformer_decoder_layer.3} parent=11 // pred_check_branch
        %338 = sbr.rel (%p336) target = $region36
      $region35: #{transformer_decoder_layer.3} parent=11 // pred_region
        _
      $region36: #{transformer_decoder_layer.3} parent=11 // pred_fallthru
        _
      // Predicated region
      $region37: #{transformer_decoder_layer.3} parent=11 // pred_check
        %p339 = pneg %p217
      $region38: #{transformer_decoder_layer.3} parent=11 // pred_check_branch
        %341 = sbr.rel (%p339) target = $region40
      $region39: #{transformer_decoder_layer.3} parent=11 // pred_region
        _
      $region40: #{transformer_decoder_layer.3} parent=11 // pred_fallthru
        _
      // Predicated region
      $region41: #{transformer_decoder_layer.3} parent=11 // pred_check
        %p342 = pneg %p238
      $region42: #{transformer_decoder_layer.3} parent=11 // pred_check_branch
        %344 = sbr.rel (%p342) target = $region44
      $region43: #{transformer_decoder_layer.3} parent=11 // pred_region
        _
      $region44: #{transformer_decoder_layer.3} parent=11 // pred_fallthru
        _
      // Predicated region
      $region45: #{transformer_decoder_layer.3} parent=11 // pred_check
        %p345 = pneg %p259
      $region46: #{transformer_decoder_layer.3} parent=11 // pred_check_branch
        %347 = sbr.rel (%p345) target = $region48
      $region47: #{transformer_decoder_layer.3} parent=11 // pred_region
        _
      $region48: #{transformer_decoder_layer.3} parent=11 // pred_fallthru
        _
      // Predicated region
      $region49: #{transformer_decoder_layer.3} parent=11 // pred_check
        %p348 = pneg %p280
      $region50: #{transformer_decoder_layer.3} parent=11 // pred_check_branch
        %350 = sbr.rel (%p348) target = $region52
      $region51: #{transformer_decoder_layer.3} parent=11 // pred_region
        _
      $region52: #{transformer_decoder_layer.3} parent=11 // pred_fallthru
        _
    $region12: #{transformer_decoder_layer.3} parent=5 // pred_fallthru
      _
    %p351 = scmp.lt.s32.totalorder %s18, 2
    // Predicated region
    $region53: #{transformer_decoder_layer.3} parent=5 // pred_check
      %p352 = pneg %p351
    $region54: #{transformer_decoder_layer.3} parent=5 // pred_check_branch
      %354 = sbr.rel (%p352) target = $region56
    $region55: #{transformer_decoder_layer.3} parent=5 // pred_region
      // Predicated region
      $region57: #{transformer_decoder_layer.3} parent=55 // pred_check
        %p355 = pneg %p38
      $region58: #{transformer_decoder_layer.3} parent=55 // pred_check_branch
        %357 = sbr.rel (%p355) target = $region60
      $region59: #{transformer_decoder_layer.3} parent=55 // pred_region
        %p358 = scmp.lt.s32.totalorder %s18, 1
        %s359 = scalar_select %p358, %s18, 1
        %s360 = smul.addr %s359, 8
        %s361 = smul.addr %s360, 8
        %s362 = scalar_lea.vmem %s0, %s361
      $region60: #{transformer_decoder_layer.3} parent=55 // pred_fallthru
        _
      // Predicated region
      $region61: #{transformer_decoder_layer.3} parent=55 // pred_check
        %p363 = pneg %p64
      $region62: #{transformer_decoder_layer.3} parent=55 // pred_check_branch
        %365 = sbr.rel (%p363) target = $region64
      $region63: #{transformer_decoder_layer.3} parent=55 // pred_region
        %p366 = scmp.lt.s32.totalorder %s18, 1
        %s367 = scalar_select %p366, %s18, 1
        %s368 = smul.addr %s367, 8
        %s369 = smul.addr %s368, 8
        %s370 = scalar_lea.vmem %s1, %s369
      $region64: #{transformer_decoder_layer.3} parent=55 // pred_fallthru
        _
    $region56: #{transformer_decoder_layer.3} parent=5 // pred_fallthru
      _
    %p371 = scmp.le.s32.totalorder 1, %s18
    %p372 = scmp.lt.s32.totalorder %s18, 3
    %p373 = pnand %p371, %p372
    %p374 = pneg %p373
    // Predicated region
    $region65: #{transformer_decoder_layer.3} parent=5 // pred_check
      _
    $region66: #{transformer_decoder_layer.3} parent=5 // pred_check_branch
      %376 = sbr.rel (%p373) target = $region68
    $region67: #{transformer_decoder_layer.3} parent=5 // pred_region
      %s377 = ssub.s32 %s18, 1
      %p378 = scmp.lt.s32.totalorder %s23, 1
      %s379 = scalar_select %p378, %s23, 1
      %s380 = smul.addr %s379, 8
      %s381 = smul.addr %s380, 8
      %s382 = scalar_lea.vmem %s0, %s381
      %p383 = pneg %p44
      %p384 = pneg %p41
      %p385 = scmp.lt.s32.totalorder %s23, 1
      %s386 = scalar_select %p385, %s23, 1
      %s387 = smul.addr %s386, 8
      %s388 = smul.addr %s387, 8
      %s389 = scalar_lea.vmem %s1, %s388
      %p390 = pneg %p70
      %p391 = pneg %p67
      %p392 = pneg %p91
      %p393 = pneg %p88
      %p394 = pneg %p112
      %p395 = pneg %p109
      %p396 = pneg %p133
      %p397 = pneg %p130
      %p398 = pneg %p154
      %p399 = pneg %p151
      %p400 = pneg %p175
      %p401 = pneg %p172
      %p402 = pneg %p196
      %p403 = pneg %p193
      %p404 = pneg %p217
      %p405 = pneg %p214
      %p406 = pneg %p238
      %p407 = pneg %p235
      %p408 = pneg %p259
      %p409 = pneg %p256
      %p410 = pneg %p280
      %p411 = pneg %p277
      %p412 = pneg %p306
      %p413 = pneg %p303
      %p414 = scmp.lt.s32.totalorder %s23, 1
      %s415 = scalar_select %p414, %s23, 1
      %s416 = smul.addr %s415, 8
      %s417 = smul.addr %s416, 8
      %s418 = scalar_lea.vmem %s12, %s417
      %p419 = scmp.lt.s32.totalorder %s23, 1
      %s420 = scalar_select %p419, %s23, 1
      %s421 = smul.addr %s420, 8
      %s422 = smul.addr %s421, 8
      %s423 = scalar_lea.vmem %s0, %s422
      %p424 = scmp.lt.s32.totalorder %s23, 1
      %s425 = scalar_select %p424, %s23, 1
      %s426 = smul.addr %s425, 8
      %s427 = smul.addr %s426, 8
      %s428 = scalar_lea.vmem %s1, %s427
      %p429 = scmp.lt.s32.totalorder %s23, 1
      %s430 = scalar_select %p429, %s23, 1
      %s431 = smul.addr %s430, 8
      %s432 = smul.addr %s431, 8
      %s433 = scalar_lea.vmem %s12, %s432
      %v435 = vld [vmem:[%s423] sm:$0xff]
      %v436 = vld [vmem:[%s423 + $0x8] sm:$0xff]
      %v437 = vld [vmem:[%s423 + $0x10] sm:$0xff]
      %v438 = vld [vmem:[%s423 + $0x18] sm:$0xff]
      %v439 = vld [vmem:[%s423 + $0x20] sm:$0xff]
      %v440 = vld [vmem:[%s423 + $0x28] sm:$0xff]
      %v441 = vld [vmem:[%s423 + $0x30] sm:$0xff]
      %v442 = vld [vmem:[%s423 + $0x38] sm:$0xff]
      %v443 = vld [vmem:[%s428] sm:$0xff]
      %v444 = vld [vmem:[%s428 + $0x8] sm:$0xff]
      %v445 = vld [vmem:[%s428 + $0x10] sm:$0xff]
      %v446 = vld [vmem:[%s428 + $0x18] sm:$0xff]
      %v447 = vld [vmem:[%s428 + $0x20] sm:$0xff]
      %v448 = vld [vmem:[%s428 + $0x28] sm:$0xff]
      %v449 = vld [vmem:[%s428 + $0x30] sm:$0xff]
      %v450 = vld [vmem:[%s428 + $0x38] sm:$0xff]
      %v451 = vpack.c.bf16 %v436, %v435
      %v452 = vpack.c.bf16 %v438, %v437
      %v453 = vpack.c.bf16 %v440, %v439
      %v454 = vpack.c.bf16 %v442, %v441
      %v455 = vpack.c.bf16 %v444, %v443
      %v456 = vpack.c.bf16 %v446, %v445
      %v457 = vpack.c.bf16 %v448, %v447
      %v458 = vpack.c.bf16 %v450, %v449
      %v459 = vld [vmem:[%s2] sm:$0xf]
      %v460 = vld [vmem:[%s2 + $0x4] sm:$0xf]
      %v461 = vld [vmem:[%s2 + $0x8] sm:$0xf]
      %v462 = vld [vmem:[%s2 + $0xc] sm:$0xf]
      %v463 = vld [vmem:[%s2 + $0x10] sm:$0xf]
      %v464 = vld [vmem:[%s2 + $0x14] sm:$0xf]
      %v465 = vld [vmem:[%s2 + $0x18] sm:$0xf]
      %v466 = vld [vmem:[%s2 + $0x1c] sm:$0xf]
      %v467 = vld [vmem:[%s2 + $0x20] sm:$0xf]
      %v468 = vld [vmem:[%s2 + $0x24] sm:$0xf]
      %v469 = vld [vmem:[%s2 + $0x28] sm:$0xf]
      %v470 = vld [vmem:[%s2 + $0x2c] sm:$0xf]
      %v471 = vld [vmem:[%s2 + $0x30] sm:$0xf]
      %v472 = vld [vmem:[%s2 + $0x34] sm:$0xf]
      %v473 = vld [vmem:[%s2 + $0x38] sm:$0xf]
      %v474 = vld [vmem:[%s2 + $0x3c] sm:$0xf]
      %v475 = vld [vmem:[%s3] sm:$0x1]
      %v477 = vlaneseq
      %v478 = vshrl.u32 %v477, 7
      %v479 = vsub.s32 0, %v478
      %v480 = vrot.slane %v475, %v479
      %v498 = vunpack.c.l.b16 %v459
      %v499 = vunpack.c.l.b16 %v460
      %v500 = vunpack.c.l.b16 %v461
      %v501 = vunpack.c.l.b16 %v462
      %v502 = vunpack.c.l.b16 %v463
      %v503 = vunpack.c.l.b16 %v464
      %v504 = vunpack.c.l.b16 %v465
      %v505 = vunpack.c.l.b16 %v466
      %v506 = vunpack.c.l.b16 %v467
      %v507 = vunpack.c.l.b16 %v468
      %v508 = vunpack.c.l.b16 %v469
      %v509 = vunpack.c.l.b16 %v470
      %v510 = vunpack.c.l.b16 %v471
      %v511 = vunpack.c.l.b16 %v472
      %v512 = vunpack.c.l.b16 %v473
      %v513 = vunpack.c.l.b16 %v474
      %v514 = vpack.c.b16 %v499, %v498
      %v515 = vpack.c.b16 %v501, %v500
      %v516 = vpack.c.b16 %v503, %v502
      %v517 = vpack.c.b16 %v505, %v504
      %v518 = vpack.c.b16 %v507, %v506
      %v519 = vpack.c.b16 %v509, %v508
      %v520 = vpack.c.b16 %v511, %v510
      %v521 = vpack.c.b16 %v513, %v512
      %530 = vmatprep.subr.bf16.mxu0 0
      %531 = vmatpush1.bf16.msra.mxu0 %v514
      %532 = vmatprep.subr.bf16.mxu0 0
      %533 = vmatpush1.bf16.msra.mxu0 %v515
      %534 = vmatprep.subr.bf16.mxu0 0
      %535 = vmatpush1.bf16.msra.mxu0 %v516
      %536 = vmatprep.subr.bf16.mxu0 0
      %537 = vmatpush1.bf16.msra.mxu0 %v517
      %538 = vmatprep.subr.bf16.mxu0 0
      %539 = vmatpush1.bf16.msra.mxu0 %v518
      %540 = vmatprep.subr.bf16.mxu0 0
      %541 = vmatpush1.bf16.msra.mxu0 %v519
      %542 = vmatprep.subr.bf16.mxu0 0
      %543 = vmatpush1.bf16.msra.mxu0 %v520
      %544 = vmatprep.subr.bf16.mxu0 0
      %545 = vmatpush1.bf16.msra.mxu0 %v521
      %546 = vmatprep.subr.bf16.mxu0 0
      %547 = vmatpush1.bf16.msra.mxu0 0
      %548 = vmatprep.subr.bf16.mxu0 0
      %549 = vmatpush1.bf16.msra.mxu0 0
      %550 = vmatprep.subr.bf16.mxu0 0
      %551 = vmatpush1.bf16.msra.mxu0 0
      %552 = vmatprep.subr.bf16.mxu0 0
      %553 = vmatpush1.bf16.msra.mxu0 0
      %554 = vmatprep.subr.bf16.mxu0 0
      %555 = vmatpush1.bf16.msra.mxu0 0
      %556 = vmatprep.subr.bf16.mxu0 0
      %557 = vmatpush1.bf16.msra.mxu0 0
      %558 = vmatprep.subr.bf16.mxu0 0
      %559 = vmatpush1.bf16.msra.mxu0 0
      %560 = vmatprep.subr.bf16.mxu0 0
      %561 = vmatpush1.bf16.msra.mxu0 0
      %562 = vmatprep.mubr.bf16.mxu0 0
      %563 = vmatmul.mubr.bf16.gmra.mrb[0].mxu0 %v451
      %v564 = vpop.f32.mrb[0].mxu0
      %v565 = vadd.f32 %v480, %v564
      %v566 = vpop.f32.mrb[0].mxu0
      %v567 = vpop.f32.mrb[0].mxu0
      %v568 = vadd.f32 %v480, %v567
      %v569 = vpop.f32.mrb[0].mxu0
      %570 = vmatprep.mubr.bf16.mxu0 0
      %571 = vmatmul.mubr.bf16.gmra.mrb[0].mxu0 %v452
      %v572 = vpop.f32.mrb[0].mxu0
      %v573 = vadd.f32 %v480, %v572
      %v574 = vpop.f32.mrb[0].mxu0
      %v575 = vpop.f32.mrb[0].mxu0
      %v576 = vadd.f32 %v480, %v575
      %v577 = vpop.f32.mrb[0].mxu0
      %578 = vmatprep.mubr.bf16.mxu0 0
      %579 = vmatmul.mubr.bf16.gmra.mrb[0].mxu0 %v453
      %v580 = vpop.f32.mrb[0].mxu0
      %v581 = vadd.f32 %v480, %v580
      %v582 = vpop.f32.mrb[0].mxu0
      %v583 = vpop.f32.mrb[0].mxu0
      %v584 = vadd.f32 %v480, %v583
      %v585 = vpop.f32.mrb[0].mxu0
      %586 = vmatprep.mubr.bf16.mxu0 0
      %587 = vmatmul.mubr.bf16.gmra.mrb[0].mxu0 %v454
      %v588 = vpop.f32.mrb[0].mxu0
      %v589 = vadd.f32 %v480, %v588
      %v590 = vpop.f32.mrb[0].mxu0
      %v591 = vpop.f32.mrb[0].mxu0
      %v592 = vadd.f32 %v480, %v591
      %v593 = vpop.f32.mrb[0].mxu0
      %594 = vdwg.mxu0
      %v595 = vld [vmem:[%s4] sm:$0xf]
      %v596 = vld [vmem:[%s4 + $0x4] sm:$0xf]
      %v597 = vld [vmem:[%s4 + $0x8] sm:$0xf]
      %v598 = vld [vmem:[%s4 + $0xc] sm:$0xf]
      %v599 = vld [vmem:[%s4 + $0x10] sm:$0xf]
      %v600 = vld [vmem:[%s4 + $0x14] sm:$0xf]
      %v601 = vld [vmem:[%s4 + $0x18] sm:$0xf]
      %v602 = vld [vmem:[%s4 + $0x1c] sm:$0xf]
      %v603 = vld [vmem:[%s4 + $0x20] sm:$0xf]
      %v604 = vld [vmem:[%s4 + $0x24] sm:$0xf]
      %v605 = vld [vmem:[%s4 + $0x28] sm:$0xf]
      %v606 = vld [vmem:[%s4 + $0x2c] sm:$0xf]
      %v607 = vld [vmem:[%s4 + $0x30] sm:$0xf]
      %v608 = vld [vmem:[%s4 + $0x34] sm:$0xf]
      %v609 = vld [vmem:[%s4 + $0x38] sm:$0xf]
      %v610 = vld [vmem:[%s4 + $0x3c] sm:$0xf]
      %v611 = vld [vmem:[%s5] sm:$0x1]
      %v613 = vlaneseq
      %v614 = vshrl.u32 %v613, 7
      %v615 = vsub.s32 0, %v614
      %v616 = vrot.slane %v611, %v615
      %v634 = vunpack.c.l.b16 %v595
      %v635 = vunpack.c.l.b16 %v596
      %v636 = vunpack.c.l.b16 %v597
      %v637 = vunpack.c.l.b16 %v598
      %v638 = vunpack.c.l.b16 %v599
      %v639 = vunpack.c.l.b16 %v600
      %v640 = vunpack.c.l.b16 %v601
      %v641 = vunpack.c.l.b16 %v602
      %v642 = vunpack.c.l.b16 %v603
      %v643 = vunpack.c.l.b16 %v604
      %v644 = vunpack.c.l.b16 %v605
      %v645 = vunpack.c.l.b16 %v606
      %v646 = vunpack.c.l.b16 %v607
      %v647 = vunpack.c.l.b16 %v608
      %v648 = vunpack.c.l.b16 %v609
      %v649 = vunpack.c.l.b16 %v610
      %v650 = vpack.c.b16 %v635, %v634
      %v651 = vpack.c.b16 %v637, %v636
      %v652 = vpack.c.b16 %v639, %v638
      %v653 = vpack.c.b16 %v641, %v640
      %v654 = vpack.c.b16 %v643, %v642
      %v655 = vpack.c.b16 %v645, %v644
      %v656 = vpack.c.b16 %v647, %v646
      %v657 = vpack.c.b16 %v649, %v648
      %666 = vmatprep.subr.bf16.mxu0 0
      %667 = vmatpush1.bf16.msra.mxu0 %v650
      %668 = vmatprep.subr.bf16.mxu0 0
      %669 = vmatpush1.bf16.msra.mxu0 %v651
      %670 = vmatprep.subr.bf16.mxu0 0
      %671 = vmatpush1.bf16.msra.mxu0 %v652
      %672 = vmatprep.subr.bf16.mxu0 0
      %673 = vmatpush1.bf16.msra.mxu0 %v653
      %674 = vmatprep.subr.bf16.mxu0 0
      %675 = vmatpush1.bf16.msra.mxu0 %v654
      %676 = vmatprep.subr.bf16.mxu0 0
      %677 = vmatpush1.bf16.msra.mxu0 %v655
      %678 = vmatprep.subr.bf16.mxu0 0
      %679 = vmatpush1.bf16.msra.mxu0 %v656
      %680 = vmatprep.subr.bf16.mxu0 0
      %681 = vmatpush1.bf16.msra.mxu0 %v657
      %682 = vmatprep.subr.bf16.mxu0 0
      %683 = vmatpush1.bf16.msra.mxu0 0
      %684 = vmatprep.subr.bf16.mxu0 0
      %685 = vmatpush1.bf16.msra.mxu0 0
      %686 = vmatprep.subr.bf16.mxu0 0
      %687 = vmatpush1.bf16.msra.mxu0 0
      %688 = vmatprep.subr.bf16.mxu0 0
      %689 = vmatpush1.bf16.msra.mxu0 0
      %690 = vmatprep.subr.bf16.mxu0 0
      %691 = vmatpush1.bf16.msra.mxu0 0
      %692 = vmatprep.subr.bf16.mxu0 0
      %693 = vmatpush1.bf16.msra.mxu0 0
      %694 = vmatprep.subr.bf16.mxu0 0
      %695 = vmatpush1.bf16.msra.mxu0 0
      %696 = vmatprep.subr.bf16.mxu0 0
      %697 = vmatpush1.bf16.msra.mxu0 0
      %698 = vmatprep.mubr.bf16.mxu0 0
      %699 = vmatmul.mubr.bf16.gmra.mrb[0].mxu0 %v455
      %v700 = vpop.f32.mrb[0].mxu0
      %v701 = vadd.f32 %v616, %v700
      %v702 = vpop.f32.mrb[0].mxu0
      %v703 = vpop.f32.mrb[0].mxu0
      %v704 = vadd.f32 %v616, %v703
      %v705 = vpop.f32.mrb[0].mxu0
      %706 = vmatprep.mubr.bf16.mxu0 0
      %707 = vmatmul.mubr.bf16.gmra.mrb[0].mxu0 %v456
      %v708 = vpop.f32.mrb[0].mxu0
      %v709 = vadd.f32 %v616, %v708
      %v710 = vpop.f32.mrb[0].mxu0
      %v711 = vpop.f32.mrb[0].mxu0
      %v712 = vadd.f32 %v616, %v711
      %v713 = vpop.f32.mrb[0].mxu0
      %714 = vmatprep.mubr.bf16.mxu0 0
      %715 = vmatmul.mubr.bf16.gmra.mrb[0].mxu0 %v457
      %v716 = vpop.f32.mrb[0].mxu0
      %v717 = vadd.f32 %v616, %v716
      %v718 = vpop.f32.mrb[0].mxu0
      %v719 = vpop.f32.mrb[0].mxu0
      %v720 = vadd.f32 %v616, %v719
      %v721 = vpop.f32.mrb[0].mxu0
      %722 = vmatprep.mubr.bf16.mxu0 0
      %723 = vmatmul.mubr.bf16.gmra.mrb[0].mxu0 %v458
      %v724 = vpop.f32.mrb[0].mxu0
      %v725 = vadd.f32 %v616, %v724
      %v726 = vpop.f32.mrb[0].mxu0
      %v727 = vpop.f32.mrb[0].mxu0
      %v728 = vadd.f32 %v616, %v727
      %v729 = vpop.f32.mrb[0].mxu0
      %730 = vdwg.mxu0
      %v731 = vld [vmem:[%s6] sm:$0xf]
      %v732 = vld [vmem:[%s6 + $0x4] sm:$0xf]
      %v733 = vld [vmem:[%s6 + $0x8] sm:$0xf]
      %v734 = vld [vmem:[%s6 + $0xc] sm:$0xf]
      %v735 = vld [vmem:[%s6 + $0x10] sm:$0xf]
      %v736 = vld [vmem:[%s6 + $0x14] sm:$0xf]
      %v737 = vld [vmem:[%s6 + $0x18] sm:$0xf]
      %v738 = vld [vmem:[%s6 + $0x1c] sm:$0xf]
      %v739 = vld [vmem:[%s6 + $0x20] sm:$0xf]
      %v740 = vld [vmem:[%s6 + $0x24] sm:$0xf]
      %v741 = vld [vmem:[%s6 + $0x28] sm:$0xf]
      %v742 = vld [vmem:[%s6 + $0x2c] sm:$0xf]
      %v743 = vld [vmem:[%s6 + $0x30] sm:$0xf]
      %v744 = vld [vmem:[%s6 + $0x34] sm:$0xf]
      %v745 = vld [vmem:[%s6 + $0x38] sm:$0xf]
      %v746 = vld [vmem:[%s6 + $0x3c] sm:$0xf]
      %v747 = vld [vmem:[%s7] sm:$0x1]
      %v749 = vlaneseq
      %v750 = vshrl.u32 %v749, 7
      %v751 = vsub.s32 0, %v750
      %v752 = vrot.slane %v747, %v751
      %v770 = vunpack.c.l.b16 %v731
      %v771 = vunpack.c.l.b16 %v732
      %v772 = vunpack.c.l.b16 %v733
      %v773 = vunpack.c.l.b16 %v734
      %v774 = vunpack.c.l.b16 %v735
      %v775 = vunpack.c.l.b16 %v736
      %v776 = vunpack.c.l.b16 %v737
      %v777 = vunpack.c.l.b16 %v738
      %v778 = vunpack.c.l.b16 %v739
      %v779 = vunpack.c.l.b16 %v740
      %v780 = vunpack.c.l.b16 %v741
      %v781 = vunpack.c.l.b16 %v742
      %v782 = vunpack.c.l.b16 %v743
      %v783 = vunpack.c.l.b16 %v744
      %v784 = vunpack.c.l.b16 %v745
      %v785 = vunpack.c.l.b16 %v746
      %v786 = vpack.c.b16 %v771, %v770
      %v787 = vpack.c.b16 %v773, %v772
      %v788 = vpack.c.b16 %v775, %v774
      %v789 = vpack.c.b16 %v777, %v776
      %v790 = vpack.c.b16 %v779, %v778
      %v791 = vpack.c.b16 %v781, %v780
      %v792 = vpack.c.b16 %v783, %v782
      %v793 = vpack.c.b16 %v785, %v784
      %802 = vmatprep.subr.bf16.mxu0 0
      %803 = vmatpush1.bf16.msra.mxu0 %v786
      %804 = vmatprep.subr.bf16.mxu0 0
      %805 = vmatpush1.bf16.msra.mxu0 %v787
      %806 = vmatprep.subr.bf16.mxu0 0
      %807 = vmatpush1.bf16.msra.mxu0 %v788
      %808 = vmatprep.subr.bf16.mxu0 0
      %809 = vmatpush1.bf16.msra.mxu0 %v789
      %810 = vmatprep.subr.bf16.mxu0 0
      %811 = vmatpush1.bf16.msra.mxu0 %v790
      %812 = vmatprep.subr.bf16.mxu0 0
      %813 = vmatpush1.bf16.msra.mxu0 %v791
      %814 = vmatprep.subr.bf16.mxu0 0
      %815 = vmatpush1.bf16.msra.mxu0 %v792
      %816 = vmatprep.subr.bf16.mxu0 0
      %817 = vmatpush1.bf16.msra.mxu0 %v793
      %818 = vmatprep.subr.bf16.mxu0 0
      %819 = vmatpush1.bf16.msra.mxu0 0
      %820 = vmatprep.subr.bf16.mxu0 0
      %821 = vmatpush1.bf16.msra.mxu0 0
      %822 = vmatprep.subr.bf16.mxu0 0
      %823 = vmatpush1.bf16.msra.mxu0 0
      %824 = vmatprep.subr.bf16.mxu0 0
      %825 = vmatpush1.bf16.msra.mxu0 0
      %826 = vmatprep.subr.bf16.mxu0 0
      %827 = vmatpush1.bf16.msra.mxu0 0
      %828 = vmatprep.subr.bf16.mxu0 0
      %829 = vmatpush1.bf16.msra.mxu0 0
      %830 = vmatprep.subr.bf16.mxu0 0
      %831 = vmatpush1.bf16.msra.mxu0 0
      %832 = vmatprep.subr.bf16.mxu0 0
      %833 = vmatpush1.bf16.msra.mxu0 0
      %834 = vmatprep.mubr.bf16.mxu0 0
      %835 = vmatmul.mubr.bf16.gmra.mrb[0].mxu0 %v455
      %v836 = vpop.f32.mrb[0].mxu0
      %v837 = vadd.f32 %v752, %v836
      %v838 = vpop.f32.mrb[0].mxu0
      %v839 = vpop.f32.mrb[0].mxu0
      %v840 = vadd.f32 %v752, %v839
      %v841 = vpop.f32.mrb[0].mxu0
      %842 = vmatprep.mubr.bf16.mxu0 0
      %843 = vmatmul.mubr.bf16.gmra.mrb[0].mxu0 %v456
      %v844 = vpop.f32.mrb[0].mxu0
      %v845 = vadd.f32 %v752, %v844
      %v846 = vpop.f32.mrb[0].mxu0
      %v847 = vpop.f32.mrb[0].mxu0
      %v848 = vadd.f32 %v752, %v847
      %v849 = vpop.f32.mrb[0].mxu0
      %850 = vmatprep.mubr.bf16.mxu0 0
      %851 = vmatmul.mubr.bf16.gmra.mrb[0].mxu0 %v457
      %v852 = vpop.f32.mrb[0].mxu0
      %v853 = vadd.f32 %v752, %v852
      %v854 = vpop.f32.mrb[0].mxu0
      %v855 = vpop.f32.mrb[0].mxu0
      %v856 = vadd.f32 %v752, %v855
      %v857 = vpop.f32.mrb[0].mxu0
      %858 = vmatprep.mubr.bf16.mxu0 0
      %859 = vmatmul.mubr.bf16.gmra.mrb[0].mxu0 %v458
      %v860 = vpop.f32.mrb[0].mxu0
      %v861 = vadd.f32 %v752, %v860
      %v862 = vpop.f32.mrb[0].mxu0
      %v863 = vpop.f32.mrb[0].mxu0
      %v864 = vadd.f32 %v752, %v863
      %v865 = vpop.f32.mrb[0].mxu0
      %866 = vdwg.mxu0
      %v867 = vpack.c.bf16 %v568, %v565
      %v868 = vpack.c.bf16 %v576, %v573
      %v869 = vpack.c.bf16 %v584, %v581
      %v870 = vpack.c.bf16 %v592, %v589
      %871 = vxpose.xlu0.b32.start [1/16] %v701, 128
      %872 = vxpose.xlu0.b32.cont [2/16] %v704, 128
      %873 = vxpose.xlu0.b32.cont [3/16] %v709, 128
      %874 = vxpose.xlu0.b32.cont [4/16] %v712, 128
      %875 = vxpose.xlu0.b32.cont [5/16] %v717, 128
      %876 = vxpose.xlu0.b32.cont [6/16] %v720, 128
      %877 = vxpose.xlu0.b32.cont [7/16] %v725, 128
      %878 = vxpose.xlu0.b32.cont [8/16] %v728, 128
      %879 = vxpose.xlu0.b32.cont [9/16] 0.0, 128
      %880 = vxpose.xlu0.b32.cont [10/16] 0.0, 128
      %881 = vxpose.xlu0.b32.cont [11/16] 0.0, 128
      %882 = vxpose.xlu0.b32.cont [12/16] 0.0, 128
      %883 = vxpose.xlu0.b32.cont [13/16] 0.0, 128
      %884 = vxpose.xlu0.b32.cont [14/16] 0.0, 128
      %885 = vxpose.xlu0.b32.cont [15/16] 0.0, 128
      %886 = vxpose.xlu0.b32.end [16/16] 0.0, 128
      %v887 = vpop.trf.xlu0
      %v888 = vpop.trf.xlu0
      %v889 = vpop.trf.xlu0
      %v890 = vpop.trf.xlu0
      %v891 = vpop.trf.xlu0
      %v892 = vpop.trf.xlu0
      %v893 = vpop.trf.xlu0
      %v894 = vpop.trf.xlu0
      %v895 = vpop.trf.xlu0
      %v896 = vpop.trf.xlu0
      %v897 = vpop.trf.xlu0
      %v898 = vpop.trf.xlu0
      %v899 = vpop.trf.xlu0
      %v900 = vpop.trf.xlu0
      %v901 = vpop.trf.xlu0
      %v902 = vpop.trf.xlu0
      %v903 = vpack.c.bf16 %v888, %v887
      %v904 = vpack.c.bf16 %v840, %v837
      %v905 = vpack.c.bf16 %v848, %v845
      %v906 = vpack.c.bf16 %v856, %v853
      %v907 = vpack.c.bf16 %v864, %v861
      %vm908 = vcmask 130048
      %v910 = vsel %vm908, %v867, 0
      %v913 = vsel %vm908, %v868, 0
      %v916 = vsel %vm908, %v869, 0
      %v919 = vsel %vm908, %v870, 0
      %921 = vmatprep.subr.bf16.mxu0 0
      %922 = vmatpush1.bf16.msra.mxu0 %v903
      %923 = vmatprep.subr.bf16.mxu0 0
      %924 = vmatpush1.bf16.msra.mxu0 0
      %925 = vmatprep.subr.bf16.mxu0 0
      %926 = vmatpush1.bf16.msra.mxu0 0
      %927 = vmatprep.subr.bf16.mxu0 0
      %928 = vmatpush1.bf16.msra.mxu0 0
      %929 = vmatprep.subr.bf16.mxu0 0
      %930 = vmatpush1.bf16.msra.mxu0 0
      %931 = vmatprep.subr.bf16.mxu0 0
      %932 = vmatpush1.bf16.msra.mxu0 0
      %933 = vmatprep.subr.bf16.mxu0 0
      %934 = vmatpush1.bf16.msra.mxu0 0
      %935 = vmatprep.subr.bf16.mxu0 0
      %936 = vmatpush1.bf16.msra.mxu0 0
      %937 = vmatprep.subr.bf16.mxu0 0
      %938 = vmatpush1.bf16.msra.mxu0 0
      %939 = vmatprep.subr.bf16.mxu0 0
      %940 = vmatpush1.bf16.msra.mxu0 0
      %941 = vmatprep.subr.bf16.mxu0 0
      %942 = vmatpush1.bf16.msra.mxu0 0
      %943 = vmatprep.subr.bf16.mxu0 0
      %944 = vmatpush1.bf16.msra.mxu0 0
      %945 = vmatprep.subr.bf16.mxu0 0
      %946 = vmatpush1.bf16.msra.mxu0 0
      %947 = vmatprep.subr.bf16.mxu0 0
      %948 = vmatpush1.bf16.msra.mxu0 0
      %949 = vmatprep.subr.bf16.mxu0 0
      %950 = vmatpush1.bf16.msra.mxu0 0
      %951 = vmatprep.subr.bf16.mxu0 0
      %952 = vmatpush1.bf16.msra.mxu0 0
      %953 = vmatprep.mubr.bf16.mxu0 0
      %954 = vmatmul.mubr.bf16.gmra.mrb[0].mxu0 %v910
      %v955 = vpop.f32.mrb[0].mxu0
      %v956 = vadd.f32 0.0, %v955
      %v957 = vpop.f32.mrb[0].mxu0
      %v958 = vpop.f32.mrb[0].mxu0
      %v959 = vadd.f32 0.0, %v958
      %v960 = vpop.f32.mrb[0].mxu0
      %961 = vmatprep.mubr.bf16.mxu0 0
      %962 = vmatmul.mubr.bf16.gmra.mrb[0].mxu0 %v913
      %v963 = vpop.f32.mrb[0].mxu0
      %v964 = vadd.f32 0.0, %v963
      %v965 = vpop.f32.mrb[0].mxu0
      %v966 = vpop.f32.mrb[0].mxu0
      %v967 = vadd.f32 0.0, %v966
      %v968 = vpop.f32.mrb[0].mxu0
      %969 = vmatprep.mubr.bf16.mxu0 0
      %970 = vmatmul.mubr.bf16.gmra.mrb[0].mxu0 %v916
      %v971 = vpop.f32.mrb[0].mxu0
      %v972 = vadd.f32 0.0, %v971
      %v973 = vpop.f32.mrb[0].mxu0
      %v974 = vpop.f32.mrb[0].mxu0
      %v975 = vadd.f32 0.0, %v974
      %v976 = vpop.f32.mrb[0].mxu0
      %977 = vmatprep.mubr.bf16.mxu0 0
      %978 = vmatmul.mubr.bf16.gmra.mrb[0].mxu0 %v919
      %v979 = vpop.f32.mrb[0].mxu0
      %v980 = vadd.f32 0.0, %v979
      %v981 = vpop.f32.mrb[0].mxu0
      %v982 = vpop.f32.mrb[0].mxu0
      %v983 = vadd.f32 0.0, %v982
      %v984 = vpop.f32.mrb[0].mxu0
      %985 = vdwg.mxu0
      %vm986 = vcmask 523264
      %v987 = vsel %vm986, %v956, -inf
      %988 = vmax.xlane.f32.xlu0 %v987
      %v989 = vpop.xlane.xlu0 %988
      %v990 = vsel %vm986, %v959, -inf
      %991 = vmax.xlane.f32.xlu0 %v990
      %v992 = vpop.xlane.xlu0 %991
      %v993 = vsel %vm986, %v964, -inf
      %994 = vmax.xlane.f32.xlu0 %v993
      %v995 = vpop.xlane.xlu0 %994
      %v996 = vsel %vm986, %v967, -inf
      %997 = vmax.xlane.f32.xlu0 %v996
      %v998 = vpop.xlane.xlu0 %997
      %v999 = vsel %vm986, %v972, -inf
      %1000 = vmax.xlane.f32.xlu0 %v999
      %v1001 = vpop.xlane.xlu0 %1000
      %v1002 = vsel %vm986, %v975, -inf
      %1003 = vmax.xlane.f32.xlu0 %v1002
      %v1004 = vpop.xlane.xlu0 %1003
      %v1005 = vsel %vm986, %v980, -inf
      %1006 = vmax.xlane.f32.xlu0 %v1005
      %v1007 = vpop.xlane.xlu0 %1006
      %v1008 = vsel %vm986, %v983, -inf
      %1009 = vmax.xlane.f32.xlu0 %v1008
      %v1010 = vpop.xlane.xlu0 %1009
      %v1011 = vsub.f32 %v956, %v989
      %v1012 = vsub.f32 %v959, %v992
      %v1013 = vsub.f32 %v964, %v995
      %v1014 = vsub.f32 %v967, %v998
      %v1015 = vsub.f32 %v972, %v1001
      %v1016 = vsub.f32 %v975, %v1004
      %v1017 = vsub.f32 %v980, %v1007
      %v1018 = vsub.f32 %v983, %v1010
      %v1019 = vmul.f32 %v1011, 1.442695
      %v1020 = vpow.pop %v1019
      %v1021 = vmul.f32 %v1012, 1.442695
      %v1022 = vpow.pop %v1021
      %v1023 = vmul.f32 %v1013, 1.442695
      %v1024 = vpow.pop %v1023
      %v1025 = vmul.f32 %v1014, 1.442695
      %v1026 = vpow.pop %v1025
      %v1027 = vmul.f32 %v1015, 1.442695
      %v1028 = vpow.pop %v1027
      %v1029 = vmul.f32 %v1016, 1.442695
      %v1030 = vpow.pop %v1029
      %v1031 = vmul.f32 %v1017, 1.442695
      %v1032 = vpow.pop %v1031
      %v1033 = vmul.f32 %v1018, 1.442695
      %v1034 = vpow.pop %v1033
      %v1035 = vsel %vm986, %v1020, 0.0
      %1036 = vadd.xlane.f32.xlu0 %v1035
      %v1037 = vpop.xlane.xlu0 %1036
      %v1038 = vsel %vm986, %v1022, 0.0
      %1039 = vadd.xlane.f32.xlu0 %v1038
      %v1040 = vpop.xlane.xlu0 %1039
      %v1041 = vsel %vm986, %v1024, 0.0
      %1042 = vadd.xlane.f32.xlu0 %v1041
      %v1043 = vpop.xlane.xlu0 %1042
      %v1044 = vsel %vm986, %v1026, 0.0
      %1045 = vadd.xlane.f32.xlu0 %v1044
      %v1046 = vpop.xlane.xlu0 %1045
      %v1047 = vsel %vm986, %v1028, 0.0
      %1048 = vadd.xlane.f32.xlu0 %v1047
      %v1049 = vpop.xlane.xlu0 %1048
      %v1050 = vsel %vm986, %v1030, 0.0
      %1051 = vadd.xlane.f32.xlu0 %v1050
      %v1052 = vpop.xlane.xlu0 %1051
      %v1053 = vsel %vm986, %v1032, 0.0
      %1054 = vadd.xlane.f32.xlu0 %v1053
      %v1055 = vpop.xlane.xlu0 %1054
      %v1056 = vsel %vm986, %v1034, 0.0
      %1057 = vadd.xlane.f32.xlu0 %v1056
      %v1058 = vpop.xlane.xlu0 %1057
      %v1059 = vrcp.pop %v1037
      %v1060 = vrcp.pop %v1040
      %v1061 = vrcp.pop %v1043
      %v1062 = vrcp.pop %v1046
      %v1063 = vrcp.pop %v1049
      %v1064 = vrcp.pop %v1052
      %v1065 = vrcp.pop %v1055
      %v1066 = vrcp.pop %v1058
      %v1067 = vmul.f32 %v1020, %v1059
      %v1068 = vmul.f32 %v1022, %v1060
      %v1069 = vmul.f32 %v1024, %v1061
      %v1070 = vmul.f32 %v1026, %v1062
      %v1071 = vmul.f32 %v1028, %v1063
      %v1072 = vmul.f32 %v1030, %v1064
      %v1073 = vmul.f32 %v1032, %v1065
      %v1074 = vmul.f32 %v1034, %v1066
      %v1075 = vpack.c.bf16 %v1068, %v1067
      %v1076 = vpack.c.bf16 %v1070, %v1069
      %v1077 = vpack.c.bf16 %v1072, %v1071
      %v1078 = vpack.c.bf16 %v1074, %v1073
      %v1080 = vsel %vm986, %v1075, 0
      %v1083 = vsel %vm986, %v1076, 0
      %v1086 = vsel %vm986, %v1077, 0
      %v1089 = vsel %vm986, %v1078, 0
      %1091 = vmatprep.subr.bf16.mxu0 0
      %1092 = vmatpush1.bf16.msra.mxu0 %v904
      %1093 = vmatprep.subr.bf16.mxu0 0
      %1094 = vmatpush1.bf16.msra.mxu0 %v905
      %1095 = vmatprep.subr.bf16.mxu0 0
      %1096 = vmatpush1.bf16.msra.mxu0 %v906
      %1097 = vmatprep.subr.bf16.mxu0 0
      %1098 = vmatpush1.bf16.msra.mxu0 %v907
      %1099 = vmatprep.subr.bf16.mxu0 0
      %1100 = vmatpush1.bf16.msra.mxu0 0
      %1101 = vmatprep.subr.bf16.mxu0 0
      %1102 = vmatpush1.bf16.msra.mxu0 0
      %1103 = vmatprep.subr.bf16.mxu0 0
      %1104 = vmatpush1.bf16.msra.mxu0 0
      %1105 = vmatprep.subr.bf16.mxu0 0
      %1106 = vmatpush1.bf16.msra.mxu0 0
      %1107 = vmatprep.subr.bf16.mxu0 0
      %1108 = vmatpush1.bf16.msra.mxu0 0
      %1109 = vmatprep.subr.bf16.mxu0 0
      %1110 = vmatpush1.bf16.msra.mxu0 0
      %1111 = vmatprep.subr.bf16.mxu0 0
      %1112 = vmatpush1.bf16.msra.mxu0 0
      %1113 = vmatprep.subr.bf16.mxu0 0
      %1114 = vmatpush1.bf16.msra.mxu0 0
      %1115 = vmatprep.subr.bf16.mxu0 0
      %1116 = vmatpush1.bf16.msra.mxu0 0
      %1117 = vmatprep.subr.bf16.mxu0 0
      %1118 = vmatpush1.bf16.msra.mxu0 0
      %1119 = vmatprep.subr.bf16.mxu0 0
      %1120 = vmatpush1.bf16.msra.mxu0 0
      %1121 = vmatprep.subr.bf16.mxu0 0
      %1122 = vmatpush1.bf16.msra.mxu0 0
      %1123 = vmatprep.mubr.bf16.mxu0 0
      %1124 = vmatmul.mubr.bf16.gmra.mrb[0].mxu0 %v1080
      %v1125 = vpop.f32.mrb[0].mxu0
      %v1126 = vadd.f32 0.0, %v1125
      %v1127 = vpop.f32.mrb[0].mxu0
      %v1128 = vpop.f32.mrb[0].mxu0
      %v1129 = vadd.f32 0.0, %v1128
      %v1130 = vpop.f32.mrb[0].mxu0
      %1131 = vmatprep.mubr.bf16.mxu0 0
      %1132 = vmatmul.mubr.bf16.gmra.mrb[0].mxu0 %v1083
      %v1133 = vpop.f32.mrb[0].mxu0
      %v1134 = vadd.f32 0.0, %v1133
      %v1135 = vpop.f32.mrb[0].mxu0
      %v1136 = vpop.f32.mrb[0].mxu0
      %v1137 = vadd.f32 0.0, %v1136
      %v1138 = vpop.f32.mrb[0].mxu0
      %1139 = vmatprep.mubr.bf16.mxu0 0
      %1140 = vmatmul.mubr.bf16.gmra.mrb[0].mxu0 %v1086
      %v1141 = vpop.f32.mrb[0].mxu0
      %v1142 = vadd.f32 0.0, %v1141
      %v1143 = vpop.f32.mrb[0].mxu0
      %v1144 = vpop.f32.mrb[0].mxu0
      %v1145 = vadd.f32 0.0, %v1144
      %v1146 = vpop.f32.mrb[0].mxu0
      %1147 = vmatprep.mubr.bf16.mxu0 0
      %1148 = vmatmul.mubr.bf16.gmra.mrb[0].mxu0 %v1089
      %v1149 = vpop.f32.mrb[0].mxu0
      %v1150 = vadd.f32 0.0, %v1149
      %v1151 = vpop.f32.mrb[0].mxu0
      %v1152 = vpop.f32.mrb[0].mxu0
      %v1153 = vadd.f32 0.0, %v1152
      %v1154 = vpop.f32.mrb[0].mxu0
      %1155 = vdwg.mxu0
      %v1156 = vld [vmem:[%s8] sm:$0xff]
      %v1157 = vld [vmem:[%s8 + $0x8] sm:$0xff]
      %v1158 = vpack.c.bf16 %v1157, %v1156
      %v1159 = vpack.c.bf16 %v1129, %v1126
      %v1160 = vpack.c.bf16 %v1137, %v1134
      %v1161 = vpack.c.bf16 %v1145, %v1142
      %v1162 = vpack.c.bf16 %v1153, %v1150
      %1171 = vrot.lane.b32.xlu0 %v701, 112
      %v1172 = vpop.permute.xlu0 %1171
      %1173 = vrot.lane.b32.xlu0 %v704, 112
      %v1174 = vpop.permute.xlu0 %1173
      %1175 = vrot.lane.b32.xlu0 %v709, 112
      %v1176 = vpop.permute.xlu0 %1175
      %1177 = vrot.lane.b32.xlu0 %v712, 112
      %v1178 = vpop.permute.xlu0 %1177
      %1179 = vrot.lane.b32.xlu0 %v717, 112
      %v1180 = vpop.permute.xlu0 %1179
      %1181 = vrot.lane.b32.xlu0 %v720, 112
      %v1182 = vpop.permute.xlu0 %1181
      %1183 = vrot.lane.b32.xlu0 %v725, 112
      %v1184 = vpop.permute.xlu0 %1183
      %1185 = vrot.lane.b32.xlu0 %v728, 112
      %v1186 = vpop.permute.xlu0 %1185
      %1195 = vxpose.xlu0.b32.start [1/16] %v1172, 128
      %1196 = vxpose.xlu0.b32.cont [2/16] %v1174, 128
      %1197 = vxpose.xlu0.b32.cont [3/16] %v1176, 128
      %1198 = vxpose.xlu0.b32.cont [4/16] %v1178, 128
      %1199 = vxpose.xlu0.b32.cont [5/16] %v1180, 128
      %1200 = vxpose.xlu0.b32.cont [6/16] %v1182, 128
      %1201 = vxpose.xlu0.b32.cont [7/16] %v1184, 128
      %1202 = vxpose.xlu0.b32.cont [8/16] %v1186, 128
      %1203 = vxpose.xlu0.b32.cont [9/16] 0.0, 128
      %1204 = vxpose.xlu0.b32.cont [10/16] 0.0, 128
      %1205 = vxpose.xlu0.b32.cont [11/16] 0.0, 128
      %1206 = vxpose.xlu0.b32.cont [12/16] 0.0, 128
      %1207 = vxpose.xlu0.b32.cont [13/16] 0.0, 128
      %1208 = vxpose.xlu0.b32.cont [14/16] 0.0, 128
      %1209 = vxpose.xlu0.b32.cont [15/16] 0.0, 128
      %1210 = vxpose.xlu0.b32.end [16/16] 0.0, 128
      %v1211 = vpop.trf.xlu0
      %v1212 = vpop.trf.xlu0
      %v1213 = vpop.trf.xlu0
      %v1214 = vpop.trf.xlu0
      %v1215 = vpop.trf.xlu0
      %v1216 = vpop.trf.xlu0
      %v1217 = vpop.trf.xlu0
      %v1218 = vpop.trf.xlu0
      %v1219 = vpop.trf.xlu0
      %v1220 = vpop.trf.xlu0
      %v1221 = vpop.trf.xlu0
      %v1222 = vpop.trf.xlu0
      %v1223 = vpop.trf.xlu0
      %v1224 = vpop.trf.xlu0
      %v1225 = vpop.trf.xlu0
      %v1226 = vpop.trf.xlu0
      %v1227 = vpack.c.bf16 %v1212, %v1211
      %1232 = vrot.lane.b32.xlu0 %v867, 112
      %v1233 = vpop.permute.xlu0 %1232
      %1234 = vrot.lane.b32.xlu0 %v868, 112
      %v1235 = vpop.permute.xlu0 %1234
      %1236 = vrot.lane.b32.xlu0 %v869, 112
      %v1237 = vpop.permute.xlu0 %1236
      %1238 = vrot.lane.b32.xlu0 %v870, 112
      %v1239 = vpop.permute.xlu0 %1238
      %v1241 = vsel %vm908, %v1233, 0
      %v1244 = vsel %vm908, %v1235, 0
      %v1247 = vsel %vm908, %v1237, 0
      %v1250 = vsel %vm908, %v1239, 0
      %1252 = vmatprep.subr.bf16.mxu0 0
      %1253 = vmatpush1.bf16.msra.mxu0 %v1227
      %1254 = vmatprep.subr.bf16.mxu0 0
      %1255 = vmatpush1.bf16.msra.mxu0 0
      %1256 = vmatprep.subr.bf16.mxu0 0
      %1257 = vmatpush1.bf16.msra.mxu0 0
      %1258 = vmatprep.subr.bf16.mxu0 0
      %1259 = vmatpush1.bf16.msra.mxu0 0
      %1260 = vmatprep.subr.bf16.mxu0 0
      %1261 = vmatpush1.bf16.msra.mxu0 0
      %1262 = vmatprep.subr.bf16.mxu0 0
      %1263 = vmatpush1.bf16.msra.mxu0 0
      %1264 = vmatprep.subr.bf16.mxu0 0
      %1265 = vmatpush1.bf16.msra.mxu0 0
      %1266 = vmatprep.subr.bf16.mxu0 0
      %1267 = vmatpush1.bf16.msra.mxu0 0
      %1268 = vmatprep.subr.bf16.mxu0 0
      %1269 = vmatpush1.bf16.msra.mxu0 0
      %1270 = vmatprep.subr.bf16.mxu0 0
      %1271 = vmatpush1.bf16.msra.mxu0 0
      %1272 = vmatprep.subr.bf16.mxu0 0
      %1273 = vmatpush1.bf16.msra.mxu0 0
      %1274 = vmatprep.subr.bf16.mxu0 0
      %1275 = vmatpush1.bf16.msra.mxu0 0
      %1276 = vmatprep.subr.bf16.mxu0 0
      %1277 = vmatpush1.bf16.msra.mxu0 0
      %1278 = vmatprep.subr.bf16.mxu0 0
      %1279 = vmatpush1.bf16.msra.mxu0 0
      %1280 = vmatprep.subr.bf16.mxu0 0
      %1281 = vmatpush1.bf16.msra.mxu0 0
      %1282 = vmatprep.subr.bf16.mxu0 0
      %1283 = vmatpush1.bf16.msra.mxu0 0
      %1284 = vmatprep.mubr.bf16.mxu0 0
      %1285 = vmatmul.mubr.bf16.gmra.mrb[0].mxu0 %v1241
      %v1286 = vpop.f32.mrb[0].mxu0
      %v1287 = vadd.f32 0.0, %v1286
      %v1288 = vpop.f32.mrb[0].mxu0
      %v1289 = vpop.f32.mrb[0].mxu0
      %v1290 = vadd.f32 0.0, %v1289
      %v1291 = vpop.f32.mrb[0].mxu0
      %1292 = vmatprep.mubr.bf16.mxu0 0
      %1293 = vmatmul.mubr.bf16.gmra.mrb[0].mxu0 %v1244
      %v1294 = vpop.f32.mrb[0].mxu0
      %v1295 = vadd.f32 0.0, %v1294
      %v1296 = vpop.f32.mrb[0].mxu0
      %v1297 = vpop.f32.mrb[0].mxu0
      %v1298 = vadd.f32 0.0, %v1297
      %v1299 = vpop.f32.mrb[0].mxu0
      %1300 = vmatprep.mubr.bf16.mxu0 0
      %1301 = vmatmul.mubr.bf16.gmra.mrb[0].mxu0 %v1247
      %v1302 = vpop.f32.mrb[0].mxu0
      %v1303 = vadd.f32 0.0, %v1302
      %v1304 = vpop.f32.mrb[0].mxu0
      %v1305 = vpop.f32.mrb[0].mxu0
      %v1306 = vadd.f32 0.0, %v1305
      %v1307 = vpop.f32.mrb[0].mxu0
      %1308 = vmatprep.mubr.bf16.mxu0 0
      %1309 = vmatmul.mubr.bf16.gmra.mrb[0].mxu0 %v1250
      %v1310 = vpop.f32.mrb[0].mxu0
      %v1311 = vadd.f32 0.0, %v1310
      %v1312 = vpop.f32.mrb[0].mxu0
      %v1313 = vpop.f32.mrb[0].mxu0
      %v1314 = vadd.f32 0.0, %v1313
      %v1315 = vpop.f32.mrb[0].mxu0
      %1316 = vdwg.mxu0
      %v1317 = vsel %vm986, %v1287, -inf
      %1318 = vmax.xlane.f32.xlu0 %v1317
      %v1319 = vpop.xlane.xlu0 %1318
      %v1320 = vsel %vm986, %v1290, -inf
      %1321 = vmax.xlane.f32.xlu0 %v1320
      %v1322 = vpop.xlane.xlu0 %1321
      %v1323 = vsel %vm986, %v1295, -inf
      %1324 = vmax.xlane.f32.xlu0 %v1323
      %v1325 = vpop.xlane.xlu0 %1324
      %v1326 = vsel %vm986, %v1298, -inf
      %1327 = vmax.xlane.f32.xlu0 %v1326
      %v1328 = vpop.xlane.xlu0 %1327
      %v1329 = vsel %vm986, %v1303, -inf
      %1330 = vmax.xlane.f32.xlu0 %v1329
      %v1331 = vpop.xlane.xlu0 %1330
      %v1332 = vsel %vm986, %v1306, -inf
      %1333 = vmax.xlane.f32.xlu0 %v1332
      %v1334 = vpop.xlane.xlu0 %1333
      %v1335 = vsel %vm986, %v1311, -inf
      %1336 = vmax.xlane.f32.xlu0 %v1335
      %v1337 = vpop.xlane.xlu0 %1336
      %v1338 = vsel %vm986, %v1314, -inf
      %1339 = vmax.xlane.f32.xlu0 %v1338
      %v1340 = vpop.xlane.xlu0 %1339
      %v1341 = vsub.f32 %v1287, %v1319
      %v1342 = vsub.f32 %v1290, %v1322
      %v1343 = vsub.f32 %v1295, %v1325
      %v1344 = vsub.f32 %v1298, %v1328
      %v1345 = vsub.f32 %v1303, %v1331
      %v1346 = vsub.f32 %v1306, %v1334
      %v1347 = vsub.f32 %v1311, %v1337
      %v1348 = vsub.f32 %v1314, %v1340
      %v1349 = vmul.f32 %v1341, 1.442695
      %v1350 = vpow.pop %v1349
      %v1351 = vmul.f32 %v1342, 1.442695
      %v1352 = vpow.pop %v1351
      %v1353 = vmul.f32 %v1343, 1.442695
      %v1354 = vpow.pop %v1353
      %v1355 = vmul.f32 %v1344, 1.442695
      %v1356 = vpow.pop %v1355
      %v1357 = vmul.f32 %v1345, 1.442695
      %v1358 = vpow.pop %v1357
      %v1359 = vmul.f32 %v1346, 1.442695
      %v1360 = vpow.pop %v1359
      %v1361 = vmul.f32 %v1347, 1.442695
      %v1362 = vpow.pop %v1361
      %v1363 = vmul.f32 %v1348, 1.442695
      %v1364 = vpow.pop %v1363
      %v1365 = vsel %vm986, %v1350, 0.0
      %1366 = vadd.xlane.f32.xlu0 %v1365
      %v1367 = vpop.xlane.xlu0 %1366
      %v1368 = vsel %vm986, %v1352, 0.0
      %1369 = vadd.xlane.f32.xlu0 %v1368
      %v1370 = vpop.xlane.xlu0 %1369
      %v1371 = vsel %vm986, %v1354, 0.0
      %1372 = vadd.xlane.f32.xlu0 %v1371
      %v1373 = vpop.xlane.xlu0 %1372
      %v1374 = vsel %vm986, %v1356, 0.0
      %1375 = vadd.xlane.f32.xlu0 %v1374
      %v1376 = vpop.xlane.xlu0 %1375
      %v1377 = vsel %vm986, %v1358, 0.0
      %1378 = vadd.xlane.f32.xlu0 %v1377
      %v1379 = vpop.xlane.xlu0 %1378
      %v1380 = vsel %vm986, %v1360, 0.0
      %1381 = vadd.xlane.f32.xlu0 %v1380
      %v1382 = vpop.xlane.xlu0 %1381
      %v1383 = vsel %vm986, %v1362, 0.0
      %1384 = vadd.xlane.f32.xlu0 %v1383
      %v1385 = vpop.xlane.xlu0 %1384
      %v1386 = vsel %vm986, %v1364, 0.0
      %1387 = vadd.xlane.f32.xlu0 %v1386
      %v1388 = vpop.xlane.xlu0 %1387
      %v1389 = vrcp.pop %v1367
      %v1390 = vrcp.pop %v1370
      %v1391 = vrcp.pop %v1373
      %v1392 = vrcp.pop %v1376
      %v1393 = vrcp.pop %v1379
      %v1394 = vrcp.pop %v1382
      %v1395 = vrcp.pop %v1385
      %v1396 = vrcp.pop %v1388
      %v1397 = vmul.f32 %v1350, %v1389
      %v1398 = vmul.f32 %v1352, %v1390
      %v1399 = vmul.f32 %v1354, %v1391
      %v1400 = vmul.f32 %v1356, %v1392
      %v1401 = vmul.f32 %v1358, %v1393
      %v1402 = vmul.f32 %v1360, %v1394
      %v1403 = vmul.f32 %v1362, %v1395
      %v1404 = vmul.f32 %v1364, %v1396
      %v1405 = vpack.c.bf16 %v1398, %v1397
      %v1406 = vpack.c.bf16 %v1400, %v1399
      %v1407 = vpack.c.bf16 %v1402, %v1401
      %v1408 = vpack.c.bf16 %v1404, %v1403
      %1413 = vrot.lane.b32.xlu0 %v904, 112
      %v1414 = vpop.permute.xlu0 %1413
      %1415 = vrot.lane.b32.xlu0 %v905, 112
      %v1416 = vpop.permute.xlu0 %1415
      %1417 = vrot.lane.b32.xlu0 %v906, 112
      %v1418 = vpop.permute.xlu0 %1417
      %1419 = vrot.lane.b32.xlu0 %v907, 112
      %v1420 = vpop.permute.xlu0 %1419
      %v1426 = vsel %vm986, %v1405, 0
      %v1429 = vsel %vm986, %v1406, 0
      %v1432 = vsel %vm986, %v1407, 0
      %v1435 = vsel %vm986, %v1408, 0
      %1437 = vmatprep.subr.bf16.mxu0 0
      %1438 = vmatpush1.bf16.msra.mxu0 %v1414
      %1439 = vmatprep.subr.bf16.mxu0 0
      %1440 = vmatpush1.bf16.msra.mxu0 %v1416
      %1441 = vmatprep.subr.bf16.mxu0 0
      %1442 = vmatpush1.bf16.msra.mxu0 %v1418
      %1443 = vmatprep.subr.bf16.mxu0 0
      %1444 = vmatpush1.bf16.msra.mxu0 %v1420
      %1445 = vmatprep.subr.bf16.mxu0 0
      %1446 = vmatpush1.bf16.msra.mxu0 0
      %1447 = vmatprep.subr.bf16.mxu0 0
      %1448 = vmatpush1.bf16.msra.mxu0 0
      %1449 = vmatprep.subr.bf16.mxu0 0
      %1450 = vmatpush1.bf16.msra.mxu0 0
      %1451 = vmatprep.subr.bf16.mxu0 0
      %1452 = vmatpush1.bf16.msra.mxu0 0
      %1453 = vmatprep.subr.bf16.mxu0 0
      %1454 = vmatpush1.bf16.msra.mxu0 0
      %1455 = vmatprep.subr.bf16.mxu0 0
      %1456 = vmatpush1.bf16.msra.mxu0 0
      %1457 = vmatprep.subr.bf16.mxu0 0
      %1458 = vmatpush1.bf16.msra.mxu0 0
      %1459 = vmatprep.subr.bf16.mxu0 0
      %1460 = vmatpush1.bf16.msra.mxu0 0
      %1461 = vmatprep.subr.bf16.mxu0 0
      %1462 = vmatpush1.bf16.msra.mxu0 0
      %1463 = vmatprep.subr.bf16.mxu0 0
      %1464 = vmatpush1.bf16.msra.mxu0 0
      %1465 = vmatprep.subr.bf16.mxu0 0
      %1466 = vmatpush1.bf16.msra.mxu0 0
      %1467 = vmatprep.subr.bf16.mxu0 0
      %1468 = vmatpush1.bf16.msra.mxu0 0
      %1469 = vmatprep.mubr.bf16.mxu0 0
      %1470 = vmatmul.mubr.bf16.gmra.mrb[0].mxu0 %v1426
      %v1471 = vpop.f32.mrb[0].mxu0
      %v1472 = vadd.f32 0.0, %v1471
      %v1473 = vpop.f32.mrb[0].mxu0
      %v1474 = vpop.f32.mrb[0].mxu0
      %v1475 = vadd.f32 0.0, %v1474
      %v1476 = vpop.f32.mrb[0].mxu0
      %1477 = vmatprep.mubr.bf16.mxu0 0
      %1478 = vmatmul.mubr.bf16.gmra.mrb[0].mxu0 %v1429
      %v1479 = vpop.f32.mrb[0].mxu0
      %v1480 = vadd.f32 0.0, %v1479
      %v1481 = vpop.f32.mrb[0].mxu0
      %v1482 = vpop.f32.mrb[0].mxu0
      %v1483 = vadd.f32 0.0, %v1482
      %v1484 = vpop.f32.mrb[0].mxu0
      %1485 = vmatprep.mubr.bf16.mxu0 0
      %1486 = vmatmul.mubr.bf16.gmra.mrb[0].mxu0 %v1432
      %v1487 = vpop.f32.mrb[0].mxu0
      %v1488 = vadd.f32 0.0, %v1487
      %v1489 = vpop.f32.mrb[0].mxu0
      %v1490 = vpop.f32.mrb[0].mxu0
      %v1491 = vadd.f32 0.0, %v1490
      %v1492 = vpop.f32.mrb[0].mxu0
      %1493 = vmatprep.mubr.bf16.mxu0 0
      %1494 = vmatmul.mubr.bf16.gmra.mrb[0].mxu0 %v1435
      %v1495 = vpop.f32.mrb[0].mxu0
      %v1496 = vadd.f32 0.0, %v1495
      %v1497 = vpop.f32.mrb[0].mxu0
      %v1498 = vpop.f32.mrb[0].mxu0
      %v1499 = vadd.f32 0.0, %v1498
      %v1500 = vpop.f32.mrb[0].mxu0
      %1501 = vdwg.mxu0
      %v1502 = vld [vmem:[%s8 + $0x10] sm:$0xff]
      %v1503 = vld [vmem:[%s8 + $0x18] sm:$0xff]
      %v1504 = vpack.c.bf16 %v1503, %v1502
      %v1505 = vpack.c.bf16 %v1475, %v1472
      %v1506 = vpack.c.bf16 %v1483, %v1480
      %v1507 = vpack.c.bf16 %v1491, %v1488
      %v1508 = vpack.c.bf16 %v1499, %v1496
      %v1510 = vsel %vm908, %v1505, 0
      %v1513 = vsel %vm908, %v1506, 0
      %v1516 = vsel %vm908, %v1507, 0
      %v1519 = vsel %vm908, %v1508, 0
      %1521 = vmatprep.subr.bf16.mxu0 0
      %1522 = vmatpush1.bf16.msra.mxu0 %v1504
      %1523 = vmatprep.subr.bf16.mxu0 0
      %1524 = vmatpush1.bf16.msra.mxu0 0
      %1525 = vmatprep.subr.bf16.mxu0 0
      %1526 = vmatpush1.bf16.msra.mxu0 0
      %1527 = vmatprep.subr.bf16.mxu0 0
      %1528 = vmatpush1.bf16.msra.mxu0 0
      %1529 = vmatprep.subr.bf16.mxu0 0
      %1530 = vmatpush1.bf16.msra.mxu0 0
      %1531 = vmatprep.subr.bf16.mxu0 0
      %1532 = vmatpush1.bf16.msra.mxu0 0
      %1533 = vmatprep.subr.bf16.mxu0 0
      %1534 = vmatpush1.bf16.msra.mxu0 0
      %1535 = vmatprep.subr.bf16.mxu0 0
      %1536 = vmatpush1.bf16.msra.mxu0 0
      %1537 = vmatprep.subr.bf16.mxu0 0
      %1538 = vmatpush1.bf16.msra.mxu0 0
      %1539 = vmatprep.subr.bf16.mxu0 0
      %1540 = vmatpush1.bf16.msra.mxu0 0
      %1541 = vmatprep.subr.bf16.mxu0 0
      %1542 = vmatpush1.bf16.msra.mxu0 0
      %1543 = vmatprep.subr.bf16.mxu0 0
      %1544 = vmatpush1.bf16.msra.mxu0 0
      %1545 = vmatprep.subr.bf16.mxu0 0
      %1546 = vmatpush1.bf16.msra.mxu0 0
      %1547 = vmatprep.subr.bf16.mxu0 0
      %1548 = vmatpush1.bf16.msra.mxu0 0
      %1549 = vmatprep.subr.bf16.mxu0 0
      %1550 = vmatpush1.bf16.msra.mxu0 0
      %1551 = vmatprep.subr.bf16.mxu0 0
      %1552 = vmatpush1.bf16.msra.mxu0 0
      %1553 = vmatprep.mubr.bf16.mxu0 0
      %1554 = vmatmul.mubr.bf16.gmra.mrb[0].mxu0 %v1510
      %v1555 = vpop.f32.mrb[0].mxu0
      %v1556 = vadd.f32 0.0, %v1555
      %v1557 = vpop.f32.mrb[0].mxu0
      %v1558 = vpop.f32.mrb[0].mxu0
      %v1559 = vadd.f32 0.0, %v1558
      %v1560 = vpop.f32.mrb[0].mxu0
      %1561 = vmatprep.mubr.bf16.mxu0 0
      %1562 = vmatmul.mubr.bf16.gmra.mrb[0].mxu0 %v1513
      %v1563 = vpop.f32.mrb[0].mxu0
      %v1564 = vadd.f32 0.0, %v1563
      %v1565 = vpop.f32.mrb[0].mxu0
      %v1566 = vpop.f32.mrb[0].mxu0
      %v1567 = vadd.f32 0.0, %v1566
      %v1568 = vpop.f32.mrb[0].mxu0
      %1569 = vmatprep.mubr.bf16.mxu0 0
      %1570 = vmatmul.mubr.bf16.gmra.mrb[0].mxu0 %v1516
      %v1571 = vpop.f32.mrb[0].mxu0
      %v1572 = vadd.f32 0.0, %v1571
      %v1573 = vpop.f32.mrb[0].mxu0
      %v1574 = vpop.f32.mrb[0].mxu0
      %v1575 = vadd.f32 0.0, %v1574
      %v1576 = vpop.f32.mrb[0].mxu0
      %1577 = vmatprep.mubr.bf16.mxu0 0
      %1578 = vmatmul.mubr.bf16.gmra.mrb[0].mxu0 %v1519
      %v1579 = vpop.f32.mrb[0].mxu0
      %v1580 = vadd.f32 0.0, %v1579
      %v1581 = vpop.f32.mrb[0].mxu0
      %v1582 = vpop.f32.mrb[0].mxu0
      %v1583 = vadd.f32 0.0, %v1582
      %v1584 = vpop.f32.mrb[0].mxu0
      %1585 = vdwg.mxu0
      %v1587 = vsel %vm908, %v1159, 0
      %v1590 = vsel %vm908, %v1160, 0
      %v1593 = vsel %vm908, %v1161, 0
      %v1596 = vsel %vm908, %v1162, 0
      %1598 = vmatprep.subr.bf16.mxu0 0
      %1599 = vmatpush1.bf16.msra.mxu0 %v1158
      %1600 = vmatprep.subr.bf16.mxu0 0
      %1601 = vmatpush1.bf16.msra.mxu0 0
      %1602 = vmatprep.subr.bf16.mxu0 0
      %1603 = vmatpush1.bf16.msra.mxu0 0
      %1604 = vmatprep.subr.bf16.mxu0 0
      %1605 = vmatpush1.bf16.msra.mxu0 0
      %1606 = vmatprep.subr.bf16.mxu0 0
      %1607 = vmatpush1.bf16.msra.mxu0 0
      %1608 = vmatprep.subr.bf16.mxu0 0
      %1609 = vmatpush1.bf16.msra.mxu0 0
      %1610 = vmatprep.subr.bf16.mxu0 0
      %1611 = vmatpush1.bf16.msra.mxu0 0
      %1612 = vmatprep.subr.bf16.mxu0 0
      %1613 = vmatpush1.bf16.msra.mxu0 0
      %1614 = vmatprep.subr.bf16.mxu0 0
      %1615 = vmatpush1.bf16.msra.mxu0 0
      %1616 = vmatprep.subr.bf16.mxu0 0
      %1617 = vmatpush1.bf16.msra.mxu0 0
      %1618 = vmatprep.subr.bf16.mxu0 0
      %1619 = vmatpush1.bf16.msra.mxu0 0
      %1620 = vmatprep.subr.bf16.mxu0 0
      %1621 = vmatpush1.bf16.msra.mxu0 0
      %1622 = vmatprep.subr.bf16.mxu0 0
      %1623 = vmatpush1.bf16.msra.mxu0 0
      %1624 = vmatprep.subr.bf16.mxu0 0
      %1625 = vmatpush1.bf16.msra.mxu0 0
      %1626 = vmatprep.subr.bf16.mxu0 0
      %1627 = vmatpush1.bf16.msra.mxu0 0
      %1628 = vmatprep.subr.bf16.mxu0 0
      %1629 = vmatpush1.bf16.msra.mxu0 0
      %1630 = vmatprep.mubr.bf16.mxu0 0
      %1631 = vmatmul.mubr.bf16.gmra.mrb[0].mxu0 %v1587
      %v1632 = vpop.f32.mrb[0].mxu0
      %v1633 = vadd.f32 %v1556, %v1632
      %v1634 = vpop.f32.mrb[0].mxu0
      %v1635 = vpop.f32.mrb[0].mxu0
      %v1636 = vadd.f32 %v1559, %v1635
      %v1637 = vpop.f32.mrb[0].mxu0
      %1638 = vmatprep.mubr.bf16.mxu0 0
      %1639 = vmatmul.mubr.bf16.gmra.mrb[0].mxu0 %v1590
      %v1640 = vpop.f32.mrb[0].mxu0
      %v1641 = vadd.f32 %v1564, %v1640
      %v1642 = vpop.f32.mrb[0].mxu0
      %v1643 = vpop.f32.mrb[0].mxu0
      %v1644 = vadd.f32 %v1567, %v1643
      %v1645 = vpop.f32.mrb[0].mxu0
      %1646 = vmatprep.mubr.bf16.mxu0 0
      %1647 = vmatmul.mubr.bf16.gmra.mrb[0].mxu0 %v1593
      %v1648 = vpop.f32.mrb[0].mxu0
      %v1649 = vadd.f32 %v1572, %v1648
      %v1650 = vpop.f32.mrb[0].mxu0
      %v1651 = vpop.f32.mrb[0].mxu0
      %v1652 = vadd.f32 %v1575, %v1651
      %v1653 = vpop.f32.mrb[0].mxu0
      %1654 = vmatprep.mubr.bf16.mxu0 0
      %1655 = vmatmul.mubr.bf16.gmra.mrb[0].mxu0 %v1596
      %v1656 = vpop.f32.mrb[0].mxu0
      %v1657 = vadd.f32 %v1580, %v1656
      %v1658 = vpop.f32.mrb[0].mxu0
      %v1659 = vpop.f32.mrb[0].mxu0
      %v1660 = vadd.f32 %v1583, %v1659
      %v1661 = vpop.f32.mrb[0].mxu0
      %1662 = vdwg.mxu0
      %1663 = vrot.lane.b32.xlu0 %v701, 96
      %v1664 = vpop.permute.xlu0 %1663
      %1665 = vrot.lane.b32.xlu0 %v704, 96
      %v1666 = vpop.permute.xlu0 %1665
      %1667 = vrot.lane.b32.xlu0 %v709, 96
      %v1668 = vpop.permute.xlu0 %1667
      %1669 = vrot.lane.b32.xlu0 %v712, 96
      %v1670 = vpop.permute.xlu0 %1669
      %1671 = vrot.lane.b32.xlu0 %v717, 96
      %v1672 = vpop.permute.xlu0 %1671
      %1673 = vrot.lane.b32.xlu0 %v720, 96
      %v1674 = vpop.permute.xlu0 %1673
      %1675 = vrot.lane.b32.xlu0 %v725, 96
      %v1676 = vpop.permute.xlu0 %1675
      %1677 = vrot.lane.b32.xlu0 %v728, 96
      %v1678 = vpop.permute.xlu0 %1677
      %1687 = vxpose.xlu0.b32.start [1/16] %v1664, 128
      %1688 = vxpose.xlu0.b32.cont [2/16] %v1666, 128
      %1689 = vxpose.xlu0.b32.cont [3/16] %v1668, 128
      %1690 = vxpose.xlu0.b32.cont [4/16] %v1670, 128
      %1691 = vxpose.xlu0.b32.cont [5/16] %v1672, 128
      %1692 = vxpose.xlu0.b32.cont [6/16] %v1674, 128
      %1693 = vxpose.xlu0.b32.cont [7/16] %v1676, 128
      %1694 = vxpose.xlu0.b32.cont [8/16] %v1678, 128
      %1695 = vxpose.xlu0.b32.cont [9/16] 0.0, 128
      %1696 = vxpose.xlu0.b32.cont [10/16] 0.0, 128
      %1697 = vxpose.xlu0.b32.cont [11/16] 0.0, 128
      %1698 = vxpose.xlu0.b32.cont [12/16] 0.0, 128
      %1699 = vxpose.xlu0.b32.cont [13/16] 0.0, 128
      %1700 = vxpose.xlu0.b32.cont [14/16] 0.0, 128
      %1701 = vxpose.xlu0.b32.cont [15/16] 0.0, 128
      %1702 = vxpose.xlu0.b32.end [16/16] 0.0, 128
      %v1703 = vpop.trf.xlu0
      %v1704 = vpop.trf.xlu0
      %v1705 = vpop.trf.xlu0
      %v1706 = vpop.trf.xlu0
      %v1707 = vpop.trf.xlu0
      %v1708 = vpop.trf.xlu0
      %v1709 = vpop.trf.xlu0
      %v1710 = vpop.trf.xlu0
      %v1711 = vpop.trf.xlu0
      %v1712 = vpop.trf.xlu0
      %v1713 = vpop.trf.xlu0
      %v1714 = vpop.trf.xlu0
      %v1715 = vpop.trf.xlu0
      %v1716 = vpop.trf.xlu0
      %v1717 = vpop.trf.xlu0
      %v1718 = vpop.trf.xlu0
      %v1719 = vpack.c.bf16 %v1704, %v1703
      %1720 = vrot.lane.b32.xlu0 %v867, 96
      %v1721 = vpop.permute.xlu0 %1720
      %1722 = vrot.lane.b32.xlu0 %v868, 96
      %v1723 = vpop.permute.xlu0 %1722
      %1724 = vrot.lane.b32.xlu0 %v869, 96
      %v1725 = vpop.permute.xlu0 %1724
      %1726 = vrot.lane.b32.xlu0 %v870, 96
      %v1727 = vpop.permute.xlu0 %1726
      %v1729 = vsel %vm908, %v1721, 0
      %v1732 = vsel %vm908, %v1723, 0
      %v1735 = vsel %vm908, %v1725, 0
      %v1738 = vsel %vm908, %v1727, 0
      %1740 = vmatprep.subr.bf16.mxu0 0
      %1741 = vmatpush1.bf16.msra.mxu0 %v1719
      %1742 = vmatprep.subr.bf16.mxu0 0
      %1743 = vmatpush1.bf16.msra.mxu0 0
      %1744 = vmatprep.subr.bf16.mxu0 0
      %1745 = vmatpush1.bf16.msra.mxu0 0
      %1746 = vmatprep.subr.bf16.mxu0 0
      %1747 = vmatpush1.bf16.msra.mxu0 0
      %1748 = vmatprep.subr.bf16.mxu0 0
      %1749 = vmatpush1.bf16.msra.mxu0 0
      %1750 = vmatprep.subr.bf16.mxu0 0
      %1751 = vmatpush1.bf16.msra.mxu0 0
      %1752 = vmatprep.subr.bf16.mxu0 0
      %1753 = vmatpush1.bf16.msra.mxu0 0
      %1754 = vmatprep.subr.bf16.mxu0 0
      %1755 = vmatpush1.bf16.msra.mxu0 0
      %1756 = vmatprep.subr.bf16.mxu0 0
      %1757 = vmatpush1.bf16.msra.mxu0 0
      %1758 = vmatprep.subr.bf16.mxu0 0
      %1759 = vmatpush1.bf16.msra.mxu0 0
      %1760 = vmatprep.subr.bf16.mxu0 0
      %1761 = vmatpush1.bf16.msra.mxu0 0
      %1762 = vmatprep.subr.bf16.mxu0 0
      %1763 = vmatpush1.bf16.msra.mxu0 0
      %1764 = vmatprep.subr.bf16.mxu0 0
      %1765 = vmatpush1.bf16.msra.mxu0 0
      %1766 = vmatprep.subr.bf16.mxu0 0
      %1767 = vmatpush1.bf16.msra.mxu0 0
      %1768 = vmatprep.subr.bf16.mxu0 0
      %1769 = vmatpush1.bf16.msra.mxu0 0
      %1770 = vmatprep.subr.bf16.mxu0 0
      %1771 = vmatpush1.bf16.msra.mxu0 0
      %1772 = vmatprep.mubr.bf16.mxu0 0
      %1773 = vmatmul.mubr.bf16.gmra.mrb[0].mxu0 %v1729
      %v1774 = vpop.f32.mrb[0].mxu0
      %v1775 = vadd.f32 0.0, %v1774
      %v1776 = vpop.f32.mrb[0].mxu0
      %v1777 = vpop.f32.mrb[0].mxu0
      %v1778 = vadd.f32 0.0, %v1777
      %v1779 = vpop.f32.mrb[0].mxu0
      %1780 = vmatprep.mubr.bf16.mxu0 0
      %1781 = vmatmul.mubr.bf16.gmra.mrb[0].mxu0 %v1732
      %v1782 = vpop.f32.mrb[0].mxu0
      %v1783 = vadd.f32 0.0, %v1782
      %v1784 = vpop.f32.mrb[0].mxu0
      %v1785 = vpop.f32.mrb[0].mxu0
      %v1786 = vadd.f32 0.0, %v1785
      %v1787 = vpop.f32.mrb[0].mxu0
      %1788 = vmatprep.mubr.bf16.mxu0 0
      %1789 = vmatmul.mubr.bf16.gmra.mrb[0].mxu0 %v1735
      %v1790 = vpop.f32.mrb[0].mxu0
      %v1791 = vadd.f32 0.0, %v1790
      %v1792 = vpop.f32.mrb[0].mxu0
      %v1793 = vpop.f32.mrb[0].mxu0
      %v1794 = vadd.f32 0.0, %v1793
      %v1795 = vpop.f32.mrb[0].mxu0
      %1796 = vmatprep.mubr.bf16.mxu0 0
      %1797 = vmatmul.mubr.bf16.gmra.mrb[0].mxu0 %v1738
      %v1798 = vpop.f32.mrb[0].mxu0
      %v1799 = vadd.f32 0.0, %v1798
      %v1800 = vpop.f32.mrb[0].mxu0
      %v1801 = vpop.f32.mrb[0].mxu0
      %v1802 = vadd.f32 0.0, %v1801
      %v1803 = vpop.f32.mrb[0].mxu0
      %1804 = vdwg.mxu0
      %v1805 = vsel %vm986, %v1775, -inf
      %1806 = vmax.xlane.f32.xlu0 %v1805
      %v1807 = vpop.xlane.xlu0 %1806
      %v1808 = vsel %vm986, %v1778, -inf
      %1809 = vmax.xlane.f32.xlu0 %v1808
      %v1810 = vpop.xlane.xlu0 %1809
      %v1811 = vsel %vm986, %v1783, -inf
      %1812 = vmax.xlane.f32.xlu0 %v1811
      %v1813 = vpop.xlane.xlu0 %1812
      %v1814 = vsel %vm986, %v1786, -inf
      %1815 = vmax.xlane.f32.xlu0 %v1814
      %v1816 = vpop.xlane.xlu0 %1815
      %v1817 = vsel %vm986, %v1791, -inf
      %1818 = vmax.xlane.f32.xlu0 %v1817
      %v1819 = vpop.xlane.xlu0 %1818
      %v1820 = vsel %vm986, %v1794, -inf
      %1821 = vmax.xlane.f32.xlu0 %v1820
      %v1822 = vpop.xlane.xlu0 %1821
      %v1823 = vsel %vm986, %v1799, -inf
      %1824 = vmax.xlane.f32.xlu0 %v1823
      %v1825 = vpop.xlane.xlu0 %1824
      %v1826 = vsel %vm986, %v1802, -inf
      %1827 = vmax.xlane.f32.xlu0 %v1826
      %v1828 = vpop.xlane.xlu0 %1827
      %v1829 = vsub.f32 %v1775, %v1807
      %v1830 = vsub.f32 %v1778, %v1810
      %v1831 = vsub.f32 %v1783, %v1813
      %v1832 = vsub.f32 %v1786, %v1816
      %v1833 = vsub.f32 %v1791, %v1819
      %v1834 = vsub.f32 %v1794, %v1822
      %v1835 = vsub.f32 %v1799, %v1825
      %v1836 = vsub.f32 %v1802, %v1828
      %v1837 = vmul.f32 %v1829, 1.442695
      %v1838 = vpow.pop %v1837
      %v1839 = vmul.f32 %v1830, 1.442695
      %v1840 = vpow.pop %v1839
      %v1841 = vmul.f32 %v1831, 1.442695
      %v1842 = vpow.pop %v1841
      %v1843 = vmul.f32 %v1832, 1.442695
      %v1844 = vpow.pop %v1843
      %v1845 = vmul.f32 %v1833, 1.442695
      %v1846 = vpow.pop %v1845
      %v1847 = vmul.f32 %v1834, 1.442695
      %v1848 = vpow.pop %v1847
      %v1849 = vmul.f32 %v1835, 1.442695
      %v1850 = vpow.pop %v1849
      %v1851 = vmul.f32 %v1836, 1.442695
      %v1852 = vpow.pop %v1851
      %v1853 = vsel %vm986, %v1838, 0.0
      %1854 = vadd.xlane.f32.xlu0 %v1853
      %v1855 = vpop.xlane.xlu0 %1854
      %v1856 = vsel %vm986, %v1840, 0.0
      %1857 = vadd.xlane.f32.xlu0 %v1856
      %v1858 = vpop.xlane.xlu0 %1857
      %v1859 = vsel %vm986, %v1842, 0.0
      %1860 = vadd.xlane.f32.xlu0 %v1859
      %v1861 = vpop.xlane.xlu0 %1860
      %v1862 = vsel %vm986, %v1844, 0.0
      %1863 = vadd.xlane.f32.xlu0 %v1862
      %v1864 = vpop.xlane.xlu0 %1863
      %v1865 = vsel %vm986, %v1846, 0.0
      %1866 = vadd.xlane.f32.xlu0 %v1865
      %v1867 = vpop.xlane.xlu0 %1866
      %v1868 = vsel %vm986, %v1848, 0.0
      %1869 = vadd.xlane.f32.xlu0 %v1868
      %v1870 = vpop.xlane.xlu0 %1869
      %v1871 = vsel %vm986, %v1850, 0.0
      %1872 = vadd.xlane.f32.xlu0 %v1871
      %v1873 = vpop.xlane.xlu0 %1872
      %v1874 = vsel %vm986, %v1852, 0.0
      %1875 = vadd.xlane.f32.xlu0 %v1874
      %v1876 = vpop.xlane.xlu0 %1875
      %v1877 = vrcp.pop %v1855
      %v1878 = vrcp.pop %v1858
      %v1879 = vrcp.pop %v1861
      %v1880 = vrcp.pop %v1864
      %v1881 = vrcp.pop %v1867
      %v1882 = vrcp.pop %v1870
      %v1883 = vrcp.pop %v1873
      %v1884 = vrcp.pop %v1876
      %v1885 = vmul.f32 %v1838, %v1877
      %v1886 = vmul.f32 %v1840, %v1878
      %v1887 = vmul.f32 %v1842, %v1879
      %v1888 = vmul.f32 %v1844, %v1880
      %v1889 = vmul.f32 %v1846, %v1881
      %v1890 = vmul.f32 %v1848, %v1882
      %v1891 = vmul.f32 %v1850, %v1883
      %v1892 = vmul.f32 %v1852, %v1884
      %v1893 = vpack.c.bf16 %v1886, %v1885
      %v1894 = vpack.c.bf16 %v1888, %v1887
      %v1895 = vpack.c.bf16 %v1890, %v1889
      %v1896 = vpack.c.bf16 %v1892, %v1891
      %1897 = vrot.lane.b32.xlu0 %v904, 96
      %v1898 = vpop.permute.xlu0 %1897
      %1899 = vrot.lane.b32.xlu0 %v905, 96
      %v1900 = vpop.permute.xlu0 %1899
      %1901 = vrot.lane.b32.xlu0 %v906, 96
      %v1902 = vpop.permute.xlu0 %1901
      %1903 = vrot.lane.b32.xlu0 %v907, 96
      %v1904 = vpop.permute.xlu0 %1903
      %v1910 = vsel %vm986, %v1893, 0
      %v1913 = vsel %vm986, %v1894, 0
      %v1916 = vsel %vm986, %v1895, 0
      %v1919 = vsel %vm986, %v1896, 0
      %1921 = vmatprep.subr.bf16.mxu0 0
      %1922 = vmatpush1.bf16.msra.mxu0 %v1898
      %1923 = vmatprep.subr.bf16.mxu0 0
      %1924 = vmatpush1.bf16.msra.mxu0 %v1900
      %1925 = vmatprep.subr.bf16.mxu0 0
      %1926 = vmatpush1.bf16.msra.mxu0 %v1902
      %1927 = vmatprep.subr.bf16.mxu0 0
      %1928 = vmatpush1.bf16.msra.mxu0 %v1904
      %1929 = vmatprep.subr.bf16.mxu0 0
      %1930 = vmatpush1.bf16.msra.mxu0 0
      %1931 = vmatprep.subr.bf16.mxu0 0
      %1932 = vmatpush1.bf16.msra.mxu0 0
      %1933 = vmatprep.subr.bf16.mxu0 0
      %1934 = vmatpush1.bf16.msra.mxu0 0
      %1935 = vmatprep.subr.bf16.mxu0 0
      %1936 = vmatpush1.bf16.msra.mxu0 0
      %1937 = vmatprep.subr.bf16.mxu0 0
      %1938 = vmatpush1.bf16.msra.mxu0 0
      %1939 = vmatprep.subr.bf16.mxu0 0
      %1940 = vmatpush1.bf16.msra.mxu0 0
      %1941 = vmatprep.subr.bf16.mxu0 0
      %1942 = vmatpush1.bf16.msra.mxu0 0
      %1943 = vmatprep.subr.bf16.mxu0 0
      %1944 = vmatpush1.bf16.msra.mxu0 0
      %1945 = vmatprep.subr.bf16.mxu0 0
      %1946 = vmatpush1.bf16.msra.mxu0 0
      %1947 = vmatprep.subr.bf16.mxu0 0
      %1948 = vmatpush1.bf16.msra.mxu0 0
      %1949 = vmatprep.subr.bf16.mxu0 0
      %1950 = vmatpush1.bf16.msra.mxu0 0
      %1951 = vmatprep.subr.bf16.mxu0 0
      %1952 = vmatpush1.bf16.msra.mxu0 0
      %1953 = vmatprep.mubr.bf16.mxu0 0
      %1954 = vmatmul.mubr.bf16.gmra.mrb[0].mxu0 %v1910
      %v1955 = vpop.f32.mrb[0].mxu0
      %v1956 = vadd.f32 0.0, %v1955
      %v1957 = vpop.f32.mrb[0].mxu0
      %v1958 = vpop.f32.mrb[0].mxu0
      %v1959 = vadd.f32 0.0, %v1958
      %v1960 = vpop.f32.mrb[0].mxu0
      %1961 = vmatprep.mubr.bf16.mxu0 0
      %1962 = vmatmul.mubr.bf16.gmra.mrb[0].mxu0 %v1913
      %v1963 = vpop.f32.mrb[0].mxu0
      %v1964 = vadd.f32 0.0, %v1963
      %v1965 = vpop.f32.mrb[0].mxu0
      %v1966 = vpop.f32.mrb[0].mxu0
      %v1967 = vadd.f32 0.0, %v1966
      %v1968 = vpop.f32.mrb[0].mxu0
      %1969 = vmatprep.mubr.bf16.mxu0 0
      %1970 = vmatmul.mubr.bf16.gmra.mrb[0].mxu0 %v1916
      %v1971 = vpop.f32.mrb[0].mxu0
      %v1972 = vadd.f32 0.0, %v1971
      %v1973 = vpop.f32.mrb[0].mxu0
      %v1974 = vpop.f32.mrb[0].mxu0
      %v1975 = vadd.f32 0.0, %v1974
      %v1976 = vpop.f32.mrb[0].mxu0
      %1977 = vmatprep.mubr.bf16.mxu0 0
      %1978 = vmatmul.mubr.bf16.gmra.mrb[0].mxu0 %v1919
      %v1979 = vpop.f32.mrb[0].mxu0
      %v1980 = vadd.f32 0.0, %v1979
      %v1981 = vpop.f32.mrb[0].mxu0
      %v1982 = vpop.f32.mrb[0].mxu0
      %v1983 = vadd.f32 0.0, %v1982
      %v1984 = vpop.f32.mrb[0].mxu0
      %1985 = vdwg.mxu0
      %v1986 = vld [vmem:[%s8 + $0x20] sm:$0xff]
      %v1987 = vld [vmem:[%s8 + $0x28] sm:$0xff]
      %v1988 = vpack.c.bf16 %v1987, %v1986
      %v1989 = vpack.c.bf16 %v1959, %v1956
      %v1990 = vpack.c.bf16 %v1967, %v1964
      %v1991 = vpack.c.bf16 %v1975, %v1972
      %v1992 = vpack.c.bf16 %v1983, %v1980
      %v1994 = vsel %vm908, %v1989, 0
      %v1997 = vsel %vm908, %v1990, 0
      %v2000 = vsel %vm908, %v1991, 0
      %v2003 = vsel %vm908, %v1992, 0
      %2005 = vmatprep.subr.bf16.mxu0 0
      %2006 = vmatpush1.bf16.msra.mxu0 %v1988
      %2007 = vmatprep.subr.bf16.mxu0 0
      %2008 = vmatpush1.bf16.msra.mxu0 0
      %2009 = vmatprep.subr.bf16.mxu0 0
      %2010 = vmatpush1.bf16.msra.mxu0 0
      %2011 = vmatprep.subr.bf16.mxu0 0
      %2012 = vmatpush1.bf16.msra.mxu0 0
      %2013 = vmatprep.subr.bf16.mxu0 0
      %2014 = vmatpush1.bf16.msra.mxu0 0
      %2015 = vmatprep.subr.bf16.mxu0 0
      %2016 = vmatpush1.bf16.msra.mxu0 0
      %2017 = vmatprep.subr.bf16.mxu0 0
      %2018 = vmatpush1.bf16.msra.mxu0 0
      %2019 = vmatprep.subr.bf16.mxu0 0
      %2020 = vmatpush1.bf16.msra.mxu0 0
      %2021 = vmatprep.subr.bf16.mxu0 0
      %2022 = vmatpush1.bf16.msra.mxu0 0
      %2023 = vmatprep.subr.bf16.mxu0 0
      %2024 = vmatpush1.bf16.msra.mxu0 0
      %2025 = vmatprep.subr.bf16.mxu0 0
      %2026 = vmatpush1.bf16.msra.mxu0 0
      %2027 = vmatprep.subr.bf16.mxu0 0
      %2028 = vmatpush1.bf16.msra.mxu0 0
      %2029 = vmatprep.subr.bf16.mxu0 0
      %2030 = vmatpush1.bf16.msra.mxu0 0
      %2031 = vmatprep.subr.bf16.mxu0 0
      %2032 = vmatpush1.bf16.msra.mxu0 0
      %2033 = vmatprep.subr.bf16.mxu0 0
      %2034 = vmatpush1.bf16.msra.mxu0 0
      %2035 = vmatprep.subr.bf16.mxu0 0
      %2036 = vmatpush1.bf16.msra.mxu0 0
      %2037 = vmatprep.mubr.bf16.mxu0 0
      %2038 = vmatmul.mubr.bf16.gmra.mrb[0].mxu0 %v1994
      %v2039 = vpop.f32.mrb[0].mxu0
      %v2040 = vadd.f32 0.0, %v2039
      %v2041 = vpop.f32.mrb[0].mxu0
      %v2042 = vpop.f32.mrb[0].mxu0
      %v2043 = vadd.f32 0.0, %v2042
      %v2044 = vpop.f32.mrb[0].mxu0
      %2045 = vmatprep.mubr.bf16.mxu0 0
      %2046 = vmatmul.mubr.bf16.gmra.mrb[0].mxu0 %v1997
      %v2047 = vpop.f32.mrb[0].mxu0
      %v2048 = vadd.f32 0.0, %v2047
      %v2049 = vpop.f32.mrb[0].mxu0
      %v2050 = vpop.f32.mrb[0].mxu0
      %v2051 = vadd.f32 0.0, %v2050
      %v2052 = vpop.f32.mrb[0].mxu0
      %2053 = vmatprep.mubr.bf16.mxu0 0
      %2054 = vmatmul.mubr.bf16.gmra.mrb[0].mxu0 %v2000
      %v2055 = vpop.f32.mrb[0].mxu0
      %v2056 = vadd.f32 0.0, %v2055
      %v2057 = vpop.f32.mrb[0].mxu0
      %v2058 = vpop.f32.mrb[0].mxu0
      %v2059 = vadd.f32 0.0, %v2058
      %v2060 = vpop.f32.mrb[0].mxu0
      %2061 = vmatprep.mubr.bf16.mxu0 0
      %2062 = vmatmul.mubr.bf16.gmra.mrb[0].mxu0 %v2003
      %v2063 = vpop.f32.mrb[0].mxu0
      %v2064 = vadd.f32 0.0, %v2063
      %v2065 = vpop.f32.mrb[0].mxu0
      %v2066 = vpop.f32.mrb[0].mxu0
      %v2067 = vadd.f32 0.0, %v2066
      %v2068 = vpop.f32.mrb[0].mxu0
      %2069 = vdwg.mxu0
      %v2070 = vadd.f32 %v1633, %v2040
      %v2071 = vadd.f32 %v1636, %v2043
      %v2072 = vadd.f32 %v1641, %v2048
      %v2073 = vadd.f32 %v1644, %v2051
      %v2074 = vadd.f32 %v1649, %v2056
      %v2075 = vadd.f32 %v1652, %v2059
      %v2076 = vadd.f32 %v1657, %v2064
      %v2077 = vadd.f32 %v1660, %v2067
      %2078 = vrot.lane.b32.xlu0 %v701, 80
      %v2079 = vpop.permute.xlu0 %2078
      %2080 = vrot.lane.b32.xlu0 %v704, 80
      %v2081 = vpop.permute.xlu0 %2080
      %2082 = vrot.lane.b32.xlu0 %v709, 80
      %v2083 = vpop.permute.xlu0 %2082
      %2084 = vrot.lane.b32.xlu0 %v712, 80
      %v2085 = vpop.permute.xlu0 %2084
      %2086 = vrot.lane.b32.xlu0 %v717, 80
      %v2087 = vpop.permute.xlu0 %2086
      %2088 = vrot.lane.b32.xlu0 %v720, 80
      %v2089 = vpop.permute.xlu0 %2088
      %2090 = vrot.lane.b32.xlu0 %v725, 80
      %v2091 = vpop.permute.xlu0 %2090
      %2092 = vrot.lane.b32.xlu0 %v728, 80
      %v2093 = vpop.permute.xlu0 %2092
      %2102 = vxpose.xlu0.b32.start [1/16] %v2079, 128
      %2103 = vxpose.xlu0.b32.cont [2/16] %v2081, 128
      %2104 = vxpose.xlu0.b32.cont [3/16] %v2083, 128
      %2105 = vxpose.xlu0.b32.cont [4/16] %v2085, 128
      %2106 = vxpose.xlu0.b32.cont [5/16] %v2087, 128
      %2107 = vxpose.xlu0.b32.cont [6/16] %v2089, 128
      %2108 = vxpose.xlu0.b32.cont [7/16] %v2091, 128
      %2109 = vxpose.xlu0.b32.cont [8/16] %v2093, 128
      %2110 = vxpose.xlu0.b32.cont [9/16] 0.0, 128
      %2111 = vxpose.xlu0.b32.cont [10/16] 0.0, 128
      %2112 = vxpose.xlu0.b32.cont [11/16] 0.0, 128
      %2113 = vxpose.xlu0.b32.cont [12/16] 0.0, 128
      %2114 = vxpose.xlu0.b32.cont [13/16] 0.0, 128
      %2115 = vxpose.xlu0.b32.cont [14/16] 0.0, 128
      %2116 = vxpose.xlu0.b32.cont [15/16] 0.0, 128
      %2117 = vxpose.xlu0.b32.end [16/16] 0.0, 128
      %v2118 = vpop.trf.xlu0
      %v2119 = vpop.trf.xlu0
      %v2120 = vpop.trf.xlu0
      %v2121 = vpop.trf.xlu0
      %v2122 = vpop.trf.xlu0
      %v2123 = vpop.trf.xlu0
      %v2124 = vpop.trf.xlu0
      %v2125 = vpop.trf.xlu0
      %v2126 = vpop.trf.xlu0
      %v2127 = vpop.trf.xlu0
      %v2128 = vpop.trf.xlu0
      %v2129 = vpop.trf.xlu0
      %v2130 = vpop.trf.xlu0
      %v2131 = vpop.trf.xlu0
      %v2132 = vpop.trf.xlu0
      %v2133 = vpop.trf.xlu0
      %v2134 = vpack.c.bf16 %v2119, %v2118
      %2135 = vrot.lane.b32.xlu0 %v867, 80
      %v2136 = vpop.permute.xlu0 %2135
      %2137 = vrot.lane.b32.xlu0 %v868, 80
      %v2138 = vpop.permute.xlu0 %2137
      %2139 = vrot.lane.b32.xlu0 %v869, 80
      %v2140 = vpop.permute.xlu0 %2139
      %2141 = vrot.lane.b32.xlu0 %v870, 80
      %v2142 = vpop.permute.xlu0 %2141
      %v2144 = vsel %vm908, %v2136, 0
      %v2147 = vsel %vm908, %v2138, 0
      %v2150 = vsel %vm908, %v2140, 0
      %v2153 = vsel %vm908, %v2142, 0
      %2155 = vmatprep.subr.bf16.mxu0 0
      %2156 = vmatpush1.bf16.msra.mxu0 %v2134
      %2157 = vmatprep.subr.bf16.mxu0 0
      %2158 = vmatpush1.bf16.msra.mxu0 0
      %2159 = vmatprep.subr.bf16.mxu0 0
      %2160 = vmatpush1.bf16.msra.mxu0 0
      %2161 = vmatprep.subr.bf16.mxu0 0
      %2162 = vmatpush1.bf16.msra.mxu0 0
      %2163 = vmatprep.subr.bf16.mxu0 0
      %2164 = vmatpush1.bf16.msra.mxu0 0
      %2165 = vmatprep.subr.bf16.mxu0 0
      %2166 = vmatpush1.bf16.msra.mxu0 0
      %2167 = vmatprep.subr.bf16.mxu0 0
      %2168 = vmatpush1.bf16.msra.mxu0 0
      %2169 = vmatprep.subr.bf16.mxu0 0
      %2170 = vmatpush1.bf16.msra.mxu0 0
      %2171 = vmatprep.subr.bf16.mxu0 0
      %2172 = vmatpush1.bf16.msra.mxu0 0
      %2173 = vmatprep.subr.bf16.mxu0 0
      %2174 = vmatpush1.bf16.msra.mxu0 0
      %2175 = vmatprep.subr.bf16.mxu0 0
      %2176 = vmatpush1.bf16.msra.mxu0 0
      %2177 = vmatprep.subr.bf16.mxu0 0
      %2178 = vmatpush1.bf16.msra.mxu0 0
      %2179 = vmatprep.subr.bf16.mxu0 0
      %2180 = vmatpush1.bf16.msra.mxu0 0
      %2181 = vmatprep.subr.bf16.mxu0 0
      %2182 = vmatpush1.bf16.msra.mxu0 0
      %2183 = vmatprep.subr.bf16.mxu0 0
      %2184 = vmatpush1.bf16.msra.mxu0 0
      %2185 = vmatprep.subr.bf16.mxu0 0
      %2186 = vmatpush1.bf16.msra.mxu0 0
      %2187 = vmatprep.mubr.bf16.mxu0 0
      %2188 = vmatmul.mubr.bf16.gmra.mrb[0].mxu0 %v2144
      %v2189 = vpop.f32.mrb[0].mxu0
      %v2190 = vadd.f32 0.0, %v2189
      %v2191 = vpop.f32.mrb[0].mxu0
      %v2192 = vpop.f32.mrb[0].mxu0
      %v2193 = vadd.f32 0.0, %v2192
      %v2194 = vpop.f32.mrb[0].mxu0
      %2195 = vmatprep.mubr.bf16.mxu0 0
      %2196 = vmatmul.mubr.bf16.gmra.mrb[0].mxu0 %v2147
      %v2197 = vpop.f32.mrb[0].mxu0
      %v2198 = vadd.f32 0.0, %v2197
      %v2199 = vpop.f32.mrb[0].mxu0
      %v2200 = vpop.f32.mrb[0].mxu0
      %v2201 = vadd.f32 0.0, %v2200
      %v2202 = vpop.f32.mrb[0].mxu0
      %2203 = vmatprep.mubr.bf16.mxu0 0
      %2204 = vmatmul.mubr.bf16.gmra.mrb[0].mxu0 %v2150
      %v2205 = vpop.f32.mrb[0].mxu0
      %v2206 = vadd.f32 0.0, %v2205
      %v2207 = vpop.f32.mrb[0].mxu0
      %v2208 = vpop.f32.mrb[0].mxu0
      %v2209 = vadd.f32 0.0, %v2208
      %v2210 = vpop.f32.mrb[0].mxu0
      %2211 = vmatprep.mubr.bf16.mxu0 0
      %2212 = vmatmul.mubr.bf16.gmra.mrb[0].mxu0 %v2153
      %v2213 = vpop.f32.mrb[0].mxu0
      %v2214 = vadd.f32 0.0, %v2213
      %v2215 = vpop.f32.mrb[0].mxu0
      %v2216 = vpop.f32.mrb[0].mxu0
      %v2217 = vadd.f32 0.0, %v2216
      %v2218 = vpop.f32.mrb[0].mxu0
      %2219 = vdwg.mxu0
      %v2220 = vsel %vm986, %v2190, -inf
      %2221 = vmax.xlane.f32.xlu0 %v2220
      %v2222 = vpop.xlane.xlu0 %2221
      %v2223 = vsel %vm986, %v2193, -inf
      %2224 = vmax.xlane.f32.xlu0 %v2223
      %v2225 = vpop.xlane.xlu0 %2224
      %v2226 = vsel %vm986, %v2198, -inf
      %2227 = vmax.xlane.f32.xlu0 %v2226
      %v2228 = vpop.xlane.xlu0 %2227
      %v2229 = vsel %vm986, %v2201, -inf
      %2230 = vmax.xlane.f32.xlu0 %v2229
      %v2231 = vpop.xlane.xlu0 %2230
      %v2232 = vsel %vm986, %v2206, -inf
      %2233 = vmax.xlane.f32.xlu0 %v2232
      %v2234 = vpop.xlane.xlu0 %2233
      %v2235 = vsel %vm986, %v2209, -inf
      %2236 = vmax.xlane.f32.xlu0 %v2235
      %v2237 = vpop.xlane.xlu0 %2236
      %v2238 = vsel %vm986, %v2214, -inf
      %2239 = vmax.xlane.f32.xlu0 %v2238
      %v2240 = vpop.xlane.xlu0 %2239
      %v2241 = vsel %vm986, %v2217, -inf
      %2242 = vmax.xlane.f32.xlu0 %v2241
      %v2243 = vpop.xlane.xlu0 %2242
      %v2244 = vsub.f32 %v2190, %v2222
      %v2245 = vsub.f32 %v2193, %v2225
      %v2246 = vsub.f32 %v2198, %v2228
      %v2247 = vsub.f32 %v2201, %v2231
      %v2248 = vsub.f32 %v2206, %v2234
      %v2249 = vsub.f32 %v2209, %v2237
      %v2250 = vsub.f32 %v2214, %v2240
      %v2251 = vsub.f32 %v2217, %v2243
      %v2252 = vmul.f32 %v2244, 1.442695
      %v2253 = vpow.pop %v2252
      %v2254 = vmul.f32 %v2245, 1.442695
      %v2255 = vpow.pop %v2254
      %v2256 = vmul.f32 %v2246, 1.442695
      %v2257 = vpow.pop %v2256
      %v2258 = vmul.f32 %v2247, 1.442695
      %v2259 = vpow.pop %v2258
      %v2260 = vmul.f32 %v2248, 1.442695
      %v2261 = vpow.pop %v2260
      %v2262 = vmul.f32 %v2249, 1.442695
      %v2263 = vpow.pop %v2262
      %v2264 = vmul.f32 %v2250, 1.442695
      %v2265 = vpow.pop %v2264
      %v2266 = vmul.f32 %v2251, 1.442695
      %v2267 = vpow.pop %v2266
      %v2268 = vsel %vm986, %v2253, 0.0
      %2269 = vadd.xlane.f32.xlu0 %v2268
      %v2270 = vpop.xlane.xlu0 %2269
      %v2271 = vsel %vm986, %v2255, 0.0
      %2272 = vadd.xlane.f32.xlu0 %v2271
      %v2273 = vpop.xlane.xlu0 %2272
      %v2274 = vsel %vm986, %v2257, 0.0
      %2275 = vadd.xlane.f32.xlu0 %v2274
      %v2276 = vpop.xlane.xlu0 %2275
      %v2277 = vsel %vm986, %v2259, 0.0
      %2278 = vadd.xlane.f32.xlu0 %v2277
      %v2279 = vpop.xlane.xlu0 %2278
      %v2280 = vsel %vm986, %v2261, 0.0
      %2281 = vadd.xlane.f32.xlu0 %v2280
      %v2282 = vpop.xlane.xlu0 %2281
      %v2283 = vsel %vm986, %v2263, 0.0
      %2284 = vadd.xlane.f32.xlu0 %v2283
      %v2285 = vpop.xlane.xlu0 %2284
      %v2286 = vsel %vm986, %v2265, 0.0
      %2287 = vadd.xlane.f32.xlu0 %v2286
      %v2288 = vpop.xlane.xlu0 %2287
      %v2289 = vsel %vm986, %v2267, 0.0
      %2290 = vadd.xlane.f32.xlu0 %v2289
      %v2291 = vpop.xlane.xlu0 %2290
      %v2292 = vrcp.pop %v2270
      %v2293 = vrcp.pop %v2273
      %v2294 = vrcp.pop %v2276
      %v2295 = vrcp.pop %v2279
      %v2296 = vrcp.pop %v2282
      %v2297 = vrcp.pop %v2285
      %v2298 = vrcp.pop %v2288
      %v2299 = vrcp.pop %v2291
      %v2300 = vmul.f32 %v2253, %v2292
      %v2301 = vmul.f32 %v2255, %v2293
      %v2302 = vmul.f32 %v2257, %v2294
      %v2303 = vmul.f32 %v2259, %v2295
      %v2304 = vmul.f32 %v2261, %v2296
      %v2305 = vmul.f32 %v2263, %v2297
      %v2306 = vmul.f32 %v2265, %v2298
      %v2307 = vmul.f32 %v2267, %v2299
      %v2308 = vpack.c.bf16 %v2301, %v2300
      %v2309 = vpack.c.bf16 %v2303, %v2302
      %v2310 = vpack.c.bf16 %v2305, %v2304
      %v2311 = vpack.c.bf16 %v2307, %v2306
      %2312 = vrot.lane.b32.xlu0 %v904, 80
      %v2313 = vpop.permute.xlu0 %2312
      %2314 = vrot.lane.b32.xlu0 %v905, 80
      %v2315 = vpop.permute.xlu0 %2314
      %2316 = vrot.lane.b32.xlu0 %v906, 80
      %v2317 = vpop.permute.xlu0 %2316
      %2318 = vrot.lane.b32.xlu0 %v907, 80
      %v2319 = vpop.permute.xlu0 %2318
      %v2325 = vsel %vm986, %v2308, 0
      %v2328 = vsel %vm986, %v2309, 0
      %v2331 = vsel %vm986, %v2310, 0
      %v2334 = vsel %vm986, %v2311, 0
      %2336 = vmatprep.subr.bf16.mxu0 0
      %2337 = vmatpush1.bf16.msra.mxu0 %v2313
      %2338 = vmatprep.subr.bf16.mxu0 0
      %2339 = vmatpush1.bf16.msra.mxu0 %v2315
      %2340 = vmatprep.subr.bf16.mxu0 0
      %2341 = vmatpush1.bf16.msra.mxu0 %v2317
      %2342 = vmatprep.subr.bf16.mxu0 0
      %2343 = vmatpush1.bf16.msra.mxu0 %v2319
      %2344 = vmatprep.subr.bf16.mxu0 0
      %2345 = vmatpush1.bf16.msra.mxu0 0
      %2346 = vmatprep.subr.bf16.mxu0 0
      %2347 = vmatpush1.bf16.msra.mxu0 0
      %2348 = vmatprep.subr.bf16.mxu0 0
      %2349 = vmatpush1.bf16.msra.mxu0 0
      %2350 = vmatprep.subr.bf16.mxu0 0
      %2351 = vmatpush1.bf16.msra.mxu0 0
      %2352 = vmatprep.subr.bf16.mxu0 0
      %2353 = vmatpush1.bf16.msra.mxu0 0
      %2354 = vmatprep.subr.bf16.mxu0 0
      %2355 = vmatpush1.bf16.msra.mxu0 0
      %2356 = vmatprep.subr.bf16.mxu0 0
      %2357 = vmatpush1.bf16.msra.mxu0 0
      %2358 = vmatprep.subr.bf16.mxu0 0
      %2359 = vmatpush1.bf16.msra.mxu0 0
      %2360 = vmatprep.subr.bf16.mxu0 0
      %2361 = vmatpush1.bf16.msra.mxu0 0
      %2362 = vmatprep.subr.bf16.mxu0 0
      %2363 = vmatpush1.bf16.msra.mxu0 0
      %2364 = vmatprep.subr.bf16.mxu0 0
      %2365 = vmatpush1.bf16.msra.mxu0 0
      %2366 = vmatprep.subr.bf16.mxu0 0
      %2367 = vmatpush1.bf16.msra.mxu0 0
      %2368 = vmatprep.mubr.bf16.mxu0 0
      %2369 = vmatmul.mubr.bf16.gmra.mrb[0].mxu0 %v2325
      %v2370 = vpop.f32.mrb[0].mxu0
      %v2371 = vadd.f32 0.0, %v2370
      %v2372 = vpop.f32.mrb[0].mxu0
      %v2373 = vpop.f32.mrb[0].mxu0
      %v2374 = vadd.f32 0.0, %v2373
      %v2375 = vpop.f32.mrb[0].mxu0
      %2376 = vmatprep.mubr.bf16.mxu0 0
      %2377 = vmatmul.mubr.bf16.gmra.mrb[0].mxu0 %v2328
      %v2378 = vpop.f32.mrb[0].mxu0
      %v2379 = vadd.f32 0.0, %v2378
      %v2380 = vpop.f32.mrb[0].mxu0
      %v2381 = vpop.f32.mrb[0].mxu0
      %v2382 = vadd.f32 0.0, %v2381
      %v2383 = vpop.f32.mrb[0].mxu0
      %2384 = vmatprep.mubr.bf16.mxu0 0
      %2385 = vmatmul.mubr.bf16.gmra.mrb[0].mxu0 %v2331
      %v2386 = vpop.f32.mrb[0].mxu0
      %v2387 = vadd.f32 0.0, %v2386
      %v2388 = vpop.f32.mrb[0].mxu0
      %v2389 = vpop.f32.mrb[0].mxu0
      %v2390 = vadd.f32 0.0, %v2389
      %v2391 = vpop.f32.mrb[0].mxu0
      %2392 = vmatprep.mubr.bf16.mxu0 0
      %2393 = vmatmul.mubr.bf16.gmra.mrb[0].mxu0 %v2334
      %v2394 = vpop.f32.mrb[0].mxu0
      %v2395 = vadd.f32 0.0, %v2394
      %v2396 = vpop.f32.mrb[0].mxu0
      %v2397 = vpop.f32.mrb[0].mxu0
      %v2398 = vadd.f32 0.0, %v2397
      %v2399 = vpop.f32.mrb[0].mxu0
      %2400 = vdwg.mxu0
      %v2401 = vld [vmem:[%s8 + $0x30] sm:$0xff]
      %v2402 = vld [vmem:[%s8 + $0x38] sm:$0xff]
      %v2403 = vpack.c.bf16 %v2402, %v2401
      %v2404 = vpack.c.bf16 %v2374, %v2371
      %v2405 = vpack.c.bf16 %v2382, %v2379
      %v2406 = vpack.c.bf16 %v2390, %v2387
      %v2407 = vpack.c.bf16 %v2398, %v2395
      %v2409 = vsel %vm908, %v2404, 0
      %v2412 = vsel %vm908, %v2405, 0
      %v2415 = vsel %vm908, %v2406, 0
      %v2418 = vsel %vm908, %v2407, 0
      %2420 = vmatprep.subr.bf16.mxu0 0
      %2421 = vmatpush1.bf16.msra.mxu0 %v2403
      %2422 = vmatprep.subr.bf16.mxu0 0
      %2423 = vmatpush1.bf16.msra.mxu0 0
      %2424 = vmatprep.subr.bf16.mxu0 0
      %2425 = vmatpush1.bf16.msra.mxu0 0
      %2426 = vmatprep.subr.bf16.mxu0 0
      %2427 = vmatpush1.bf16.msra.mxu0 0
      %2428 = vmatprep.subr.bf16.mxu0 0
      %2429 = vmatpush1.bf16.msra.mxu0 0
      %2430 = vmatprep.subr.bf16.mxu0 0
      %2431 = vmatpush1.bf16.msra.mxu0 0
      %2432 = vmatprep.subr.bf16.mxu0 0
      %2433 = vmatpush1.bf16.msra.mxu0 0
      %2434 = vmatprep.subr.bf16.mxu0 0
      %2435 = vmatpush1.bf16.msra.mxu0 0
      %2436 = vmatprep.subr.bf16.mxu0 0
      %2437 = vmatpush1.bf16.msra.mxu0 0
      %2438 = vmatprep.subr.bf16.mxu0 0
      %2439 = vmatpush1.bf16.msra.mxu0 0
      %2440 = vmatprep.subr.bf16.mxu0 0
      %2441 = vmatpush1.bf16.msra.mxu0 0
      %2442 = vmatprep.subr.bf16.mxu0 0
      %2443 = vmatpush1.bf16.msra.mxu0 0
      %2444 = vmatprep.subr.bf16.mxu0 0
      %2445 = vmatpush1.bf16.msra.mxu0 0
      %2446 = vmatprep.subr.bf16.mxu0 0
      %2447 = vmatpush1.bf16.msra.mxu0 0
      %2448 = vmatprep.subr.bf16.mxu0 0
      %2449 = vmatpush1.bf16.msra.mxu0 0
      %2450 = vmatprep.subr.bf16.mxu0 0
      %2451 = vmatpush1.bf16.msra.mxu0 0
      %2452 = vmatprep.mubr.bf16.mxu0 0
      %2453 = vmatmul.mubr.bf16.gmra.mrb[0].mxu0 %v2409
      %v2454 = vpop.f32.mrb[0].mxu0
      %v2455 = vadd.f32 0.0, %v2454
      %v2456 = vpop.f32.mrb[0].mxu0
      %v2457 = vpop.f32.mrb[0].mxu0
      %v2458 = vadd.f32 0.0, %v2457
      %v2459 = vpop.f32.mrb[0].mxu0
      %2460 = vmatprep.mubr.bf16.mxu0 0
      %2461 = vmatmul.mubr.bf16.gmra.mrb[0].mxu0 %v2412
      %v2462 = vpop.f32.mrb[0].mxu0
      %v2463 = vadd.f32 0.0, %v2462
      %v2464 = vpop.f32.mrb[0].mxu0
      %v2465 = vpop.f32.mrb[0].mxu0
      %v2466 = vadd.f32 0.0, %v2465
      %v2467 = vpop.f32.mrb[0].mxu0
      %2468 = vmatprep.mubr.bf16.mxu0 0
      %2469 = vmatmul.mubr.bf16.gmra.mrb[0].mxu0 %v2415
      %v2470 = vpop.f32.mrb[0].mxu0
      %v2471 = vadd.f32 0.0, %v2470
      %v2472 = vpop.f32.mrb[0].mxu0
      %v2473 = vpop.f32.mrb[0].mxu0
      %v2474 = vadd.f32 0.0, %v2473
      %v2475 = vpop.f32.mrb[0].mxu0
      %2476 = vmatprep.mubr.bf16.mxu0 0
      %2477 = vmatmul.mubr.bf16.gmra.mrb[0].mxu0 %v2418
      %v2478 = vpop.f32.mrb[0].mxu0
      %v2479 = vadd.f32 0.0, %v2478
      %v2480 = vpop.f32.mrb[0].mxu0
      %v2481 = vpop.f32.mrb[0].mxu0
      %v2482 = vadd.f32 0.0, %v2481
      %v2483 = vpop.f32.mrb[0].mxu0
      %2484 = vdwg.mxu0
      %v2485 = vadd.f32 %v2070, %v2455
      %v2486 = vadd.f32 %v2071, %v2458
      %v2487 = vadd.f32 %v2072, %v2463
      %v2488 = vadd.f32 %v2073, %v2466
      %v2489 = vadd.f32 %v2074, %v2471
      %v2490 = vadd.f32 %v2075, %v2474
      %v2491 = vadd.f32 %v2076, %v2479
      %v2492 = vadd.f32 %v2077, %v2482
      %2493 = vrot.lane.b32.xlu0 %v701, 64
      %v2494 = vpop.permute.xlu0 %2493
      %2495 = vrot.lane.b32.xlu0 %v704, 64
      %v2496 = vpop.permute.xlu0 %2495
      %2497 = vrot.lane.b32.xlu0 %v709, 64
      %v2498 = vpop.permute.xlu0 %2497
      %2499 = vrot.lane.b32.xlu0 %v712, 64
      %v2500 = vpop.permute.xlu0 %2499
      %2501 = vrot.lane.b32.xlu0 %v717, 64
      %v2502 = vpop.permute.xlu0 %2501
      %2503 = vrot.lane.b32.xlu0 %v720, 64
      %v2504 = vpop.permute.xlu0 %2503
      %2505 = vrot.lane.b32.xlu0 %v725, 64
      %v2506 = vpop.permute.xlu0 %2505
      %2507 = vrot.lane.b32.xlu0 %v728, 64
      %v2508 = vpop.permute.xlu0 %2507
      %2517 = vxpose.xlu0.b32.start [1/16] %v2494, 128
      %2518 = vxpose.xlu0.b32.cont [2/16] %v2496, 128
      %2519 = vxpose.xlu0.b32.cont [3/16] %v2498, 128
      %2520 = vxpose.xlu0.b32.cont [4/16] %v2500, 128
      %2521 = vxpose.xlu0.b32.cont [5/16] %v2502, 128
      %2522 = vxpose.xlu0.b32.cont [6/16] %v2504, 128
      %2523 = vxpose.xlu0.b32.cont [7/16] %v2506, 128
      %2524 = vxpose.xlu0.b32.cont [8/16] %v2508, 128
      %2525 = vxpose.xlu0.b32.cont [9/16] 0.0, 128
      %2526 = vxpose.xlu0.b32.cont [10/16] 0.0, 128
      %2527 = vxpose.xlu0.b32.cont [11/16] 0.0, 128
      %2528 = vxpose.xlu0.b32.cont [12/16] 0.0, 128
      %2529 = vxpose.xlu0.b32.cont [13/16] 0.0, 128
      %2530 = vxpose.xlu0.b32.cont [14/16] 0.0, 128
      %2531 = vxpose.xlu0.b32.cont [15/16] 0.0, 128
      %2532 = vxpose.xlu0.b32.end [16/16] 0.0, 128
      %v2533 = vpop.trf.xlu0
      %v2534 = vpop.trf.xlu0
      %v2535 = vpop.trf.xlu0
      %v2536 = vpop.trf.xlu0
      %v2537 = vpop.trf.xlu0
      %v2538 = vpop.trf.xlu0
      %v2539 = vpop.trf.xlu0
      %v2540 = vpop.trf.xlu0
      %v2541 = vpop.trf.xlu0
      %v2542 = vpop.trf.xlu0
      %v2543 = vpop.trf.xlu0
      %v2544 = vpop.trf.xlu0
      %v2545 = vpop.trf.xlu0
      %v2546 = vpop.trf.xlu0
      %v2547 = vpop.trf.xlu0
      %v2548 = vpop.trf.xlu0
      %v2549 = vpack.c.bf16 %v2534, %v2533
      %2550 = vrot.lane.b32.xlu0 %v867, 64
      %v2551 = vpop.permute.xlu0 %2550
      %2552 = vrot.lane.b32.xlu0 %v868, 64
      %v2553 = vpop.permute.xlu0 %2552
      %2554 = vrot.lane.b32.xlu0 %v869, 64
      %v2555 = vpop.permute.xlu0 %2554
      %2556 = vrot.lane.b32.xlu0 %v870, 64
      %v2557 = vpop.permute.xlu0 %2556
      %v2559 = vsel %vm908, %v2551, 0
      %v2562 = vsel %vm908, %v2553, 0
      %v2565 = vsel %vm908, %v2555, 0
      %v2568 = vsel %vm908, %v2557, 0
      %2570 = vmatprep.subr.bf16.mxu0 0
      %2571 = vmatpush1.bf16.msra.mxu0 %v2549
      %2572 = vmatprep.subr.bf16.mxu0 0
      %2573 = vmatpush1.bf16.msra.mxu0 0
      %2574 = vmatprep.subr.bf16.mxu0 0
      %2575 = vmatpush1.bf16.msra.mxu0 0
      %2576 = vmatprep.subr.bf16.mxu0 0
      %2577 = vmatpush1.bf16.msra.mxu0 0
      %2578 = vmatprep.subr.bf16.mxu0 0
      %2579 = vmatpush1.bf16.msra.mxu0 0
      %2580 = vmatprep.subr.bf16.mxu0 0
      %2581 = vmatpush1.bf16.msra.mxu0 0
      %2582 = vmatprep.subr.bf16.mxu0 0
      %2583 = vmatpush1.bf16.msra.mxu0 0
      %2584 = vmatprep.subr.bf16.mxu0 0
      %2585 = vmatpush1.bf16.msra.mxu0 0
      %2586 = vmatprep.subr.bf16.mxu0 0
      %2587 = vmatpush1.bf16.msra.mxu0 0
      %2588 = vmatprep.subr.bf16.mxu0 0
      %2589 = vmatpush1.bf16.msra.mxu0 0
      %2590 = vmatprep.subr.bf16.mxu0 0
      %2591 = vmatpush1.bf16.msra.mxu0 0
      %2592 = vmatprep.subr.bf16.mxu0 0
      %2593 = vmatpush1.bf16.msra.mxu0 0
      %2594 = vmatprep.subr.bf16.mxu0 0
      %2595 = vmatpush1.bf16.msra.mxu0 0
      %2596 = vmatprep.subr.bf16.mxu0 0
      %2597 = vmatpush1.bf16.msra.mxu0 0
      %2598 = vmatprep.subr.bf16.mxu0 0
      %2599 = vmatpush1.bf16.msra.mxu0 0
      %2600 = vmatprep.subr.bf16.mxu0 0
      %2601 = vmatpush1.bf16.msra.mxu0 0
      %2602 = vmatprep.mubr.bf16.mxu0 0
      %2603 = vmatmul.mubr.bf16.gmra.mrb[0].mxu0 %v2559
      %v2604 = vpop.f32.mrb[0].mxu0
      %v2605 = vadd.f32 0.0, %v2604
      %v2606 = vpop.f32.mrb[0].mxu0
      %v2607 = vpop.f32.mrb[0].mxu0
      %v2608 = vadd.f32 0.0, %v2607
      %v2609 = vpop.f32.mrb[0].mxu0
      %2610 = vmatprep.mubr.bf16.mxu0 0
      %2611 = vmatmul.mubr.bf16.gmra.mrb[0].mxu0 %v2562
      %v2612 = vpop.f32.mrb[0].mxu0
      %v2613 = vadd.f32 0.0, %v2612
      %v2614 = vpop.f32.mrb[0].mxu0
      %v2615 = vpop.f32.mrb[0].mxu0
      %v2616 = vadd.f32 0.0, %v2615
      %v2617 = vpop.f32.mrb[0].mxu0
      %2618 = vmatprep.mubr.bf16.mxu0 0
      %2619 = vmatmul.mubr.bf16.gmra.mrb[0].mxu0 %v2565
      %v2620 = vpop.f32.mrb[0].mxu0
      %v2621 = vadd.f32 0.0, %v2620
      %v2622 = vpop.f32.mrb[0].mxu0
      %v2623 = vpop.f32.mrb[0].mxu0
      %v2624 = vadd.f32 0.0, %v2623
      %v2625 = vpop.f32.mrb[0].mxu0
      %2626 = vmatprep.mubr.bf16.mxu0 0
      %2627 = vmatmul.mubr.bf16.gmra.mrb[0].mxu0 %v2568
      %v2628 = vpop.f32.mrb[0].mxu0
      %v2629 = vadd.f32 0.0, %v2628
      %v2630 = vpop.f32.mrb[0].mxu0
      %v2631 = vpop.f32.mrb[0].mxu0
      %v2632 = vadd.f32 0.0, %v2631
      %v2633 = vpop.f32.mrb[0].mxu0
      %2634 = vdwg.mxu0
      %v2635 = vsel %vm986, %v2605, -inf
      %2636 = vmax.xlane.f32.xlu0 %v2635
      %v2637 = vpop.xlane.xlu0 %2636
      %v2638 = vsel %vm986, %v2608, -inf
      %2639 = vmax.xlane.f32.xlu0 %v2638
      %v2640 = vpop.xlane.xlu0 %2639
      %v2641 = vsel %vm986, %v2613, -inf
      %2642 = vmax.xlane.f32.xlu0 %v2641
      %v2643 = vpop.xlane.xlu0 %2642
      %v2644 = vsel %vm986, %v2616, -inf
      %2645 = vmax.xlane.f32.xlu0 %v2644
      %v2646 = vpop.xlane.xlu0 %2645
      %v2647 = vsel %vm986, %v2621, -inf
      %2648 = vmax.xlane.f32.xlu0 %v2647
      %v2649 = vpop.xlane.xlu0 %2648
      %v2650 = vsel %vm986, %v2624, -inf
      %2651 = vmax.xlane.f32.xlu0 %v2650
      %v2652 = vpop.xlane.xlu0 %2651
      %v2653 = vsel %vm986, %v2629, -inf
      %2654 = vmax.xlane.f32.xlu0 %v2653
      %v2655 = vpop.xlane.xlu0 %2654
      %v2656 = vsel %vm986, %v2632, -inf
      %2657 = vmax.xlane.f32.xlu0 %v2656
      %v2658 = vpop.xlane.xlu0 %2657
      %v2659 = vsub.f32 %v2605, %v2637
      %v2660 = vsub.f32 %v2608, %v2640
      %v2661 = vsub.f32 %v2613, %v2643
      %v2662 = vsub.f32 %v2616, %v2646
      %v2663 = vsub.f32 %v2621, %v2649
      %v2664 = vsub.f32 %v2624, %v2652
      %v2665 = vsub.f32 %v2629, %v2655
      %v2666 = vsub.f32 %v2632, %v2658
      %v2667 = vmul.f32 %v2659, 1.442695
      %v2668 = vpow.pop %v2667
      %v2669 = vmul.f32 %v2660, 1.442695
      %v2670 = vpow.pop %v2669
      %v2671 = vmul.f32 %v2661, 1.442695
      %v2672 = vpow.pop %v2671
      %v2673 = vmul.f32 %v2662, 1.442695
      %v2674 = vpow.pop %v2673
      %v2675 = vmul.f32 %v2663, 1.442695
      %v2676 = vpow.pop %v2675
      %v2677 = vmul.f32 %v2664, 1.442695
      %v2678 = vpow.pop %v2677
      %v2679 = vmul.f32 %v2665, 1.442695
      %v2680 = vpow.pop %v2679
      %v2681 = vmul.f32 %v2666, 1.442695
      %v2682 = vpow.pop %v2681
      %v2683 = vsel %vm986, %v2668, 0.0
      %2684 = vadd.xlane.f32.xlu0 %v2683
      %v2685 = vpop.xlane.xlu0 %2684
      %v2686 = vsel %vm986, %v2670, 0.0
      %2687 = vadd.xlane.f32.xlu0 %v2686
      %v2688 = vpop.xlane.xlu0 %2687
      %v2689 = vsel %vm986, %v2672, 0.0
      %2690 = vadd.xlane.f32.xlu0 %v2689
      %v2691 = vpop.xlane.xlu0 %2690
      %v2692 = vsel %vm986, %v2674, 0.0
      %2693 = vadd.xlane.f32.xlu0 %v2692
      %v2694 = vpop.xlane.xlu0 %2693
      %v2695 = vsel %vm986, %v2676, 0.0
      %2696 = vadd.xlane.f32.xlu0 %v2695
      %v2697 = vpop.xlane.xlu0 %2696
      %v2698 = vsel %vm986, %v2678, 0.0
      %2699 = vadd.xlane.f32.xlu0 %v2698
      %v2700 = vpop.xlane.xlu0 %2699
      %v2701 = vsel %vm986, %v2680, 0.0
      %2702 = vadd.xlane.f32.xlu0 %v2701
      %v2703 = vpop.xlane.xlu0 %2702
      %v2704 = vsel %vm986, %v2682, 0.0
      %2705 = vadd.xlane.f32.xlu0 %v2704
      %v2706 = vpop.xlane.xlu0 %2705
      %v2707 = vrcp.pop %v2685
      %v2708 = vrcp.pop %v2688
      %v2709 = vrcp.pop %v2691
      %v2710 = vrcp.pop %v2694
      %v2711 = vrcp.pop %v2697
      %v2712 = vrcp.pop %v2700
      %v2713 = vrcp.pop %v2703
      %v2714 = vrcp.pop %v2706
      %v2715 = vmul.f32 %v2668, %v2707
      %v2716 = vmul.f32 %v2670, %v2708
      %v2717 = vmul.f32 %v2672, %v2709
      %v2718 = vmul.f32 %v2674, %v2710
      %v2719 = vmul.f32 %v2676, %v2711
      %v2720 = vmul.f32 %v2678, %v2712
      %v2721 = vmul.f32 %v2680, %v2713
      %v2722 = vmul.f32 %v2682, %v2714
      %v2723 = vpack.c.bf16 %v2716, %v2715
      %v2724 = vpack.c.bf16 %v2718, %v2717
      %v2725 = vpack.c.bf16 %v2720, %v2719
      %v2726 = vpack.c.bf16 %v2722, %v2721
      %2727 = vrot.lane.b32.xlu0 %v904, 64
      %v2728 = vpop.permute.xlu0 %2727
      %2729 = vrot.lane.b32.xlu0 %v905, 64
      %v2730 = vpop.permute.xlu0 %2729
      %2731 = vrot.lane.b32.xlu0 %v906, 64
      %v2732 = vpop.permute.xlu0 %2731
      %2733 = vrot.lane.b32.xlu0 %v907, 64
      %v2734 = vpop.permute.xlu0 %2733
      %v2740 = vsel %vm986, %v2723, 0
      %v2743 = vsel %vm986, %v2724, 0
      %v2746 = vsel %vm986, %v2725, 0
      %v2749 = vsel %vm986, %v2726, 0
      %2751 = vmatprep.subr.bf16.mxu0 0
      %2752 = vmatpush1.bf16.msra.mxu0 %v2728
      %2753 = vmatprep.subr.bf16.mxu0 0
      %2754 = vmatpush1.bf16.msra.mxu0 %v2730
      %2755 = vmatprep.subr.bf16.mxu0 0
      %2756 = vmatpush1.bf16.msra.mxu0 %v2732
      %2757 = vmatprep.subr.bf16.mxu0 0
      %2758 = vmatpush1.bf16.msra.mxu0 %v2734
      %2759 = vmatprep.subr.bf16.mxu0 0
      %2760 = vmatpush1.bf16.msra.mxu0 0
      %2761 = vmatprep.subr.bf16.mxu0 0
      %2762 = vmatpush1.bf16.msra.mxu0 0
      %2763 = vmatprep.subr.bf16.mxu0 0
      %2764 = vmatpush1.bf16.msra.mxu0 0
      %2765 = vmatprep.subr.bf16.mxu0 0
      %2766 = vmatpush1.bf16.msra.mxu0 0
      %2767 = vmatprep.subr.bf16.mxu0 0
      %2768 = vmatpush1.bf16.msra.mxu0 0
      %2769 = vmatprep.subr.bf16.mxu0 0
      %2770 = vmatpush1.bf16.msra.mxu0 0
      %2771 = vmatprep.subr.bf16.mxu0 0
      %2772 = vmatpush1.bf16.msra.mxu0 0
      %2773 = vmatprep.subr.bf16.mxu0 0
      %2774 = vmatpush1.bf16.msra.mxu0 0
      %2775 = vmatprep.subr.bf16.mxu0 0
      %2776 = vmatpush1.bf16.msra.mxu0 0
      %2777 = vmatprep.subr.bf16.mxu0 0
      %2778 = vmatpush1.bf16.msra.mxu0 0
      %2779 = vmatprep.subr.bf16.mxu0 0
      %2780 = vmatpush1.bf16.msra.mxu0 0
      %2781 = vmatprep.subr.bf16.mxu0 0
      %2782 = vmatpush1.bf16.msra.mxu0 0
      %2783 = vmatprep.mubr.bf16.mxu0 0
      %2784 = vmatmul.mubr.bf16.gmra.mrb[0].mxu0 %v2740
      %v2785 = vpop.f32.mrb[0].mxu0
      %v2786 = vadd.f32 0.0, %v2785
      %v2787 = vpop.f32.mrb[0].mxu0
      %v2788 = vpop.f32.mrb[0].mxu0
      %v2789 = vadd.f32 0.0, %v2788
      %v2790 = vpop.f32.mrb[0].mxu0
      %2791 = vmatprep.mubr.bf16.mxu0 0
      %2792 = vmatmul.mubr.bf16.gmra.mrb[0].mxu0 %v2743
      %v2793 = vpop.f32.mrb[0].mxu0
      %v2794 = vadd.f32 0.0, %v2793
      %v2795 = vpop.f32.mrb[0].mxu0
      %v2796 = vpop.f32.mrb[0].mxu0
      %v2797 = vadd.f32 0.0, %v2796
      %v2798 = vpop.f32.mrb[0].mxu0
      %2799 = vmatprep.mubr.bf16.mxu0 0
      %2800 = vmatmul.mubr.bf16.gmra.mrb[0].mxu0 %v2746
      %v2801 = vpop.f32.mrb[0].mxu0
      %v2802 = vadd.f32 0.0, %v2801
      %v2803 = vpop.f32.mrb[0].mxu0
      %v2804 = vpop.f32.mrb[0].mxu0
      %v2805 = vadd.f32 0.0, %v2804
      %v2806 = vpop.f32.mrb[0].mxu0
      %2807 = vmatprep.mubr.bf16.mxu0 0
      %2808 = vmatmul.mubr.bf16.gmra.mrb[0].mxu0 %v2749
      %v2809 = vpop.f32.mrb[0].mxu0
      %v2810 = vadd.f32 0.0, %v2809
      %v2811 = vpop.f32.mrb[0].mxu0
      %v2812 = vpop.f32.mrb[0].mxu0
      %v2813 = vadd.f32 0.0, %v2812
      %v2814 = vpop.f32.mrb[0].mxu0
      %2815 = vdwg.mxu0
      %v2816 = vld [vmem:[%s8 + $0x40] sm:$0xff]
      %v2817 = vld [vmem:[%s8 + $0x48] sm:$0xff]
      %v2818 = vpack.c.bf16 %v2817, %v2816
      %v2819 = vpack.c.bf16 %v2789, %v2786
      %v2820 = vpack.c.bf16 %v2797, %v2794
      %v2821 = vpack.c.bf16 %v2805, %v2802
      %v2822 = vpack.c.bf16 %v2813, %v2810
      %v2824 = vsel %vm908, %v2819, 0
      %v2827 = vsel %vm908, %v2820, 0
      %v2830 = vsel %vm908, %v2821, 0
      %v2833 = vsel %vm908, %v2822, 0
      %2835 = vmatprep.subr.bf16.mxu0 0
      %2836 = vmatpush1.bf16.msra.mxu0 %v2818
      %2837 = vmatprep.subr.bf16.mxu0 0
      %2838 = vmatpush1.bf16.msra.mxu0 0
      %2839 = vmatprep.subr.bf16.mxu0 0
      %2840 = vmatpush1.bf16.msra.mxu0 0
      %2841 = vmatprep.subr.bf16.mxu0 0
      %2842 = vmatpush1.bf16.msra.mxu0 0
      %2843 = vmatprep.subr.bf16.mxu0 0
      %2844 = vmatpush1.bf16.msra.mxu0 0
      %2845 = vmatprep.subr.bf16.mxu0 0
      %2846 = vmatpush1.bf16.msra.mxu0 0
      %2847 = vmatprep.subr.bf16.mxu0 0
      %2848 = vmatpush1.bf16.msra.mxu0 0
      %2849 = vmatprep.subr.bf16.mxu0 0
      %2850 = vmatpush1.bf16.msra.mxu0 0
      %2851 = vmatprep.subr.bf16.mxu0 0
      %2852 = vmatpush1.bf16.msra.mxu0 0
      %2853 = vmatprep.subr.bf16.mxu0 0
      %2854 = vmatpush1.bf16.msra.mxu0 0
      %2855 = vmatprep.subr.bf16.mxu0 0
      %2856 = vmatpush1.bf16.msra.mxu0 0
      %2857 = vmatprep.subr.bf16.mxu0 0
      %2858 = vmatpush1.bf16.msra.mxu0 0
      %2859 = vmatprep.subr.bf16.mxu0 0
      %2860 = vmatpush1.bf16.msra.mxu0 0
      %2861 = vmatprep.subr.bf16.mxu0 0
      %2862 = vmatpush1.bf16.msra.mxu0 0
      %2863 = vmatprep.subr.bf16.mxu0 0
      %2864 = vmatpush1.bf16.msra.mxu0 0
      %2865 = vmatprep.subr.bf16.mxu0 0
      %2866 = vmatpush1.bf16.msra.mxu0 0
      %2867 = vmatprep.mubr.bf16.mxu0 0
      %2868 = vmatmul.mubr.bf16.gmra.mrb[0].mxu0 %v2824
      %v2869 = vpop.f32.mrb[0].mxu0
      %v2870 = vadd.f32 0.0, %v2869
      %v2871 = vpop.f32.mrb[0].mxu0
      %v2872 = vpop.f32.mrb[0].mxu0
      %v2873 = vadd.f32 0.0, %v2872
      %v2874 = vpop.f32.mrb[0].mxu0
      %2875 = vmatprep.mubr.bf16.mxu0 0
      %2876 = vmatmul.mubr.bf16.gmra.mrb[0].mxu0 %v2827
      %v2877 = vpop.f32.mrb[0].mxu0
      %v2878 = vadd.f32 0.0, %v2877
      %v2879 = vpop.f32.mrb[0].mxu0
      %v2880 = vpop.f32.mrb[0].mxu0
      %v2881 = vadd.f32 0.0, %v2880
      %v2882 = vpop.f32.mrb[0].mxu0
      %2883 = vmatprep.mubr.bf16.mxu0 0
      %2884 = vmatmul.mubr.bf16.gmra.mrb[0].mxu0 %v2830
      %v2885 = vpop.f32.mrb[0].mxu0
      %v2886 = vadd.f32 0.0, %v2885
      %v2887 = vpop.f32.mrb[0].mxu0
      %v2888 = vpop.f32.mrb[0].mxu0
      %v2889 = vadd.f32 0.0, %v2888
      %v2890 = vpop.f32.mrb[0].mxu0
      %2891 = vmatprep.mubr.bf16.mxu0 0
      %2892 = vmatmul.mubr.bf16.gmra.mrb[0].mxu0 %v2833
      %v2893 = vpop.f32.mrb[0].mxu0
      %v2894 = vadd.f32 0.0, %v2893
      %v2895 = vpop.f32.mrb[0].mxu0
      %v2896 = vpop.f32.mrb[0].mxu0
      %v2897 = vadd.f32 0.0, %v2896
      %v2898 = vpop.f32.mrb[0].mxu0
      %2899 = vdwg.mxu0
      %v2900 = vadd.f32 %v2485, %v2870
      %v2901 = vadd.f32 %v2486, %v2873
      %v2902 = vadd.f32 %v2487, %v2878
      %v2903 = vadd.f32 %v2488, %v2881
      %v2904 = vadd.f32 %v2489, %v2886
      %v2905 = vadd.f32 %v2490, %v2889
      %v2906 = vadd.f32 %v2491, %v2894
      %v2907 = vadd.f32 %v2492, %v2897
      %2908 = vrot.lane.b32.xlu0 %v701, 48
      %v2909 = vpop.permute.xlu0 %2908
      %2910 = vrot.lane.b32.xlu0 %v704, 48
      %v2911 = vpop.permute.xlu0 %2910
      %2912 = vrot.lane.b32.xlu0 %v709, 48
      %v2913 = vpop.permute.xlu0 %2912
      %2914 = vrot.lane.b32.xlu0 %v712, 48
      %v2915 = vpop.permute.xlu0 %2914
      %2916 = vrot.lane.b32.xlu0 %v717, 48
      %v2917 = vpop.permute.xlu0 %2916
      %2918 = vrot.lane.b32.xlu0 %v720, 48
      %v2919 = vpop.permute.xlu0 %2918
      %2920 = vrot.lane.b32.xlu0 %v725, 48
      %v2921 = vpop.permute.xlu0 %2920
      %2922 = vrot.lane.b32.xlu0 %v728, 48
      %v2923 = vpop.permute.xlu0 %2922
      %2932 = vxpose.xlu0.b32.start [1/16] %v2909, 128
      %2933 = vxpose.xlu0.b32.cont [2/16] %v2911, 128
      %2934 = vxpose.xlu0.b32.cont [3/16] %v2913, 128
      %2935 = vxpose.xlu0.b32.cont [4/16] %v2915, 128
      %2936 = vxpose.xlu0.b32.cont [5/16] %v2917, 128
      %2937 = vxpose.xlu0.b32.cont [6/16] %v2919, 128
      %2938 = vxpose.xlu0.b32.cont [7/16] %v2921, 128
      %2939 = vxpose.xlu0.b32.cont [8/16] %v2923, 128
      %2940 = vxpose.xlu0.b32.cont [9/16] 0.0, 128
      %2941 = vxpose.xlu0.b32.cont [10/16] 0.0, 128
      %2942 = vxpose.xlu0.b32.cont [11/16] 0.0, 128
      %2943 = vxpose.xlu0.b32.cont [12/16] 0.0, 128
      %2944 = vxpose.xlu0.b32.cont [13/16] 0.0, 128
      %2945 = vxpose.xlu0.b32.cont [14/16] 0.0, 128
      %2946 = vxpose.xlu0.b32.cont [15/16] 0.0, 128
      %2947 = vxpose.xlu0.b32.end [16/16] 0.0, 128
      %v2948 = vpop.trf.xlu0
      %v2949 = vpop.trf.xlu0
      %v2950 = vpop.trf.xlu0
      %v2951 = vpop.trf.xlu0
      %v2952 = vpop.trf.xlu0
      %v2953 = vpop.trf.xlu0
      %v2954 = vpop.trf.xlu0
      %v2955 = vpop.trf.xlu0
      %v2956 = vpop.trf.xlu0
      %v2957 = vpop.trf.xlu0
      %v2958 = vpop.trf.xlu0
      %v2959 = vpop.trf.xlu0
      %v2960 = vpop.trf.xlu0
      %v2961 = vpop.trf.xlu0
      %v2962 = vpop.trf.xlu0
      %v2963 = vpop.trf.xlu0
      %v2964 = vpack.c.bf16 %v2949, %v2948
      %2965 = vrot.lane.b32.xlu0 %v867, 48
      %v2966 = vpop.permute.xlu0 %2965
      %2967 = vrot.lane.b32.xlu0 %v868, 48
      %v2968 = vpop.permute.xlu0 %2967
      %2969 = vrot.lane.b32.xlu0 %v869, 48
      %v2970 = vpop.permute.xlu0 %2969
      %2971 = vrot.lane.b32.xlu0 %v870, 48
      %v2972 = vpop.permute.xlu0 %2971
      %v2974 = vsel %vm908, %v2966, 0
      %v2977 = vsel %vm908, %v2968, 0
      %v2980 = vsel %vm908, %v2970, 0
      %v2983 = vsel %vm908, %v2972, 0
      %2985 = vmatprep.subr.bf16.mxu0 0
      %2986 = vmatpush1.bf16.msra.mxu0 %v2964
      %2987 = vmatprep.subr.bf16.mxu0 0
      %2988 = vmatpush1.bf16.msra.mxu0 0
      %2989 = vmatprep.subr.bf16.mxu0 0
      %2990 = vmatpush1.bf16.msra.mxu0 0
      %2991 = vmatprep.subr.bf16.mxu0 0
      %2992 = vmatpush1.bf16.msra.mxu0 0
      %2993 = vmatprep.subr.bf16.mxu0 0
      %2994 = vmatpush1.bf16.msra.mxu0 0
      %2995 = vmatprep.subr.bf16.mxu0 0
      %2996 = vmatpush1.bf16.msra.mxu0 0
      %2997 = vmatprep.subr.bf16.mxu0 0
      %2998 = vmatpush1.bf16.msra.mxu0 0
      %2999 = vmatprep.subr.bf16.mxu0 0
      %3000 = vmatpush1.bf16.msra.mxu0 0
      %3001 = vmatprep.subr.bf16.mxu0 0
      %3002 = vmatpush1.bf16.msra.mxu0 0
      %3003 = vmatprep.subr.bf16.mxu0 0
      %3004 = vmatpush1.bf16.msra.mxu0 0
      %3005 = vmatprep.subr.bf16.mxu0 0
      %3006 = vmatpush1.bf16.msra.mxu0 0
      %3007 = vmatprep.subr.bf16.mxu0 0
      %3008 = vmatpush1.bf16.msra.mxu0 0
      %3009 = vmatprep.subr.bf16.mxu0 0
      %3010 = vmatpush1.bf16.msra.mxu0 0
      %3011 = vmatprep.subr.bf16.mxu0 0
      %3012 = vmatpush1.bf16.msra.mxu0 0
      %3013 = vmatprep.subr.bf16.mxu0 0
      %3014 = vmatpush1.bf16.msra.mxu0 0
      %3015 = vmatprep.subr.bf16.mxu0 0
      %3016 = vmatpush1.bf16.msra.mxu0 0
      %3017 = vmatprep.mubr.bf16.mxu0 0
      %3018 = vmatmul.mubr.bf16.gmra.mrb[0].mxu0 %v2974
      %v3019 = vpop.f32.mrb[0].mxu0
      %v3020 = vadd.f32 0.0, %v3019
      %v3021 = vpop.f32.mrb[0].mxu0
      %v3022 = vpop.f32.mrb[0].mxu0
      %v3023 = vadd.f32 0.0, %v3022
      %v3024 = vpop.f32.mrb[0].mxu0
      %3025 = vmatprep.mubr.bf16.mxu0 0
      %3026 = vmatmul.mubr.bf16.gmra.mrb[0].mxu0 %v2977
      %v3027 = vpop.f32.mrb[0].mxu0
      %v3028 = vadd.f32 0.0, %v3027
      %v3029 = vpop.f32.mrb[0].mxu0
      %v3030 = vpop.f32.mrb[0].mxu0
      %v3031 = vadd.f32 0.0, %v3030
      %v3032 = vpop.f32.mrb[0].mxu0
      %3033 = vmatprep.mubr.bf16.mxu0 0
      %3034 = vmatmul.mubr.bf16.gmra.mrb[0].mxu0 %v2980
      %v3035 = vpop.f32.mrb[0].mxu0
      %v3036 = vadd.f32 0.0, %v3035
      %v3037 = vpop.f32.mrb[0].mxu0
      %v3038 = vpop.f32.mrb[0].mxu0
      %v3039 = vadd.f32 0.0, %v3038
      %v3040 = vpop.f32.mrb[0].mxu0
      %3041 = vmatprep.mubr.bf16.mxu0 0
      %3042 = vmatmul.mubr.bf16.gmra.mrb[0].mxu0 %v2983
      %v3043 = vpop.f32.mrb[0].mxu0
      %v3044 = vadd.f32 0.0, %v3043
      %v3045 = vpop.f32.mrb[0].mxu0
      %v3046 = vpop.f32.mrb[0].mxu0
      %v3047 = vadd.f32 0.0, %v3046
      %v3048 = vpop.f32.mrb[0].mxu0
      %3049 = vdwg.mxu0
      %v3050 = vsel %vm986, %v3020, -inf
      %3051 = vmax.xlane.f32.xlu0 %v3050
      %v3052 = vpop.xlane.xlu0 %3051
      %v3053 = vsel %vm986, %v3023, -inf
      %3054 = vmax.xlane.f32.xlu0 %v3053
      %v3055 = vpop.xlane.xlu0 %3054
      %v3056 = vsel %vm986, %v3028, -inf
      %3057 = vmax.xlane.f32.xlu0 %v3056
      %v3058 = vpop.xlane.xlu0 %3057
      %v3059 = vsel %vm986, %v3031, -inf
      %3060 = vmax.xlane.f32.xlu0 %v3059
      %v3061 = vpop.xlane.xlu0 %3060
      %v3062 = vsel %vm986, %v3036, -inf
      %3063 = vmax.xlane.f32.xlu0 %v3062
      %v3064 = vpop.xlane.xlu0 %3063
      %v3065 = vsel %vm986, %v3039, -inf
      %3066 = vmax.xlane.f32.xlu0 %v3065
      %v3067 = vpop.xlane.xlu0 %3066
      %v3068 = vsel %vm986, %v3044, -inf
      %3069 = vmax.xlane.f32.xlu0 %v3068
      %v3070 = vpop.xlane.xlu0 %3069
      %v3071 = vsel %vm986, %v3047, -inf
      %3072 = vmax.xlane.f32.xlu0 %v3071
      %v3073 = vpop.xlane.xlu0 %3072
      %v3074 = vsub.f32 %v3020, %v3052
      %v3075 = vsub.f32 %v3023, %v3055
      %v3076 = vsub.f32 %v3028, %v3058
      %v3077 = vsub.f32 %v3031, %v3061
      %v3078 = vsub.f32 %v3036, %v3064
      %v3079 = vsub.f32 %v3039, %v3067
      %v3080 = vsub.f32 %v3044, %v3070
      %v3081 = vsub.f32 %v3047, %v3073
      %v3082 = vmul.f32 %v3074, 1.442695
      %v3083 = vpow.pop %v3082
      %v3084 = vmul.f32 %v3075, 1.442695
      %v3085 = vpow.pop %v3084
      %v3086 = vmul.f32 %v3076, 1.442695
      %v3087 = vpow.pop %v3086
      %v3088 = vmul.f32 %v3077, 1.442695
      %v3089 = vpow.pop %v3088
      %v3090 = vmul.f32 %v3078, 1.442695
      %v3091 = vpow.pop %v3090
      %v3092 = vmul.f32 %v3079, 1.442695
      %v3093 = vpow.pop %v3092
      %v3094 = vmul.f32 %v3080, 1.442695
      %v3095 = vpow.pop %v3094
      %v3096 = vmul.f32 %v3081, 1.442695
      %v3097 = vpow.pop %v3096
      %v3098 = vsel %vm986, %v3083, 0.0
      %3099 = vadd.xlane.f32.xlu0 %v3098
      %v3100 = vpop.xlane.xlu0 %3099
      %v3101 = vsel %vm986, %v3085, 0.0
      %3102 = vadd.xlane.f32.xlu0 %v3101
      %v3103 = vpop.xlane.xlu0 %3102
      %v3104 = vsel %vm986, %v3087, 0.0
      %3105 = vadd.xlane.f32.xlu0 %v3104
      %v3106 = vpop.xlane.xlu0 %3105
      %v3107 = vsel %vm986, %v3089, 0.0
      %3108 = vadd.xlane.f32.xlu0 %v3107
      %v3109 = vpop.xlane.xlu0 %3108
      %v3110 = vsel %vm986, %v3091, 0.0
      %3111 = vadd.xlane.f32.xlu0 %v3110
      %v3112 = vpop.xlane.xlu0 %3111
      %v3113 = vsel %vm986, %v3093, 0.0
      %3114 = vadd.xlane.f32.xlu0 %v3113
      %v3115 = vpop.xlane.xlu0 %3114
      %v3116 = vsel %vm986, %v3095, 0.0
      %3117 = vadd.xlane.f32.xlu0 %v3116
      %v3118 = vpop.xlane.xlu0 %3117
      %v3119 = vsel %vm986, %v3097, 0.0
      %3120 = vadd.xlane.f32.xlu0 %v3119
      %v3121 = vpop.xlane.xlu0 %3120
      %v3122 = vrcp.pop %v3100
      %v3123 = vrcp.pop %v3103
      %v3124 = vrcp.pop %v3106
      %v3125 = vrcp.pop %v3109
      %v3126 = vrcp.pop %v3112
      %v3127 = vrcp.pop %v3115
      %v3128 = vrcp.pop %v3118
      %v3129 = vrcp.pop %v3121
      %v3130 = vmul.f32 %v3083, %v3122
      %v3131 = vmul.f32 %v3085, %v3123
      %v3132 = vmul.f32 %v3087, %v3124
      %v3133 = vmul.f32 %v3089, %v3125
      %v3134 = vmul.f32 %v3091, %v3126
      %v3135 = vmul.f32 %v3093, %v3127
      %v3136 = vmul.f32 %v3095, %v3128
      %v3137 = vmul.f32 %v3097, %v3129
      %v3138 = vpack.c.bf16 %v3131, %v3130
      %v3139 = vpack.c.bf16 %v3133, %v3132
      %v3140 = vpack.c.bf16 %v3135, %v3134
      %v3141 = vpack.c.bf16 %v3137, %v3136
      %3142 = vrot.lane.b32.xlu0 %v904, 48
      %v3143 = vpop.permute.xlu0 %3142
      %3144 = vrot.lane.b32.xlu0 %v905, 48
      %v3145 = vpop.permute.xlu0 %3144
      %3146 = vrot.lane.b32.xlu0 %v906, 48
      %v3147 = vpop.permute.xlu0 %3146
      %3148 = vrot.lane.b32.xlu0 %v907, 48
      %v3149 = vpop.permute.xlu0 %3148
      %v3155 = vsel %vm986, %v3138, 0
      %v3158 = vsel %vm986, %v3139, 0
      %v3161 = vsel %vm986, %v3140, 0
      %v3164 = vsel %vm986, %v3141, 0
      %3166 = vmatprep.subr.bf16.mxu0 0
      %3167 = vmatpush1.bf16.msra.mxu0 %v3143
      %3168 = vmatprep.subr.bf16.mxu0 0
      %3169 = vmatpush1.bf16.msra.mxu0 %v3145
      %3170 = vmatprep.subr.bf16.mxu0 0
      %3171 = vmatpush1.bf16.msra.mxu0 %v3147
      %3172 = vmatprep.subr.bf16.mxu0 0
      %3173 = vmatpush1.bf16.msra.mxu0 %v3149
      %3174 = vmatprep.subr.bf16.mxu0 0
      %3175 = vmatpush1.bf16.msra.mxu0 0
      %3176 = vmatprep.subr.bf16.mxu0 0
      %3177 = vmatpush1.bf16.msra.mxu0 0
      %3178 = vmatprep.subr.bf16.mxu0 0
      %3179 = vmatpush1.bf16.msra.mxu0 0
      %3180 = vmatprep.subr.bf16.mxu0 0
      %3181 = vmatpush1.bf16.msra.mxu0 0
      %3182 = vmatprep.subr.bf16.mxu0 0
      %3183 = vmatpush1.bf16.msra.mxu0 0
      %3184 = vmatprep.subr.bf16.mxu0 0
      %3185 = vmatpush1.bf16.msra.mxu0 0
      %3186 = vmatprep.subr.bf16.mxu0 0
      %3187 = vmatpush1.bf16.msra.mxu0 0
      %3188 = vmatprep.subr.bf16.mxu0 0
      %3189 = vmatpush1.bf16.msra.mxu0 0
      %3190 = vmatprep.subr.bf16.mxu0 0
      %3191 = vmatpush1.bf16.msra.mxu0 0
      %3192 = vmatprep.subr.bf16.mxu0 0
      %3193 = vmatpush1.bf16.msra.mxu0 0
      %3194 = vmatprep.subr.bf16.mxu0 0
      %3195 = vmatpush1.bf16.msra.mxu0 0
      %3196 = vmatprep.subr.bf16.mxu0 0
      %3197 = vmatpush1.bf16.msra.mxu0 0
      %3198 = vmatprep.mubr.bf16.mxu0 0
      %3199 = vmatmul.mubr.bf16.gmra.mrb[0].mxu0 %v3155
      %v3200 = vpop.f32.mrb[0].mxu0
      %v3201 = vadd.f32 0.0, %v3200
      %v3202 = vpop.f32.mrb[0].mxu0
      %v3203 = vpop.f32.mrb[0].mxu0
      %v3204 = vadd.f32 0.0, %v3203
      %v3205 = vpop.f32.mrb[0].mxu0
      %3206 = vmatprep.mubr.bf16.mxu0 0
      %3207 = vmatmul.mubr.bf16.gmra.mrb[0].mxu0 %v3158
      %v3208 = vpop.f32.mrb[0].mxu0
      %v3209 = vadd.f32 0.0, %v3208
      %v3210 = vpop.f32.mrb[0].mxu0
      %v3211 = vpop.f32.mrb[0].mxu0
      %v3212 = vadd.f32 0.0, %v3211
      %v3213 = vpop.f32.mrb[0].mxu0
      %3214 = vmatprep.mubr.bf16.mxu0 0
      %3215 = vmatmul.mubr.bf16.gmra.mrb[0].mxu0 %v3161
      %v3216 = vpop.f32.mrb[0].mxu0
      %v3217 = vadd.f32 0.0, %v3216
      %v3218 = vpop.f32.mrb[0].mxu0
      %v3219 = vpop.f32.mrb[0].mxu0
      %v3220 = vadd.f32 0.0, %v3219
      %v3221 = vpop.f32.mrb[0].mxu0
      %3222 = vmatprep.mubr.bf16.mxu0 0
      %3223 = vmatmul.mubr.bf16.gmra.mrb[0].mxu0 %v3164
      %v3224 = vpop.f32.mrb[0].mxu0
      %v3225 = vadd.f32 0.0, %v3224
      %v3226 = vpop.f32.mrb[0].mxu0
      %v3227 = vpop.f32.mrb[0].mxu0
      %v3228 = vadd.f32 0.0, %v3227
      %v3229 = vpop.f32.mrb[0].mxu0
      %3230 = vdwg.mxu0
      %v3231 = vld [vmem:[%s8 + $0x50] sm:$0xff]
      %v3232 = vld [vmem:[%s8 + $0x58] sm:$0xff]
      %v3233 = vpack.c.bf16 %v3232, %v3231
      %v3234 = vpack.c.bf16 %v3204, %v3201
      %v3235 = vpack.c.bf16 %v3212, %v3209
      %v3236 = vpack.c.bf16 %v3220, %v3217
      %v3237 = vpack.c.bf16 %v3228, %v3225
      %v3239 = vsel %vm908, %v3234, 0
      %v3242 = vsel %vm908, %v3235, 0
      %v3245 = vsel %vm908, %v3236, 0
      %v3248 = vsel %vm908, %v3237, 0
      %3250 = vmatprep.subr.bf16.mxu0 0
      %3251 = vmatpush1.bf16.msra.mxu0 %v3233
      %3252 = vmatprep.subr.bf16.mxu0 0
      %3253 = vmatpush1.bf16.msra.mxu0 0
      %3254 = vmatprep.subr.bf16.mxu0 0
      %3255 = vmatpush1.bf16.msra.mxu0 0
      %3256 = vmatprep.subr.bf16.mxu0 0
      %3257 = vmatpush1.bf16.msra.mxu0 0
      %3258 = vmatprep.subr.bf16.mxu0 0
      %3259 = vmatpush1.bf16.msra.mxu0 0
      %3260 = vmatprep.subr.bf16.mxu0 0
      %3261 = vmatpush1.bf16.msra.mxu0 0
      %3262 = vmatprep.subr.bf16.mxu0 0
      %3263 = vmatpush1.bf16.msra.mxu0 0
      %3264 = vmatprep.subr.bf16.mxu0 0
      %3265 = vmatpush1.bf16.msra.mxu0 0
      %3266 = vmatprep.subr.bf16.mxu0 0
      %3267 = vmatpush1.bf16.msra.mxu0 0
      %3268 = vmatprep.subr.bf16.mxu0 0
      %3269 = vmatpush1.bf16.msra.mxu0 0
      %3270 = vmatprep.subr.bf16.mxu0 0
      %3271 = vmatpush1.bf16.msra.mxu0 0
      %3272 = vmatprep.subr.bf16.mxu0 0
      %3273 = vmatpush1.bf16.msra.mxu0 0
      %3274 = vmatprep.subr.bf16.mxu0 0
      %3275 = vmatpush1.bf16.msra.mxu0 0
      %3276 = vmatprep.subr.bf16.mxu0 0
      %3277 = vmatpush1.bf16.msra.mxu0 0
      %3278 = vmatprep.subr.bf16.mxu0 0
      %3279 = vmatpush1.bf16.msra.mxu0 0
      %3280 = vmatprep.subr.bf16.mxu0 0
      %3281 = vmatpush1.bf16.msra.mxu0 0
      %3282 = vmatprep.mubr.bf16.mxu0 0
      %3283 = vmatmul.mubr.bf16.gmra.mrb[0].mxu0 %v3239
      %v3284 = vpop.f32.mrb[0].mxu0
      %v3285 = vadd.f32 0.0, %v3284
      %v3286 = vpop.f32.mrb[0].mxu0
      %v3287 = vpop.f32.mrb[0].mxu0
      %v3288 = vadd.f32 0.0, %v3287
      %v3289 = vpop.f32.mrb[0].mxu0
      %3290 = vmatprep.mubr.bf16.mxu0 0
      %3291 = vmatmul.mubr.bf16.gmra.mrb[0].mxu0 %v3242
      %v3292 = vpop.f32.mrb[0].mxu0
      %v3293 = vadd.f32 0.0, %v3292
      %v3294 = vpop.f32.mrb[0].mxu0
      %v3295 = vpop.f32.mrb[0].mxu0
      %v3296 = vadd.f32 0.0, %v3295
      %v3297 = vpop.f32.mrb[0].mxu0
      %3298 = vmatprep.mubr.bf16.mxu0 0
      %3299 = vmatmul.mubr.bf16.gmra.mrb[0].mxu0 %v3245
      %v3300 = vpop.f32.mrb[0].mxu0
      %v3301 = vadd.f32 0.0, %v3300
      %v3302 = vpop.f32.mrb[0].mxu0
      %v3303 = vpop.f32.mrb[0].mxu0
      %v3304 = vadd.f32 0.0, %v3303
      %v3305 = vpop.f32.mrb[0].mxu0
      %3306 = vmatprep.mubr.bf16.mxu0 0
      %3307 = vmatmul.mubr.bf16.gmra.mrb[0].mxu0 %v3248
      %v3308 = vpop.f32.mrb[0].mxu0
      %v3309 = vadd.f32 0.0, %v3308
      %v3310 = vpop.f32.mrb[0].mxu0
      %v3311 = vpop.f32.mrb[0].mxu0
      %v3312 = vadd.f32 0.0, %v3311
      %v3313 = vpop.f32.mrb[0].mxu0
      %3314 = vdwg.mxu0
      %v3315 = vadd.f32 %v2900, %v3285
      %v3316 = vadd.f32 %v2901, %v3288
      %v3317 = vadd.f32 %v2902, %v3293
      %v3318 = vadd.f32 %v2903, %v3296
      %v3319 = vadd.f32 %v2904, %v3301
      %v3320 = vadd.f32 %v2905, %v3304
      %v3321 = vadd.f32 %v2906, %v3309
      %v3322 = vadd.f32 %v2907, %v3312
      %3323 = vrot.lane.b32.xlu0 %v701, 32
      %v3324 = vpop.permute.xlu0 %3323
      %3325 = vrot.lane.b32.xlu0 %v704, 32
      %v3326 = vpop.permute.xlu0 %3325
      %3327 = vrot.lane.b32.xlu0 %v709, 32
      %v3328 = vpop.permute.xlu0 %3327
      %3329 = vrot.lane.b32.xlu0 %v712, 32
      %v3330 = vpop.permute.xlu0 %3329
      %3331 = vrot.lane.b32.xlu0 %v717, 32
      %v3332 = vpop.permute.xlu0 %3331
      %3333 = vrot.lane.b32.xlu0 %v720, 32
      %v3334 = vpop.permute.xlu0 %3333
      %3335 = vrot.lane.b32.xlu0 %v725, 32
      %v3336 = vpop.permute.xlu0 %3335
      %3337 = vrot.lane.b32.xlu0 %v728, 32
      %v3338 = vpop.permute.xlu0 %3337
      %3347 = vxpose.xlu0.b32.start [1/16] %v3324, 128
      %3348 = vxpose.xlu0.b32.cont [2/16] %v3326, 128
      %3349 = vxpose.xlu0.b32.cont [3/16] %v3328, 128
      %3350 = vxpose.xlu0.b32.cont [4/16] %v3330, 128
      %3351 = vxpose.xlu0.b32.cont [5/16] %v3332, 128
      %3352 = vxpose.xlu0.b32.cont [6/16] %v3334, 128
      %3353 = vxpose.xlu0.b32.cont [7/16] %v3336, 128
      %3354 = vxpose.xlu0.b32.cont [8/16] %v3338, 128
      %3355 = vxpose.xlu0.b32.cont [9/16] 0.0, 128
      %3356 = vxpose.xlu0.b32.cont [10/16] 0.0, 128
      %3357 = vxpose.xlu0.b32.cont [11/16] 0.0, 128
      %3358 = vxpose.xlu0.b32.cont [12/16] 0.0, 128
      %3359 = vxpose.xlu0.b32.cont [13/16] 0.0, 128
      %3360 = vxpose.xlu0.b32.cont [14/16] 0.0, 128
      %3361 = vxpose.xlu0.b32.cont [15/16] 0.0, 128
      %3362 = vxpose.xlu0.b32.end [16/16] 0.0, 128
      %v3363 = vpop.trf.xlu0
      %v3364 = vpop.trf.xlu0
      %v3365 = vpop.trf.xlu0
      %v3366 = vpop.trf.xlu0
      %v3367 = vpop.trf.xlu0
      %v3368 = vpop.trf.xlu0
      %v3369 = vpop.trf.xlu0
      %v3370 = vpop.trf.xlu0
      %v3371 = vpop.trf.xlu0
      %v3372 = vpop.trf.xlu0
      %v3373 = vpop.trf.xlu0
      %v3374 = vpop.trf.xlu0
      %v3375 = vpop.trf.xlu0
      %v3376 = vpop.trf.xlu0
      %v3377 = vpop.trf.xlu0
      %v3378 = vpop.trf.xlu0
      %v3379 = vpack.c.bf16 %v3364, %v3363
      %3380 = vrot.lane.b32.xlu0 %v867, 32
      %v3381 = vpop.permute.xlu0 %3380
      %3382 = vrot.lane.b32.xlu0 %v868, 32
      %v3383 = vpop.permute.xlu0 %3382
      %3384 = vrot.lane.b32.xlu0 %v869, 32
      %v3385 = vpop.permute.xlu0 %3384
      %3386 = vrot.lane.b32.xlu0 %v870, 32
      %v3387 = vpop.permute.xlu0 %3386
      %v3389 = vsel %vm908, %v3381, 0
      %v3392 = vsel %vm908, %v3383, 0
      %v3395 = vsel %vm908, %v3385, 0
      %v3398 = vsel %vm908, %v3387, 0
      %3400 = vmatprep.subr.bf16.mxu0 0
      %3401 = vmatpush1.bf16.msra.mxu0 %v3379
      %3402 = vmatprep.subr.bf16.mxu0 0
      %3403 = vmatpush1.bf16.msra.mxu0 0
      %3404 = vmatprep.subr.bf16.mxu0 0
      %3405 = vmatpush1.bf16.msra.mxu0 0
      %3406 = vmatprep.subr.bf16.mxu0 0
      %3407 = vmatpush1.bf16.msra.mxu0 0
      %3408 = vmatprep.subr.bf16.mxu0 0
      %3409 = vmatpush1.bf16.msra.mxu0 0
      %3410 = vmatprep.subr.bf16.mxu0 0
      %3411 = vmatpush1.bf16.msra.mxu0 0
      %3412 = vmatprep.subr.bf16.mxu0 0
      %3413 = vmatpush1.bf16.msra.mxu0 0
      %3414 = vmatprep.subr.bf16.mxu0 0
      %3415 = vmatpush1.bf16.msra.mxu0 0
      %3416 = vmatprep.subr.bf16.mxu0 0
      %3417 = vmatpush1.bf16.msra.mxu0 0
      %3418 = vmatprep.subr.bf16.mxu0 0
      %3419 = vmatpush1.bf16.msra.mxu0 0
      %3420 = vmatprep.subr.bf16.mxu0 0
      %3421 = vmatpush1.bf16.msra.mxu0 0
      %3422 = vmatprep.subr.bf16.mxu0 0
      %3423 = vmatpush1.bf16.msra.mxu0 0
      %3424 = vmatprep.subr.bf16.mxu0 0
      %3425 = vmatpush1.bf16.msra.mxu0 0
      %3426 = vmatprep.subr.bf16.mxu0 0
      %3427 = vmatpush1.bf16.msra.mxu0 0
      %3428 = vmatprep.subr.bf16.mxu0 0
      %3429 = vmatpush1.bf16.msra.mxu0 0
      %3430 = vmatprep.subr.bf16.mxu0 0
      %3431 = vmatpush1.bf16.msra.mxu0 0
      %3432 = vmatprep.mubr.bf16.mxu0 0
      %3433 = vmatmul.mubr.bf16.gmra.mrb[0].mxu0 %v3389
      %v3434 = vpop.f32.mrb[0].mxu0
      %v3435 = vadd.f32 0.0, %v3434
      %v3436 = vpop.f32.mrb[0].mxu0
      %v3437 = vpop.f32.mrb[0].mxu0
      %v3438 = vadd.f32 0.0, %v3437
      %v3439 = vpop.f32.mrb[0].mxu0
      %3440 = vmatprep.mubr.bf16.mxu0 0
      %3441 = vmatmul.mubr.bf16.gmra.mrb[0].mxu0 %v3392
      %v3442 = vpop.f32.mrb[0].mxu0
      %v3443 = vadd.f32 0.0, %v3442
      %v3444 = vpop.f32.mrb[0].mxu0
      %v3445 = vpop.f32.mrb[0].mxu0
      %v3446 = vadd.f32 0.0, %v3445
      %v3447 = vpop.f32.mrb[0].mxu0
      %3448 = vmatprep.mubr.bf16.mxu0 0
      %3449 = vmatmul.mubr.bf16.gmra.mrb[0].mxu0 %v3395
      %v3450 = vpop.f32.mrb[0].mxu0
      %v3451 = vadd.f32 0.0, %v3450
      %v3452 = vpop.f32.mrb[0].mxu0
      %v3453 = vpop.f32.mrb[0].mxu0
      %v3454 = vadd.f32 0.0, %v3453
      %v3455 = vpop.f32.mrb[0].mxu0
      %3456 = vmatprep.mubr.bf16.mxu0 0
      %3457 = vmatmul.mubr.bf16.gmra.mrb[0].mxu0 %v3398
      %v3458 = vpop.f32.mrb[0].mxu0
      %v3459 = vadd.f32 0.0, %v3458
      %v3460 = vpop.f32.mrb[0].mxu0
      %v3461 = vpop.f32.mrb[0].mxu0
      %v3462 = vadd.f32 0.0, %v3461
      %v3463 = vpop.f32.mrb[0].mxu0
      %3464 = vdwg.mxu0
      %v3465 = vsel %vm986, %v3435, -inf
      %3466 = vmax.xlane.f32.xlu0 %v3465
      %v3467 = vpop.xlane.xlu0 %3466
      %v3468 = vsel %vm986, %v3438, -inf
      %3469 = vmax.xlane.f32.xlu0 %v3468
      %v3470 = vpop.xlane.xlu0 %3469
      %v3471 = vsel %vm986, %v3443, -inf
      %3472 = vmax.xlane.f32.xlu0 %v3471
      %v3473 = vpop.xlane.xlu0 %3472
      %v3474 = vsel %vm986, %v3446, -inf
      %3475 = vmax.xlane.f32.xlu0 %v3474
      %v3476 = vpop.xlane.xlu0 %3475
      %v3477 = vsel %vm986, %v3451, -inf
      %3478 = vmax.xlane.f32.xlu0 %v3477
      %v3479 = vpop.xlane.xlu0 %3478
      %v3480 = vsel %vm986, %v3454, -inf
      %3481 = vmax.xlane.f32.xlu0 %v3480
      %v3482 = vpop.xlane.xlu0 %3481
      %v3483 = vsel %vm986, %v3459, -inf
      %3484 = vmax.xlane.f32.xlu0 %v3483
      %v3485 = vpop.xlane.xlu0 %3484
      %v3486 = vsel %vm986, %v3462, -inf
      %3487 = vmax.xlane.f32.xlu0 %v3486
      %v3488 = vpop.xlane.xlu0 %3487
      %v3489 = vsub.f32 %v3435, %v3467
      %v3490 = vsub.f32 %v3438, %v3470
      %v3491 = vsub.f32 %v3443, %v3473
      %v3492 = vsub.f32 %v3446, %v3476
      %v3493 = vsub.f32 %v3451, %v3479
      %v3494 = vsub.f32 %v3454, %v3482
      %v3495 = vsub.f32 %v3459, %v3485
      %v3496 = vsub.f32 %v3462, %v3488
      %v3497 = vmul.f32 %v3489, 1.442695
      %v3498 = vpow.pop %v3497
      %v3499 = vmul.f32 %v3490, 1.442695
      %v3500 = vpow.pop %v3499
      %v3501 = vmul.f32 %v3491, 1.442695
      %v3502 = vpow.pop %v3501
      %v3503 = vmul.f32 %v3492, 1.442695
      %v3504 = vpow.pop %v3503
      %v3505 = vmul.f32 %v3493, 1.442695
      %v3506 = vpow.pop %v3505
      %v3507 = vmul.f32 %v3494, 1.442695
      %v3508 = vpow.pop %v3507
      %v3509 = vmul.f32 %v3495, 1.442695
      %v3510 = vpow.pop %v3509
      %v3511 = vmul.f32 %v3496, 1.442695
      %v3512 = vpow.pop %v3511
      %v3513 = vsel %vm986, %v3498, 0.0
      %3514 = vadd.xlane.f32.xlu0 %v3513
      %v3515 = vpop.xlane.xlu0 %3514
      %v3516 = vsel %vm986, %v3500, 0.0
      %3517 = vadd.xlane.f32.xlu0 %v3516
      %v3518 = vpop.xlane.xlu0 %3517
      %v3519 = vsel %vm986, %v3502, 0.0
      %3520 = vadd.xlane.f32.xlu0 %v3519
      %v3521 = vpop.xlane.xlu0 %3520
      %v3522 = vsel %vm986, %v3504, 0.0
      %3523 = vadd.xlane.f32.xlu0 %v3522
      %v3524 = vpop.xlane.xlu0 %3523
      %v3525 = vsel %vm986, %v3506, 0.0
      %3526 = vadd.xlane.f32.xlu0 %v3525
      %v3527 = vpop.xlane.xlu0 %3526
      %v3528 = vsel %vm986, %v3508, 0.0
      %3529 = vadd.xlane.f32.xlu0 %v3528
      %v3530 = vpop.xlane.xlu0 %3529
      %v3531 = vsel %vm986, %v3510, 0.0
      %3532 = vadd.xlane.f32.xlu0 %v3531
      %v3533 = vpop.xlane.xlu0 %3532
      %v3534 = vsel %vm986, %v3512, 0.0
      %3535 = vadd.xlane.f32.xlu0 %v3534
      %v3536 = vpop.xlane.xlu0 %3535
      %v3537 = vrcp.pop %v3515
      %v3538 = vrcp.pop %v3518
      %v3539 = vrcp.pop %v3521
      %v3540 = vrcp.pop %v3524
      %v3541 = vrcp.pop %v3527
      %v3542 = vrcp.pop %v3530
      %v3543 = vrcp.pop %v3533
      %v3544 = vrcp.pop %v3536
      %v3545 = vmul.f32 %v3498, %v3537
      %v3546 = vmul.f32 %v3500, %v3538
      %v3547 = vmul.f32 %v3502, %v3539
      %v3548 = vmul.f32 %v3504, %v3540
      %v3549 = vmul.f32 %v3506, %v3541
      %v3550 = vmul.f32 %v3508, %v3542
      %v3551 = vmul.f32 %v3510, %v3543
      %v3552 = vmul.f32 %v3512, %v3544
      %v3553 = vpack.c.bf16 %v3546, %v3545
      %v3554 = vpack.c.bf16 %v3548, %v3547
      %v3555 = vpack.c.bf16 %v3550, %v3549
      %v3556 = vpack.c.bf16 %v3552, %v3551
      %3557 = vrot.lane.b32.xlu0 %v904, 32
      %v3558 = vpop.permute.xlu0 %3557
      %3559 = vrot.lane.b32.xlu0 %v905, 32
      %v3560 = vpop.permute.xlu0 %3559
      %3561 = vrot.lane.b32.xlu0 %v906, 32
      %v3562 = vpop.permute.xlu0 %3561
      %3563 = vrot.lane.b32.xlu0 %v907, 32
      %v3564 = vpop.permute.xlu0 %3563
      %v3570 = vsel %vm986, %v3553, 0
      %v3573 = vsel %vm986, %v3554, 0
      %v3576 = vsel %vm986, %v3555, 0
      %v3579 = vsel %vm986, %v3556, 0
      %3581 = vmatprep.subr.bf16.mxu0 0
      %3582 = vmatpush1.bf16.msra.mxu0 %v3558
      %3583 = vmatprep.subr.bf16.mxu0 0
      %3584 = vmatpush1.bf16.msra.mxu0 %v3560
      %3585 = vmatprep.subr.bf16.mxu0 0
      %3586 = vmatpush1.bf16.msra.mxu0 %v3562
      %3587 = vmatprep.subr.bf16.mxu0 0
      %3588 = vmatpush1.bf16.msra.mxu0 %v3564
      %3589 = vmatprep.subr.bf16.mxu0 0
      %3590 = vmatpush1.bf16.msra.mxu0 0
      %3591 = vmatprep.subr.bf16.mxu0 0
      %3592 = vmatpush1.bf16.msra.mxu0 0
      %3593 = vmatprep.subr.bf16.mxu0 0
      %3594 = vmatpush1.bf16.msra.mxu0 0
      %3595 = vmatprep.subr.bf16.mxu0 0
      %3596 = vmatpush1.bf16.msra.mxu0 0
      %3597 = vmatprep.subr.bf16.mxu0 0
      %3598 = vmatpush1.bf16.msra.mxu0 0
      %3599 = vmatprep.subr.bf16.mxu0 0
      %3600 = vmatpush1.bf16.msra.mxu0 0
      %3601 = vmatprep.subr.bf16.mxu0 0
      %3602 = vmatpush1.bf16.msra.mxu0 0
      %3603 = vmatprep.subr.bf16.mxu0 0
      %3604 = vmatpush1.bf16.msra.mxu0 0
      %3605 = vmatprep.subr.bf16.mxu0 0
      %3606 = vmatpush1.bf16.msra.mxu0 0
      %3607 = vmatprep.subr.bf16.mxu0 0
      %3608 = vmatpush1.bf16.msra.mxu0 0
      %3609 = vmatprep.subr.bf16.mxu0 0
      %3610 = vmatpush1.bf16.msra.mxu0 0
      %3611 = vmatprep.subr.bf16.mxu0 0
      %3612 = vmatpush1.bf16.msra.mxu0 0
      %3613 = vmatprep.mubr.bf16.mxu0 0
      %3614 = vmatmul.mubr.bf16.gmra.mrb[0].mxu0 %v3570
      %v3615 = vpop.f32.mrb[0].mxu0
      %v3616 = vadd.f32 0.0, %v3615
      %v3617 = vpop.f32.mrb[0].mxu0
      %v3618 = vpop.f32.mrb[0].mxu0
      %v3619 = vadd.f32 0.0, %v3618
      %v3620 = vpop.f32.mrb[0].mxu0
      %3621 = vmatprep.mubr.bf16.mxu0 0
      %3622 = vmatmul.mubr.bf16.gmra.mrb[0].mxu0 %v3573
      %v3623 = vpop.f32.mrb[0].mxu0
      %v3624 = vadd.f32 0.0, %v3623
      %v3625 = vpop.f32.mrb[0].mxu0
      %v3626 = vpop.f32.mrb[0].mxu0
      %v3627 = vadd.f32 0.0, %v3626
      %v3628 = vpop.f32.mrb[0].mxu0
      %3629 = vmatprep.mubr.bf16.mxu0 0
      %3630 = vmatmul.mubr.bf16.gmra.mrb[0].mxu0 %v3576
      %v3631 = vpop.f32.mrb[0].mxu0
      %v3632 = vadd.f32 0.0, %v3631
      %v3633 = vpop.f32.mrb[0].mxu0
      %v3634 = vpop.f32.mrb[0].mxu0
      %v3635 = vadd.f32 0.0, %v3634
      %v3636 = vpop.f32.mrb[0].mxu0
      %3637 = vmatprep.mubr.bf16.mxu0 0
      %3638 = vmatmul.mubr.bf16.gmra.mrb[0].mxu0 %v3579
      %v3639 = vpop.f32.mrb[0].mxu0
      %v3640 = vadd.f32 0.0, %v3639
      %v3641 = vpop.f32.mrb[0].mxu0
      %v3642 = vpop.f32.mrb[0].mxu0
      %v3643 = vadd.f32 0.0, %v3642
      %v3644 = vpop.f32.mrb[0].mxu0
      %3645 = vdwg.mxu0
      %v3646 = vld [vmem:[%s8 + $0x60] sm:$0xff]
      %v3647 = vld [vmem:[%s8 + $0x68] sm:$0xff]
      %v3648 = vpack.c.bf16 %v3647, %v3646
      %v3649 = vpack.c.bf16 %v3619, %v3616
      %v3650 = vpack.c.bf16 %v3627, %v3624
      %v3651 = vpack.c.bf16 %v3635, %v3632
      %v3652 = vpack.c.bf16 %v3643, %v3640
      %v3654 = vsel %vm908, %v3649, 0
      %v3657 = vsel %vm908, %v3650, 0
      %v3660 = vsel %vm908, %v3651, 0
      %v3663 = vsel %vm908, %v3652, 0
      %3665 = vmatprep.subr.bf16.mxu0 0
      %3666 = vmatpush1.bf16.msra.mxu0 %v3648
      %3667 = vmatprep.subr.bf16.mxu0 0
      %3668 = vmatpush1.bf16.msra.mxu0 0
      %3669 = vmatprep.subr.bf16.mxu0 0
      %3670 = vmatpush1.bf16.msra.mxu0 0
      %3671 = vmatprep.subr.bf16.mxu0 0
      %3672 = vmatpush1.bf16.msra.mxu0 0
      %3673 = vmatprep.subr.bf16.mxu0 0
      %3674 = vmatpush1.bf16.msra.mxu0 0
      %3675 = vmatprep.subr.bf16.mxu0 0
      %3676 = vmatpush1.bf16.msra.mxu0 0
      %3677 = vmatprep.subr.bf16.mxu0 0
      %3678 = vmatpush1.bf16.msra.mxu0 0
      %3679 = vmatprep.subr.bf16.mxu0 0
      %3680 = vmatpush1.bf16.msra.mxu0 0
      %3681 = vmatprep.subr.bf16.mxu0 0
      %3682 = vmatpush1.bf16.msra.mxu0 0
      %3683 = vmatprep.subr.bf16.mxu0 0
      %3684 = vmatpush1.bf16.msra.mxu0 0
      %3685 = vmatprep.subr.bf16.mxu0 0
      %3686 = vmatpush1.bf16.msra.mxu0 0
      %3687 = vmatprep.subr.bf16.mxu0 0
      %3688 = vmatpush1.bf16.msra.mxu0 0
      %3689 = vmatprep.subr.bf16.mxu0 0
      %3690 = vmatpush1.bf16.msra.mxu0 0
      %3691 = vmatprep.subr.bf16.mxu0 0
      %3692 = vmatpush1.bf16.msra.mxu0 0
      %3693 = vmatprep.subr.bf16.mxu0 0
      %3694 = vmatpush1.bf16.msra.mxu0 0
      %3695 = vmatprep.subr.bf16.mxu0 0
      %3696 = vmatpush1.bf16.msra.mxu0 0
      %3697 = vmatprep.mubr.bf16.mxu0 0
      %3698 = vmatmul.mubr.bf16.gmra.mrb[0].mxu0 %v3654
      %v3699 = vpop.f32.mrb[0].mxu0
      %v3700 = vadd.f32 0.0, %v3699
      %v3701 = vpop.f32.mrb[0].mxu0
      %v3702 = vpop.f32.mrb[0].mxu0
      %v3703 = vadd.f32 0.0, %v3702
      %v3704 = vpop.f32.mrb[0].mxu0
      %3705 = vmatprep.mubr.bf16.mxu0 0
      %3706 = vmatmul.mubr.bf16.gmra.mrb[0].mxu0 %v3657
      %v3707 = vpop.f32.mrb[0].mxu0
      %v3708 = vadd.f32 0.0, %v3707
      %v3709 = vpop.f32.mrb[0].mxu0
      %v3710 = vpop.f32.mrb[0].mxu0
      %v3711 = vadd.f32 0.0, %v3710
      %v3712 = vpop.f32.mrb[0].mxu0
      %3713 = vmatprep.mubr.bf16.mxu0 0
      %3714 = vmatmul.mubr.bf16.gmra.mrb[0].mxu0 %v3660
      %v3715 = vpop.f32.mrb[0].mxu0
      %v3716 = vadd.f32 0.0, %v3715
      %v3717 = vpop.f32.mrb[0].mxu0
      %v3718 = vpop.f32.mrb[0].mxu0
      %v3719 = vadd.f32 0.0, %v3718
      %v3720 = vpop.f32.mrb[0].mxu0
      %3721 = vmatprep.mubr.bf16.mxu0 0
      %3722 = vmatmul.mubr.bf16.gmra.mrb[0].mxu0 %v3663
      %v3723 = vpop.f32.mrb[0].mxu0
      %v3724 = vadd.f32 0.0, %v3723
      %v3725 = vpop.f32.mrb[0].mxu0
      %v3726 = vpop.f32.mrb[0].mxu0
      %v3727 = vadd.f32 0.0, %v3726
      %v3728 = vpop.f32.mrb[0].mxu0
      %3729 = vdwg.mxu0
      %v3730 = vadd.f32 %v3315, %v3700
      %v3731 = vadd.f32 %v3316, %v3703
      %v3732 = vadd.f32 %v3317, %v3708
      %v3733 = vadd.f32 %v3318, %v3711
      %v3734 = vadd.f32 %v3319, %v3716
      %v3735 = vadd.f32 %v3320, %v3719
      %v3736 = vadd.f32 %v3321, %v3724
      %v3737 = vadd.f32 %v3322, %v3727
      %3738 = vrot.lane.b32.xlu0 %v701, 16
      %v3739 = vpop.permute.xlu0 %3738
      %3740 = vrot.lane.b32.xlu0 %v704, 16
      %v3741 = vpop.permute.xlu0 %3740
      %3742 = vrot.lane.b32.xlu0 %v709, 16
      %v3743 = vpop.permute.xlu0 %3742
      %3744 = vrot.lane.b32.xlu0 %v712, 16
      %v3745 = vpop.permute.xlu0 %3744
      %3746 = vrot.lane.b32.xlu0 %v717, 16
      %v3747 = vpop.permute.xlu0 %3746
      %3748 = vrot.lane.b32.xlu0 %v720, 16
      %v3749 = vpop.permute.xlu0 %3748
      %3750 = vrot.lane.b32.xlu0 %v725, 16
      %v3751 = vpop.permute.xlu0 %3750
      %3752 = vrot.lane.b32.xlu0 %v728, 16
      %v3753 = vpop.permute.xlu0 %3752
      %3762 = vxpose.xlu0.b32.start [1/16] %v3739, 128
      %3763 = vxpose.xlu0.b32.cont [2/16] %v3741, 128
      %3764 = vxpose.xlu0.b32.cont [3/16] %v3743, 128
      %3765 = vxpose.xlu0.b32.cont [4/16] %v3745, 128
      %3766 = vxpose.xlu0.b32.cont [5/16] %v3747, 128
      %3767 = vxpose.xlu0.b32.cont [6/16] %v3749, 128
      %3768 = vxpose.xlu0.b32.cont [7/16] %v3751, 128
      %3769 = vxpose.xlu0.b32.cont [8/16] %v3753, 128
      %3770 = vxpose.xlu0.b32.cont [9/16] 0.0, 128
      %3771 = vxpose.xlu0.b32.cont [10/16] 0.0, 128
      %3772 = vxpose.xlu0.b32.cont [11/16] 0.0, 128
      %3773 = vxpose.xlu0.b32.cont [12/16] 0.0, 128
      %3774 = vxpose.xlu0.b32.cont [13/16] 0.0, 128
      %3775 = vxpose.xlu0.b32.cont [14/16] 0.0, 128
      %3776 = vxpose.xlu0.b32.cont [15/16] 0.0, 128
      %3777 = vxpose.xlu0.b32.end [16/16] 0.0, 128
      %v3778 = vpop.trf.xlu0
      %v3779 = vpop.trf.xlu0
      %v3780 = vpop.trf.xlu0
      %v3781 = vpop.trf.xlu0
      %v3782 = vpop.trf.xlu0
      %v3783 = vpop.trf.xlu0
      %v3784 = vpop.trf.xlu0
      %v3785 = vpop.trf.xlu0
      %v3786 = vpop.trf.xlu0
      %v3787 = vpop.trf.xlu0
      %v3788 = vpop.trf.xlu0
      %v3789 = vpop.trf.xlu0
      %v3790 = vpop.trf.xlu0
      %v3791 = vpop.trf.xlu0
      %v3792 = vpop.trf.xlu0
      %v3793 = vpop.trf.xlu0
      %v3794 = vpack.c.bf16 %v3779, %v3778
      %3795 = vrot.lane.b32.xlu0 %v867, 16
      %v3796 = vpop.permute.xlu0 %3795
      %3797 = vrot.lane.b32.xlu0 %v868, 16
      %v3798 = vpop.permute.xlu0 %3797
      %3799 = vrot.lane.b32.xlu0 %v869, 16
      %v3800 = vpop.permute.xlu0 %3799
      %3801 = vrot.lane.b32.xlu0 %v870, 16
      %v3802 = vpop.permute.xlu0 %3801
      %v3804 = vsel %vm908, %v3796, 0
      %v3807 = vsel %vm908, %v3798, 0
      %v3810 = vsel %vm908, %v3800, 0
      %v3813 = vsel %vm908, %v3802, 0
      %3815 = vmatprep.subr.bf16.mxu0 0
      %3816 = vmatpush1.bf16.msra.mxu0 %v3794
      %3817 = vmatprep.subr.bf16.mxu0 0
      %3818 = vmatpush1.bf16.msra.mxu0 0
      %3819 = vmatprep.subr.bf16.mxu0 0
      %3820 = vmatpush1.bf16.msra.mxu0 0
      %3821 = vmatprep.subr.bf16.mxu0 0
      %3822 = vmatpush1.bf16.msra.mxu0 0
      %3823 = vmatprep.subr.bf16.mxu0 0
      %3824 = vmatpush1.bf16.msra.mxu0 0
      %3825 = vmatprep.subr.bf16.mxu0 0
      %3826 = vmatpush1.bf16.msra.mxu0 0
      %3827 = vmatprep.subr.bf16.mxu0 0
      %3828 = vmatpush1.bf16.msra.mxu0 0
      %3829 = vmatprep.subr.bf16.mxu0 0
      %3830 = vmatpush1.bf16.msra.mxu0 0
      %3831 = vmatprep.subr.bf16.mxu0 0
      %3832 = vmatpush1.bf16.msra.mxu0 0
      %3833 = vmatprep.subr.bf16.mxu0 0
      %3834 = vmatpush1.bf16.msra.mxu0 0
      %3835 = vmatprep.subr.bf16.mxu0 0
      %3836 = vmatpush1.bf16.msra.mxu0 0
      %3837 = vmatprep.subr.bf16.mxu0 0
      %3838 = vmatpush1.bf16.msra.mxu0 0
      %3839 = vmatprep.subr.bf16.mxu0 0
      %3840 = vmatpush1.bf16.msra.mxu0 0
      %3841 = vmatprep.subr.bf16.mxu0 0
      %3842 = vmatpush1.bf16.msra.mxu0 0
      %3843 = vmatprep.subr.bf16.mxu0 0
      %3844 = vmatpush1.bf16.msra.mxu0 0
      %3845 = vmatprep.subr.bf16.mxu0 0
      %3846 = vmatpush1.bf16.msra.mxu0 0
      %3847 = vmatprep.mubr.bf16.mxu0 0
      %3848 = vmatmul.mubr.bf16.gmra.mrb[0].mxu0 %v3804
      %v3849 = vpop.f32.mrb[0].mxu0
      %v3850 = vadd.f32 0.0, %v3849
      %v3851 = vpop.f32.mrb[0].mxu0
      %v3852 = vpop.f32.mrb[0].mxu0
      %v3853 = vadd.f32 0.0, %v3852
      %v3854 = vpop.f32.mrb[0].mxu0
      %3855 = vmatprep.mubr.bf16.mxu0 0
      %3856 = vmatmul.mubr.bf16.gmra.mrb[0].mxu0 %v3807
      %v3857 = vpop.f32.mrb[0].mxu0
      %v3858 = vadd.f32 0.0, %v3857
      %v3859 = vpop.f32.mrb[0].mxu0
      %v3860 = vpop.f32.mrb[0].mxu0
      %v3861 = vadd.f32 0.0, %v3860
      %v3862 = vpop.f32.mrb[0].mxu0
      %3863 = vmatprep.mubr.bf16.mxu0 0
      %3864 = vmatmul.mubr.bf16.gmra.mrb[0].mxu0 %v3810
      %v3865 = vpop.f32.mrb[0].mxu0
      %v3866 = vadd.f32 0.0, %v3865
      %v3867 = vpop.f32.mrb[0].mxu0
      %v3868 = vpop.f32.mrb[0].mxu0
      %v3869 = vadd.f32 0.0, %v3868
      %v3870 = vpop.f32.mrb[0].mxu0
      %3871 = vmatprep.mubr.bf16.mxu0 0
      %3872 = vmatmul.mubr.bf16.gmra.mrb[0].mxu0 %v3813
      %v3873 = vpop.f32.mrb[0].mxu0
      %v3874 = vadd.f32 0.0, %v3873
      %v3875 = vpop.f32.mrb[0].mxu0
      %v3876 = vpop.f32.mrb[0].mxu0
      %v3877 = vadd.f32 0.0, %v3876
      %v3878 = vpop.f32.mrb[0].mxu0
      %3879 = vdwg.mxu0
      %v3880 = vsel %vm986, %v3850, -inf
      %3881 = vmax.xlane.f32.xlu0 %v3880
      %v3882 = vpop.xlane.xlu0 %3881
      %v3883 = vsel %vm986, %v3853, -inf
      %3884 = vmax.xlane.f32.xlu0 %v3883
      %v3885 = vpop.xlane.xlu0 %3884
      %v3886 = vsel %vm986, %v3858, -inf
      %3887 = vmax.xlane.f32.xlu0 %v3886
      %v3888 = vpop.xlane.xlu0 %3887
      %v3889 = vsel %vm986, %v3861, -inf
      %3890 = vmax.xlane.f32.xlu0 %v3889
      %v3891 = vpop.xlane.xlu0 %3890
      %v3892 = vsel %vm986, %v3866, -inf
      %3893 = vmax.xlane.f32.xlu0 %v3892
      %v3894 = vpop.xlane.xlu0 %3893
      %v3895 = vsel %vm986, %v3869, -inf
      %3896 = vmax.xlane.f32.xlu0 %v3895
      %v3897 = vpop.xlane.xlu0 %3896
      %v3898 = vsel %vm986, %v3874, -inf
      %3899 = vmax.xlane.f32.xlu0 %v3898
      %v3900 = vpop.xlane.xlu0 %3899
      %v3901 = vsel %vm986, %v3877, -inf
      %3902 = vmax.xlane.f32.xlu0 %v3901
      %v3903 = vpop.xlane.xlu0 %3902
      %v3904 = vsub.f32 %v3850, %v3882
      %v3905 = vsub.f32 %v3853, %v3885
      %v3906 = vsub.f32 %v3858, %v3888
      %v3907 = vsub.f32 %v3861, %v3891
      %v3908 = vsub.f32 %v3866, %v3894
      %v3909 = vsub.f32 %v3869, %v3897
      %v3910 = vsub.f32 %v3874, %v3900
      %v3911 = vsub.f32 %v3877, %v3903
      %v3912 = vmul.f32 %v3904, 1.442695
      %v3913 = vpow.pop %v3912
      %v3914 = vmul.f32 %v3905, 1.442695
      %v3915 = vpow.pop %v3914
      %v3916 = vmul.f32 %v3906, 1.442695
      %v3917 = vpow.pop %v3916
      %v3918 = vmul.f32 %v3907, 1.442695
      %v3919 = vpow.pop %v3918
      %v3920 = vmul.f32 %v3908, 1.442695
      %v3921 = vpow.pop %v3920
      %v3922 = vmul.f32 %v3909, 1.442695
      %v3923 = vpow.pop %v3922
      %v3924 = vmul.f32 %v3910, 1.442695
      %v3925 = vpow.pop %v3924
      %v3926 = vmul.f32 %v3911, 1.442695
      %v3927 = vpow.pop %v3926
      %v3928 = vsel %vm986, %v3913, 0.0
      %3929 = vadd.xlane.f32.xlu0 %v3928
      %v3930 = vpop.xlane.xlu0 %3929
      %v3931 = vsel %vm986, %v3915, 0.0
      %3932 = vadd.xlane.f32.xlu0 %v3931
      %v3933 = vpop.xlane.xlu0 %3932
      %v3934 = vsel %vm986, %v3917, 0.0
      %3935 = vadd.xlane.f32.xlu0 %v3934
      %v3936 = vpop.xlane.xlu0 %3935
      %v3937 = vsel %vm986, %v3919, 0.0
      %3938 = vadd.xlane.f32.xlu0 %v3937
      %v3939 = vpop.xlane.xlu0 %3938
      %v3940 = vsel %vm986, %v3921, 0.0
      %3941 = vadd.xlane.f32.xlu0 %v3940
      %v3942 = vpop.xlane.xlu0 %3941
      %v3943 = vsel %vm986, %v3923, 0.0
      %3944 = vadd.xlane.f32.xlu0 %v3943
      %v3945 = vpop.xlane.xlu0 %3944
      %v3946 = vsel %vm986, %v3925, 0.0
      %3947 = vadd.xlane.f32.xlu0 %v3946
      %v3948 = vpop.xlane.xlu0 %3947
      %v3949 = vsel %vm986, %v3927, 0.0
      %3950 = vadd.xlane.f32.xlu0 %v3949
      %v3951 = vpop.xlane.xlu0 %3950
      %v3952 = vrcp.pop %v3930
      %v3953 = vrcp.pop %v3933
      %v3954 = vrcp.pop %v3936
      %v3955 = vrcp.pop %v3939
      %v3956 = vrcp.pop %v3942
      %v3957 = vrcp.pop %v3945
      %v3958 = vrcp.pop %v3948
      %v3959 = vrcp.pop %v3951
      %v3960 = vmul.f32 %v3913, %v3952
      %v3961 = vmul.f32 %v3915, %v3953
      %v3962 = vmul.f32 %v3917, %v3954
      %v3963 = vmul.f32 %v3919, %v3955
      %v3964 = vmul.f32 %v3921, %v3956
      %v3965 = vmul.f32 %v3923, %v3957
      %v3966 = vmul.f32 %v3925, %v3958
      %v3967 = vmul.f32 %v3927, %v3959
      %v3968 = vpack.c.bf16 %v3961, %v3960
      %v3969 = vpack.c.bf16 %v3963, %v3962
      %v3970 = vpack.c.bf16 %v3965, %v3964
      %v3971 = vpack.c.bf16 %v3967, %v3966
      %3972 = vrot.lane.b32.xlu0 %v904, 16
      %v3973 = vpop.permute.xlu0 %3972
      %3974 = vrot.lane.b32.xlu0 %v905, 16
      %v3975 = vpop.permute.xlu0 %3974
      %3976 = vrot.lane.b32.xlu0 %v906, 16
      %v3977 = vpop.permute.xlu0 %3976
      %3978 = vrot.lane.b32.xlu0 %v907, 16
      %v3979 = vpop.permute.xlu0 %3978
      %v3985 = vsel %vm986, %v3968, 0
      %v3988 = vsel %vm986, %v3969, 0
      %v3991 = vsel %vm986, %v3970, 0
      %v3994 = vsel %vm986, %v3971, 0
      %3996 = vmatprep.subr.bf16.mxu0 0
      %3997 = vmatpush1.bf16.msra.mxu0 %v3973
      %3998 = vmatprep.subr.bf16.mxu0 0
      %3999 = vmatpush1.bf16.msra.mxu0 %v3975
      %4000 = vmatprep.subr.bf16.mxu0 0
      %4001 = vmatpush1.bf16.msra.mxu0 %v3977
      %4002 = vmatprep.subr.bf16.mxu0 0
      %4003 = vmatpush1.bf16.msra.mxu0 %v3979
      %4004 = vmatprep.subr.bf16.mxu0 0
      %4005 = vmatpush1.bf16.msra.mxu0 0
      %4006 = vmatprep.subr.bf16.mxu0 0
      %4007 = vmatpush1.bf16.msra.mxu0 0
      %4008 = vmatprep.subr.bf16.mxu0 0
      %4009 = vmatpush1.bf16.msra.mxu0 0
      %4010 = vmatprep.subr.bf16.mxu0 0
      %4011 = vmatpush1.bf16.msra.mxu0 0
      %4012 = vmatprep.subr.bf16.mxu0 0
      %4013 = vmatpush1.bf16.msra.mxu0 0
      %4014 = vmatprep.subr.bf16.mxu0 0
      %4015 = vmatpush1.bf16.msra.mxu0 0
      %4016 = vmatprep.subr.bf16.mxu0 0
      %4017 = vmatpush1.bf16.msra.mxu0 0
      %4018 = vmatprep.subr.bf16.mxu0 0
      %4019 = vmatpush1.bf16.msra.mxu0 0
      %4020 = vmatprep.subr.bf16.mxu0 0
      %4021 = vmatpush1.bf16.msra.mxu0 0
      %4022 = vmatprep.subr.bf16.mxu0 0
      %4023 = vmatpush1.bf16.msra.mxu0 0
      %4024 = vmatprep.subr.bf16.mxu0 0
      %4025 = vmatpush1.bf16.msra.mxu0 0
      %4026 = vmatprep.subr.bf16.mxu0 0
      %4027 = vmatpush1.bf16.msra.mxu0 0
      %4028 = vmatprep.mubr.bf16.mxu0 0
      %4029 = vmatmul.mubr.bf16.gmra.mrb[0].mxu0 %v3985
      %v4030 = vpop.f32.mrb[0].mxu0
      %v4031 = vadd.f32 0.0, %v4030
      %v4032 = vpop.f32.mrb[0].mxu0
      %v4033 = vpop.f32.mrb[0].mxu0
      %v4034 = vadd.f32 0.0, %v4033
      %v4035 = vpop.f32.mrb[0].mxu0
      %4036 = vmatprep.mubr.bf16.mxu0 0
      %4037 = vmatmul.mubr.bf16.gmra.mrb[0].mxu0 %v3988
      %v4038 = vpop.f32.mrb[0].mxu0
      %v4039 = vadd.f32 0.0, %v4038
      %v4040 = vpop.f32.mrb[0].mxu0
      %v4041 = vpop.f32.mrb[0].mxu0
      %v4042 = vadd.f32 0.0, %v4041
      %v4043 = vpop.f32.mrb[0].mxu0
      %4044 = vmatprep.mubr.bf16.mxu0 0
      %4045 = vmatmul.mubr.bf16.gmra.mrb[0].mxu0 %v3991
      %v4046 = vpop.f32.mrb[0].mxu0
      %v4047 = vadd.f32 0.0, %v4046
      %v4048 = vpop.f32.mrb[0].mxu0
      %v4049 = vpop.f32.mrb[0].mxu0
      %v4050 = vadd.f32 0.0, %v4049
      %v4051 = vpop.f32.mrb[0].mxu0
      %4052 = vmatprep.mubr.bf16.mxu0 0
      %4053 = vmatmul.mubr.bf16.gmra.mrb[0].mxu0 %v3994
      %v4054 = vpop.f32.mrb[0].mxu0
      %v4055 = vadd.f32 0.0, %v4054
      %v4056 = vpop.f32.mrb[0].mxu0
      %v4057 = vpop.f32.mrb[0].mxu0
      %v4058 = vadd.f32 0.0, %v4057
      %v4059 = vpop.f32.mrb[0].mxu0
      %4060 = vdwg.mxu0
      %v4061 = vld [vmem:[%s8 + $0x70] sm:$0xff]
      %v4062 = vld [vmem:[%s8 + $0x78] sm:$0xff]
      %v4063 = vpack.c.bf16 %v4062, %v4061
      %v4064 = vpack.c.bf16 %v4034, %v4031
      %v4065 = vpack.c.bf16 %v4042, %v4039
      %v4066 = vpack.c.bf16 %v4050, %v4047
      %v4067 = vpack.c.bf16 %v4058, %v4055
      %v4069 = vsel %vm908, %v4064, 0
      %v4072 = vsel %vm908, %v4065, 0
      %v4075 = vsel %vm908, %v4066, 0
      %v4078 = vsel %vm908, %v4067, 0
      %4080 = vmatprep.subr.bf16.mxu0 0
      %4081 = vmatpush1.bf16.msra.mxu0 %v4063
      %4082 = vmatprep.subr.bf16.mxu0 0
      %4083 = vmatpush1.bf16.msra.mxu0 0
      %4084 = vmatprep.subr.bf16.mxu0 0
      %4085 = vmatpush1.bf16.msra.mxu0 0
      %4086 = vmatprep.subr.bf16.mxu0 0
      %4087 = vmatpush1.bf16.msra.mxu0 0
      %4088 = vmatprep.subr.bf16.mxu0 0
      %4089 = vmatpush1.bf16.msra.mxu0 0
      %4090 = vmatprep.subr.bf16.mxu0 0
      %4091 = vmatpush1.bf16.msra.mxu0 0
      %4092 = vmatprep.subr.bf16.mxu0 0
      %4093 = vmatpush1.bf16.msra.mxu0 0
      %4094 = vmatprep.subr.bf16.mxu0 0
      %4095 = vmatpush1.bf16.msra.mxu0 0
      %4096 = vmatprep.subr.bf16.mxu0 0
      %4097 = vmatpush1.bf16.msra.mxu0 0
      %4098 = vmatprep.subr.bf16.mxu0 0
      %4099 = vmatpush1.bf16.msra.mxu0 0
      %4100 = vmatprep.subr.bf16.mxu0 0
      %4101 = vmatpush1.bf16.msra.mxu0 0
      %4102 = vmatprep.subr.bf16.mxu0 0
      %4103 = vmatpush1.bf16.msra.mxu0 0
      %4104 = vmatprep.subr.bf16.mxu0 0
      %4105 = vmatpush1.bf16.msra.mxu0 0
      %4106 = vmatprep.subr.bf16.mxu0 0
      %4107 = vmatpush1.bf16.msra.mxu0 0
      %4108 = vmatprep.subr.bf16.mxu0 0
      %4109 = vmatpush1.bf16.msra.mxu0 0
      %4110 = vmatprep.subr.bf16.mxu0 0
      %4111 = vmatpush1.bf16.msra.mxu0 0
      %4112 = vmatprep.mubr.bf16.mxu0 0
      %4113 = vmatmul.mubr.bf16.gmra.mrb[0].mxu0 %v4069
      %v4114 = vpop.f32.mrb[0].mxu0
      %v4115 = vadd.f32 0.0, %v4114
      %v4116 = vpop.f32.mrb[0].mxu0
      %v4117 = vpop.f32.mrb[0].mxu0
      %v4118 = vadd.f32 0.0, %v4117
      %v4119 = vpop.f32.mrb[0].mxu0
      %4120 = vmatprep.mubr.bf16.mxu0 0
      %4121 = vmatmul.mubr.bf16.gmra.mrb[0].mxu0 %v4072
      %v4122 = vpop.f32.mrb[0].mxu0
      %v4123 = vadd.f32 0.0, %v4122
      %v4124 = vpop.f32.mrb[0].mxu0
      %v4125 = vpop.f32.mrb[0].mxu0
      %v4126 = vadd.f32 0.0, %v4125
      %v4127 = vpop.f32.mrb[0].mxu0
      %4128 = vmatprep.mubr.bf16.mxu0 0
      %4129 = vmatmul.mubr.bf16.gmra.mrb[0].mxu0 %v4075
      %v4130 = vpop.f32.mrb[0].mxu0
      %v4131 = vadd.f32 0.0, %v4130
      %v4132 = vpop.f32.mrb[0].mxu0
      %v4133 = vpop.f32.mrb[0].mxu0
      %v4134 = vadd.f32 0.0, %v4133
      %v4135 = vpop.f32.mrb[0].mxu0
      %4136 = vmatprep.mubr.bf16.mxu0 0
      %4137 = vmatmul.mubr.bf16.gmra.mrb[0].mxu0 %v4078
      %v4138 = vpop.f32.mrb[0].mxu0
      %v4139 = vadd.f32 0.0, %v4138
      %v4140 = vpop.f32.mrb[0].mxu0
      %v4141 = vpop.f32.mrb[0].mxu0
      %v4142 = vadd.f32 0.0, %v4141
      %v4143 = vpop.f32.mrb[0].mxu0
      %4144 = vdwg.mxu0
      %v4145 = vadd.f32 %v3730, %v4115
      %v4146 = vadd.f32 %v3731, %v4118
      %v4147 = vadd.f32 %v3732, %v4123
      %v4148 = vadd.f32 %v3733, %v4126
      %v4149 = vadd.f32 %v3734, %v4131
      %v4150 = vadd.f32 %v3735, %v4134
      %v4151 = vadd.f32 %v3736, %v4139
      %v4152 = vadd.f32 %v3737, %v4142
      %v4153 = vld [vmem:[%s9] sm:$0x1]
      %v4155 = vlaneseq
      %v4156 = vshrl.u32 %v4155, 7
      %v4157 = vsub.s32 0, %v4156
      %v4158 = vrot.slane %v4153, %v4157
      %v4160 = vadd.f32 %v4145, %v4158
      %v4161 = vadd.f32 %v4146, %v4158
      %v4162 = vadd.f32 %v4147, %v4158
      %v4163 = vadd.f32 %v4148, %v4158
      %v4164 = vadd.f32 %v4149, %v4158
      %v4165 = vadd.f32 %v4150, %v4158
      %v4166 = vadd.f32 %v4151, %v4158
      %v4167 = vadd.f32 %v4152, %v4158
      %v4168 = vadd.f32 %v435, %v4160
      %v4169 = vadd.f32 %v436, %v4161
      %v4170 = vadd.f32 %v437, %v4162
      %v4171 = vadd.f32 %v438, %v4163
      %v4172 = vadd.f32 %v439, %v4164
      %v4173 = vadd.f32 %v440, %v4165
      %v4174 = vadd.f32 %v441, %v4166
      %v4175 = vadd.f32 %v442, %v4167
      %4176 = vadd.xlane.f32.xlu0 %v4168
      %v4177 = vpop.xlane.xlu0 %4176
      %4178 = vadd.xlane.f32.xlu0 %v4169
      %v4179 = vpop.xlane.xlu0 %4178
      %4180 = vadd.xlane.f32.xlu0 %v4170
      %v4181 = vpop.xlane.xlu0 %4180
      %4182 = vadd.xlane.f32.xlu0 %v4171
      %v4183 = vpop.xlane.xlu0 %4182
      %4184 = vadd.xlane.f32.xlu0 %v4172
      %v4185 = vpop.xlane.xlu0 %4184
      %4186 = vadd.xlane.f32.xlu0 %v4173
      %v4187 = vpop.xlane.xlu0 %4186
      %4188 = vadd.xlane.f32.xlu0 %v4174
      %v4189 = vpop.xlane.xlu0 %4188
      %4190 = vadd.xlane.f32.xlu0 %v4175
      %v4191 = vpop.xlane.xlu0 %4190
      %v4192 = vrcp.pop 128.0
      %v4193 = vmul.f32 %v4177, %v4192
      %v4194 = vmul.f32 %v4179, %v4192
      %v4195 = vmul.f32 %v4181, %v4192
      %v4196 = vmul.f32 %v4183, %v4192
      %v4197 = vmul.f32 %v4185, %v4192
      %v4198 = vmul.f32 %v4187, %v4192
      %v4199 = vmul.f32 %v4189, %v4192
      %v4200 = vmul.f32 %v4191, %v4192
      %v4201 = vsub.f32 %v4168, %v4193
      %v4202 = vsub.f32 %v4169, %v4194
      %v4203 = vsub.f32 %v4170, %v4195
      %v4204 = vsub.f32 %v4171, %v4196
      %v4205 = vsub.f32 %v4172, %v4197
      %v4206 = vsub.f32 %v4173, %v4198
      %v4207 = vsub.f32 %v4174, %v4199
      %v4208 = vsub.f32 %v4175, %v4200
      %v4209 = vmul.f32 %v4201, %v4201
      %v4210 = vmul.f32 %v4202, %v4202
      %v4211 = vmul.f32 %v4203, %v4203
      %v4212 = vmul.f32 %v4204, %v4204
      %v4213 = vmul.f32 %v4205, %v4205
      %v4214 = vmul.f32 %v4206, %v4206
      %v4215 = vmul.f32 %v4207, %v4207
      %v4216 = vmul.f32 %v4208, %v4208
      %4217 = vadd.xlane.f32.xlu0 %v4209
      %v4218 = vpop.xlane.xlu0 %4217
      %4219 = vadd.xlane.f32.xlu0 %v4210
      %v4220 = vpop.xlane.xlu0 %4219
      %4221 = vadd.xlane.f32.xlu0 %v4211
      %v4222 = vpop.xlane.xlu0 %4221
      %4223 = vadd.xlane.f32.xlu0 %v4212
      %v4224 = vpop.xlane.xlu0 %4223
      %4225 = vadd.xlane.f32.xlu0 %v4213
      %v4226 = vpop.xlane.xlu0 %4225
      %4227 = vadd.xlane.f32.xlu0 %v4214
      %v4228 = vpop.xlane.xlu0 %4227
      %4229 = vadd.xlane.f32.xlu0 %v4215
      %v4230 = vpop.xlane.xlu0 %4229
      %4231 = vadd.xlane.f32.xlu0 %v4216
      %v4232 = vpop.xlane.xlu0 %4231
      %v4233 = vmul.f32 %v4218, %v4192
      %v4234 = vmul.f32 %v4220, %v4192
      %v4235 = vmul.f32 %v4222, %v4192
      %v4236 = vmul.f32 %v4224, %v4192
      %v4237 = vmul.f32 %v4226, %v4192
      %v4238 = vmul.f32 %v4228, %v4192
      %v4239 = vmul.f32 %v4230, %v4192
      %v4240 = vmul.f32 %v4232, %v4192
      %v4241 = vadd.f32 %v4233, 1e-05
      %v4242 = vadd.f32 %v4234, 1e-05
      %v4243 = vadd.f32 %v4235, 1e-05
      %v4244 = vadd.f32 %v4236, 1e-05
      %v4245 = vadd.f32 %v4237, 1e-05
      %v4246 = vadd.f32 %v4238, 1e-05
      %v4247 = vadd.f32 %v4239, 1e-05
      %v4248 = vadd.f32 %v4240, 1e-05
      %v4249 = vrsqrt.pop %v4241
      %v4250 = vrsqrt.pop %v4242
      %v4251 = vrsqrt.pop %v4243
      %v4252 = vrsqrt.pop %v4244
      %v4253 = vrsqrt.pop %v4245
      %v4254 = vrsqrt.pop %v4246
      %v4255 = vrsqrt.pop %v4247
      %v4256 = vrsqrt.pop %v4248
      %v4257 = vmul.f32 %v4201, %v4249
      %v4258 = vmul.f32 %v4202, %v4250
      %v4259 = vmul.f32 %v4203, %v4251
      %v4260 = vmul.f32 %v4204, %v4252
      %v4261 = vmul.f32 %v4205, %v4253
      %v4262 = vmul.f32 %v4206, %v4254
      %v4263 = vmul.f32 %v4207, %v4255
      %v4264 = vmul.f32 %v4208, %v4256
      %v4265 = vld [vmem:[%s10] sm:$0x1]
      %v4267 = vlaneseq
      %v4268 = vshrl.u32 %v4267, 7
      %v4269 = vsub.s32 0, %v4268
      %v4270 = vrot.slane %v4265, %v4269
      %v4272 = vmul.f32 %v4257, %v4270
      %v4273 = vmul.f32 %v4258, %v4270
      %v4274 = vmul.f32 %v4259, %v4270
      %v4275 = vmul.f32 %v4260, %v4270
      %v4276 = vmul.f32 %v4261, %v4270
      %v4277 = vmul.f32 %v4262, %v4270
      %v4278 = vmul.f32 %v4263, %v4270
      %v4279 = vmul.f32 %v4264, %v4270
      %v4280 = vld [vmem:[%s11] sm:$0x1]
      %v4282 = vlaneseq
      %v4283 = vshrl.u32 %v4282, 7
      %v4284 = vsub.s32 0, %v4283
      %v4285 = vrot.slane %v4280, %v4284
      %v4287 = vadd.f32 %v4272, %v4285
      %v4288 = vadd.f32 %v4273, %v4285
      %v4289 = vadd.f32 %v4274, %v4285
      %v4290 = vadd.f32 %v4275, %v4285
      %v4291 = vadd.f32 %v4276, %v4285
      %v4292 = vadd.f32 %v4277, %v4285
      %v4293 = vadd.f32 %v4278, %v4285
      %v4294 = vadd.f32 %v4279, %v4285
      %4295 = vst [vmem:[%s433] sm:$0xff] %v4287
      %4296 = vst [vmem:[%s433 + $0x8] sm:$0xff] %v4288
      %4297 = vst [vmem:[%s433 + $0x10] sm:$0xff] %v4289
      %4298 = vst [vmem:[%s433 + $0x18] sm:$0xff] %v4290
      %4299 = vst [vmem:[%s433 + $0x20] sm:$0xff] %v4291
      %4300 = vst [vmem:[%s433 + $0x28] sm:$0xff] %v4292
      %4301 = vst [vmem:[%s433 + $0x30] sm:$0xff] %v4293
      %4302 = vst [vmem:[%s433 + $0x38] sm:$0xff] %v4294
      %p4303 = scmp.lt.s32.totalorder %s23, 1
      %s4304 = scalar_select %p4303, %s23, 1
      %s4305 = smul.addr %s4304, 8
      %s4306 = smul.addr %s4305, 8
      %s4307 = scalar_lea.vmem %s12, %s4306
      // Predicated region
      $region69: #{transformer_decoder_layer.3} parent=67 // pred_check
        %p4308 = pneg %p303
      $region70: #{transformer_decoder_layer.3} parent=67 // pred_check_branch
        %4310 = sbr.rel (%p4308) target = $region72
      $region71: #{transformer_decoder_layer.3} parent=67 // pred_region
        _
      $region72: #{transformer_decoder_layer.3} parent=67 // pred_fallthru
        _
    $region68: #{transformer_decoder_layer.3} parent=5 // pred_fallthru
      _
    %p4311 = scmp.le.s32.totalorder 2, %s18
    // Predicated region
    $region73: #{transformer_decoder_layer.3} parent=5 // pred_check
      %p4312 = pneg %p4311
    $region74: #{transformer_decoder_layer.3} parent=5 // pred_check_branch
      %4314 = sbr.rel (%p4312) target = $region76
    $region75: #{transformer_decoder_layer.3} parent=5 // pred_region
      %s4315 = ssub.s32 %s18, 2
      // Predicated region
      $region77: #{transformer_decoder_layer.3} parent=75 // pred_check
        %p4316 = pneg %p309
      $region78: #{transformer_decoder_layer.3} parent=75 // pred_check_branch
        %4318 = sbr.rel (%p4316) target = $region80
      $region79: #{transformer_decoder_layer.3} parent=75 // pred_region
        %p4319 = scmp.lt.s32.totalorder %s24, 1
        %s4320 = scalar_select %p4319, %s24, 1
        %s4321 = smul.addr %s4320, 8
        %s4322 = smul.addr %s4321, 8
        %s4323 = scalar_lea.vmem %s12, %s4322
      $region80: #{transformer_decoder_layer.3} parent=75 // pred_fallthru
        _
    $region76: #{transformer_decoder_layer.3} parent=5 // pred_fallthru
      _
  $region6: #{transformer_decoder_layer.3} parent=0 // loop_footer
    %s22 = sadd.s32 1, %s18
  $region7: #{transformer_decoder_layer.3} parent=0 // loop_footer_branch
    %17 = sbr.rel target = $region3
  $region8: #{transformer_decoder_layer.3} parent=0 // loop_exit
    _

</llo_original>
